<compile_context>
chip_gen: v5e
topology: v5e:2x2
jax: 0.10.0
libtpu: 0.0.40
codegen_flags: <defaults>
</compile_context>

<pallas_src>
import functools

import jax
import jax.numpy as jnp
from jax import lax
from jax.experimental import pallas as pl
from jax.experimental.pallas import tpu as pltpu

C = 128          # channels fixed by the module definition
EPS = 1e-5       # torch.nn.InstanceNorm2d default eps


def _conv_in_relu_stage(x_hwc_bf16, w_ref, g_ref, b_ref, s_ref, H, W,
                        out_dtype, residual_f32=None):
    """Conv3x3('SAME') + InstanceNorm2d(affine) + ReLU (+ optional fused residual), in VMEM.

    x_hwc_bf16  : (H, W, C) bf16 value
    w_ref       : (3, 3*C, C) bf16 Ref; w_ref[dy][dx*C:(dx+1)*C, :] = W[dy, dx] (Cin, Cout)
    g_ref/b_ref : (1, C) f32 Refs (InstanceNorm gamma / beta)
    s_ref       : (H+2, W, 3*C) bf16 VMEM scratch im2col slab (border rows pre-zeroed)
    residual_f32: optional (H*W, C) f32 value added after ReLU (fused epilogue)
    returns (H, W, C) value in out_dtype
    """
    dt = x_hwc_bf16.dtype

    # --- im2col slab: width taps on the lane axis, height padding via the border rows ---
    # All slab stores are lane-tile aligned (full 128-lane groups, full W, rows 1..H); the
    # width shift is done on a small transient value so no unaligned packed-bf16 stores.
    zcol = jnp.zeros((H, 1, C), dt)
    xl = jnp.concatenate([zcol, x_hwc_bf16[:, :W - 1, :]], axis=1)      # x[:, w-1, :]
    xr = jnp.concatenate([x_hwc_bf16[:, 1:, :], zcol], axis=1)          # x[:, w+1, :]
    s_ref[1:H + 1, :, 0:C] = xl
    s_ref[1:H + 1, :, C:2 * C] = x_hwc_bf16
    s_ref[1:H + 1, :, 2 * C:3 * C] = xr

    # Flatten rows: row = h' * W + w. Free relayout when W is a multiple of 16 (bf16 tile).
    slab = s_ref[...].reshape((H + 2) * W, 3 * C)

    # --- 3 MXU matmuls per stage, K = 3C = 384, bf16 inputs, f32 accumulation ---
    # K=384 is exactly 3 full passes on v5e's 128-deep MXU; see TODO at top for v6e/v7x.
    acc = jnp.zeros((H * W, C), jnp.float32)
    for dy in range(3):
        acc = acc + jnp.dot(slab[dy * W:dy * W + H * W], w_ref[dy],
                            preferred_element_type=jnp.float32)

    # --- single-pass InstanceNorm stats + folded affine + ReLU (+ residual), all f32 ---
    # NOTE: var = E[x^2] - mean^2 can cancel if |mean| >> std; fine for IN-scale activations.
    inv_hw = jnp.float32(1.0 / (H * W))
    mean = jnp.sum(acc, axis=0, keepdims=True) * inv_hw                 # (1, C)
    ex2 = jnp.sum(acc * acc, axis=0, keepdims=True) * inv_hw            # (1, C)
    var = ex2 - mean * mean                                             # biased variance
    scale = g_ref[...] * lax.rsqrt(var + EPS)
    shift = b_ref[...] - mean * scale
    y = jnp.maximum(acc * scale + shift, 0.0)
    if residual_f32 is not None:
        y = y + residual_f32
    return y.reshape(H, W, C).astype(out_dtype)


def residual_block_kernel(x_ref, w1_ref, g1_ref, b1_ref,
                          w2_ref, g2_ref, b2_ref, out_ref, s_ref, *, H, W, B_TILE):
    # Height 'SAME' zero padding lives in the slab's two border rows; the stage stores
    # never touch them, so zero them once per grid step (tiny: 2 rows).
    zrow = jnp.zeros((1, W, 3 * C), s_ref.dtype)
    s_ref[0:1, :, :] = zrow
    s_ref[H + 1:H + 2, :, :] = zrow

    # Amortize per-grid-step overhead across B_TILE images (static, short trip count).
    for b in range(B_TILE):
        x = x_ref[b]                                                    # (H, W, C)
        x_bf = x.astype(jnp.bfloat16)
        # Stage 1: output produced directly in bf16 (feeds stage-2 im2col, no f32 y1).
        y1 = _conv_in_relu_stage(x_bf, w1_ref, g1_ref, b1_ref, s_ref, H, W,
                                 out_dtype=jnp.bfloat16)
        # Stage 2: residual add fused into the scale/shift/ReLU epilogue, store once.
        out_ref[b] = _conv_in_relu_stage(
            y1, w2_ref, g2_ref, b2_ref, s_ref, H, W,
            out_dtype=out_ref.dtype,
            residual_f32=x.astype(jnp.float32).reshape(H * W, C))


def _pick_batch_tile(N, H, W):
    """Largest divisor of N (<=8) whose per-step x block stays small (~4 MiB)."""
    per_img_bytes = H * W * C * 4
    cap = min(8, max(1, (4 << 20) // per_img_bytes))
    best = 1
    for d in range(1, N + 1):
        if N % d == 0 and d <= cap:
            best = d
    return best


def residual_block_nhwc(x_nhwc, params, *, batch_tile=None):
    """Production entry point: (N, H, W, 128) in / out, no layout passes."""
    w1, g1, b1, w2, g2, b2 = params
    N, H, W, Cc = x_nhwc.shape
    assert Cc == C

    bt = batch_tile if batch_tile is not None else _pick_batch_tile(N, H, W)
    assert N % bt == 0

    # Weights: (9, Cin, Cout) tap-major (tap = dy*3+dx) -> wide-K bf16 layout (3, 3*Cin, Cout).
    w1w = w1.reshape(3, 3 * C, C).astype(jnp.bfloat16)
    w2w = w2.reshape(3, 3 * C, C).astype(jnp.bfloat16)

    # Rough per-step VMEM need (double-buffered in/out blocks + weights + slab + temps);
    # only raise the scoped limit when the default (16/32 MiB) would not cover it.
    blk = bt * H * W * C * 4
    slab = (H + 2) * W * 3 * C * 2
    temps = H * W * C * (3 * 4 + 3 * 2)            # coarse: f32 acc/epilogue + bf16 temps
    need = 4 * blk + 2 * (3 * 3 * C * C * 2) + slab + temps
    cp_kwargs = dict(dimension_semantics=("parallel",))
    if need > (24 << 20):
        # TODO(synk): images beyond ~64 px per side on v7x (64 MiB VMEM) also need a
        # row-strip grid axis (1-row halo + two-pass IN stats); fine at these sizes.
        cp_kwargs["vmem_limit_bytes"] = min(int(need * 1.5), 128 << 20)

    kernel = functools.partial(residual_block_kernel, H=H, W=W, B_TILE=bt)
    return pl.pallas_call(
        kernel,
        out_shape=jax.ShapeDtypeStruct((N, H, W, C), x_nhwc.dtype),
        grid=(N // bt,),
        in_specs=[
            pl.BlockSpec((bt, H, W, C), lambda n: (n, 0, 0, 0)),
            pl.BlockSpec((3, 3 * C, C), lambda n: (0, 0, 0)),
            pl.BlockSpec((1, C), lambda n: (0, 0)),
            pl.BlockSpec((1, C), lambda n: (0, 0)),
            pl.BlockSpec((3, 3 * C, C), lambda n: (0, 0, 0)),
            pl.BlockSpec((1, C), lambda n: (0, 0)),
            pl.BlockSpec((1, C), lambda n: (0, 0)),
        ],
        out_specs=pl.BlockSpec((bt, H, W, C), lambda n: (n, 0, 0, 0)),
        scratch_shapes=[pltpu.VMEM((H + 2, W, 3 * C), jnp.bfloat16)],
        compiler_params=pltpu.CompilerParams(**cp_kwargs),
    )(x_nhwc, w1w, g1, b1, w2w, g2, b2)


def residual_block(x_nchw, params, *, batch_tile=None):
    """PyTorch-layout interface: (N, 128, H, W), matching the nn.Module.

    NOTE: the two transposes below are full-tensor HBM relayout passes; production
    callers should use residual_block_nhwc end-to-end (C=128 on the lane axis) instead.
    """
    x = jnp.transpose(x_nchw, (0, 2, 3, 1))
    out = residual_block_nhwc(x, params, batch_tile=batch_tile)
    return jnp.transpose(out, (0, 3, 1, 2))


def reference(x_nchw, params):
    """Pure-JAX f32 reference with the module's exact semantics (correctness check)."""
    w1, g1, b1, w2, g2, b2 = params
    x = jnp.transpose(x_nchw, (0, 2, 3, 1))

    def block(h, w9, g, b):
        rhs = w9.reshape(3, 3, C, C)  # HWIO
        c = lax.conv_general_dilated(
            h, rhs, (1, 1), [(1, 1), (1, 1)],
            dimension_numbers=("NHWC", "HWIO", "NHWC"),
            precision=lax.Precision.HIGHEST)
        mean = jnp.mean(c, axis=(1, 2), keepdims=True)
        var = jnp.mean((c - mean) ** 2, axis=(1, 2), keepdims=True)
        y = (c - mean) * lax.rsqrt(var + EPS)
        y = y * g.reshape(1, 1, 1, C) + b.reshape(1, 1, 1, C)
        return jnp.maximum(y, 0.0)

    o = block(block(x, w1, g1, b1), w2, g2, b2) + x
    return jnp.transpose(o, (0, 3, 1, 2))


if __name__ == "__main__":
    key = jax.random.PRNGKey(0)
    ks = jax.random.split(key, 7)
    N, H, W = 2, 16, 16

    # Deterministic synthetic parameters (shapes implied by the module __init__).
    x = jax.random.normal(ks[0], (N, C, H, W), jnp.float32)          # NCHW input
    scale = 1.0 / (3 * 3 * C) ** 0.5
    # Conv weights as (9, Cin, Cout), tap-major (tap = dy*3+dx).
    # (From a torch Conv2d weight (Cout,Cin,3,3): w.permute(2,3,1,0).reshape(9,Cin,Cout).)
    w1 = jax.random.normal(ks[1], (9, C, C), jnp.float32) * scale
    w2 = jax.random.normal(ks[2], (9, C, C), jnp.float32) * scale
    g1 = 1.0 + 0.1 * jax.random.normal(ks[3], (1, C), jnp.float32)   # IN1 gamma
    b1 = 0.1 * jax.random.normal(ks[4], (1, C), jnp.float32)         # IN1 beta
    g2 = 1.0 + 0.1 * jax.random.normal(ks[5], (1, C), jnp.float32)   # IN2 gamma
    b2 = 0.1 * jax.random.normal(ks[6], (1, C), jnp.float32)         # IN2 beta
    # TODO(synk): conv bias omitted -- a per-channel constant is exactly cancelled by the
    # InstanceNorm mean subtraction; this breaks if IN is removed or made non-affine-free.
    params = (w1, g1, b1, w2, g2, b2)

    out = jax.block_until_ready(jax.jit(residual_block)(x, params))
    ref = jax.block_until_ready(jax.jit(reference)(x, params))

    assert out.shape == x.shape and out.dtype == x.dtype
    # Kernel runs the conv matmuls with bf16 activations (f32 accumulation); vs the full-f32
    # reference the expected max-abs deviation is ~1e-2, so gate at 5e-2.
    err = float(jnp.max(jnp.abs(out - ref)))
    if not err < 5e-2:
        raise SystemExit(f"mismatch: max abs err {err}")
    print("KERNEL_OK")
</pallas_src>

<mosaic_0001>
module attributes {stable_mosaic.version = 11 : i64} {
  func.func @residual_block_kernel(%arg0: i32, %arg1: memref<2x16x16x128xf32, #tpu.memory_space<vmem>>, %arg2: memref<3x384x128xbf16, #tpu.memory_space<vmem>>, %arg3: memref<1x128xf32, #tpu.memory_space<vmem>>, %arg4: memref<1x128xf32, #tpu.memory_space<vmem>>, %arg5: memref<3x384x128xbf16, #tpu.memory_space<vmem>>, %arg6: memref<1x128xf32, #tpu.memory_space<vmem>>, %arg7: memref<1x128xf32, #tpu.memory_space<vmem>>, %arg8: memref<2x16x16x128xf32, #tpu.memory_space<vmem>>, %arg9: memref<18x16x384xbf16, #tpu.memory_space<vmem>>) attributes {dimension_semantics = [#tpu.dimension_semantics<parallel>], iteration_bounds = array<i64: 1>, scalar_prefetch = 0 : i64, scratch_operands = 1 : i64, tpu.core_type = #tpu.core_type<tc>, window_params = [{transform_indices = @transform_0, window_bounds = array<i64: 2, 16, 16, 128>}, {pipeline_mode = #tpu.pipeline_mode<synchronous>, transform_indices = @transform_1, window_bounds = array<i64: 3, 384, 128>}, {pipeline_mode = #tpu.pipeline_mode<synchronous>, transform_indices = @transform_2, window_bounds = array<i64: 1, 128>}, {pipeline_mode = #tpu.pipeline_mode<synchronous>, transform_indices = @transform_3, window_bounds = array<i64: 1, 128>}, {pipeline_mode = #tpu.pipeline_mode<synchronous>, transform_indices = @transform_4, window_bounds = array<i64: 3, 384, 128>}, {pipeline_mode = #tpu.pipeline_mode<synchronous>, transform_indices = @transform_5, window_bounds = array<i64: 1, 128>}, {pipeline_mode = #tpu.pipeline_mode<synchronous>, transform_indices = @transform_6, window_bounds = array<i64: 1, 128>}, {transform_indices = @transform_7, window_bounds = array<i64: 2, 16, 16, 128>}]} {
    %cst = arith.constant 0.000000e+00 : bf16
    %0 = vector.broadcast %cst : bf16 to vector<1x16x384xbf16>
    %c0 = arith.constant 0 : index
    %c0_0 = arith.constant 0 : index
    %c0_1 = arith.constant 0 : index
    %1 = vector.load %arg9[%c0, %c0_0, %c0_1] : memref<18x16x384xbf16, #tpu.memory_space<vmem>>, vector<1x16x384xbf16>
    tpu.vector_store %arg9[%c0, %c0_0, %c0_1], %0 {strides = array<i32>} : memref<18x16x384xbf16, #tpu.memory_space<vmem>>, vector<1x16x384xbf16>,
    %c17 = arith.constant 17 : index
    %c0_2 = arith.constant 0 : index
    %c0_3 = arith.constant 0 : index
    %2 = vector.load %arg9[%c17, %c0_2, %c0_3] : memref<18x16x384xbf16, #tpu.memory_space<vmem>>, vector<1x16x384xbf16>
    tpu.vector_store %arg9[%c17, %c0_2, %c0_3], %0 {strides = array<i32>} : memref<18x16x384xbf16, #tpu.memory_space<vmem>>, vector<1x16x384xbf16>,
    %c0_4 = arith.constant 0 : index
    %c0_5 = arith.constant 0 : index
    %c0_6 = arith.constant 0 : index
    %c0_7 = arith.constant 0 : index
    %3 = vector.load %arg1[%c0_4, %c0_5, %c0_6, %c0_7] : memref<2x16x16x128xf32, #tpu.memory_space<vmem>>, vector<1x16x16x128xf32>
    %4 = vector.shape_cast %3 : vector<1x16x16x128xf32> to vector<16x16x128xf32>
    %5 = arith.truncf %4 : vector<16x16x128xf32> to vector<16x16x128xbf16>
    %cst_8 = arith.constant 0.000000e+00 : bf16
    %6 = vector.broadcast %cst_8 : bf16 to vector<16x1x128xbf16>
    %7 = vector.extract_strided_slice %5 {offsets = [0, 0, 0], sizes = [16, 15, 128], strides = [1, 1, 1]} : vector<16x16x128xbf16> to vector<16x15x128xbf16>
    %8 = tpu.concatenate %6, %7 in 1 : vector<16x1x128xbf16>, vector<16x15x128xbf16> -> vector<16x16x128xbf16>
    %9 = vector.extract_strided_slice %5 {offsets = [0, 1, 0], sizes = [16, 15, 128], strides = [1, 1, 1]} : vector<16x16x128xbf16> to vector<16x15x128xbf16>
    %10 = tpu.concatenate %9, %6 in 1 : vector<16x15x128xbf16>, vector<16x1x128xbf16> -> vector<16x16x128xbf16>
    %c1 = arith.constant 1 : index
    %c0_9 = arith.constant 0 : index
    %c0_10 = arith.constant 0 : index
    %11 = vector.load %arg9[%c1, %c0_9, %c0_10] : memref<18x16x384xbf16, #tpu.memory_space<vmem>>, vector<16x16x128xbf16>
    tpu.vector_store %arg9[%c1, %c0_9, %c0_10], %8 {strides = array<i32>} : memref<18x16x384xbf16, #tpu.memory_space<vmem>>, vector<16x16x128xbf16>,
    %c1_11 = arith.constant 1 : index
    %c0_12 = arith.constant 0 : index
    %c128 = arith.constant 128 : index
    %12 = vector.load %arg9[%c1_11, %c0_12, %c128] : memref<18x16x384xbf16, #tpu.memory_space<vmem>>, vector<16x16x128xbf16>
    tpu.vector_store %arg9[%c1_11, %c0_12, %c128], %5 {strides = array<i32>} : memref<18x16x384xbf16, #tpu.memory_space<vmem>>, vector<16x16x128xbf16>,
    %c1_13 = arith.constant 1 : index
    %c0_14 = arith.constant 0 : index
    %c256 = arith.constant 256 : index
    %13 = vector.load %arg9[%c1_13, %c0_14, %c256] : memref<18x16x384xbf16, #tpu.memory_space<vmem>>, vector<16x16x128xbf16>
    tpu.vector_store %arg9[%c1_13, %c0_14, %c256], %10 {strides = array<i32>} : memref<18x16x384xbf16, #tpu.memory_space<vmem>>, vector<16x16x128xbf16>,
    %c0_15 = arith.constant 0 : index
    %c0_16 = arith.constant 0 : index
    %c0_17 = arith.constant 0 : index
    %14 = vector.load %arg9[%c0_15, %c0_16, %c0_17] : memref<18x16x384xbf16, #tpu.memory_space<vmem>>, vector<18x16x384xbf16>
    %15 = vector.shape_cast %14 : vector<18x16x384xbf16> to vector<288x384xbf16>
    %cst_18 = arith.constant 0.000000e+00 : f32
    %16 = vector.broadcast %cst_18 : f32 to vector<256x128xf32>
    %17 = vector.extract_strided_slice %15 {offsets = [0, 0], sizes = [256, 384], strides = [1, 1]} : vector<288x384xbf16> to vector<256x384xbf16>
    %c0_19 = arith.constant 0 : index
    %c0_20 = arith.constant 0 : index
    %c0_21 = arith.constant 0 : index
    %18 = vector.load %arg2[%c0_19, %c0_20, %c0_21] : memref<3x384x128xbf16, #tpu.memory_space<vmem>>, vector<1x384x128xbf16>
    %19 = vector.shape_cast %18 : vector<1x384x128xbf16> to vector<384x128xbf16>
    %cst_22 = arith.constant dense<0.000000e+00> : vector<256x128xf32>
    %20 = tpu.matmul %17, %19, %cst_22 {dimension_numbers = #tpu.dot_dimension_numbers<[1], [0], [0], [1], [0, 0, 1, 1], [], []>} : vector<256x384xbf16>, vector<384x128xbf16>, vector<256x128xf32> -> vector<256x128xf32>
    %21 = arith.addf %16, %20 : vector<256x128xf32>
    %22 = vector.extract_strided_slice %15 {offsets = [16, 0], sizes = [256, 384], strides = [1, 1]} : vector<288x384xbf16> to vector<256x384xbf16>
    %c1_23 = arith.constant 1 : index
    %c0_24 = arith.constant 0 : index
    %c0_25 = arith.constant 0 : index
    %23 = vector.load %arg2[%c1_23, %c0_24, %c0_25] : memref<3x384x128xbf16, #tpu.memory_space<vmem>>, vector<1x384x128xbf16>
    %24 = vector.shape_cast %23 : vector<1x384x128xbf16> to vector<384x128xbf16>
    %cst_26 = arith.constant dense<0.000000e+00> : vector<256x128xf32>
    %25 = tpu.matmul %22, %24, %cst_26 {dimension_numbers = #tpu.dot_dimension_numbers<[1], [0], [0], [1], [0, 0, 1, 1], [], []>} : vector<256x384xbf16>, vector<384x128xbf16>, vector<256x128xf32> -> vector<256x128xf32>
    %26 = arith.addf %21, %25 : vector<256x128xf32>
    %27 = vector.extract_strided_slice %15 {offsets = [32, 0], sizes = [256, 384], strides = [1, 1]} : vector<288x384xbf16> to vector<256x384xbf16>
    %c2 = arith.constant 2 : index
    %c0_27 = arith.constant 0 : index
    %c0_28 = arith.constant 0 : index
    %28 = vector.load %arg2[%c2, %c0_27, %c0_28] : memref<3x384x128xbf16, #tpu.memory_space<vmem>>, vector<1x384x128xbf16>
    %29 = vector.shape_cast %28 : vector<1x384x128xbf16> to vector<384x128xbf16>
    %cst_29 = arith.constant dense<0.000000e+00> : vector<256x128xf32>
    %30 = tpu.matmul %27, %29, %cst_29 {dimension_numbers = #tpu.dot_dimension_numbers<[1], [0], [0], [1], [0, 0, 1, 1], [], []>} : vector<256x384xbf16>, vector<384x128xbf16>, vector<256x128xf32> -> vector<256x128xf32>
    %31 = arith.addf %26, %30 : vector<256x128xf32>
    %cst_30 = arith.constant dense<0.000000e+00> : vector<128xf32>
    %32 = vector.multi_reduction <add>, %31, %cst_30 [0] : vector<256x128xf32> to vector<128xf32>
    %33 = vector.shape_cast %32 : vector<128xf32> to vector<1x128xf32>
    %cst_31 = arith.constant 3.906250e-03 : f32
    %34 = vector.broadcast %cst_31 : f32 to vector<1x128xf32>
    %35 = arith.mulf %33, %34 : vector<1x128xf32>
    %36 = arith.mulf %31, %31 : vector<256x128xf32>
    %cst_32 = arith.constant dense<0.000000e+00> : vector<128xf32>
    %37 = vector.multi_reduction <add>, %36, %cst_32 [0] : vector<256x128xf32> to vector<128xf32>
    %38 = vector.shape_cast %37 : vector<128xf32> to vector<1x128xf32>
    %cst_33 = arith.constant 3.906250e-03 : f32
    %39 = vector.broadcast %cst_33 : f32 to vector<1x128xf32>
    %40 = arith.mulf %38, %39 : vector<1x128xf32>
    %41 = arith.mulf %35, %35 : vector<1x128xf32>
    %42 = arith.subf %40, %41 : vector<1x128xf32>
    %c0_34 = arith.constant 0 : index
    %c0_35 = arith.constant 0 : index
    %43 = vector.load %arg3[%c0_34, %c0_35] : memref<1x128xf32, #tpu.memory_space<vmem>>, vector<1x128xf32>
    %cst_36 = arith.constant 9.99999974E-6 : f32
    %44 = vector.broadcast %cst_36 : f32 to vector<1x128xf32>
    %45 = arith.addf %42, %44 : vector<1x128xf32>
    %46 = math.rsqrt %45 : vector<1x128xf32>
    %47 = arith.mulf %43, %46 : vector<1x128xf32>
    %c0_37 = arith.constant 0 : index
    %c0_38 = arith.constant 0 : index
    %48 = vector.load %arg4[%c0_37, %c0_38] : memref<1x128xf32, #tpu.memory_space<vmem>>, vector<1x128xf32>
    %49 = arith.mulf %35, %47 : vector<1x128xf32>
    %50 = arith.subf %48, %49 : vector<1x128xf32>
    %51 = vector.broadcast %47 : vector<1x128xf32> to vector<256x128xf32>
    %52 = arith.mulf %31, %51 : vector<256x128xf32>
    %53 = vector.broadcast %50 : vector<1x128xf32> to vector<256x128xf32>
    %54 = arith.addf %52, %53 : vector<256x128xf32>
    %cst_39 = arith.constant 0.000000e+00 : f32
    %55 = vector.broadcast %cst_39 : f32 to vector<256x128xf32>
    %56 = arith.maximumf %54, %55 : vector<256x128xf32>
    %57 = vector.shape_cast %56 : vector<256x128xf32> to vector<16x16x128xf32>
    %58 = arith.truncf %57 : vector<16x16x128xf32> to vector<16x16x128xbf16>
    %59 = vector.shape_cast %4 : vector<16x16x128xf32> to vector<256x128xf32>
    %cst_40 = arith.constant 0.000000e+00 : bf16
    %60 = vector.broadcast %cst_40 : bf16 to vector<16x1x128xbf16>
    %61 = vector.extract_strided_slice %58 {offsets = [0, 0, 0], sizes = [16, 15, 128], strides = [1, 1, 1]} : vector<16x16x128xbf16> to vector<16x15x128xbf16>
    %62 = tpu.concatenate %60, %61 in 1 : vector<16x1x128xbf16>, vector<16x15x128xbf16> -> vector<16x16x128xbf16>
    %63 = vector.extract_strided_slice %58 {offsets = [0, 1, 0], sizes = [16, 15, 128], strides = [1, 1, 1]} : vector<16x16x128xbf16> to vector<16x15x128xbf16>
    %64 = tpu.concatenate %63, %60 in 1 : vector<16x15x128xbf16>, vector<16x1x128xbf16> -> vector<16x16x128xbf16>
    %c1_41 = arith.constant 1 : index
    %c0_42 = arith.constant 0 : index
    %c0_43 = arith.constant 0 : index
    %65 = vector.load %arg9[%c1_41, %c0_42, %c0_43] : memref<18x16x384xbf16, #tpu.memory_space<vmem>>, vector<16x16x128xbf16>
    tpu.vector_store %arg9[%c1_41, %c0_42, %c0_43], %62 {strides = array<i32>} : memref<18x16x384xbf16, #tpu.memory_space<vmem>>, vector<16x16x128xbf16>,
    %c1_44 = arith.constant 1 : index
    %c0_45 = arith.constant 0 : index
    %c128_46 = arith.constant 128 : index
    %66 = vector.load %arg9[%c1_44, %c0_45, %c128_46] : memref<18x16x384xbf16, #tpu.memory_space<vmem>>, vector<16x16x128xbf16>
    tpu.vector_store %arg9[%c1_44, %c0_45, %c128_46], %58 {strides = array<i32>} : memref<18x16x384xbf16, #tpu.memory_space<vmem>>, vector<16x16x128xbf16>,
    %c1_47 = arith.constant 1 : index
    %c0_48 = arith.constant 0 : index
    %c256_49 = arith.constant 256 : index
    %67 = vector.load %arg9[%c1_47, %c0_48, %c256_49] : memref<18x16x384xbf16, #tpu.memory_space<vmem>>, vector<16x16x128xbf16>
    tpu.vector_store %arg9[%c1_47, %c0_48, %c256_49], %64 {strides = array<i32>} : memref<18x16x384xbf16, #tpu.memory_space<vmem>>, vector<16x16x128xbf16>,
    %c0_50 = arith.constant 0 : index
    %c0_51 = arith.constant 0 : index
    %c0_52 = arith.constant 0 : index
    %68 = vector.load %arg9[%c0_50, %c0_51, %c0_52] : memref<18x16x384xbf16, #tpu.memory_space<vmem>>, vector<18x16x384xbf16>
    %69 = vector.shape_cast %68 : vector<18x16x384xbf16> to vector<288x384xbf16>
    %cst_53 = arith.constant 0.000000e+00 : f32
    %70 = vector.broadcast %cst_53 : f32 to vector<256x128xf32>
    %71 = vector.extract_strided_slice %69 {offsets = [0, 0], sizes = [256, 384], strides = [1, 1]} : vector<288x384xbf16> to vector<256x384xbf16>
    %c0_54 = arith.constant 0 : index
    %c0_55 = arith.constant 0 : index
    %c0_56 = arith.constant 0 : index
    %72 = vector.load %arg5[%c0_54, %c0_55, %c0_56] : memref<3x384x128xbf16, #tpu.memory_space<vmem>>, vector<1x384x128xbf16>
    %73 = vector.shape_cast %72 : vector<1x384x128xbf16> to vector<384x128xbf16>
    %cst_57 = arith.constant dense<0.000000e+00> : vector<256x128xf32>
    %74 = tpu.matmul %71, %73, %cst_57 {dimension_numbers = #tpu.dot_dimension_numbers<[1], [0], [0], [1], [0, 0, 1, 1], [], []>} : vector<256x384xbf16>, vector<384x128xbf16>, vector<256x128xf32> -> vector<256x128xf32>
    %75 = arith.addf %70, %74 : vector<256x128xf32>
    %76 = vector.extract_strided_slice %69 {offsets = [16, 0], sizes = [256, 384], strides = [1, 1]} : vector<288x384xbf16> to vector<256x384xbf16>
    %c1_58 = arith.constant 1 : index
    %c0_59 = arith.constant 0 : index
    %c0_60 = arith.constant 0 : index
    %77 = vector.load %arg5[%c1_58, %c0_59, %c0_60] : memref<3x384x128xbf16, #tpu.memory_space<vmem>>, vector<1x384x128xbf16>
    %78 = vector.shape_cast %77 : vector<1x384x128xbf16> to vector<384x128xbf16>
    %cst_61 = arith.constant dense<0.000000e+00> : vector<256x128xf32>
    %79 = tpu.matmul %76, %78, %cst_61 {dimension_numbers = #tpu.dot_dimension_numbers<[1], [0], [0], [1], [0, 0, 1, 1], [], []>} : vector<256x384xbf16>, vector<384x128xbf16>, vector<256x128xf32> -> vector<256x128xf32>
    %80 = arith.addf %75, %79 : vector<256x128xf32>
    %81 = vector.extract_strided_slice %69 {offsets = [32, 0], sizes = [256, 384], strides = [1, 1]} : vector<288x384xbf16> to vector<256x384xbf16>
    %c2_62 = arith.constant 2 : index
    %c0_63 = arith.constant 0 : index
    %c0_64 = arith.constant 0 : index
    %82 = vector.load %arg5[%c2_62, %c0_63, %c0_64] : memref<3x384x128xbf16, #tpu.memory_space<vmem>>, vector<1x384x128xbf16>
    %83 = vector.shape_cast %82 : vector<1x384x128xbf16> to vector<384x128xbf16>
    %cst_65 = arith.constant dense<0.000000e+00> : vector<256x128xf32>
    %84 = tpu.matmul %81, %83, %cst_65 {dimension_numbers = #tpu.dot_dimension_numbers<[1], [0], [0], [1], [0, 0, 1, 1], [], []>} : vector<256x384xbf16>, vector<384x128xbf16>, vector<256x128xf32> -> vector<256x128xf32>
    %85 = arith.addf %80, %84 : vector<256x128xf32>
    %cst_66 = arith.constant dense<0.000000e+00> : vector<128xf32>
    %86 = vector.multi_reduction <add>, %85, %cst_66 [0] : vector<256x128xf32> to vector<128xf32>
    %87 = vector.shape_cast %86 : vector<128xf32> to vector<1x128xf32>
    %cst_67 = arith.constant 3.906250e-03 : f32
    %88 = vector.broadcast %cst_67 : f32 to vector<1x128xf32>
    %89 = arith.mulf %87, %88 : vector<1x128xf32>
    %90 = arith.mulf %85, %85 : vector<256x128xf32>
    %cst_68 = arith.constant dense<0.000000e+00> : vector<128xf32>
    %91 = vector.multi_reduction <add>, %90, %cst_68 [0] : vector<256x128xf32> to vector<128xf32>
    %92 = vector.shape_cast %91 : vector<128xf32> to vector<1x128xf32>
    %cst_69 = arith.constant 3.906250e-03 : f32
    %93 = vector.broadcast %cst_69 : f32 to vector<1x128xf32>
    %94 = arith.mulf %92, %93 : vector<1x128xf32>
    %95 = arith.mulf %89, %89 : vector<1x128xf32>
    %96 = arith.subf %94, %95 : vector<1x128xf32>
    %c0_70 = arith.constant 0 : index
    %c0_71 = arith.constant 0 : index
    %97 = vector.load %arg6[%c0_70, %c0_71] : memref<1x128xf32, #tpu.memory_space<vmem>>, vector<1x128xf32>
    %cst_72 = arith.constant 9.99999974E-6 : f32
    %98 = vector.broadcast %cst_72 : f32 to vector<1x128xf32>
    %99 = arith.addf %96, %98 : vector<1x128xf32>
    %100 = math.rsqrt %99 : vector<1x128xf32>
    %101 = arith.mulf %97, %100 : vector<1x128xf32>
    %c0_73 = arith.constant 0 : index
    %c0_74 = arith.constant 0 : index
    %102 = vector.load %arg7[%c0_73, %c0_74] : memref<1x128xf32, #tpu.memory_space<vmem>>, vector<1x128xf32>
    %103 = arith.mulf %89, %101 : vector<1x128xf32>
    %104 = arith.subf %102, %103 : vector<1x128xf32>
    %105 = vector.broadcast %101 : vector<1x128xf32> to vector<256x128xf32>
    %106 = arith.mulf %85, %105 : vector<256x128xf32>
    %107 = vector.broadcast %104 : vector<1x128xf32> to vector<256x128xf32>
    %108 = arith.addf %106, %107 : vector<256x128xf32>
    %cst_75 = arith.constant 0.000000e+00 : f32
    %109 = vector.broadcast %cst_75 : f32 to vector<256x128xf32>
    %110 = arith.maximumf %108, %109 : vector<256x128xf32>
    %111 = arith.addf %110, %59 : vector<256x128xf32>
    %112 = vector.shape_cast %111 : vector<256x128xf32> to vector<16x16x128xf32>
    %c0_76 = arith.constant 0 : index
    %c0_77 = arith.constant 0 : index
    %c0_78 = arith.constant 0 : index
    %c0_79 = arith.constant 0 : index
    %113 = vector.load %arg8[%c0_76, %c0_77, %c0_78, %c0_79] : memref<2x16x16x128xf32, #tpu.memory_space<vmem>>, vector<1x16x16x128xf32>
    %114 = vector.shape_cast %113 : vector<1x16x16x128xf32> to vector<16x16x128xf32>
    %115 = vector.shape_cast %112 : vector<16x16x128xf32> to vector<1x16x16x128xf32>
    tpu.vector_store %arg8[%c0_76, %c0_77, %c0_78, %c0_79], %115 {strides = array<i32>} : memref<2x16x16x128xf32, #tpu.memory_space<vmem>>, vector<1x16x16x128xf32>,
    %c1_80 = arith.constant 1 : index
    %c0_81 = arith.constant 0 : index
    %c0_82 = arith.constant 0 : index
    %c0_83 = arith.constant 0 : index
    %116 = vector.load %arg1[%c1_80, %c0_81, %c0_82, %c0_83] : memref<2x16x16x128xf32, #tpu.memory_space<vmem>>, vector<1x16x16x128xf32>
    %117 = vector.shape_cast %116 : vector<1x16x16x128xf32> to vector<16x16x128xf32>
    %118 = arith.truncf %117 : vector<16x16x128xf32> to vector<16x16x128xbf16>
    %cst_84 = arith.constant 0.000000e+00 : bf16
    %119 = vector.broadcast %cst_84 : bf16 to vector<16x1x128xbf16>
    %120 = vector.extract_strided_slice %118 {offsets = [0, 0, 0], sizes = [16, 15, 128], strides = [1, 1, 1]} : vector<16x16x128xbf16> to vector<16x15x128xbf16>
    %121 = tpu.concatenate %119, %120 in 1 : vector<16x1x128xbf16>, vector<16x15x128xbf16> -> vector<16x16x128xbf16>
    %122 = vector.extract_strided_slice %118 {offsets = [0, 1, 0], sizes = [16, 15, 128], strides = [1, 1, 1]} : vector<16x16x128xbf16> to vector<16x15x128xbf16>
    %123 = tpu.concatenate %122, %119 in 1 : vector<16x15x128xbf16>, vector<16x1x128xbf16> -> vector<16x16x128xbf16>
    %c1_85 = arith.constant 1 : index
    %c0_86 = arith.constant 0 : index
    %c0_87 = arith.constant 0 : index
    %124 = vector.load %arg9[%c1_85, %c0_86, %c0_87] : memref<18x16x384xbf16, #tpu.memory_space<vmem>>, vector<16x16x128xbf16>
    tpu.vector_store %arg9[%c1_85, %c0_86, %c0_87], %121 {strides = array<i32>} : memref<18x16x384xbf16, #tpu.memory_space<vmem>>, vector<16x16x128xbf16>,
    %c1_88 = arith.constant 1 : index
    %c0_89 = arith.constant 0 : index
    %c128_90 = arith.constant 128 : index
    %125 = vector.load %arg9[%c1_88, %c0_89, %c128_90] : memref<18x16x384xbf16, #tpu.memory_space<vmem>>, vector<16x16x128xbf16>
    tpu.vector_store %arg9[%c1_88, %c0_89, %c128_90], %118 {strides = array<i32>} : memref<18x16x384xbf16, #tpu.memory_space<vmem>>, vector<16x16x128xbf16>,
    %c1_91 = arith.constant 1 : index
    %c0_92 = arith.constant 0 : index
    %c256_93 = arith.constant 256 : index
    %126 = vector.load %arg9[%c1_91, %c0_92, %c256_93] : memref<18x16x384xbf16, #tpu.memory_space<vmem>>, vector<16x16x128xbf16>
    tpu.vector_store %arg9[%c1_91, %c0_92, %c256_93], %123 {strides = array<i32>} : memref<18x16x384xbf16, #tpu.memory_space<vmem>>, vector<16x16x128xbf16>,
    %c0_94 = arith.constant 0 : index
    %c0_95 = arith.constant 0 : index
    %c0_96 = arith.constant 0 : index
    %127 = vector.load %arg9[%c0_94, %c0_95, %c0_96] : memref<18x16x384xbf16, #tpu.memory_space<vmem>>, vector<18x16x384xbf16>
    %128 = vector.shape_cast %127 : vector<18x16x384xbf16> to vector<288x384xbf16>
    %cst_97 = arith.constant 0.000000e+00 : f32
    %129 = vector.broadcast %cst_97 : f32 to vector<256x128xf32>
    %130 = vector.extract_strided_slice %128 {offsets = [0, 0], sizes = [256, 384], strides = [1, 1]} : vector<288x384xbf16> to vector<256x384xbf16>
    %c0_98 = arith.constant 0 : index
    %c0_99 = arith.constant 0 : index
    %c0_100 = arith.constant 0 : index
    %131 = vector.load %arg2[%c0_98, %c0_99, %c0_100] : memref<3x384x128xbf16, #tpu.memory_space<vmem>>, vector<1x384x128xbf16>
    %132 = vector.shape_cast %131 : vector<1x384x128xbf16> to vector<384x128xbf16>
    %cst_101 = arith.constant dense<0.000000e+00> : vector<256x128xf32>
    %133 = tpu.matmul %130, %132, %cst_101 {dimension_numbers = #tpu.dot_dimension_numbers<[1], [0], [0], [1], [0, 0, 1, 1], [], []>} : vector<256x384xbf16>, vector<384x128xbf16>, vector<256x128xf32> -> vector<256x128xf32>
    %134 = arith.addf %129, %133 : vector<256x128xf32>
    %135 = vector.extract_strided_slice %128 {offsets = [16, 0], sizes = [256, 384], strides = [1, 1]} : vector<288x384xbf16> to vector<256x384xbf16>
    %c1_102 = arith.constant 1 : index
    %c0_103 = arith.constant 0 : index
    %c0_104 = arith.constant 0 : index
    %136 = vector.load %arg2[%c1_102, %c0_103, %c0_104] : memref<3x384x128xbf16, #tpu.memory_space<vmem>>, vector<1x384x128xbf16>
    %137 = vector.shape_cast %136 : vector<1x384x128xbf16> to vector<384x128xbf16>
    %cst_105 = arith.constant dense<0.000000e+00> : vector<256x128xf32>
    %138 = tpu.matmul %135, %137, %cst_105 {dimension_numbers = #tpu.dot_dimension_numbers<[1], [0], [0], [1], [0, 0, 1, 1], [], []>} : vector<256x384xbf16>, vector<384x128xbf16>, vector<256x128xf32> -> vector<256x128xf32>
    %139 = arith.addf %134, %138 : vector<256x128xf32>
    %140 = vector.extract_strided_slice %128 {offsets = [32, 0], sizes = [256, 384], strides = [1, 1]} : vector<288x384xbf16> to vector<256x384xbf16>
    %c2_106 = arith.constant 2 : index
    %c0_107 = arith.constant 0 : index
    %c0_108 = arith.constant 0 : index
    %141 = vector.load %arg2[%c2_106, %c0_107, %c0_108] : memref<3x384x128xbf16, #tpu.memory_space<vmem>>, vector<1x384x128xbf16>
    %142 = vector.shape_cast %141 : vector<1x384x128xbf16> to vector<384x128xbf16>
    %cst_109 = arith.constant dense<0.000000e+00> : vector<256x128xf32>
    %143 = tpu.matmul %140, %142, %cst_109 {dimension_numbers = #tpu.dot_dimension_numbers<[1], [0], [0], [1], [0, 0, 1, 1], [], []>} : vector<256x384xbf16>, vector<384x128xbf16>, vector<256x128xf32> -> vector<256x128xf32>
    %144 = arith.addf %139, %143 : vector<256x128xf32>
    %cst_110 = arith.constant dense<0.000000e+00> : vector<128xf32>
    %145 = vector.multi_reduction <add>, %144, %cst_110 [0] : vector<256x128xf32> to vector<128xf32>
    %146 = vector.shape_cast %145 : vector<128xf32> to vector<1x128xf32>
    %cst_111 = arith.constant 3.906250e-03 : f32
    %147 = vector.broadcast %cst_111 : f32 to vector<1x128xf32>
    %148 = arith.mulf %146, %147 : vector<1x128xf32>
    %149 = arith.mulf %144, %144 : vector<256x128xf32>
    %cst_112 = arith.constant dense<0.000000e+00> : vector<128xf32>
    %150 = vector.multi_reduction <add>, %149, %cst_112 [0] : vector<256x128xf32> to vector<128xf32>
    %151 = vector.shape_cast %150 : vector<128xf32> to vector<1x128xf32>
    %cst_113 = arith.constant 3.906250e-03 : f32
    %152 = vector.broadcast %cst_113 : f32 to vector<1x128xf32>
    %153 = arith.mulf %151, %152 : vector<1x128xf32>
    %154 = arith.mulf %148, %148 : vector<1x128xf32>
    %155 = arith.subf %153, %154 : vector<1x128xf32>
    %c0_114 = arith.constant 0 : index
    %c0_115 = arith.constant 0 : index
    %156 = vector.load %arg3[%c0_114, %c0_115] : memref<1x128xf32, #tpu.memory_space<vmem>>, vector<1x128xf32>
    %cst_116 = arith.constant 9.99999974E-6 : f32
    %157 = vector.broadcast %cst_116 : f32 to vector<1x128xf32>
    %158 = arith.addf %155, %157 : vector<1x128xf32>
    %159 = math.rsqrt %158 : vector<1x128xf32>
    %160 = arith.mulf %156, %159 : vector<1x128xf32>
    %c0_117 = arith.constant 0 : index
    %c0_118 = arith.constant 0 : index
    %161 = vector.load %arg4[%c0_117, %c0_118] : memref<1x128xf32, #tpu.memory_space<vmem>>, vector<1x128xf32>
    %162 = arith.mulf %148, %160 : vector<1x128xf32>
    %163 = arith.subf %161, %162 : vector<1x128xf32>
    %164 = vector.broadcast %160 : vector<1x128xf32> to vector<256x128xf32>
    %165 = arith.mulf %144, %164 : vector<256x128xf32>
    %166 = vector.broadcast %163 : vector<1x128xf32> to vector<256x128xf32>
    %167 = arith.addf %165, %166 : vector<256x128xf32>
    %cst_119 = arith.constant 0.000000e+00 : f32
    %168 = vector.broadcast %cst_119 : f32 to vector<256x128xf32>
    %169 = arith.maximumf %167, %168 : vector<256x128xf32>
    %170 = vector.shape_cast %169 : vector<256x128xf32> to vector<16x16x128xf32>
    %171 = arith.truncf %170 : vector<16x16x128xf32> to vector<16x16x128xbf16>
    %172 = vector.shape_cast %117 : vector<16x16x128xf32> to vector<256x128xf32>
    %cst_120 = arith.constant 0.000000e+00 : bf16
    %173 = vector.broadcast %cst_120 : bf16 to vector<16x1x128xbf16>
    %174 = vector.extract_strided_slice %171 {offsets = [0, 0, 0], sizes = [16, 15, 128], strides = [1, 1, 1]} : vector<16x16x128xbf16> to vector<16x15x128xbf16>
    %175 = tpu.concatenate %173, %174 in 1 : vector<16x1x128xbf16>, vector<16x15x128xbf16> -> vector<16x16x128xbf16>
    %176 = vector.extract_strided_slice %171 {offsets = [0, 1, 0], sizes = [16, 15, 128], strides = [1, 1, 1]} : vector<16x16x128xbf16> to vector<16x15x128xbf16>
    %177 = tpu.concatenate %176, %173 in 1 : vector<16x15x128xbf16>, vector<16x1x128xbf16> -> vector<16x16x128xbf16>
    %c1_121 = arith.constant 1 : index
    %c0_122 = arith.constant 0 : index
    %c0_123 = arith.constant 0 : index
    %178 = vector.load %arg9[%c1_121, %c0_122, %c0_123] : memref<18x16x384xbf16, #tpu.memory_space<vmem>>, vector<16x16x128xbf16>
    tpu.vector_store %arg9[%c1_121, %c0_122, %c0_123], %175 {strides = array<i32>} : memref<18x16x384xbf16, #tpu.memory_space<vmem>>, vector<16x16x128xbf16>,
    %c1_124 = arith.constant 1 : index
    %c0_125 = arith.constant 0 : index
    %c128_126 = arith.constant 128 : index
    %179 = vector.load %arg9[%c1_124, %c0_125, %c128_126] : memref<18x16x384xbf16, #tpu.memory_space<vmem>>, vector<16x16x128xbf16>
    tpu.vector_store %arg9[%c1_124, %c0_125, %c128_126], %171 {strides = array<i32>} : memref<18x16x384xbf16, #tpu.memory_space<vmem>>, vector<16x16x128xbf16>,
    %c1_127 = arith.constant 1 : index
    %c0_128 = arith.constant 0 : index
    %c256_129 = arith.constant 256 : index
    %180 = vector.load %arg9[%c1_127, %c0_128, %c256_129] : memref<18x16x384xbf16, #tpu.memory_space<vmem>>, vector<16x16x128xbf16>
    tpu.vector_store %arg9[%c1_127, %c0_128, %c256_129], %177 {strides = array<i32>} : memref<18x16x384xbf16, #tpu.memory_space<vmem>>, vector<16x16x128xbf16>,
    %c0_130 = arith.constant 0 : index
    %c0_131 = arith.constant 0 : index
    %c0_132 = arith.constant 0 : index
    %181 = vector.load %arg9[%c0_130, %c0_131, %c0_132] : memref<18x16x384xbf16, #tpu.memory_space<vmem>>, vector<18x16x384xbf16>
    %182 = vector.shape_cast %181 : vector<18x16x384xbf16> to vector<288x384xbf16>
    %cst_133 = arith.constant 0.000000e+00 : f32
    %183 = vector.broadcast %cst_133 : f32 to vector<256x128xf32>
    %184 = vector.extract_strided_slice %182 {offsets = [0, 0], sizes = [256, 384], strides = [1, 1]} : vector<288x384xbf16> to vector<256x384xbf16>
    %c0_134 = arith.constant 0 : index
    %c0_135 = arith.constant 0 : index
    %c0_136 = arith.constant 0 : index
    %185 = vector.load %arg5[%c0_134, %c0_135, %c0_136] : memref<3x384x128xbf16, #tpu.memory_space<vmem>>, vector<1x384x128xbf16>
    %186 = vector.shape_cast %185 : vector<1x384x128xbf16> to vector<384x128xbf16>
    %cst_137 = arith.constant dense<0.000000e+00> : vector<256x128xf32>
    %187 = tpu.matmul %184, %186, %cst_137 {dimension_numbers = #tpu.dot_dimension_numbers<[1], [0], [0], [1], [0, 0, 1, 1], [], []>} : vector<256x384xbf16>, vector<384x128xbf16>, vector<256x128xf32> -> vector<256x128xf32>
    %188 = arith.addf %183, %187 : vector<256x128xf32>
    %189 = vector.extract_strided_slice %182 {offsets = [16, 0], sizes = [256, 384], strides = [1, 1]} : vector<288x384xbf16> to vector<256x384xbf16>
    %c1_138 = arith.constant 1 : index
    %c0_139 = arith.constant 0 : index
    %c0_140 = arith.constant 0 : index
    %190 = vector.load %arg5[%c1_138, %c0_139, %c0_140] : memref<3x384x128xbf16, #tpu.memory_space<vmem>>, vector<1x384x128xbf16>
    %191 = vector.shape_cast %190 : vector<1x384x128xbf16> to vector<384x128xbf16>
    %cst_141 = arith.constant dense<0.000000e+00> : vector<256x128xf32>
    %192 = tpu.matmul %189, %191, %cst_141 {dimension_numbers = #tpu.dot_dimension_numbers<[1], [0], [0], [1], [0, 0, 1, 1], [], []>} : vector<256x384xbf16>, vector<384x128xbf16>, vector<256x128xf32> -> vector<256x128xf32>
    %193 = arith.addf %188, %192 : vector<256x128xf32>
    %194 = vector.extract_strided_slice %182 {offsets = [32, 0], sizes = [256, 384], strides = [1, 1]} : vector<288x384xbf16> to vector<256x384xbf16>
    %c2_142 = arith.constant 2 : index
    %c0_143 = arith.constant 0 : index
    %c0_144 = arith.constant 0 : index
    %195 = vector.load %arg5[%c2_142, %c0_143, %c0_144] : memref<3x384x128xbf16, #tpu.memory_space<vmem>>, vector<1x384x128xbf16>
    %196 = vector.shape_cast %195 : vector<1x384x128xbf16> to vector<384x128xbf16>
    %cst_145 = arith.constant dense<0.000000e+00> : vector<256x128xf32>
    %197 = tpu.matmul %194, %196, %cst_145 {dimension_numbers = #tpu.dot_dimension_numbers<[1], [0], [0], [1], [0, 0, 1, 1], [], []>} : vector<256x384xbf16>, vector<384x128xbf16>, vector<256x128xf32> -> vector<256x128xf32>
    %198 = arith.addf %193, %197 : vector<256x128xf32>
    %cst_146 = arith.constant dense<0.000000e+00> : vector<128xf32>
    %199 = vector.multi_reduction <add>, %198, %cst_146 [0] : vector<256x128xf32> to vector<128xf32>
    %200 = vector.shape_cast %199 : vector<128xf32> to vector<1x128xf32>
    %cst_147 = arith.constant 3.906250e-03 : f32
    %201 = vector.broadcast %cst_147 : f32 to vector<1x128xf32>
    %202 = arith.mulf %200, %201 : vector<1x128xf32>
    %203 = arith.mulf %198, %198 : vector<256x128xf32>
    %cst_148 = arith.constant dense<0.000000e+00> : vector<128xf32>
    %204 = vector.multi_reduction <add>, %203, %cst_148 [0] : vector<256x128xf32> to vector<128xf32>
    %205 = vector.shape_cast %204 : vector<128xf32> to vector<1x128xf32>
    %cst_149 = arith.constant 3.906250e-03 : f32
    %206 = vector.broadcast %cst_149 : f32 to vector<1x128xf32>
    %207 = arith.mulf %205, %206 : vector<1x128xf32>
    %208 = arith.mulf %202, %202 : vector<1x128xf32>
    %209 = arith.subf %207, %208 : vector<1x128xf32>
    %c0_150 = arith.constant 0 : index
    %c0_151 = arith.constant 0 : index
    %210 = vector.load %arg6[%c0_150, %c0_151] : memref<1x128xf32, #tpu.memory_space<vmem>>, vector<1x128xf32>
    %cst_152 = arith.constant 9.99999974E-6 : f32
    %211 = vector.broadcast %cst_152 : f32 to vector<1x128xf32>
    %212 = arith.addf %209, %211 : vector<1x128xf32>
    %213 = math.rsqrt %212 : vector<1x128xf32>
    %214 = arith.mulf %210, %213 : vector<1x128xf32>
    %c0_153 = arith.constant 0 : index
    %c0_154 = arith.constant 0 : index
    %215 = vector.load %arg7[%c0_153, %c0_154] : memref<1x128xf32, #tpu.memory_space<vmem>>, vector<1x128xf32>
    %216 = arith.mulf %202, %214 : vector<1x128xf32>
    %217 = arith.subf %215, %216 : vector<1x128xf32>
    %218 = vector.broadcast %214 : vector<1x128xf32> to vector<256x128xf32>
    %219 = arith.mulf %198, %218 : vector<256x128xf32>
    %220 = vector.broadcast %217 : vector<1x128xf32> to vector<256x128xf32>
    %221 = arith.addf %219, %220 : vector<256x128xf32>
    %cst_155 = arith.constant 0.000000e+00 : f32
    %222 = vector.broadcast %cst_155 : f32 to vector<256x128xf32>
    %223 = arith.maximumf %221, %222 : vector<256x128xf32>
    %224 = arith.addf %223, %172 : vector<256x128xf32>
    %225 = vector.shape_cast %224 : vector<256x128xf32> to vector<16x16x128xf32>
    %c1_156 = arith.constant 1 : index
    %c0_157 = arith.constant 0 : index
    %c0_158 = arith.constant 0 : index
    %c0_159 = arith.constant 0 : index
    %226 = vector.load %arg8[%c1_156, %c0_157, %c0_158, %c0_159] : memref<2x16x16x128xf32, #tpu.memory_space<vmem>>, vector<1x16x16x128xf32>
    %227 = vector.shape_cast %226 : vector<1x16x16x128xf32> to vector<16x16x128xf32>
    %228 = vector.shape_cast %225 : vector<16x16x128xf32> to vector<1x16x16x128xf32>
    tpu.vector_store %arg8[%c1_156, %c0_157, %c0_158, %c0_159], %228 {strides = array<i32>} : memref<2x16x16x128xf32, #tpu.memory_space<vmem>>, vector<1x16x16x128xf32>,
    return
  }
  func.func @transform_0(%arg0: i32) -> (i32, i32, i32, i32) {
    %c0_i32 = arith.constant 0 : i32
    %c0_i32_0 = arith.constant 0 : i32
    %c0_i32_1 = arith.constant 0 : i32
    %c0_i32_2 = arith.constant 0 : i32
    return %arg0, %c0_i32, %c0_i32_0, %c0_i32_1 : i32, i32, i32, i32
  }
  func.func @transform_1(%arg0: i32) -> (i32, i32, i32) {
    %c0_i32 = arith.constant 0 : i32
    %c0_i32_0 = arith.constant 0 : i32
    %c0_i32_1 = arith.constant 0 : i32
    %c0_i32_2 = arith.constant 0 : i32
    return %c0_i32, %c0_i32_0, %c0_i32_1 : i32, i32, i32
  }
  func.func @transform_2(%arg0: i32) -> (i32, i32) {
    %c0_i32 = arith.constant 0 : i32
    %c0_i32_0 = arith.constant 0 : i32
    %c0_i32_1 = arith.constant 0 : i32
    return %c0_i32, %c0_i32_0 : i32, i32
  }
  func.func @transform_3(%arg0: i32) -> (i32, i32) {
    %c0_i32 = arith.constant 0 : i32
    %c0_i32_0 = arith.constant 0 : i32
    %c0_i32_1 = arith.constant 0 : i32
    return %c0_i32, %c0_i32_0 : i32, i32
  }
  func.func @transform_4(%arg0: i32) -> (i32, i32, i32) {
    %c0_i32 = arith.constant 0 : i32
    %c0_i32_0 = arith.constant 0 : i32
    %c0_i32_1 = arith.constant 0 : i32
    %c0_i32_2 = arith.constant 0 : i32
    return %c0_i32, %c0_i32_0, %c0_i32_1 : i32, i32, i32
  }
  func.func @transform_5(%arg0: i32) -> (i32, i32) {
    %c0_i32 = arith.constant 0 : i32
    %c0_i32_0 = arith.constant 0 : i32
    %c0_i32_1 = arith.constant 0 : i32
    return %c0_i32, %c0_i32_0 : i32, i32
  }
  func.func @transform_6(%arg0: i32) -> (i32, i32) {
    %c0_i32 = arith.constant 0 : i32
    %c0_i32_0 = arith.constant 0 : i32
    %c0_i32_1 = arith.constant 0 : i32
    return %c0_i32, %c0_i32_0 : i32, i32
  }
  func.func @transform_7(%arg0: i32) -> (i32, i32, i32, i32) {
    %c0_i32 = arith.constant 0 : i32
    %c0_i32_0 = arith.constant 0 : i32
    %c0_i32_1 = arith.constant 0 : i32
    %c0_i32_2 = arith.constant 0 : i32
    return %arg0, %c0_i32, %c0_i32_0, %c0_i32_1 : i32, i32, i32, i32
  }
}

</mosaic_0001>

<llo_original>
// kernel: residual_block.1
$region0: #{residual_block.1}
  #allocation0 [shape = 'u32[]', space=smem, size = 0x4, offset = 0x4, fixed_abs, tag = 'smem constant byte address 0x4 - core index']
  #allocation1 [shape = 'u32[72,128]{1,0:T(1,128)}', space=vmem, size = 0x9000, scoped, tag = 'internal scratch']
  #allocation2 [shape = 'bf16[18,16,384]{2,1,0:T(8,128)(2,1)}', space=vmem, size = 0x36000, scoped, tag = 'scratch operand']
  %s0 = inlined_call_operand.vmem [shape: f32[2,16,16,128], index: 0, kind: input, shape index: {}]
  %s1 = inlined_call_operand.vmem [shape: bf16[3,384,128], index: 1, kind: input, shape index: {}]
  %s2 = inlined_call_operand.vmem [shape: f32[1,128], index: 2, kind: input, shape index: {}]
  %s3 = inlined_call_operand.vmem [shape: f32[1,128], index: 3, kind: input, shape index: {}]
  %s4 = inlined_call_operand.vmem [shape: bf16[3,384,128], index: 4, kind: input, shape index: {}]
  %s5 = inlined_call_operand.vmem [shape: f32[1,128], index: 5, kind: input, shape index: {}]
  %s6 = inlined_call_operand.vmem [shape: f32[1,128], index: 6, kind: input, shape index: {}]
  %s7 = inlined_call_operand.hbm [shape: f32[2,16,16,128], index: 7, kind: output, shape index: {}]
  %s8 = sld [smem:[#allocation0]]
  $region38: #{residual_block.1} parent=0
    _
  %s10 = ssub.s32 1, %s8
  %s11 = scalar_select 0, %s10, %s8
  $region1: #{residual_block.1} parent=0
    #allocation3 [shape = 'u8[262144]{0}', space=vmem, size = 0x40000, scoped, tag = 'output window, operand 0, single buffered']
    #allocation4 [shape = 's32[1]{0}', space=sflag, size = 0x4, scoped, tag = 'scoped memory for residual_block.1']
    %12 = vsyncpa [#allocation4], 0
    // Predicated region
    $region2: #{residual_block.1} parent=1 // pred_check
      _
    $region3: #{residual_block.1} parent=1 // pred_check_branch
      %14 = sbr.rel (0) target = $region5
    $region4: #{residual_block.1} parent=1 // pred_region
      _
    $region5: #{residual_block.1} parent=1 // pred_fallthru
      _
    // Predicated region
    $region6: #{residual_block.1} parent=1 // pred_check
      _
    $region7: #{residual_block.1} parent=1 // pred_check_branch
      %16 = sbr.rel (0) target = $region9
    $region8: #{residual_block.1} parent=1 // pred_region
      _
    $region9: #{residual_block.1} parent=1 // pred_fallthru
      _
    // Predicated region
    $region10: #{residual_block.1} parent=1 // pred_check
      _
    $region11: #{residual_block.1} parent=1 // pred_check_branch
      %18 = sbr.rel (0) target = $region13
    $region12: #{residual_block.1} parent=1 // pred_region
      _
    $region13: #{residual_block.1} parent=1 // pred_fallthru
      _
    // Predicated region
    $region14: #{residual_block.1} parent=1 // pred_check
      _
    $region15: #{residual_block.1} parent=1 // pred_check_branch
      %20 = sbr.rel (0) target = $region17
    $region16: #{residual_block.1} parent=1 // pred_region
      _
    $region17: #{residual_block.1} parent=1 // pred_fallthru
      _
    // Predicated region
    $region18: #{residual_block.1} parent=1 // pred_check
      _
    $region19: #{residual_block.1} parent=1 // pred_check_branch
      %22 = sbr.rel (0) target = $region21
    $region20: #{residual_block.1} parent=1 // pred_region
      _
    $region21: #{residual_block.1} parent=1 // pred_fallthru
      _
    // Predicated region
    $region22: #{residual_block.1} parent=1 // pred_check
      _
    $region23: #{residual_block.1} parent=1 // pred_check_branch
      %24 = sbr.rel (0) target = $region25
    $region24: #{residual_block.1} parent=1 // pred_region
      _
    $region25: #{residual_block.1} parent=1 // pred_fallthru
      _
    // Predicated region
    $region26: #{residual_block.1} parent=1 // pred_check
      _
    $region27: #{residual_block.1} parent=1 // pred_check_branch
      %26 = sbr.rel (0) target = $region29
    $region28: #{residual_block.1} parent=1 // pred_region
      _
    $region29: #{residual_block.1} parent=1 // pred_fallthru
      _
    %28 = vst [vmem:[#allocation2] sm:$0xff] 0
    %29 = vst [vmem:[#allocation2 + $0x8] sm:$0xf] 0
    %30 = vst [vmem:[#allocation2 + $0xc] sm:$0xff] 0
    %31 = vst [vmem:[#allocation2 + $0x14] sm:$0xf] 0
    %s32 = scalar_lea.vmem [#allocation2], 408
    %33 = vst [vmem:[%s32] sm:$0xff] 0
    %34 = vst [vmem:[%s32 + $0x8] sm:$0xf] 0
    %35 = vst [vmem:[%s32 + $0xc] sm:$0xff] 0
    %36 = vst [vmem:[%s32 + $0x14] sm:$0xf] 0
    %v37 = vld [vmem:[%s0] sm:$0xff]
    %v38 = vld [vmem:[%s0 + $0x8] sm:$0xff]
    %v39 = vld [vmem:[%s0 + $0x10] sm:$0xff]
    %v40 = vld [vmem:[%s0 + $0x18] sm:$0xff]
    %v41 = vld [vmem:[%s0 + $0x20] sm:$0xff]
    %v42 = vld [vmem:[%s0 + $0x28] sm:$0xff]
    %v43 = vld [vmem:[%s0 + $0x30] sm:$0xff]
    %v44 = vld [vmem:[%s0 + $0x38] sm:$0xff]
    %v45 = vld [vmem:[%s0 + $0x40] sm:$0xff]
    %v46 = vld [vmem:[%s0 + $0x48] sm:$0xff]
    %v47 = vld [vmem:[%s0 + $0x50] sm:$0xff]
    %v48 = vld [vmem:[%s0 + $0x58] sm:$0xff]
    %v49 = vld [vmem:[%s0 + $0x60] sm:$0xff]
    %v50 = vld [vmem:[%s0 + $0x68] sm:$0xff]
    %v51 = vld [vmem:[%s0 + $0x70] sm:$0xff]
    %v52 = vld [vmem:[%s0 + $0x78] sm:$0xff]
    %v53 = vld [vmem:[%s0 + $0x80] sm:$0xff]
    %v54 = vld [vmem:[%s0 + $0x88] sm:$0xff]
    %v55 = vld [vmem:[%s0 + $0x90] sm:$0xff]
    %v56 = vld [vmem:[%s0 + $0x98] sm:$0xff]
    %v57 = vld [vmem:[%s0 + $0xa0] sm:$0xff]
    %v58 = vld [vmem:[%s0 + $0xa8] sm:$0xff]
    %v59 = vld [vmem:[%s0 + $0xb0] sm:$0xff]
    %v60 = vld [vmem:[%s0 + $0xb8] sm:$0xff]
    %v61 = vld [vmem:[%s0 + $0xc0] sm:$0xff]
    %v62 = vld [vmem:[%s0 + $0xc8] sm:$0xff]
    %v63 = vld [vmem:[%s0 + $0xd0] sm:$0xff]
    %v64 = vld [vmem:[%s0 + $0xd8] sm:$0xff]
    %v65 = vld [vmem:[%s0 + $0xe0] sm:$0xff]
    %v66 = vld [vmem:[%s0 + $0xe8] sm:$0xff]
    %v67 = vld [vmem:[%s0 + $0xf0] sm:$0xff]
    %v68 = vld [vmem:[%s0 + $0xf8] sm:$0xff]
    %v69 = vpack.c.bf16 %v37, %v37
    %v70 = vpack.c.bf16 %v38, %v38
    %v71 = vpack.c.bf16 %v39, %v39
    %v72 = vpack.c.bf16 %v40, %v40
    %v73 = vpack.c.bf16 %v41, %v41
    %v74 = vpack.c.bf16 %v42, %v42
    %v75 = vpack.c.bf16 %v43, %v43
    %v76 = vpack.c.bf16 %v44, %v44
    %v77 = vpack.c.bf16 %v45, %v45
    %v78 = vpack.c.bf16 %v46, %v46
    %v79 = vpack.c.bf16 %v47, %v47
    %v80 = vpack.c.bf16 %v48, %v48
    %v81 = vpack.c.bf16 %v49, %v49
    %v82 = vpack.c.bf16 %v50, %v50
    %v83 = vpack.c.bf16 %v51, %v51
    %v84 = vpack.c.bf16 %v52, %v52
    %v85 = vpack.c.bf16 %v53, %v53
    %v86 = vpack.c.bf16 %v54, %v54
    %v87 = vpack.c.bf16 %v55, %v55
    %v88 = vpack.c.bf16 %v56, %v56
    %v89 = vpack.c.bf16 %v57, %v57
    %v90 = vpack.c.bf16 %v58, %v58
    %v91 = vpack.c.bf16 %v59, %v59
    %v92 = vpack.c.bf16 %v60, %v60
    %v93 = vpack.c.bf16 %v61, %v61
    %v94 = vpack.c.bf16 %v62, %v62
    %v95 = vpack.c.bf16 %v63, %v63
    %v96 = vpack.c.bf16 %v64, %v64
    %v97 = vpack.c.bf16 %v65, %v65
    %v98 = vpack.c.bf16 %v66, %v66
    %v99 = vpack.c.bf16 %v67, %v67
    %v100 = vpack.c.bf16 %v68, %v68
    %v133 = vunpack.c.l.b16 %v69
    %v134 = vunpack.c.l.b16 %v70
    %v135 = vunpack.c.l.b16 %v71
    %v136 = vunpack.c.l.b16 %v72
    %v137 = vunpack.c.l.b16 %v73
    %v138 = vunpack.c.l.b16 %v74
    %v139 = vunpack.c.l.b16 %v75
    %v140 = vunpack.c.l.b16 %v76
    %v141 = vunpack.c.l.b16 %v77
    %v142 = vunpack.c.l.b16 %v78
    %v143 = vunpack.c.l.b16 %v79
    %v144 = vunpack.c.l.b16 %v80
    %v145 = vunpack.c.l.b16 %v81
    %v146 = vunpack.c.l.b16 %v82
    %v147 = vunpack.c.l.b16 %v83
    %v148 = vunpack.c.l.b16 %v84
    %v149 = vunpack.c.l.b16 %v85
    %v150 = vunpack.c.l.b16 %v86
    %v151 = vunpack.c.l.b16 %v87
    %v152 = vunpack.c.l.b16 %v88
    %v153 = vunpack.c.l.b16 %v89
    %v154 = vunpack.c.l.b16 %v90
    %v155 = vunpack.c.l.b16 %v91
    %v156 = vunpack.c.l.b16 %v92
    %v157 = vunpack.c.l.b16 %v93
    %v158 = vunpack.c.l.b16 %v94
    %v159 = vunpack.c.l.b16 %v95
    %v160 = vunpack.c.l.b16 %v96
    %v161 = vunpack.c.l.b16 %v97
    %v162 = vunpack.c.l.b16 %v98
    %v163 = vunpack.c.l.b16 %v99
    %v164 = vunpack.c.l.b16 %v100
    %v165 = vpack.c.b16 %v134, %v133
    %v166 = vpack.c.b16 %v136, %v135
    %v167 = vpack.c.b16 %v138, %v137
    %v168 = vpack.c.b16 %v140, %v139
    %v169 = vpack.c.b16 %v142, %v141
    %v170 = vpack.c.b16 %v144, %v143
    %v171 = vpack.c.b16 %v146, %v145
    %v172 = vpack.c.b16 %v148, %v147
    %v173 = vpack.c.b16 %v150, %v149
    %v174 = vpack.c.b16 %v152, %v151
    %v175 = vpack.c.b16 %v154, %v153
    %v176 = vpack.c.b16 %v156, %v155
    %v177 = vpack.c.b16 %v158, %v157
    %v178 = vpack.c.b16 %v160, %v159
    %v179 = vpack.c.b16 %v162, %v161
    %v180 = vpack.c.b16 %v164, %v163
    %v182 = vshrl.u32 %v165, 16
    %v184 = vrot.slane %v182, 7
    %v185 = vshll.u32 %v165, 16
    %v187 = vor.u32 %v184, %v185
    %v189 = vshrl.u32 %v166, 16
    %v191 = vrot.slane %v189, 7
    %v192 = vshll.u32 %v166, 16
    %v194 = vor.u32 %v191, %v192
    %v196 = vshrl.u32 %v167, 16
    %v198 = vrot.slane %v196, 7
    %v199 = vshll.u32 %v167, 16
    %v201 = vor.u32 %v198, %v199
    %v203 = vshrl.u32 %v168, 16
    %v205 = vrot.slane %v203, 7
    %v206 = vshll.u32 %v168, 16
    %v208 = vor.u32 %v205, %v206
    %v210 = vshrl.u32 %v169, 16
    %v212 = vrot.slane %v210, 7
    %v213 = vshll.u32 %v169, 16
    %v215 = vor.u32 %v212, %v213
    %v217 = vshrl.u32 %v170, 16
    %v219 = vrot.slane %v217, 7
    %v220 = vshll.u32 %v170, 16
    %v222 = vor.u32 %v219, %v220
    %v224 = vshrl.u32 %v171, 16
    %v226 = vrot.slane %v224, 7
    %v227 = vshll.u32 %v171, 16
    %v229 = vor.u32 %v226, %v227
    %v231 = vshrl.u32 %v172, 16
    %v233 = vrot.slane %v231, 7
    %v234 = vshll.u32 %v172, 16
    %v236 = vor.u32 %v233, %v234
    %v238 = vshrl.u32 %v173, 16
    %v240 = vrot.slane %v238, 7
    %v241 = vshll.u32 %v173, 16
    %v243 = vor.u32 %v240, %v241
    %v245 = vshrl.u32 %v174, 16
    %v247 = vrot.slane %v245, 7
    %v248 = vshll.u32 %v174, 16
    %v250 = vor.u32 %v247, %v248
    %v252 = vshrl.u32 %v175, 16
    %v254 = vrot.slane %v252, 7
    %v255 = vshll.u32 %v175, 16
    %v257 = vor.u32 %v254, %v255
    %v259 = vshrl.u32 %v176, 16
    %v261 = vrot.slane %v259, 7
    %v262 = vshll.u32 %v176, 16
    %v264 = vor.u32 %v261, %v262
    %v266 = vshrl.u32 %v177, 16
    %v268 = vrot.slane %v266, 7
    %v269 = vshll.u32 %v177, 16
    %v271 = vor.u32 %v268, %v269
    %v273 = vshrl.u32 %v178, 16
    %v275 = vrot.slane %v273, 7
    %v276 = vshll.u32 %v178, 16
    %v278 = vor.u32 %v275, %v276
    %v280 = vshrl.u32 %v179, 16
    %v282 = vrot.slane %v280, 7
    %v283 = vshll.u32 %v179, 16
    %v285 = vor.u32 %v282, %v283
    %v287 = vshrl.u32 %v180, 16
    %v289 = vrot.slane %v287, 7
    %v290 = vshll.u32 %v180, 16
    %v292 = vor.u32 %v289, %v290
    %vm309 = vcmask 1040384
    %vm310 = vsmask.f32 256
    %vm311 = vmand %vm309, %vm310
    %v312 = vsel %vm311, 0, %v187
    %v313 = vsel %vm311, 0, %v194
    %v314 = vsel %vm311, 0, %v201
    %v315 = vsel %vm311, 0, %v208
    %v316 = vsel %vm311, 0, %v215
    %v317 = vsel %vm311, 0, %v222
    %v318 = vsel %vm311, 0, %v229
    %v319 = vsel %vm311, 0, %v236
    %v320 = vsel %vm311, 0, %v243
    %v321 = vsel %vm311, 0, %v250
    %v322 = vsel %vm311, 0, %v257
    %v323 = vsel %vm311, 0, %v264
    %v324 = vsel %vm311, 0, %v271
    %v325 = vsel %vm311, 0, %v278
    %v326 = vsel %vm311, 0, %v285
    %v327 = vsel %vm311, 0, %v292
    %v328 = vrot.slane %v185, 1
    %v329 = vor.u32 %v182, %v328
    %v330 = vrot.slane %v192, 1
    %v331 = vor.u32 %v189, %v330
    %v332 = vrot.slane %v199, 1
    %v333 = vor.u32 %v196, %v332
    %v334 = vrot.slane %v206, 1
    %v335 = vor.u32 %v203, %v334
    %v336 = vrot.slane %v213, 1
    %v337 = vor.u32 %v210, %v336
    %v338 = vrot.slane %v220, 1
    %v339 = vor.u32 %v217, %v338
    %v340 = vrot.slane %v227, 1
    %v341 = vor.u32 %v224, %v340
    %v342 = vrot.slane %v234, 1
    %v343 = vor.u32 %v231, %v342
    %v344 = vrot.slane %v241, 1
    %v345 = vor.u32 %v238, %v344
    %v346 = vrot.slane %v248, 1
    %v347 = vor.u32 %v245, %v346
    %v348 = vrot.slane %v255, 1
    %v349 = vor.u32 %v252, %v348
    %v350 = vrot.slane %v262, 1
    %v351 = vor.u32 %v259, %v350
    %v352 = vrot.slane %v269, 1
    %v353 = vor.u32 %v266, %v352
    %v354 = vrot.slane %v276, 1
    %v355 = vor.u32 %v273, %v354
    %v356 = vrot.slane %v283, 1
    %v357 = vor.u32 %v280, %v356
    %v358 = vrot.slane %v290, 1
    %v359 = vor.u32 %v287, %v358
    %vm376 = vcmask 1047552
    %vm377 = vsmask.f32 7424
    %vm378 = vmand %vm376, %vm377
    %v379 = vsel %vm378, %v329, 0
    %v380 = vsel %vm378, %v331, 0
    %v381 = vsel %vm378, %v333, 0
    %v382 = vsel %vm378, %v335, 0
    %v383 = vsel %vm378, %v337, 0
    %v384 = vsel %vm378, %v339, 0
    %v385 = vsel %vm378, %v341, 0
    %v386 = vsel %vm378, %v343, 0
    %v387 = vsel %vm378, %v345, 0
    %v388 = vsel %vm378, %v347, 0
    %v389 = vsel %vm378, %v349, 0
    %v390 = vsel %vm378, %v351, 0
    %v391 = vsel %vm378, %v353, 0
    %v392 = vsel %vm378, %v355, 0
    %v393 = vsel %vm378, %v357, 0
    %v394 = vsel %vm378, %v359, 0
    %v411 = vunpack.c.l.b16 %v312
    %v412 = vunpack.c.h.b16 %v312
    %v413 = vunpack.c.l.b16 %v313
    %v414 = vunpack.c.h.b16 %v313
    %v415 = vunpack.c.l.b16 %v314
    %v416 = vunpack.c.h.b16 %v314
    %v417 = vunpack.c.l.b16 %v315
    %v418 = vunpack.c.h.b16 %v315
    %v419 = vunpack.c.l.b16 %v316
    %v420 = vunpack.c.h.b16 %v316
    %v421 = vunpack.c.l.b16 %v317
    %v422 = vunpack.c.h.b16 %v317
    %v423 = vunpack.c.l.b16 %v318
    %v424 = vunpack.c.h.b16 %v318
    %v425 = vunpack.c.l.b16 %v319
    %v426 = vunpack.c.h.b16 %v319
    %v427 = vunpack.c.l.b16 %v320
    %v428 = vunpack.c.h.b16 %v320
    %v429 = vunpack.c.l.b16 %v321
    %v430 = vunpack.c.h.b16 %v321
    %v431 = vunpack.c.l.b16 %v322
    %v432 = vunpack.c.h.b16 %v322
    %v433 = vunpack.c.l.b16 %v323
    %v434 = vunpack.c.h.b16 %v323
    %v435 = vunpack.c.l.b16 %v324
    %v436 = vunpack.c.h.b16 %v324
    %v437 = vunpack.c.l.b16 %v325
    %v438 = vunpack.c.h.b16 %v325
    %v439 = vunpack.c.l.b16 %v326
    %v440 = vunpack.c.h.b16 %v326
    %v441 = vunpack.c.l.b16 %v327
    %v442 = vunpack.c.h.b16 %v327
    %v443 = vpack.c.b16 %v411, %v411
    %v444 = vpack.c.b16 %v412, %v412
    %v445 = vpack.c.b16 %v413, %v413
    %v446 = vpack.c.b16 %v414, %v414
    %v447 = vpack.c.b16 %v415, %v415
    %v448 = vpack.c.b16 %v416, %v416
    %v449 = vpack.c.b16 %v417, %v417
    %v450 = vpack.c.b16 %v418, %v418
    %v451 = vpack.c.b16 %v419, %v419
    %v452 = vpack.c.b16 %v420, %v420
    %v453 = vpack.c.b16 %v421, %v421
    %v454 = vpack.c.b16 %v422, %v422
    %v455 = vpack.c.b16 %v423, %v423
    %v456 = vpack.c.b16 %v424, %v424
    %v457 = vpack.c.b16 %v425, %v425
    %v458 = vpack.c.b16 %v426, %v426
    %v459 = vpack.c.b16 %v427, %v427
    %v460 = vpack.c.b16 %v428, %v428
    %v461 = vpack.c.b16 %v429, %v429
    %v462 = vpack.c.b16 %v430, %v430
    %v463 = vpack.c.b16 %v431, %v431
    %v464 = vpack.c.b16 %v432, %v432
    %v465 = vpack.c.b16 %v433, %v433
    %v466 = vpack.c.b16 %v434, %v434
    %v467 = vpack.c.b16 %v435, %v435
    %v468 = vpack.c.b16 %v436, %v436
    %v469 = vpack.c.b16 %v437, %v437
    %v470 = vpack.c.b16 %v438, %v438
    %v471 = vpack.c.b16 %v439, %v439
    %v472 = vpack.c.b16 %v440, %v440
    %v473 = vpack.c.b16 %v441, %v441
    %v474 = vpack.c.b16 %v442, %v442
    %s507 = scalar_lea.vmem [#allocation2], 24
    %508 = vst [vmem:[%s507] sm:$0xf] %v443
    %509 = vst [vmem:[%s507 + $0xc] sm:$0xf] %v444
    %510 = vst [vmem:[%s507 + $0x18] sm:$0xf] %v445
    %511 = vst [vmem:[%s507 + $0x24] sm:$0xf] %v446
    %512 = vst [vmem:[%s507 + $0x30] sm:$0xf] %v447
    %513 = vst [vmem:[%s507 + $0x3c] sm:$0xf] %v448
    %514 = vst [vmem:[%s507 + $0x48] sm:$0xf] %v449
    %515 = vst [vmem:[%s507 + $0x54] sm:$0xf] %v450
    %516 = vst [vmem:[%s507 + $0x60] sm:$0xf] %v451
    %517 = vst [vmem:[%s507 + $0x6c] sm:$0xf] %v452
    %518 = vst [vmem:[%s507 + $0x78] sm:$0xf] %v453
    %519 = vst [vmem:[%s507 + $0x84] sm:$0xf] %v454
    %520 = vst [vmem:[%s507 + $0x90] sm:$0xf] %v455
    %521 = vst [vmem:[%s507 + $0x9c] sm:$0xf] %v456
    %522 = vst [vmem:[%s507 + $0xa8] sm:$0xf] %v457
    %523 = vst [vmem:[%s507 + $0xb4] sm:$0xf] %v458
    %524 = vst [vmem:[%s507 + $0xc0] sm:$0xf] %v459
    %525 = vst [vmem:[%s507 + $0xcc] sm:$0xf] %v460
    %526 = vst [vmem:[%s507 + $0xd8] sm:$0xf] %v461
    %527 = vst [vmem:[%s507 + $0xe4] sm:$0xf] %v462
    %528 = vst [vmem:[%s507 + $0xf0] sm:$0xf] %v463
    %529 = vst [vmem:[%s507 + $0xfc] sm:$0xf] %v464
    %530 = vst [vmem:[%s507 + $0x108] sm:$0xf] %v465
    %531 = vst [vmem:[%s507 + $0x114] sm:$0xf] %v466
    %532 = vst [vmem:[%s507 + $0x120] sm:$0xf] %v467
    %533 = vst [vmem:[%s507 + $0x12c] sm:$0xf] %v468
    %534 = vst [vmem:[%s507 + $0x138] sm:$0xf] %v469
    %535 = vst [vmem:[%s507 + $0x144] sm:$0xf] %v470
    %536 = vst [vmem:[%s507 + $0x150] sm:$0xf] %v471
    %537 = vst [vmem:[%s507 + $0x15c] sm:$0xf] %v472
    %538 = vst [vmem:[%s507 + $0x168] sm:$0xf] %v473
    %539 = vst [vmem:[%s507 + $0x174] sm:$0xf] %v474
    %540 = vst [vmem:[%s507 + $0x4] sm:$0xf] %v69
    %541 = vst [vmem:[%s507 + $0x10] sm:$0xf] %v70
    %542 = vst [vmem:[%s507 + $0x1c] sm:$0xf] %v71
    %543 = vst [vmem:[%s507 + $0x28] sm:$0xf] %v72
    %544 = vst [vmem:[%s507 + $0x34] sm:$0xf] %v73
    %545 = vst [vmem:[%s507 + $0x40] sm:$0xf] %v74
    %546 = vst [vmem:[%s507 + $0x4c] sm:$0xf] %v75
    %547 = vst [vmem:[%s507 + $0x58] sm:$0xf] %v76
    %548 = vst [vmem:[%s507 + $0x64] sm:$0xf] %v77
    %549 = vst [vmem:[%s507 + $0x70] sm:$0xf] %v78
    %550 = vst [vmem:[%s507 + $0x7c] sm:$0xf] %v79
    %551 = vst [vmem:[%s507 + $0x88] sm:$0xf] %v80
    %552 = vst [vmem:[%s507 + $0x94] sm:$0xf] %v81
    %553 = vst [vmem:[%s507 + $0xa0] sm:$0xf] %v82
    %554 = vst [vmem:[%s507 + $0xac] sm:$0xf] %v83
    %555 = vst [vmem:[%s507 + $0xb8] sm:$0xf] %v84
    %556 = vst [vmem:[%s507 + $0xc4] sm:$0xf] %v85
    %557 = vst [vmem:[%s507 + $0xd0] sm:$0xf] %v86
    %558 = vst [vmem:[%s507 + $0xdc] sm:$0xf] %v87
    %559 = vst [vmem:[%s507 + $0xe8] sm:$0xf] %v88
    %560 = vst [vmem:[%s507 + $0xf4] sm:$0xf] %v89
    %561 = vst [vmem:[%s507 + $0x100] sm:$0xf] %v90
    %562 = vst [vmem:[%s507 + $0x10c] sm:$0xf] %v91
    %563 = vst [vmem:[%s507 + $0x118] sm:$0xf] %v92
    %564 = vst [vmem:[%s507 + $0x124] sm:$0xf] %v93
    %565 = vst [vmem:[%s507 + $0x130] sm:$0xf] %v94
    %566 = vst [vmem:[%s507 + $0x13c] sm:$0xf] %v95
    %567 = vst [vmem:[%s507 + $0x148] sm:$0xf] %v96
    %568 = vst [vmem:[%s507 + $0x154] sm:$0xf] %v97
    %569 = vst [vmem:[%s507 + $0x160] sm:$0xf] %v98
    %570 = vst [vmem:[%s507 + $0x16c] sm:$0xf] %v99
    %571 = vst [vmem:[%s507 + $0x178] sm:$0xf] %v100
    %v588 = vunpack.c.l.b16 %v379
    %v589 = vunpack.c.h.b16 %v379
    %v590 = vunpack.c.l.b16 %v380
    %v591 = vunpack.c.h.b16 %v380
    %v592 = vunpack.c.l.b16 %v381
    %v593 = vunpack.c.h.b16 %v381
    %v594 = vunpack.c.l.b16 %v382
    %v595 = vunpack.c.h.b16 %v382
    %v596 = vunpack.c.l.b16 %v383
    %v597 = vunpack.c.h.b16 %v383
    %v598 = vunpack.c.l.b16 %v384
    %v599 = vunpack.c.h.b16 %v384
    %v600 = vunpack.c.l.b16 %v385
    %v601 = vunpack.c.h.b16 %v385
    %v602 = vunpack.c.l.b16 %v386
    %v603 = vunpack.c.h.b16 %v386
    %v604 = vunpack.c.l.b16 %v387
    %v605 = vunpack.c.h.b16 %v387
    %v606 = vunpack.c.l.b16 %v388
    %v607 = vunpack.c.h.b16 %v388
    %v608 = vunpack.c.l.b16 %v389
    %v609 = vunpack.c.h.b16 %v389
    %v610 = vunpack.c.l.b16 %v390
    %v611 = vunpack.c.h.b16 %v390
    %v612 = vunpack.c.l.b16 %v391
    %v613 = vunpack.c.h.b16 %v391
    %v614 = vunpack.c.l.b16 %v392
    %v615 = vunpack.c.h.b16 %v392
    %v616 = vunpack.c.l.b16 %v393
    %v617 = vunpack.c.h.b16 %v393
    %v618 = vunpack.c.l.b16 %v394
    %v619 = vunpack.c.h.b16 %v394
    %v620 = vpack.c.b16 %v588, %v588
    %v621 = vpack.c.b16 %v589, %v589
    %v622 = vpack.c.b16 %v590, %v590
    %v623 = vpack.c.b16 %v591, %v591
    %v624 = vpack.c.b16 %v592, %v592
    %v625 = vpack.c.b16 %v593, %v593
    %v626 = vpack.c.b16 %v594, %v594
    %v627 = vpack.c.b16 %v595, %v595
    %v628 = vpack.c.b16 %v596, %v596
    %v629 = vpack.c.b16 %v597, %v597
    %v630 = vpack.c.b16 %v598, %v598
    %v631 = vpack.c.b16 %v599, %v599
    %v632 = vpack.c.b16 %v600, %v600
    %v633 = vpack.c.b16 %v601, %v601
    %v634 = vpack.c.b16 %v602, %v602
    %v635 = vpack.c.b16 %v603, %v603
    %v636 = vpack.c.b16 %v604, %v604
    %v637 = vpack.c.b16 %v605, %v605
    %v638 = vpack.c.b16 %v606, %v606
    %v639 = vpack.c.b16 %v607, %v607
    %v640 = vpack.c.b16 %v608, %v608
    %v641 = vpack.c.b16 %v609, %v609
    %v642 = vpack.c.b16 %v610, %v610
    %v643 = vpack.c.b16 %v611, %v611
    %v644 = vpack.c.b16 %v612, %v612
    %v645 = vpack.c.b16 %v613, %v613
    %v646 = vpack.c.b16 %v614, %v614
    %v647 = vpack.c.b16 %v615, %v615
    %v648 = vpack.c.b16 %v616, %v616
    %v649 = vpack.c.b16 %v617, %v617
    %v650 = vpack.c.b16 %v618, %v618
    %v651 = vpack.c.b16 %v619, %v619
    %684 = vst [vmem:[%s507 + $0x8] sm:$0xf] %v620
    %685 = vst [vmem:[%s507 + $0x14] sm:$0xf] %v621
    %686 = vst [vmem:[%s507 + $0x20] sm:$0xf] %v622
    %687 = vst [vmem:[%s507 + $0x2c] sm:$0xf] %v623
    %688 = vst [vmem:[%s507 + $0x38] sm:$0xf] %v624
    %689 = vst [vmem:[%s507 + $0x44] sm:$0xf] %v625
    %690 = vst [vmem:[%s507 + $0x50] sm:$0xf] %v626
    %691 = vst [vmem:[%s507 + $0x5c] sm:$0xf] %v627
    %692 = vst [vmem:[%s507 + $0x68] sm:$0xf] %v628
    %693 = vst [vmem:[%s507 + $0x74] sm:$0xf] %v629
    %694 = vst [vmem:[%s507 + $0x80] sm:$0xf] %v630
    %695 = vst [vmem:[%s507 + $0x8c] sm:$0xf] %v631
    %696 = vst [vmem:[%s507 + $0x98] sm:$0xf] %v632
    %697 = vst [vmem:[%s507 + $0xa4] sm:$0xf] %v633
    %698 = vst [vmem:[%s507 + $0xb0] sm:$0xf] %v634
    %699 = vst [vmem:[%s507 + $0xbc] sm:$0xf] %v635
    %700 = vst [vmem:[%s507 + $0xc8] sm:$0xf] %v636
    %701 = vst [vmem:[%s507 + $0xd4] sm:$0xf] %v637
    %702 = vst [vmem:[%s507 + $0xe0] sm:$0xf] %v638
    %703 = vst [vmem:[%s507 + $0xec] sm:$0xf] %v639
    %704 = vst [vmem:[%s507 + $0xf8] sm:$0xf] %v640
    %705 = vst [vmem:[%s507 + $0x104] sm:$0xf] %v641
    %706 = vst [vmem:[%s507 + $0x110] sm:$0xf] %v642
    %707 = vst [vmem:[%s507 + $0x11c] sm:$0xf] %v643
    %708 = vst [vmem:[%s507 + $0x128] sm:$0xf] %v644
    %709 = vst [vmem:[%s507 + $0x134] sm:$0xf] %v645
    %710 = vst [vmem:[%s507 + $0x140] sm:$0xf] %v646
    %711 = vst [vmem:[%s507 + $0x14c] sm:$0xf] %v647
    %712 = vst [vmem:[%s507 + $0x158] sm:$0xf] %v648
    %713 = vst [vmem:[%s507 + $0x164] sm:$0xf] %v649
    %714 = vst [vmem:[%s507 + $0x170] sm:$0xf] %v650
    %715 = vst [vmem:[%s507 + $0x17c] sm:$0xf] %v651
    %v716 = vld [vmem:[#allocation2] sm:$0xff]
    %v717 = vld [vmem:[#allocation2 + $0x8] sm:$0xf]
    %v718 = vld [vmem:[#allocation2 + $0xc] sm:$0xff]
    %v719 = vld [vmem:[#allocation2 + $0x14] sm:$0xf]
    %v720 = vld [vmem:[#allocation2 + $0x18] sm:$0xff]
    %v721 = vld [vmem:[#allocation2 + $0x20] sm:$0xf]
    %v722 = vld [vmem:[#allocation2 + $0x24] sm:$0xff]
    %v723 = vld [vmem:[#allocation2 + $0x2c] sm:$0xf]
    %v724 = vld [vmem:[#allocation2 + $0x30] sm:$0xff]
    %v725 = vld [vmem:[#allocation2 + $0x38] sm:$0xf]
    %v726 = vld [vmem:[#allocation2 + $0x3c] sm:$0xff]
    %v727 = vld [vmem:[#allocation2 + $0x44] sm:$0xf]
    %v728 = vld [vmem:[#allocation2 + $0x48] sm:$0xff]
    %v729 = vld [vmem:[#allocation2 + $0x50] sm:$0xf]
    %v730 = vld [vmem:[#allocation2 + $0x54] sm:$0xff]
    %v731 = vld [vmem:[#allocation2 + $0x5c] sm:$0xf]
    %v732 = vld [vmem:[#allocation2 + $0x60] sm:$0xff]
    %v733 = vld [vmem:[#allocation2 + $0x68] sm:$0xf]
    %v734 = vld [vmem:[#allocation2 + $0x6c] sm:$0xff]
    %v735 = vld [vmem:[#allocation2 + $0x74] sm:$0xf]
    %v736 = vld [vmem:[#allocation2 + $0x78] sm:$0xff]
    %v737 = vld [vmem:[#allocation2 + $0x80] sm:$0xf]
    %v738 = vld [vmem:[#allocation2 + $0x84] sm:$0xff]
    %v739 = vld [vmem:[#allocation2 + $0x8c] sm:$0xf]
    %v740 = vld [vmem:[#allocation2 + $0x90] sm:$0xff]
    %v741 = vld [vmem:[#allocation2 + $0x98] sm:$0xf]
    %v742 = vld [vmem:[#allocation2 + $0x9c] sm:$0xff]
    %v743 = vld [vmem:[#allocation2 + $0xa4] sm:$0xf]
    %v744 = vld [vmem:[#allocation2 + $0xa8] sm:$0xff]
    %v745 = vld [vmem:[#allocation2 + $0xb0] sm:$0xf]
    %v746 = vld [vmem:[#allocation2 + $0xb4] sm:$0xff]
    %v747 = vld [vmem:[#allocation2 + $0xbc] sm:$0xf]
    %v748 = vld [vmem:[#allocation2 + $0xc0] sm:$0xff]
    %v749 = vld [vmem:[#allocation2 + $0xc8] sm:$0xf]
    %v750 = vld [vmem:[#allocation2 + $0xcc] sm:$0xff]
    %v751 = vld [vmem:[#allocation2 + $0xd4] sm:$0xf]
    %v752 = vld [vmem:[#allocation2 + $0xd8] sm:$0xff]
    %v753 = vld [vmem:[#allocation2 + $0xe0] sm:$0xf]
    %v754 = vld [vmem:[#allocation2 + $0xe4] sm:$0xff]
    %v755 = vld [vmem:[#allocation2 + $0xec] sm:$0xf]
    %v756 = vld [vmem:[#allocation2 + $0xf0] sm:$0xff]
    %v757 = vld [vmem:[#allocation2 + $0xf8] sm:$0xf]
    %v758 = vld [vmem:[#allocation2 + $0xfc] sm:$0xff]
    %v759 = vld [vmem:[#allocation2 + $0x104] sm:$0xf]
    %v760 = vld [vmem:[#allocation2 + $0x108] sm:$0xff]
    %v761 = vld [vmem:[#allocation2 + $0x110] sm:$0xf]
    %v762 = vld [vmem:[#allocation2 + $0x114] sm:$0xff]
    %v763 = vld [vmem:[#allocation2 + $0x11c] sm:$0xf]
    %v764 = vld [vmem:[#allocation2 + $0x120] sm:$0xff]
    %v765 = vld [vmem:[#allocation2 + $0x128] sm:$0xf]
    %v766 = vld [vmem:[#allocation2 + $0x12c] sm:$0xff]
    %v767 = vld [vmem:[#allocation2 + $0x134] sm:$0xf]
    %v768 = vld [vmem:[#allocation2 + $0x138] sm:$0xff]
    %v769 = vld [vmem:[#allocation2 + $0x140] sm:$0xf]
    %v770 = vld [vmem:[#allocation2 + $0x144] sm:$0xff]
    %v771 = vld [vmem:[#allocation2 + $0x14c] sm:$0xf]
    %v772 = vld [vmem:[#allocation2 + $0x150] sm:$0xff]
    %v773 = vld [vmem:[#allocation2 + $0x158] sm:$0xf]
    %v774 = vld [vmem:[#allocation2 + $0x15c] sm:$0xff]
    %v775 = vld [vmem:[#allocation2 + $0x164] sm:$0xf]
    %v776 = vld [vmem:[#allocation2 + $0x168] sm:$0xff]
    %v777 = vld [vmem:[#allocation2 + $0x170] sm:$0xf]
    %v778 = vld [vmem:[#allocation2 + $0x174] sm:$0xff]
    %v779 = vld [vmem:[#allocation2 + $0x17c] sm:$0xf]
    %v780 = vld [vmem:[#allocation2 + $0x180] sm:$0xff]
    %v781 = vld [vmem:[#allocation2 + $0x188] sm:$0xf]
    %v782 = vld [vmem:[#allocation2 + $0x18c] sm:$0xff]
    %v783 = vld [vmem:[#allocation2 + $0x194] sm:$0xf]
    %v784 = vld [vmem:[#allocation2 + $0x198] sm:$0xff]
    %v785 = vld [vmem:[#allocation2 + $0x1a0] sm:$0xf]
    %v786 = vld [vmem:[#allocation2 + $0x1a4] sm:$0xff]
    %v787 = vld [vmem:[#allocation2 + $0x1ac] sm:$0xf]
    %v788 = vld [vmem:[%s1] sm:$0xf]
    %v789 = vld [vmem:[%s1 + $0x4] sm:$0xf]
    %v790 = vld [vmem:[%s1 + $0x8] sm:$0xf]
    %v791 = vld [vmem:[%s1 + $0xc] sm:$0xf]
    %v792 = vld [vmem:[%s1 + $0x10] sm:$0xf]
    %v793 = vld [vmem:[%s1 + $0x14] sm:$0xf]
    %v794 = vld [vmem:[%s1 + $0x18] sm:$0xf]
    %v795 = vld [vmem:[%s1 + $0x1c] sm:$0xf]
    %v796 = vld [vmem:[%s1 + $0x20] sm:$0xf]
    %v797 = vld [vmem:[%s1 + $0x24] sm:$0xf]
    %v798 = vld [vmem:[%s1 + $0x28] sm:$0xf]
    %v799 = vld [vmem:[%s1 + $0x2c] sm:$0xf]
    %v800 = vld [vmem:[%s1 + $0x30] sm:$0xf]
    %v801 = vld [vmem:[%s1 + $0x34] sm:$0xf]
    %v802 = vld [vmem:[%s1 + $0x38] sm:$0xf]
    %v803 = vld [vmem:[%s1 + $0x3c] sm:$0xf]
    %v804 = vld [vmem:[%s1 + $0x40] sm:$0xf]
    %v805 = vld [vmem:[%s1 + $0x44] sm:$0xf]
    %v806 = vld [vmem:[%s1 + $0x48] sm:$0xf]
    %v807 = vld [vmem:[%s1 + $0x4c] sm:$0xf]
    %v808 = vld [vmem:[%s1 + $0x50] sm:$0xf]
    %v809 = vld [vmem:[%s1 + $0x54] sm:$0xf]
    %v810 = vld [vmem:[%s1 + $0x58] sm:$0xf]
    %v811 = vld [vmem:[%s1 + $0x5c] sm:$0xf]
    %v812 = vld [vmem:[%s1 + $0x60] sm:$0xf]
    %v813 = vld [vmem:[%s1 + $0x64] sm:$0xf]
    %v814 = vld [vmem:[%s1 + $0x68] sm:$0xf]
    %v815 = vld [vmem:[%s1 + $0x6c] sm:$0xf]
    %v816 = vld [vmem:[%s1 + $0x70] sm:$0xf]
    %v817 = vld [vmem:[%s1 + $0x74] sm:$0xf]
    %v818 = vld [vmem:[%s1 + $0x78] sm:$0xf]
    %v819 = vld [vmem:[%s1 + $0x7c] sm:$0xf]
    %v820 = vld [vmem:[%s1 + $0x80] sm:$0xf]
    %v821 = vld [vmem:[%s1 + $0x84] sm:$0xf]
    %v822 = vld [vmem:[%s1 + $0x88] sm:$0xf]
    %v823 = vld [vmem:[%s1 + $0x8c] sm:$0xf]
    %v824 = vld [vmem:[%s1 + $0x90] sm:$0xf]
    %v825 = vld [vmem:[%s1 + $0x94] sm:$0xf]
    %v826 = vld [vmem:[%s1 + $0x98] sm:$0xf]
    %v827 = vld [vmem:[%s1 + $0x9c] sm:$0xf]
    %v828 = vld [vmem:[%s1 + $0xa0] sm:$0xf]
    %v829 = vld [vmem:[%s1 + $0xa4] sm:$0xf]
    %v830 = vld [vmem:[%s1 + $0xa8] sm:$0xf]
    %v831 = vld [vmem:[%s1 + $0xac] sm:$0xf]
    %v832 = vld [vmem:[%s1 + $0xb0] sm:$0xf]
    %v833 = vld [vmem:[%s1 + $0xb4] sm:$0xf]
    %v834 = vld [vmem:[%s1 + $0xb8] sm:$0xf]
    %v835 = vld [vmem:[%s1 + $0xbc] sm:$0xf]
    %s836 = scalar_lea.vmem %s1, 192
    %v837 = vld [vmem:[%s836] sm:$0xf]
    %v838 = vld [vmem:[%s836 + $0x4] sm:$0xf]
    %v839 = vld [vmem:[%s836 + $0x8] sm:$0xf]
    %v840 = vld [vmem:[%s836 + $0xc] sm:$0xf]
    %v841 = vld [vmem:[%s836 + $0x10] sm:$0xf]
    %v842 = vld [vmem:[%s836 + $0x14] sm:$0xf]
    %v843 = vld [vmem:[%s836 + $0x18] sm:$0xf]
    %v844 = vld [vmem:[%s836 + $0x1c] sm:$0xf]
    %v845 = vld [vmem:[%s836 + $0x20] sm:$0xf]
    %v846 = vld [vmem:[%s836 + $0x24] sm:$0xf]
    %v847 = vld [vmem:[%s836 + $0x28] sm:$0xf]
    %v848 = vld [vmem:[%s836 + $0x2c] sm:$0xf]
    %v849 = vld [vmem:[%s836 + $0x30] sm:$0xf]
    %v850 = vld [vmem:[%s836 + $0x34] sm:$0xf]
    %v851 = vld [vmem:[%s836 + $0x38] sm:$0xf]
    %v852 = vld [vmem:[%s836 + $0x3c] sm:$0xf]
    %v853 = vld [vmem:[%s836 + $0x40] sm:$0xf]
    %v854 = vld [vmem:[%s836 + $0x44] sm:$0xf]
    %v855 = vld [vmem:[%s836 + $0x48] sm:$0xf]
    %v856 = vld [vmem:[%s836 + $0x4c] sm:$0xf]
    %v857 = vld [vmem:[%s836 + $0x50] sm:$0xf]
    %v858 = vld [vmem:[%s836 + $0x54] sm:$0xf]
    %v859 = vld [vmem:[%s836 + $0x58] sm:$0xf]
    %v860 = vld [vmem:[%s836 + $0x5c] sm:$0xf]
    %v861 = vld [vmem:[%s836 + $0x60] sm:$0xf]
    %v862 = vld [vmem:[%s836 + $0x64] sm:$0xf]
    %v863 = vld [vmem:[%s836 + $0x68] sm:$0xf]
    %v864 = vld [vmem:[%s836 + $0x6c] sm:$0xf]
    %v865 = vld [vmem:[%s836 + $0x70] sm:$0xf]
    %v866 = vld [vmem:[%s836 + $0x74] sm:$0xf]
    %v867 = vld [vmem:[%s836 + $0x78] sm:$0xf]
    %v868 = vld [vmem:[%s836 + $0x7c] sm:$0xf]
    %v869 = vld [vmem:[%s836 + $0x80] sm:$0xf]
    %v870 = vld [vmem:[%s836 + $0x84] sm:$0xf]
    %v871 = vld [vmem:[%s836 + $0x88] sm:$0xf]
    %v872 = vld [vmem:[%s836 + $0x8c] sm:$0xf]
    %v873 = vld [vmem:[%s836 + $0x90] sm:$0xf]
    %v874 = vld [vmem:[%s836 + $0x94] sm:$0xf]
    %v875 = vld [vmem:[%s836 + $0x98] sm:$0xf]
    %v876 = vld [vmem:[%s836 + $0x9c] sm:$0xf]
    %v877 = vld [vmem:[%s836 + $0xa0] sm:$0xf]
    %v878 = vld [vmem:[%s836 + $0xa4] sm:$0xf]
    %v879 = vld [vmem:[%s836 + $0xa8] sm:$0xf]
    %v880 = vld [vmem:[%s836 + $0xac] sm:$0xf]
    %v881 = vld [vmem:[%s836 + $0xb0] sm:$0xf]
    %v882 = vld [vmem:[%s836 + $0xb4] sm:$0xf]
    %v883 = vld [vmem:[%s836 + $0xb8] sm:$0xf]
    %v884 = vld [vmem:[%s836 + $0xbc] sm:$0xf]
    %v949 = vunpack.c.l.b16 %v720
    %v950 = vunpack.c.h.b16 %v720
    %v951 = vunpack.c.l.b16 %v721
    %v952 = vunpack.c.l.b16 %v722
    %v953 = vunpack.c.h.b16 %v722
    %v954 = vunpack.c.l.b16 %v723
    %v955 = vunpack.c.l.b16 %v724
    %v956 = vunpack.c.h.b16 %v724
    %v957 = vunpack.c.l.b16 %v725
    %v958 = vunpack.c.l.b16 %v726
    %v959 = vunpack.c.h.b16 %v726
    %v960 = vunpack.c.l.b16 %v727
    %v961 = vunpack.c.l.b16 %v728
    %v962 = vunpack.c.h.b16 %v728
    %v963 = vunpack.c.l.b16 %v729
    %v964 = vunpack.c.l.b16 %v730
    %v965 = vunpack.c.h.b16 %v730
    %v966 = vunpack.c.l.b16 %v731
    %v967 = vunpack.c.l.b16 %v732
    %v968 = vunpack.c.h.b16 %v732
    %v969 = vunpack.c.l.b16 %v733
    %v970 = vunpack.c.l.b16 %v734
    %v971 = vunpack.c.h.b16 %v734
    %v972 = vunpack.c.l.b16 %v735
    %v973 = vunpack.c.l.b16 %v736
    %v974 = vunpack.c.h.b16 %v736
    %v975 = vunpack.c.l.b16 %v737
    %v976 = vunpack.c.l.b16 %v738
    %v977 = vunpack.c.h.b16 %v738
    %v978 = vunpack.c.l.b16 %v739
    %v979 = vunpack.c.l.b16 %v740
    %v980 = vunpack.c.h.b16 %v740
    %v981 = vunpack.c.l.b16 %v741
    %v982 = vunpack.c.l.b16 %v742
    %v983 = vunpack.c.h.b16 %v742
    %v984 = vunpack.c.l.b16 %v743
    %v985 = vunpack.c.l.b16 %v744
    %v986 = vunpack.c.h.b16 %v744
    %v987 = vunpack.c.l.b16 %v745
    %v988 = vunpack.c.l.b16 %v746
    %v989 = vunpack.c.h.b16 %v746
    %v990 = vunpack.c.l.b16 %v747
    %v991 = vunpack.c.l.b16 %v748
    %v992 = vunpack.c.h.b16 %v748
    %v993 = vunpack.c.l.b16 %v749
    %v994 = vunpack.c.l.b16 %v750
    %v995 = vunpack.c.h.b16 %v750
    %v996 = vunpack.c.l.b16 %v751
    %v997 = vunpack.c.l.b16 %v752
    %v998 = vunpack.c.h.b16 %v752
    %v999 = vunpack.c.l.b16 %v753
    %v1000 = vunpack.c.l.b16 %v754
    %v1001 = vunpack.c.h.b16 %v754
    %v1002 = vunpack.c.l.b16 %v755
    %v1003 = vunpack.c.l.b16 %v756
    %v1004 = vunpack.c.h.b16 %v756
    %v1005 = vunpack.c.l.b16 %v757
    %v1006 = vunpack.c.l.b16 %v758
    %v1007 = vunpack.c.h.b16 %v758
    %v1008 = vunpack.c.l.b16 %v759
    %v1009 = vunpack.c.l.b16 %v760
    %v1010 = vunpack.c.h.b16 %v760
    %v1011 = vunpack.c.l.b16 %v761
    %v1012 = vunpack.c.l.b16 %v762
    %v1013 = vunpack.c.h.b16 %v762
    %v1014 = vunpack.c.l.b16 %v763
    %v1015 = vunpack.c.l.b16 %v764
    %v1016 = vunpack.c.h.b16 %v764
    %v1017 = vunpack.c.l.b16 %v765
    %v1018 = vunpack.c.l.b16 %v766
    %v1019 = vunpack.c.h.b16 %v766
    %v1020 = vunpack.c.l.b16 %v767
    %v1021 = vunpack.c.l.b16 %v768
    %v1022 = vunpack.c.h.b16 %v768
    %v1023 = vunpack.c.l.b16 %v769
    %v1024 = vunpack.c.l.b16 %v770
    %v1025 = vunpack.c.h.b16 %v770
    %v1026 = vunpack.c.l.b16 %v771
    %v1027 = vunpack.c.l.b16 %v772
    %v1028 = vunpack.c.h.b16 %v772
    %v1029 = vunpack.c.l.b16 %v773
    %v1030 = vunpack.c.l.b16 %v774
    %v1031 = vunpack.c.h.b16 %v774
    %v1032 = vunpack.c.l.b16 %v775
    %v1033 = vunpack.c.l.b16 %v776
    %v1034 = vunpack.c.h.b16 %v776
    %v1035 = vunpack.c.l.b16 %v777
    %v1036 = vunpack.c.l.b16 %v778
    %v1037 = vunpack.c.h.b16 %v778
    %v1038 = vunpack.c.l.b16 %v779
    %v1039 = vunpack.c.l.b16 %v780
    %v1040 = vunpack.c.h.b16 %v780
    %v1041 = vunpack.c.l.b16 %v781
    %v1042 = vunpack.c.l.b16 %v782
    %v1043 = vunpack.c.h.b16 %v782
    %v1044 = vunpack.c.l.b16 %v783
    %v1045 = vpack.c.b16 %v952, %v949
    %v1046 = vpack.c.b16 %v953, %v950
    %v1047 = vpack.c.b16 %v954, %v951
    %v1048 = vpack.c.b16 %v958, %v955
    %v1049 = vpack.c.b16 %v959, %v956
    %v1050 = vpack.c.b16 %v960, %v957
    %v1051 = vpack.c.b16 %v964, %v961
    %v1052 = vpack.c.b16 %v965, %v962
    %v1053 = vpack.c.b16 %v966, %v963
    %v1054 = vpack.c.b16 %v970, %v967
    %v1055 = vpack.c.b16 %v971, %v968
    %v1056 = vpack.c.b16 %v972, %v969
    %v1057 = vpack.c.b16 %v976, %v973
    %v1058 = vpack.c.b16 %v977, %v974
    %v1059 = vpack.c.b16 %v978, %v975
    %v1060 = vpack.c.b16 %v982, %v979
    %v1061 = vpack.c.b16 %v983, %v980
    %v1062 = vpack.c.b16 %v984, %v981
    %v1063 = vpack.c.b16 %v988, %v985
    %v1064 = vpack.c.b16 %v989, %v986
    %v1065 = vpack.c.b16 %v990, %v987
    %v1066 = vpack.c.b16 %v994, %v991
    %v1067 = vpack.c.b16 %v995, %v992
    %v1068 = vpack.c.b16 %v996, %v993
    %v1069 = vpack.c.b16 %v1000, %v997
    %v1070 = vpack.c.b16 %v1001, %v998
    %v1071 = vpack.c.b16 %v1002, %v999
    %v1072 = vpack.c.b16 %v1006, %v1003
    %v1073 = vpack.c.b16 %v1007, %v1004
    %v1074 = vpack.c.b16 %v1008, %v1005
    %v1075 = vpack.c.b16 %v1012, %v1009
    %v1076 = vpack.c.b16 %v1013, %v1010
    %v1077 = vpack.c.b16 %v1014, %v1011
    %v1078 = vpack.c.b16 %v1018, %v1015
    %v1079 = vpack.c.b16 %v1019, %v1016
    %v1080 = vpack.c.b16 %v1020, %v1017
    %v1081 = vpack.c.b16 %v1024, %v1021
    %v1082 = vpack.c.b16 %v1025, %v1022
    %v1083 = vpack.c.b16 %v1026, %v1023
    %v1084 = vpack.c.b16 %v1030, %v1027
    %v1085 = vpack.c.b16 %v1031, %v1028
    %v1086 = vpack.c.b16 %v1032, %v1029
    %v1087 = vpack.c.b16 %v1036, %v1033
    %v1088 = vpack.c.b16 %v1037, %v1034
    %v1089 = vpack.c.b16 %v1038, %v1035
    %v1090 = vpack.c.b16 %v1042, %v1039
    %v1091 = vpack.c.b16 %v1043, %v1040
    %v1092 = vpack.c.b16 %v1044, %v1041
    %v1189 = vunpack.c.l.b16 %v837
    %v1190 = vunpack.c.l.b16 %v838
    %v1191 = vunpack.c.l.b16 %v839
    %v1192 = vunpack.c.l.b16 %v840
    %v1193 = vunpack.c.l.b16 %v841
    %v1194 = vunpack.c.l.b16 %v842
    %v1195 = vunpack.c.l.b16 %v843
    %v1196 = vunpack.c.l.b16 %v844
    %v1197 = vunpack.c.l.b16 %v845
    %v1198 = vunpack.c.l.b16 %v846
    %v1199 = vunpack.c.l.b16 %v847
    %v1200 = vunpack.c.l.b16 %v848
    %v1201 = vunpack.c.l.b16 %v849
    %v1202 = vunpack.c.l.b16 %v850
    %v1203 = vunpack.c.l.b16 %v851
    %v1204 = vunpack.c.l.b16 %v852
    %v1205 = vunpack.c.l.b16 %v853
    %v1206 = vunpack.c.l.b16 %v854
    %v1207 = vunpack.c.l.b16 %v855
    %v1208 = vunpack.c.l.b16 %v856
    %v1209 = vunpack.c.l.b16 %v857
    %v1210 = vunpack.c.l.b16 %v858
    %v1211 = vunpack.c.l.b16 %v859
    %v1212 = vunpack.c.l.b16 %v860
    %v1213 = vunpack.c.l.b16 %v861
    %v1214 = vunpack.c.l.b16 %v862
    %v1215 = vunpack.c.l.b16 %v863
    %v1216 = vunpack.c.l.b16 %v864
    %v1217 = vunpack.c.l.b16 %v865
    %v1218 = vunpack.c.l.b16 %v866
    %v1219 = vunpack.c.l.b16 %v867
    %v1220 = vunpack.c.l.b16 %v868
    %v1221 = vunpack.c.l.b16 %v869
    %v1222 = vunpack.c.l.b16 %v870
    %v1223 = vunpack.c.l.b16 %v871
    %v1224 = vunpack.c.l.b16 %v872
    %v1225 = vunpack.c.l.b16 %v873
    %v1226 = vunpack.c.l.b16 %v874
    %v1227 = vunpack.c.l.b16 %v875
    %v1228 = vunpack.c.l.b16 %v876
    %v1229 = vunpack.c.l.b16 %v877
    %v1230 = vunpack.c.l.b16 %v878
    %v1231 = vunpack.c.l.b16 %v879
    %v1232 = vunpack.c.l.b16 %v880
    %v1233 = vunpack.c.l.b16 %v881
    %v1234 = vunpack.c.l.b16 %v882
    %v1235 = vunpack.c.l.b16 %v883
    %v1236 = vunpack.c.l.b16 %v884
    %v1237 = vpack.c.b16 %v1190, %v1189
    %v1238 = vpack.c.b16 %v1192, %v1191
    %v1239 = vpack.c.b16 %v1194, %v1193
    %v1240 = vpack.c.b16 %v1196, %v1195
    %v1241 = vpack.c.b16 %v1198, %v1197
    %v1242 = vpack.c.b16 %v1200, %v1199
    %v1243 = vpack.c.b16 %v1202, %v1201
    %v1244 = vpack.c.b16 %v1204, %v1203
    %v1245 = vpack.c.b16 %v1206, %v1205
    %v1246 = vpack.c.b16 %v1208, %v1207
    %v1247 = vpack.c.b16 %v1210, %v1209
    %v1248 = vpack.c.b16 %v1212, %v1211
    %v1249 = vpack.c.b16 %v1214, %v1213
    %v1250 = vpack.c.b16 %v1216, %v1215
    %v1251 = vpack.c.b16 %v1218, %v1217
    %v1252 = vpack.c.b16 %v1220, %v1219
    %v1253 = vpack.c.b16 %v1222, %v1221
    %v1254 = vpack.c.b16 %v1224, %v1223
    %v1255 = vpack.c.b16 %v1226, %v1225
    %v1256 = vpack.c.b16 %v1228, %v1227
    %v1257 = vpack.c.b16 %v1230, %v1229
    %v1258 = vpack.c.b16 %v1232, %v1231
    %v1259 = vpack.c.b16 %v1234, %v1233
    %v1260 = vpack.c.b16 %v1236, %v1235
    %1285 = vmatpush.bf16.msra.mxu0 %v1244
    %1286 = vmatpush.bf16.msra.mxu0 %v1243
    %1287 = vmatpush.bf16.msra.mxu0 %v1242
    %1288 = vmatpush.bf16.msra.mxu0 %v1241
    %1289 = vmatpush.bf16.msra.mxu0 %v1240
    %1290 = vmatpush.bf16.msra.mxu0 %v1239
    %1291 = vmatpush.bf16.msra.mxu0 %v1238
    %1292 = vmatpush.bf16.msra.mxu0 %v1237
    %1293 = vmatmul.bf16.gmra.mxu0 %v1045
    %v1294 = vpop.f32.mrf.mxu0
    %v1295 = vadd.f32 0.0, %v1294
    %v1296 = vpop.f32.mrf.mxu0
    %v1297 = vadd.f32 0.0, %v1296
    %1298 = vmatmul.bf16.gmra.mxu0 %v1048
    %v1299 = vpop.f32.mrf.mxu0
    %v1300 = vadd.f32 0.0, %v1299
    %v1301 = vpop.f32.mrf.mxu0
    %v1302 = vadd.f32 0.0, %v1301
    %1303 = vmatmul.bf16.gmra.mxu0 %v1051
    %v1304 = vpop.f32.mrf.mxu0
    %v1305 = vadd.f32 0.0, %v1304
    %v1306 = vpop.f32.mrf.mxu0
    %v1307 = vadd.f32 0.0, %v1306
    %1308 = vmatmul.bf16.gmra.mxu0 %v1054
    %v1309 = vpop.f32.mrf.mxu0
    %v1310 = vadd.f32 0.0, %v1309
    %v1311 = vpop.f32.mrf.mxu0
    %v1312 = vadd.f32 0.0, %v1311
    %1313 = vmatmul.bf16.gmra.mxu0 %v1057
    %v1314 = vpop.f32.mrf.mxu0
    %v1315 = vadd.f32 0.0, %v1314
    %v1316 = vpop.f32.mrf.mxu0
    %v1317 = vadd.f32 0.0, %v1316
    %1318 = vmatmul.bf16.gmra.mxu0 %v1060
    %v1319 = vpop.f32.mrf.mxu0
    %v1320 = vadd.f32 0.0, %v1319
    %v1321 = vpop.f32.mrf.mxu0
    %v1322 = vadd.f32 0.0, %v1321
    %1323 = vmatmul.bf16.gmra.mxu0 %v1063
    %v1324 = vpop.f32.mrf.mxu0
    %v1325 = vadd.f32 0.0, %v1324
    %v1326 = vpop.f32.mrf.mxu0
    %v1327 = vadd.f32 0.0, %v1326
    %1328 = vmatmul.bf16.gmra.mxu0 %v1066
    %v1329 = vpop.f32.mrf.mxu0
    %v1330 = vadd.f32 0.0, %v1329
    %v1331 = vpop.f32.mrf.mxu0
    %v1332 = vadd.f32 0.0, %v1331
    %1333 = vmatmul.bf16.gmra.mxu0 %v1069
    %v1334 = vpop.f32.mrf.mxu0
    %v1335 = vadd.f32 0.0, %v1334
    %v1336 = vpop.f32.mrf.mxu0
    %v1337 = vadd.f32 0.0, %v1336
    %1338 = vmatmul.bf16.gmra.mxu0 %v1072
    %v1339 = vpop.f32.mrf.mxu0
    %v1340 = vadd.f32 0.0, %v1339
    %v1341 = vpop.f32.mrf.mxu0
    %v1342 = vadd.f32 0.0, %v1341
    %1343 = vmatmul.bf16.gmra.mxu0 %v1075
    %v1344 = vpop.f32.mrf.mxu0
    %v1345 = vadd.f32 0.0, %v1344
    %v1346 = vpop.f32.mrf.mxu0
    %v1347 = vadd.f32 0.0, %v1346
    %1348 = vmatmul.bf16.gmra.mxu0 %v1078
    %v1349 = vpop.f32.mrf.mxu0
    %v1350 = vadd.f32 0.0, %v1349
    %v1351 = vpop.f32.mrf.mxu0
    %v1352 = vadd.f32 0.0, %v1351
    %1353 = vmatmul.bf16.gmra.mxu0 %v1081
    %v1354 = vpop.f32.mrf.mxu0
    %v1355 = vadd.f32 0.0, %v1354
    %v1356 = vpop.f32.mrf.mxu0
    %v1357 = vadd.f32 0.0, %v1356
    %1358 = vmatmul.bf16.gmra.mxu0 %v1084
    %v1359 = vpop.f32.mrf.mxu0
    %v1360 = vadd.f32 0.0, %v1359
    %v1361 = vpop.f32.mrf.mxu0
    %v1362 = vadd.f32 0.0, %v1361
    %1363 = vmatmul.bf16.gmra.mxu0 %v1087
    %v1364 = vpop.f32.mrf.mxu0
    %v1365 = vadd.f32 0.0, %v1364
    %v1366 = vpop.f32.mrf.mxu0
    %v1367 = vadd.f32 0.0, %v1366
    %1368 = vmatmul.bf16.gmra.mxu0 %v1090
    %v1369 = vpop.f32.mrf.mxu0
    %v1370 = vadd.f32 0.0, %v1369
    %v1371 = vpop.f32.mrf.mxu0
    %v1372 = vadd.f32 0.0, %v1371
    %1373 = vdwg.mxu0
    %1374 = vmatpush.bf16.msra.mxu0 %v1252
    %1375 = vmatpush.bf16.msra.mxu0 %v1251
    %1376 = vmatpush.bf16.msra.mxu0 %v1250
    %1377 = vmatpush.bf16.msra.mxu0 %v1249
    %1378 = vmatpush.bf16.msra.mxu0 %v1248
    %1379 = vmatpush.bf16.msra.mxu0 %v1247
    %1380 = vmatpush.bf16.msra.mxu0 %v1246
    %1381 = vmatpush.bf16.msra.mxu0 %v1245
    %1382 = vmatmul.bf16.gmra.mxu0 %v1046
    %v1383 = vpop.f32.mrf.mxu0
    %v1384 = vadd.f32 %v1295, %v1383
    %v1385 = vpop.f32.mrf.mxu0
    %v1386 = vadd.f32 %v1297, %v1385
    %1387 = vmatmul.bf16.gmra.mxu0 %v1049
    %v1388 = vpop.f32.mrf.mxu0
    %v1389 = vadd.f32 %v1300, %v1388
    %v1390 = vpop.f32.mrf.mxu0
    %v1391 = vadd.f32 %v1302, %v1390
    %1392 = vmatmul.bf16.gmra.mxu0 %v1052
    %v1393 = vpop.f32.mrf.mxu0
    %v1394 = vadd.f32 %v1305, %v1393
    %v1395 = vpop.f32.mrf.mxu0
    %v1396 = vadd.f32 %v1307, %v1395
    %1397 = vmatmul.bf16.gmra.mxu0 %v1055
    %v1398 = vpop.f32.mrf.mxu0
    %v1399 = vadd.f32 %v1310, %v1398
    %v1400 = vpop.f32.mrf.mxu0
    %v1401 = vadd.f32 %v1312, %v1400
    %1402 = vmatmul.bf16.gmra.mxu0 %v1058
    %v1403 = vpop.f32.mrf.mxu0
    %v1404 = vadd.f32 %v1315, %v1403
    %v1405 = vpop.f32.mrf.mxu0
    %v1406 = vadd.f32 %v1317, %v1405
    %1407 = vmatmul.bf16.gmra.mxu0 %v1061
    %v1408 = vpop.f32.mrf.mxu0
    %v1409 = vadd.f32 %v1320, %v1408
    %v1410 = vpop.f32.mrf.mxu0
    %v1411 = vadd.f32 %v1322, %v1410
    %1412 = vmatmul.bf16.gmra.mxu0 %v1064
    %v1413 = vpop.f32.mrf.mxu0
    %v1414 = vadd.f32 %v1325, %v1413
    %v1415 = vpop.f32.mrf.mxu0
    %v1416 = vadd.f32 %v1327, %v1415
    %1417 = vmatmul.bf16.gmra.mxu0 %v1067
    %v1418 = vpop.f32.mrf.mxu0
    %v1419 = vadd.f32 %v1330, %v1418
    %v1420 = vpop.f32.mrf.mxu0
    %v1421 = vadd.f32 %v1332, %v1420
    %1422 = vmatmul.bf16.gmra.mxu0 %v1070
    %v1423 = vpop.f32.mrf.mxu0
    %v1424 = vadd.f32 %v1335, %v1423
    %v1425 = vpop.f32.mrf.mxu0
    %v1426 = vadd.f32 %v1337, %v1425
    %1427 = vmatmul.bf16.gmra.mxu0 %v1073
    %v1428 = vpop.f32.mrf.mxu0
    %v1429 = vadd.f32 %v1340, %v1428
    %v1430 = vpop.f32.mrf.mxu0
    %v1431 = vadd.f32 %v1342, %v1430
    %1432 = vmatmul.bf16.gmra.mxu0 %v1076
    %v1433 = vpop.f32.mrf.mxu0
    %v1434 = vadd.f32 %v1345, %v1433
    %v1435 = vpop.f32.mrf.mxu0
    %v1436 = vadd.f32 %v1347, %v1435
    %1437 = vmatmul.bf16.gmra.mxu0 %v1079
    %v1438 = vpop.f32.mrf.mxu0
    %v1439 = vadd.f32 %v1350, %v1438
    %v1440 = vpop.f32.mrf.mxu0
    %v1441 = vadd.f32 %v1352, %v1440
    %1442 = vmatmul.bf16.gmra.mxu0 %v1082
    %v1443 = vpop.f32.mrf.mxu0
    %v1444 = vadd.f32 %v1355, %v1443
    %v1445 = vpop.f32.mrf.mxu0
    %v1446 = vadd.f32 %v1357, %v1445
    %1447 = vmatmul.bf16.gmra.mxu0 %v1085
    %v1448 = vpop.f32.mrf.mxu0
    %v1449 = vadd.f32 %v1360, %v1448
    %v1450 = vpop.f32.mrf.mxu0
    %v1451 = vadd.f32 %v1362, %v1450
    %1452 = vmatmul.bf16.gmra.mxu0 %v1088
    %v1453 = vpop.f32.mrf.mxu0
    %v1454 = vadd.f32 %v1365, %v1453
    %v1455 = vpop.f32.mrf.mxu0
    %v1456 = vadd.f32 %v1367, %v1455
    %1457 = vmatmul.bf16.gmra.mxu0 %v1091
    %v1458 = vpop.f32.mrf.mxu0
    %v1459 = vadd.f32 %v1370, %v1458
    %v1460 = vpop.f32.mrf.mxu0
    %v1461 = vadd.f32 %v1372, %v1460
    %1462 = vdwg.mxu0
    %1463 = vmatpush.bf16.msra.mxu0 %v1260
    %1464 = vmatpush.bf16.msra.mxu0 %v1259
    %1465 = vmatpush.bf16.msra.mxu0 %v1258
    %1466 = vmatpush.bf16.msra.mxu0 %v1257
    %1467 = vmatpush.bf16.msra.mxu0 %v1256
    %1468 = vmatpush.bf16.msra.mxu0 %v1255
    %1469 = vmatpush.bf16.msra.mxu0 %v1254
    %1470 = vmatpush.bf16.msra.mxu0 %v1253
    %1471 = vmatmul.bf16.gmra.mxu0 %v1047
    %v1472 = vpop.f32.mrf.mxu0
    %v1473 = vadd.f32 %v1384, %v1472
    %v1474 = vpop.f32.mrf.mxu0
    %v1475 = vadd.f32 %v1386, %v1474
    %1476 = vmatmul.bf16.gmra.mxu0 %v1050
    %v1477 = vpop.f32.mrf.mxu0
    %v1478 = vadd.f32 %v1389, %v1477
    %v1479 = vpop.f32.mrf.mxu0
    %v1480 = vadd.f32 %v1391, %v1479
    %1481 = vmatmul.bf16.gmra.mxu0 %v1053
    %v1482 = vpop.f32.mrf.mxu0
    %v1483 = vadd.f32 %v1394, %v1482
    %v1484 = vpop.f32.mrf.mxu0
    %v1485 = vadd.f32 %v1396, %v1484
    %1486 = vmatmul.bf16.gmra.mxu0 %v1056
    %v1487 = vpop.f32.mrf.mxu0
    %v1488 = vadd.f32 %v1399, %v1487
    %v1489 = vpop.f32.mrf.mxu0
    %v1490 = vadd.f32 %v1401, %v1489
    %1491 = vmatmul.bf16.gmra.mxu0 %v1059
    %v1492 = vpop.f32.mrf.mxu0
    %v1493 = vadd.f32 %v1404, %v1492
    %v1494 = vpop.f32.mrf.mxu0
    %v1495 = vadd.f32 %v1406, %v1494
    %1496 = vmatmul.bf16.gmra.mxu0 %v1062
    %v1497 = vpop.f32.mrf.mxu0
    %v1498 = vadd.f32 %v1409, %v1497
    %v1499 = vpop.f32.mrf.mxu0
    %v1500 = vadd.f32 %v1411, %v1499
    %1501 = vmatmul.bf16.gmra.mxu0 %v1065
    %v1502 = vpop.f32.mrf.mxu0
    %v1503 = vadd.f32 %v1414, %v1502
    %v1504 = vpop.f32.mrf.mxu0
    %v1505 = vadd.f32 %v1416, %v1504
    %1506 = vmatmul.bf16.gmra.mxu0 %v1068
    %v1507 = vpop.f32.mrf.mxu0
    %v1508 = vadd.f32 %v1419, %v1507
    %v1509 = vpop.f32.mrf.mxu0
    %v1510 = vadd.f32 %v1421, %v1509
    %1511 = vmatmul.bf16.gmra.mxu0 %v1071
    %v1512 = vpop.f32.mrf.mxu0
    %v1513 = vadd.f32 %v1424, %v1512
    %v1514 = vpop.f32.mrf.mxu0
    %v1515 = vadd.f32 %v1426, %v1514
    %1516 = vmatmul.bf16.gmra.mxu0 %v1074
    %v1517 = vpop.f32.mrf.mxu0
    %v1518 = vadd.f32 %v1429, %v1517
    %v1519 = vpop.f32.mrf.mxu0
    %v1520 = vadd.f32 %v1431, %v1519
    %1521 = vmatmul.bf16.gmra.mxu0 %v1077
    %v1522 = vpop.f32.mrf.mxu0
    %v1523 = vadd.f32 %v1434, %v1522
    %v1524 = vpop.f32.mrf.mxu0
    %v1525 = vadd.f32 %v1436, %v1524
    %1526 = vmatmul.bf16.gmra.mxu0 %v1080
    %v1527 = vpop.f32.mrf.mxu0
    %v1528 = vadd.f32 %v1439, %v1527
    %v1529 = vpop.f32.mrf.mxu0
    %v1530 = vadd.f32 %v1441, %v1529
    %1531 = vmatmul.bf16.gmra.mxu0 %v1083
    %v1532 = vpop.f32.mrf.mxu0
    %v1533 = vadd.f32 %v1444, %v1532
    %v1534 = vpop.f32.mrf.mxu0
    %v1535 = vadd.f32 %v1446, %v1534
    %1536 = vmatmul.bf16.gmra.mxu0 %v1086
    %v1537 = vpop.f32.mrf.mxu0
    %v1538 = vadd.f32 %v1449, %v1537
    %v1539 = vpop.f32.mrf.mxu0
    %v1540 = vadd.f32 %v1451, %v1539
    %1541 = vmatmul.bf16.gmra.mxu0 %v1089
    %v1542 = vpop.f32.mrf.mxu0
    %v1543 = vadd.f32 %v1454, %v1542
    %v1544 = vpop.f32.mrf.mxu0
    %v1545 = vadd.f32 %v1456, %v1544
    %1546 = vmatmul.bf16.gmra.mxu0 %v1092
    %v1547 = vpop.f32.mrf.mxu0
    %v1548 = vadd.f32 %v1459, %v1547
    %v1549 = vpop.f32.mrf.mxu0
    %v1550 = vadd.f32 %v1461, %v1549
    %1551 = vdwg.mxu0
    %v1556 = vunpack.c.l.b16 %v716
    %v1557 = vunpack.c.h.b16 %v716
    %v1558 = vunpack.c.l.b16 %v717
    %v1559 = vunpack.c.l.b16 %v718
    %v1560 = vunpack.c.h.b16 %v718
    %v1561 = vunpack.c.l.b16 %v719
    %v1562 = vpack.c.b16 %v1559, %v1556
    %v1563 = vpack.c.b16 %v1560, %v1557
    %v1564 = vpack.c.b16 %v1561, %v1558
    %v1616 = vunpack.c.l.b16 %v788
    %v1617 = vunpack.c.l.b16 %v789
    %v1618 = vunpack.c.l.b16 %v790
    %v1619 = vunpack.c.l.b16 %v791
    %v1620 = vunpack.c.l.b16 %v792
    %v1621 = vunpack.c.l.b16 %v793
    %v1622 = vunpack.c.l.b16 %v794
    %v1623 = vunpack.c.l.b16 %v795
    %v1624 = vunpack.c.l.b16 %v796
    %v1625 = vunpack.c.l.b16 %v797
    %v1626 = vunpack.c.l.b16 %v798
    %v1627 = vunpack.c.l.b16 %v799
    %v1628 = vunpack.c.l.b16 %v800
    %v1629 = vunpack.c.l.b16 %v801
    %v1630 = vunpack.c.l.b16 %v802
    %v1631 = vunpack.c.l.b16 %v803
    %v1632 = vunpack.c.l.b16 %v804
    %v1633 = vunpack.c.l.b16 %v805
    %v1634 = vunpack.c.l.b16 %v806
    %v1635 = vunpack.c.l.b16 %v807
    %v1636 = vunpack.c.l.b16 %v808
    %v1637 = vunpack.c.l.b16 %v809
    %v1638 = vunpack.c.l.b16 %v810
    %v1639 = vunpack.c.l.b16 %v811
    %v1640 = vunpack.c.l.b16 %v812
    %v1641 = vunpack.c.l.b16 %v813
    %v1642 = vunpack.c.l.b16 %v814
    %v1643 = vunpack.c.l.b16 %v815
    %v1644 = vunpack.c.l.b16 %v816
    %v1645 = vunpack.c.l.b16 %v817
    %v1646 = vunpack.c.l.b16 %v818
    %v1647 = vunpack.c.l.b16 %v819
    %v1648 = vunpack.c.l.b16 %v820
    %v1649 = vunpack.c.l.b16 %v821
    %v1650 = vunpack.c.l.b16 %v822
    %v1651 = vunpack.c.l.b16 %v823
    %v1652 = vunpack.c.l.b16 %v824
    %v1653 = vunpack.c.l.b16 %v825
    %v1654 = vunpack.c.l.b16 %v826
    %v1655 = vunpack.c.l.b16 %v827
    %v1656 = vunpack.c.l.b16 %v828
    %v1657 = vunpack.c.l.b16 %v829
    %v1658 = vunpack.c.l.b16 %v830
    %v1659 = vunpack.c.l.b16 %v831
    %v1660 = vunpack.c.l.b16 %v832
    %v1661 = vunpack.c.l.b16 %v833
    %v1662 = vunpack.c.l.b16 %v834
    %v1663 = vunpack.c.l.b16 %v835
    %v1664 = vpack.c.b16 %v1617, %v1616
    %v1665 = vpack.c.b16 %v1619, %v1618
    %v1666 = vpack.c.b16 %v1621, %v1620
    %v1667 = vpack.c.b16 %v1623, %v1622
    %v1668 = vpack.c.b16 %v1625, %v1624
    %v1669 = vpack.c.b16 %v1627, %v1626
    %v1670 = vpack.c.b16 %v1629, %v1628
    %v1671 = vpack.c.b16 %v1631, %v1630
    %v1672 = vpack.c.b16 %v1633, %v1632
    %v1673 = vpack.c.b16 %v1635, %v1634
    %v1674 = vpack.c.b16 %v1637, %v1636
    %v1675 = vpack.c.b16 %v1639, %v1638
    %v1676 = vpack.c.b16 %v1641, %v1640
    %v1677 = vpack.c.b16 %v1643, %v1642
    %v1678 = vpack.c.b16 %v1645, %v1644
    %v1679 = vpack.c.b16 %v1647, %v1646
    %v1680 = vpack.c.b16 %v1649, %v1648
    %v1681 = vpack.c.b16 %v1651, %v1650
    %v1682 = vpack.c.b16 %v1653, %v1652
    %v1683 = vpack.c.b16 %v1655, %v1654
    %v1684 = vpack.c.b16 %v1657, %v1656
    %v1685 = vpack.c.b16 %v1659, %v1658
    %v1686 = vpack.c.b16 %v1661, %v1660
    %v1687 = vpack.c.b16 %v1663, %v1662
    %1712 = vmatpush.bf16.msra.mxu0 %v1671
    %1713 = vmatpush.bf16.msra.mxu0 %v1670
    %1714 = vmatpush.bf16.msra.mxu0 %v1669
    %1715 = vmatpush.bf16.msra.mxu0 %v1668
    %1716 = vmatpush.bf16.msra.mxu0 %v1667
    %1717 = vmatpush.bf16.msra.mxu0 %v1666
    %1718 = vmatpush.bf16.msra.mxu0 %v1665
    %1719 = vmatpush.bf16.msra.mxu0 %v1664
    %1720 = vmatmul.bf16.gmra.mxu0 %v1562
    %v1721 = vpop.f32.mrf.mxu0
    %v1722 = vadd.f32 %v1473, %v1721
    %v1723 = vpop.f32.mrf.mxu0
    %v1724 = vadd.f32 %v1475, %v1723
    %1725 = vmatmul.bf16.gmra.mxu0 %v1045
    %v1726 = vpop.f32.mrf.mxu0
    %v1727 = vadd.f32 %v1478, %v1726
    %v1728 = vpop.f32.mrf.mxu0
    %v1729 = vadd.f32 %v1480, %v1728
    %1730 = vmatmul.bf16.gmra.mxu0 %v1048
    %v1731 = vpop.f32.mrf.mxu0
    %v1732 = vadd.f32 %v1483, %v1731
    %v1733 = vpop.f32.mrf.mxu0
    %v1734 = vadd.f32 %v1485, %v1733
    %1735 = vmatmul.bf16.gmra.mxu0 %v1051
    %v1736 = vpop.f32.mrf.mxu0
    %v1737 = vadd.f32 %v1488, %v1736
    %v1738 = vpop.f32.mrf.mxu0
    %v1739 = vadd.f32 %v1490, %v1738
    %1740 = vmatmul.bf16.gmra.mxu0 %v1054
    %v1741 = vpop.f32.mrf.mxu0
    %v1742 = vadd.f32 %v1493, %v1741
    %v1743 = vpop.f32.mrf.mxu0
    %v1744 = vadd.f32 %v1495, %v1743
    %1745 = vmatmul.bf16.gmra.mxu0 %v1057
    %v1746 = vpop.f32.mrf.mxu0
    %v1747 = vadd.f32 %v1498, %v1746
    %v1748 = vpop.f32.mrf.mxu0
    %v1749 = vadd.f32 %v1500, %v1748
    %1750 = vmatmul.bf16.gmra.mxu0 %v1060
    %v1751 = vpop.f32.mrf.mxu0
    %v1752 = vadd.f32 %v1503, %v1751
    %v1753 = vpop.f32.mrf.mxu0
    %v1754 = vadd.f32 %v1505, %v1753
    %1755 = vmatmul.bf16.gmra.mxu0 %v1063
    %v1756 = vpop.f32.mrf.mxu0
    %v1757 = vadd.f32 %v1508, %v1756
    %v1758 = vpop.f32.mrf.mxu0
    %v1759 = vadd.f32 %v1510, %v1758
    %1760 = vmatmul.bf16.gmra.mxu0 %v1066
    %v1761 = vpop.f32.mrf.mxu0
    %v1762 = vadd.f32 %v1513, %v1761
    %v1763 = vpop.f32.mrf.mxu0
    %v1764 = vadd.f32 %v1515, %v1763
    %1765 = vmatmul.bf16.gmra.mxu0 %v1069
    %v1766 = vpop.f32.mrf.mxu0
    %v1767 = vadd.f32 %v1518, %v1766
    %v1768 = vpop.f32.mrf.mxu0
    %v1769 = vadd.f32 %v1520, %v1768
    %1770 = vmatmul.bf16.gmra.mxu0 %v1072
    %v1771 = vpop.f32.mrf.mxu0
    %v1772 = vadd.f32 %v1523, %v1771
    %v1773 = vpop.f32.mrf.mxu0
    %v1774 = vadd.f32 %v1525, %v1773
    %1775 = vmatmul.bf16.gmra.mxu0 %v1075
    %v1776 = vpop.f32.mrf.mxu0
    %v1777 = vadd.f32 %v1528, %v1776
    %v1778 = vpop.f32.mrf.mxu0
    %v1779 = vadd.f32 %v1530, %v1778
    %1780 = vmatmul.bf16.gmra.mxu0 %v1078
    %v1781 = vpop.f32.mrf.mxu0
    %v1782 = vadd.f32 %v1533, %v1781
    %v1783 = vpop.f32.mrf.mxu0
    %v1784 = vadd.f32 %v1535, %v1783
    %1785 = vmatmul.bf16.gmra.mxu0 %v1081
    %v1786 = vpop.f32.mrf.mxu0
    %v1787 = vadd.f32 %v1538, %v1786
    %v1788 = vpop.f32.mrf.mxu0
    %v1789 = vadd.f32 %v1540, %v1788
    %1790 = vmatmul.bf16.gmra.mxu0 %v1084
    %v1791 = vpop.f32.mrf.mxu0
    %v1792 = vadd.f32 %v1543, %v1791
    %v1793 = vpop.f32.mrf.mxu0
    %v1794 = vadd.f32 %v1545, %v1793
    %1795 = vmatmul.bf16.gmra.mxu0 %v1087
    %v1796 = vpop.f32.mrf.mxu0
    %v1797 = vadd.f32 %v1548, %v1796
    %v1798 = vpop.f32.mrf.mxu0
    %v1799 = vadd.f32 %v1550, %v1798
    %1800 = vdwg.mxu0
    %1801 = vmatpush.bf16.msra.mxu0 %v1679
    %1802 = vmatpush.bf16.msra.mxu0 %v1678
    %1803 = vmatpush.bf16.msra.mxu0 %v1677
    %1804 = vmatpush.bf16.msra.mxu0 %v1676
    %1805 = vmatpush.bf16.msra.mxu0 %v1675
    %1806 = vmatpush.bf16.msra.mxu0 %v1674
    %1807 = vmatpush.bf16.msra.mxu0 %v1673
    %1808 = vmatpush.bf16.msra.mxu0 %v1672
    %1809 = vmatmul.bf16.gmra.mxu0 %v1563
    %v1810 = vpop.f32.mrf.mxu0
    %v1811 = vadd.f32 %v1722, %v1810
    %v1812 = vpop.f32.mrf.mxu0
    %v1813 = vadd.f32 %v1724, %v1812
    %1814 = vmatmul.bf16.gmra.mxu0 %v1046
    %v1815 = vpop.f32.mrf.mxu0
    %v1816 = vadd.f32 %v1727, %v1815
    %v1817 = vpop.f32.mrf.mxu0
    %v1818 = vadd.f32 %v1729, %v1817
    %1819 = vmatmul.bf16.gmra.mxu0 %v1049
    %v1820 = vpop.f32.mrf.mxu0
    %v1821 = vadd.f32 %v1732, %v1820
    %v1822 = vpop.f32.mrf.mxu0
    %v1823 = vadd.f32 %v1734, %v1822
    %1824 = vmatmul.bf16.gmra.mxu0 %v1052
    %v1825 = vpop.f32.mrf.mxu0
    %v1826 = vadd.f32 %v1737, %v1825
    %v1827 = vpop.f32.mrf.mxu0
    %v1828 = vadd.f32 %v1739, %v1827
    %1829 = vmatmul.bf16.gmra.mxu0 %v1055
    %v1830 = vpop.f32.mrf.mxu0
    %v1831 = vadd.f32 %v1742, %v1830
    %v1832 = vpop.f32.mrf.mxu0
    %v1833 = vadd.f32 %v1744, %v1832
    %1834 = vmatmul.bf16.gmra.mxu0 %v1058
    %v1835 = vpop.f32.mrf.mxu0
    %v1836 = vadd.f32 %v1747, %v1835
    %v1837 = vpop.f32.mrf.mxu0
    %v1838 = vadd.f32 %v1749, %v1837
    %1839 = vmatmul.bf16.gmra.mxu0 %v1061
    %v1840 = vpop.f32.mrf.mxu0
    %v1841 = vadd.f32 %v1752, %v1840
    %v1842 = vpop.f32.mrf.mxu0
    %v1843 = vadd.f32 %v1754, %v1842
    %1844 = vmatmul.bf16.gmra.mxu0 %v1064
    %v1845 = vpop.f32.mrf.mxu0
    %v1846 = vadd.f32 %v1757, %v1845
    %v1847 = vpop.f32.mrf.mxu0
    %v1848 = vadd.f32 %v1759, %v1847
    %1849 = vmatmul.bf16.gmra.mxu0 %v1067
    %v1850 = vpop.f32.mrf.mxu0
    %v1851 = vadd.f32 %v1762, %v1850
    %v1852 = vpop.f32.mrf.mxu0
    %v1853 = vadd.f32 %v1764, %v1852
    %1854 = vmatmul.bf16.gmra.mxu0 %v1070
    %v1855 = vpop.f32.mrf.mxu0
    %v1856 = vadd.f32 %v1767, %v1855
    %v1857 = vpop.f32.mrf.mxu0
    %v1858 = vadd.f32 %v1769, %v1857
    %1859 = vmatmul.bf16.gmra.mxu0 %v1073
    %v1860 = vpop.f32.mrf.mxu0
    %v1861 = vadd.f32 %v1772, %v1860
    %v1862 = vpop.f32.mrf.mxu0
    %v1863 = vadd.f32 %v1774, %v1862
    %1864 = vmatmul.bf16.gmra.mxu0 %v1076
    %v1865 = vpop.f32.mrf.mxu0
    %v1866 = vadd.f32 %v1777, %v1865
    %v1867 = vpop.f32.mrf.mxu0
    %v1868 = vadd.f32 %v1779, %v1867
    %1869 = vmatmul.bf16.gmra.mxu0 %v1079
    %v1870 = vpop.f32.mrf.mxu0
    %v1871 = vadd.f32 %v1782, %v1870
    %v1872 = vpop.f32.mrf.mxu0
    %v1873 = vadd.f32 %v1784, %v1872
    %1874 = vmatmul.bf16.gmra.mxu0 %v1082
    %v1875 = vpop.f32.mrf.mxu0
    %v1876 = vadd.f32 %v1787, %v1875
    %v1877 = vpop.f32.mrf.mxu0
    %v1878 = vadd.f32 %v1789, %v1877
    %1879 = vmatmul.bf16.gmra.mxu0 %v1085
    %v1880 = vpop.f32.mrf.mxu0
    %v1881 = vadd.f32 %v1792, %v1880
    %v1882 = vpop.f32.mrf.mxu0
    %v1883 = vadd.f32 %v1794, %v1882
    %1884 = vmatmul.bf16.gmra.mxu0 %v1088
    %v1885 = vpop.f32.mrf.mxu0
    %v1886 = vadd.f32 %v1797, %v1885
    %v1887 = vpop.f32.mrf.mxu0
    %v1888 = vadd.f32 %v1799, %v1887
    %1889 = vdwg.mxu0
    %1890 = vmatpush.bf16.msra.mxu0 %v1687
    %1891 = vmatpush.bf16.msra.mxu0 %v1686
    %1892 = vmatpush.bf16.msra.mxu0 %v1685
    %1893 = vmatpush.bf16.msra.mxu0 %v1684
    %1894 = vmatpush.bf16.msra.mxu0 %v1683
    %1895 = vmatpush.bf16.msra.mxu0 %v1682
    %1896 = vmatpush.bf16.msra.mxu0 %v1681
    %1897 = vmatpush.bf16.msra.mxu0 %v1680
    %1898 = vmatmul.bf16.gmra.mxu0 %v1564
    %v1899 = vpop.f32.mrf.mxu0
    %v1900 = vadd.f32 %v1811, %v1899
    %v1901 = vpop.f32.mrf.mxu0
    %v1902 = vadd.f32 %v1813, %v1901
    %1903 = vmatmul.bf16.gmra.mxu0 %v1047
    %v1904 = vpop.f32.mrf.mxu0
    %v1905 = vadd.f32 %v1816, %v1904
    %v1906 = vpop.f32.mrf.mxu0
    %v1907 = vadd.f32 %v1818, %v1906
    %1908 = vmatmul.bf16.gmra.mxu0 %v1050
    %v1909 = vpop.f32.mrf.mxu0
    %v1910 = vadd.f32 %v1821, %v1909
    %v1911 = vpop.f32.mrf.mxu0
    %v1912 = vadd.f32 %v1823, %v1911
    %1913 = vmatmul.bf16.gmra.mxu0 %v1053
    %v1914 = vpop.f32.mrf.mxu0
    %v1915 = vadd.f32 %v1826, %v1914
    %v1916 = vpop.f32.mrf.mxu0
    %v1917 = vadd.f32 %v1828, %v1916
    %1918 = vmatmul.bf16.gmra.mxu0 %v1056
    %v1919 = vpop.f32.mrf.mxu0
    %v1920 = vadd.f32 %v1831, %v1919
    %v1921 = vpop.f32.mrf.mxu0
    %v1922 = vadd.f32 %v1833, %v1921
    %1923 = vmatmul.bf16.gmra.mxu0 %v1059
    %v1924 = vpop.f32.mrf.mxu0
    %v1925 = vadd.f32 %v1836, %v1924
    %v1926 = vpop.f32.mrf.mxu0
    %v1927 = vadd.f32 %v1838, %v1926
    %1928 = vmatmul.bf16.gmra.mxu0 %v1062
    %v1929 = vpop.f32.mrf.mxu0
    %v1930 = vadd.f32 %v1841, %v1929
    %v1931 = vpop.f32.mrf.mxu0
    %v1932 = vadd.f32 %v1843, %v1931
    %1933 = vmatmul.bf16.gmra.mxu0 %v1065
    %v1934 = vpop.f32.mrf.mxu0
    %v1935 = vadd.f32 %v1846, %v1934
    %v1936 = vpop.f32.mrf.mxu0
    %v1937 = vadd.f32 %v1848, %v1936
    %1938 = vmatmul.bf16.gmra.mxu0 %v1068
    %v1939 = vpop.f32.mrf.mxu0
    %v1940 = vadd.f32 %v1851, %v1939
    %v1941 = vpop.f32.mrf.mxu0
    %v1942 = vadd.f32 %v1853, %v1941
    %1943 = vmatmul.bf16.gmra.mxu0 %v1071
    %v1944 = vpop.f32.mrf.mxu0
    %v1945 = vadd.f32 %v1856, %v1944
    %v1946 = vpop.f32.mrf.mxu0
    %v1947 = vadd.f32 %v1858, %v1946
    %1948 = vmatmul.bf16.gmra.mxu0 %v1074
    %v1949 = vpop.f32.mrf.mxu0
    %v1950 = vadd.f32 %v1861, %v1949
    %v1951 = vpop.f32.mrf.mxu0
    %v1952 = vadd.f32 %v1863, %v1951
    %1953 = vmatmul.bf16.gmra.mxu0 %v1077
    %v1954 = vpop.f32.mrf.mxu0
    %v1955 = vadd.f32 %v1866, %v1954
    %v1956 = vpop.f32.mrf.mxu0
    %v1957 = vadd.f32 %v1868, %v1956
    %1958 = vmatmul.bf16.gmra.mxu0 %v1080
    %v1959 = vpop.f32.mrf.mxu0
    %v1960 = vadd.f32 %v1871, %v1959
    %v1961 = vpop.f32.mrf.mxu0
    %v1962 = vadd.f32 %v1873, %v1961
    %1963 = vmatmul.bf16.gmra.mxu0 %v1083
    %v1964 = vpop.f32.mrf.mxu0
    %v1965 = vadd.f32 %v1876, %v1964
    %v1966 = vpop.f32.mrf.mxu0
    %v1967 = vadd.f32 %v1878, %v1966
    %1968 = vmatmul.bf16.gmra.mxu0 %v1086
    %v1969 = vpop.f32.mrf.mxu0
    %v1970 = vadd.f32 %v1881, %v1969
    %v1971 = vpop.f32.mrf.mxu0
    %v1972 = vadd.f32 %v1883, %v1971
    %1973 = vmatmul.bf16.gmra.mxu0 %v1089
    %v1974 = vpop.f32.mrf.mxu0
    %v1975 = vadd.f32 %v1886, %v1974
    %v1976 = vpop.f32.mrf.mxu0
    %v1977 = vadd.f32 %v1888, %v1976
    %1978 = vdwg.mxu0
    %s1979 = scalar_lea.vmem %s1, 384
    %v1980 = vld [vmem:[%s1979] sm:$0xf]
    %v1981 = vld [vmem:[%s1979 + $0x4] sm:$0xf]
    %v1982 = vld [vmem:[%s1979 + $0x8] sm:$0xf]
    %v1983 = vld [vmem:[%s1979 + $0xc] sm:$0xf]
    %v1984 = vld [vmem:[%s1979 + $0x10] sm:$0xf]
    %v1985 = vld [vmem:[%s1979 + $0x14] sm:$0xf]
    %v1986 = vld [vmem:[%s1979 + $0x18] sm:$0xf]
    %v1987 = vld [vmem:[%s1979 + $0x1c] sm:$0xf]
    %v1988 = vld [vmem:[%s1979 + $0x20] sm:$0xf]
    %v1989 = vld [vmem:[%s1979 + $0x24] sm:$0xf]
    %v1990 = vld [vmem:[%s1979 + $0x28] sm:$0xf]
    %v1991 = vld [vmem:[%s1979 + $0x2c] sm:$0xf]
    %v1992 = vld [vmem:[%s1979 + $0x30] sm:$0xf]
    %v1993 = vld [vmem:[%s1979 + $0x34] sm:$0xf]
    %v1994 = vld [vmem:[%s1979 + $0x38] sm:$0xf]
    %v1995 = vld [vmem:[%s1979 + $0x3c] sm:$0xf]
    %v1996 = vld [vmem:[%s1979 + $0x40] sm:$0xf]
    %v1997 = vld [vmem:[%s1979 + $0x44] sm:$0xf]
    %v1998 = vld [vmem:[%s1979 + $0x48] sm:$0xf]
    %v1999 = vld [vmem:[%s1979 + $0x4c] sm:$0xf]
    %v2000 = vld [vmem:[%s1979 + $0x50] sm:$0xf]
    %v2001 = vld [vmem:[%s1979 + $0x54] sm:$0xf]
    %v2002 = vld [vmem:[%s1979 + $0x58] sm:$0xf]
    %v2003 = vld [vmem:[%s1979 + $0x5c] sm:$0xf]
    %v2004 = vld [vmem:[%s1979 + $0x60] sm:$0xf]
    %v2005 = vld [vmem:[%s1979 + $0x64] sm:$0xf]
    %v2006 = vld [vmem:[%s1979 + $0x68] sm:$0xf]
    %v2007 = vld [vmem:[%s1979 + $0x6c] sm:$0xf]
    %v2008 = vld [vmem:[%s1979 + $0x70] sm:$0xf]
    %v2009 = vld [vmem:[%s1979 + $0x74] sm:$0xf]
    %v2010 = vld [vmem:[%s1979 + $0x78] sm:$0xf]
    %v2011 = vld [vmem:[%s1979 + $0x7c] sm:$0xf]
    %v2012 = vld [vmem:[%s1979 + $0x80] sm:$0xf]
    %v2013 = vld [vmem:[%s1979 + $0x84] sm:$0xf]
    %v2014 = vld [vmem:[%s1979 + $0x88] sm:$0xf]
    %v2015 = vld [vmem:[%s1979 + $0x8c] sm:$0xf]
    %v2016 = vld [vmem:[%s1979 + $0x90] sm:$0xf]
    %v2017 = vld [vmem:[%s1979 + $0x94] sm:$0xf]
    %v2018 = vld [vmem:[%s1979 + $0x98] sm:$0xf]
    %v2019 = vld [vmem:[%s1979 + $0x9c] sm:$0xf]
    %v2020 = vld [vmem:[%s1979 + $0xa0] sm:$0xf]
    %v2021 = vld [vmem:[%s1979 + $0xa4] sm:$0xf]
    %v2022 = vld [vmem:[%s1979 + $0xa8] sm:$0xf]
    %v2023 = vld [vmem:[%s1979 + $0xac] sm:$0xf]
    %v2024 = vld [vmem:[%s1979 + $0xb0] sm:$0xf]
    %v2025 = vld [vmem:[%s1979 + $0xb4] sm:$0xf]
    %v2026 = vld [vmem:[%s1979 + $0xb8] sm:$0xf]
    %v2027 = vld [vmem:[%s1979 + $0xbc] sm:$0xf]
    %v2032 = vunpack.c.l.b16 %v784
    %v2033 = vunpack.c.h.b16 %v784
    %v2034 = vunpack.c.l.b16 %v785
    %v2035 = vunpack.c.l.b16 %v786
    %v2036 = vunpack.c.h.b16 %v786
    %v2037 = vunpack.c.l.b16 %v787
    %v2038 = vpack.c.b16 %v2035, %v2032
    %v2039 = vpack.c.b16 %v2036, %v2033
    %v2040 = vpack.c.b16 %v2037, %v2034
    %v2092 = vunpack.c.l.b16 %v1980
    %v2093 = vunpack.c.l.b16 %v1981
    %v2094 = vunpack.c.l.b16 %v1982
    %v2095 = vunpack.c.l.b16 %v1983
    %v2096 = vunpack.c.l.b16 %v1984
    %v2097 = vunpack.c.l.b16 %v1985
    %v2098 = vunpack.c.l.b16 %v1986
    %v2099 = vunpack.c.l.b16 %v1987
    %v2100 = vunpack.c.l.b16 %v1988
    %v2101 = vunpack.c.l.b16 %v1989
    %v2102 = vunpack.c.l.b16 %v1990
    %v2103 = vunpack.c.l.b16 %v1991
    %v2104 = vunpack.c.l.b16 %v1992
    %v2105 = vunpack.c.l.b16 %v1993
    %v2106 = vunpack.c.l.b16 %v1994
    %v2107 = vunpack.c.l.b16 %v1995
    %v2108 = vunpack.c.l.b16 %v1996
    %v2109 = vunpack.c.l.b16 %v1997
    %v2110 = vunpack.c.l.b16 %v1998
    %v2111 = vunpack.c.l.b16 %v1999
    %v2112 = vunpack.c.l.b16 %v2000
    %v2113 = vunpack.c.l.b16 %v2001
    %v2114 = vunpack.c.l.b16 %v2002
    %v2115 = vunpack.c.l.b16 %v2003
    %v2116 = vunpack.c.l.b16 %v2004
    %v2117 = vunpack.c.l.b16 %v2005
    %v2118 = vunpack.c.l.b16 %v2006
    %v2119 = vunpack.c.l.b16 %v2007
    %v2120 = vunpack.c.l.b16 %v2008
    %v2121 = vunpack.c.l.b16 %v2009
    %v2122 = vunpack.c.l.b16 %v2010
    %v2123 = vunpack.c.l.b16 %v2011
    %v2124 = vunpack.c.l.b16 %v2012
    %v2125 = vunpack.c.l.b16 %v2013
    %v2126 = vunpack.c.l.b16 %v2014
    %v2127 = vunpack.c.l.b16 %v2015
    %v2128 = vunpack.c.l.b16 %v2016
    %v2129 = vunpack.c.l.b16 %v2017
    %v2130 = vunpack.c.l.b16 %v2018
    %v2131 = vunpack.c.l.b16 %v2019
    %v2132 = vunpack.c.l.b16 %v2020
    %v2133 = vunpack.c.l.b16 %v2021
    %v2134 = vunpack.c.l.b16 %v2022
    %v2135 = vunpack.c.l.b16 %v2023
    %v2136 = vunpack.c.l.b16 %v2024
    %v2137 = vunpack.c.l.b16 %v2025
    %v2138 = vunpack.c.l.b16 %v2026
    %v2139 = vunpack.c.l.b16 %v2027
    %v2140 = vpack.c.b16 %v2093, %v2092
    %v2141 = vpack.c.b16 %v2095, %v2094
    %v2142 = vpack.c.b16 %v2097, %v2096
    %v2143 = vpack.c.b16 %v2099, %v2098
    %v2144 = vpack.c.b16 %v2101, %v2100
    %v2145 = vpack.c.b16 %v2103, %v2102
    %v2146 = vpack.c.b16 %v2105, %v2104
    %v2147 = vpack.c.b16 %v2107, %v2106
    %v2148 = vpack.c.b16 %v2109, %v2108
    %v2149 = vpack.c.b16 %v2111, %v2110
    %v2150 = vpack.c.b16 %v2113, %v2112
    %v2151 = vpack.c.b16 %v2115, %v2114
    %v2152 = vpack.c.b16 %v2117, %v2116
    %v2153 = vpack.c.b16 %v2119, %v2118
    %v2154 = vpack.c.b16 %v2121, %v2120
    %v2155 = vpack.c.b16 %v2123, %v2122
    %v2156 = vpack.c.b16 %v2125, %v2124
    %v2157 = vpack.c.b16 %v2127, %v2126
    %v2158 = vpack.c.b16 %v2129, %v2128
    %v2159 = vpack.c.b16 %v2131, %v2130
    %v2160 = vpack.c.b16 %v2133, %v2132
    %v2161 = vpack.c.b16 %v2135, %v2134
    %v2162 = vpack.c.b16 %v2137, %v2136
    %v2163 = vpack.c.b16 %v2139, %v2138
    %2188 = vmatpush.bf16.msra.mxu0 %v2147
    %2189 = vmatpush.bf16.msra.mxu0 %v2146
    %2190 = vmatpush.bf16.msra.mxu0 %v2145
    %2191 = vmatpush.bf16.msra.mxu0 %v2144
    %2192 = vmatpush.bf16.msra.mxu0 %v2143
    %2193 = vmatpush.bf16.msra.mxu0 %v2142
    %2194 = vmatpush.bf16.msra.mxu0 %v2141
    %2195 = vmatpush.bf16.msra.mxu0 %v2140
    %2196 = vmatmul.bf16.gmra.mxu0 %v1048
    %v2197 = vpop.f32.mrf.mxu0
    %v2198 = vadd.f32 0.0, %v2197
    %v2199 = vpop.f32.mrf.mxu0
    %v2200 = vadd.f32 0.0, %v2199
    %2201 = vmatmul.bf16.gmra.mxu0 %v1051
    %v2202 = vpop.f32.mrf.mxu0
    %v2203 = vadd.f32 0.0, %v2202
    %v2204 = vpop.f32.mrf.mxu0
    %v2205 = vadd.f32 0.0, %v2204
    %2206 = vmatmul.bf16.gmra.mxu0 %v1054
    %v2207 = vpop.f32.mrf.mxu0
    %v2208 = vadd.f32 0.0, %v2207
    %v2209 = vpop.f32.mrf.mxu0
    %v2210 = vadd.f32 0.0, %v2209
    %2211 = vmatmul.bf16.gmra.mxu0 %v1057
    %v2212 = vpop.f32.mrf.mxu0
    %v2213 = vadd.f32 0.0, %v2212
    %v2214 = vpop.f32.mrf.mxu0
    %v2215 = vadd.f32 0.0, %v2214
    %2216 = vmatmul.bf16.gmra.mxu0 %v1060
    %v2217 = vpop.f32.mrf.mxu0
    %v2218 = vadd.f32 0.0, %v2217
    %v2219 = vpop.f32.mrf.mxu0
    %v2220 = vadd.f32 0.0, %v2219
    %2221 = vmatmul.bf16.gmra.mxu0 %v1063
    %v2222 = vpop.f32.mrf.mxu0
    %v2223 = vadd.f32 0.0, %v2222
    %v2224 = vpop.f32.mrf.mxu0
    %v2225 = vadd.f32 0.0, %v2224
    %2226 = vmatmul.bf16.gmra.mxu0 %v1066
    %v2227 = vpop.f32.mrf.mxu0
    %v2228 = vadd.f32 0.0, %v2227
    %v2229 = vpop.f32.mrf.mxu0
    %v2230 = vadd.f32 0.0, %v2229
    %2231 = vmatmul.bf16.gmra.mxu0 %v1069
    %v2232 = vpop.f32.mrf.mxu0
    %v2233 = vadd.f32 0.0, %v2232
    %v2234 = vpop.f32.mrf.mxu0
    %v2235 = vadd.f32 0.0, %v2234
    %2236 = vmatmul.bf16.gmra.mxu0 %v1072
    %v2237 = vpop.f32.mrf.mxu0
    %v2238 = vadd.f32 0.0, %v2237
    %v2239 = vpop.f32.mrf.mxu0
    %v2240 = vadd.f32 0.0, %v2239
    %2241 = vmatmul.bf16.gmra.mxu0 %v1075
    %v2242 = vpop.f32.mrf.mxu0
    %v2243 = vadd.f32 0.0, %v2242
    %v2244 = vpop.f32.mrf.mxu0
    %v2245 = vadd.f32 0.0, %v2244
    %2246 = vmatmul.bf16.gmra.mxu0 %v1078
    %v2247 = vpop.f32.mrf.mxu0
    %v2248 = vadd.f32 0.0, %v2247
    %v2249 = vpop.f32.mrf.mxu0
    %v2250 = vadd.f32 0.0, %v2249
    %2251 = vmatmul.bf16.gmra.mxu0 %v1081
    %v2252 = vpop.f32.mrf.mxu0
    %v2253 = vadd.f32 0.0, %v2252
    %v2254 = vpop.f32.mrf.mxu0
    %v2255 = vadd.f32 0.0, %v2254
    %2256 = vmatmul.bf16.gmra.mxu0 %v1084
    %v2257 = vpop.f32.mrf.mxu0
    %v2258 = vadd.f32 0.0, %v2257
    %v2259 = vpop.f32.mrf.mxu0
    %v2260 = vadd.f32 0.0, %v2259
    %2261 = vmatmul.bf16.gmra.mxu0 %v1087
    %v2262 = vpop.f32.mrf.mxu0
    %v2263 = vadd.f32 0.0, %v2262
    %v2264 = vpop.f32.mrf.mxu0
    %v2265 = vadd.f32 0.0, %v2264
    %2266 = vmatmul.bf16.gmra.mxu0 %v1090
    %v2267 = vpop.f32.mrf.mxu0
    %v2268 = vadd.f32 0.0, %v2267
    %v2269 = vpop.f32.mrf.mxu0
    %v2270 = vadd.f32 0.0, %v2269
    %2271 = vmatmul.bf16.gmra.mxu0 %v2038
    %v2272 = vpop.f32.mrf.mxu0
    %v2273 = vadd.f32 0.0, %v2272
    %v2274 = vpop.f32.mrf.mxu0
    %v2275 = vadd.f32 0.0, %v2274
    %2276 = vdwg.mxu0
    %2277 = vmatpush.bf16.msra.mxu0 %v2155
    %2278 = vmatpush.bf16.msra.mxu0 %v2154
    %2279 = vmatpush.bf16.msra.mxu0 %v2153
    %2280 = vmatpush.bf16.msra.mxu0 %v2152
    %2281 = vmatpush.bf16.msra.mxu0 %v2151
    %2282 = vmatpush.bf16.msra.mxu0 %v2150
    %2283 = vmatpush.bf16.msra.mxu0 %v2149
    %2284 = vmatpush.bf16.msra.mxu0 %v2148
    %2285 = vmatmul.bf16.gmra.mxu0 %v1049
    %v2286 = vpop.f32.mrf.mxu0
    %v2287 = vadd.f32 %v2198, %v2286
    %v2288 = vpop.f32.mrf.mxu0
    %v2289 = vadd.f32 %v2200, %v2288
    %2290 = vmatmul.bf16.gmra.mxu0 %v1052
    %v2291 = vpop.f32.mrf.mxu0
    %v2292 = vadd.f32 %v2203, %v2291
    %v2293 = vpop.f32.mrf.mxu0
    %v2294 = vadd.f32 %v2205, %v2293
    %2295 = vmatmul.bf16.gmra.mxu0 %v1055
    %v2296 = vpop.f32.mrf.mxu0
    %v2297 = vadd.f32 %v2208, %v2296
    %v2298 = vpop.f32.mrf.mxu0
    %v2299 = vadd.f32 %v2210, %v2298
    %2300 = vmatmul.bf16.gmra.mxu0 %v1058
    %v2301 = vpop.f32.mrf.mxu0
    %v2302 = vadd.f32 %v2213, %v2301
    %v2303 = vpop.f32.mrf.mxu0
    %v2304 = vadd.f32 %v2215, %v2303
    %2305 = vmatmul.bf16.gmra.mxu0 %v1061
    %v2306 = vpop.f32.mrf.mxu0
    %v2307 = vadd.f32 %v2218, %v2306
    %v2308 = vpop.f32.mrf.mxu0
    %v2309 = vadd.f32 %v2220, %v2308
    %2310 = vmatmul.bf16.gmra.mxu0 %v1064
    %v2311 = vpop.f32.mrf.mxu0
    %v2312 = vadd.f32 %v2223, %v2311
    %v2313 = vpop.f32.mrf.mxu0
    %v2314 = vadd.f32 %v2225, %v2313
    %2315 = vmatmul.bf16.gmra.mxu0 %v1067
    %v2316 = vpop.f32.mrf.mxu0
    %v2317 = vadd.f32 %v2228, %v2316
    %v2318 = vpop.f32.mrf.mxu0
    %v2319 = vadd.f32 %v2230, %v2318
    %2320 = vmatmul.bf16.gmra.mxu0 %v1070
    %v2321 = vpop.f32.mrf.mxu0
    %v2322 = vadd.f32 %v2233, %v2321
    %v2323 = vpop.f32.mrf.mxu0
    %v2324 = vadd.f32 %v2235, %v2323
    %2325 = vmatmul.bf16.gmra.mxu0 %v1073
    %v2326 = vpop.f32.mrf.mxu0
    %v2327 = vadd.f32 %v2238, %v2326
    %v2328 = vpop.f32.mrf.mxu0
    %v2329 = vadd.f32 %v2240, %v2328
    %2330 = vmatmul.bf16.gmra.mxu0 %v1076
    %v2331 = vpop.f32.mrf.mxu0
    %v2332 = vadd.f32 %v2243, %v2331
    %v2333 = vpop.f32.mrf.mxu0
    %v2334 = vadd.f32 %v2245, %v2333
    %2335 = vmatmul.bf16.gmra.mxu0 %v1079
    %v2336 = vpop.f32.mrf.mxu0
    %v2337 = vadd.f32 %v2248, %v2336
    %v2338 = vpop.f32.mrf.mxu0
    %v2339 = vadd.f32 %v2250, %v2338
    %2340 = vmatmul.bf16.gmra.mxu0 %v1082
    %v2341 = vpop.f32.mrf.mxu0
    %v2342 = vadd.f32 %v2253, %v2341
    %v2343 = vpop.f32.mrf.mxu0
    %v2344 = vadd.f32 %v2255, %v2343
    %2345 = vmatmul.bf16.gmra.mxu0 %v1085
    %v2346 = vpop.f32.mrf.mxu0
    %v2347 = vadd.f32 %v2258, %v2346
    %v2348 = vpop.f32.mrf.mxu0
    %v2349 = vadd.f32 %v2260, %v2348
    %2350 = vmatmul.bf16.gmra.mxu0 %v1088
    %v2351 = vpop.f32.mrf.mxu0
    %v2352 = vadd.f32 %v2263, %v2351
    %v2353 = vpop.f32.mrf.mxu0
    %v2354 = vadd.f32 %v2265, %v2353
    %2355 = vmatmul.bf16.gmra.mxu0 %v1091
    %v2356 = vpop.f32.mrf.mxu0
    %v2357 = vadd.f32 %v2268, %v2356
    %v2358 = vpop.f32.mrf.mxu0
    %v2359 = vadd.f32 %v2270, %v2358
    %2360 = vmatmul.bf16.gmra.mxu0 %v2039
    %v2361 = vpop.f32.mrf.mxu0
    %v2362 = vadd.f32 %v2273, %v2361
    %v2363 = vpop.f32.mrf.mxu0
    %v2364 = vadd.f32 %v2275, %v2363
    %2365 = vdwg.mxu0
    %2366 = vmatpush.bf16.msra.mxu0 %v2163
    %2367 = vmatpush.bf16.msra.mxu0 %v2162
    %2368 = vmatpush.bf16.msra.mxu0 %v2161
    %2369 = vmatpush.bf16.msra.mxu0 %v2160
    %2370 = vmatpush.bf16.msra.mxu0 %v2159
    %2371 = vmatpush.bf16.msra.mxu0 %v2158
    %2372 = vmatpush.bf16.msra.mxu0 %v2157
    %2373 = vmatpush.bf16.msra.mxu0 %v2156
    %2374 = vmatmul.bf16.gmra.mxu0 %v1050
    %v2375 = vpop.f32.mrf.mxu0
    %v2376 = vadd.f32 %v2287, %v2375
    %v2377 = vpop.f32.mrf.mxu0
    %v2378 = vadd.f32 %v2289, %v2377
    %2379 = vmatmul.bf16.gmra.mxu0 %v1053
    %v2380 = vpop.f32.mrf.mxu0
    %v2381 = vadd.f32 %v2292, %v2380
    %v2382 = vpop.f32.mrf.mxu0
    %v2383 = vadd.f32 %v2294, %v2382
    %2384 = vmatmul.bf16.gmra.mxu0 %v1056
    %v2385 = vpop.f32.mrf.mxu0
    %v2386 = vadd.f32 %v2297, %v2385
    %v2387 = vpop.f32.mrf.mxu0
    %v2388 = vadd.f32 %v2299, %v2387
    %2389 = vmatmul.bf16.gmra.mxu0 %v1059
    %v2390 = vpop.f32.mrf.mxu0
    %v2391 = vadd.f32 %v2302, %v2390
    %v2392 = vpop.f32.mrf.mxu0
    %v2393 = vadd.f32 %v2304, %v2392
    %2394 = vmatmul.bf16.gmra.mxu0 %v1062
    %v2395 = vpop.f32.mrf.mxu0
    %v2396 = vadd.f32 %v2307, %v2395
    %v2397 = vpop.f32.mrf.mxu0
    %v2398 = vadd.f32 %v2309, %v2397
    %2399 = vmatmul.bf16.gmra.mxu0 %v1065
    %v2400 = vpop.f32.mrf.mxu0
    %v2401 = vadd.f32 %v2312, %v2400
    %v2402 = vpop.f32.mrf.mxu0
    %v2403 = vadd.f32 %v2314, %v2402
    %2404 = vmatmul.bf16.gmra.mxu0 %v1068
    %v2405 = vpop.f32.mrf.mxu0
    %v2406 = vadd.f32 %v2317, %v2405
    %v2407 = vpop.f32.mrf.mxu0
    %v2408 = vadd.f32 %v2319, %v2407
    %2409 = vmatmul.bf16.gmra.mxu0 %v1071
    %v2410 = vpop.f32.mrf.mxu0
    %v2411 = vadd.f32 %v2322, %v2410
    %v2412 = vpop.f32.mrf.mxu0
    %v2413 = vadd.f32 %v2324, %v2412
    %2414 = vmatmul.bf16.gmra.mxu0 %v1074
    %v2415 = vpop.f32.mrf.mxu0
    %v2416 = vadd.f32 %v2327, %v2415
    %v2417 = vpop.f32.mrf.mxu0
    %v2418 = vadd.f32 %v2329, %v2417
    %2419 = vmatmul.bf16.gmra.mxu0 %v1077
    %v2420 = vpop.f32.mrf.mxu0
    %v2421 = vadd.f32 %v2332, %v2420
    %v2422 = vpop.f32.mrf.mxu0
    %v2423 = vadd.f32 %v2334, %v2422
    %2424 = vmatmul.bf16.gmra.mxu0 %v1080
    %v2425 = vpop.f32.mrf.mxu0
    %v2426 = vadd.f32 %v2337, %v2425
    %v2427 = vpop.f32.mrf.mxu0
    %v2428 = vadd.f32 %v2339, %v2427
    %2429 = vmatmul.bf16.gmra.mxu0 %v1083
    %v2430 = vpop.f32.mrf.mxu0
    %v2431 = vadd.f32 %v2342, %v2430
    %v2432 = vpop.f32.mrf.mxu0
    %v2433 = vadd.f32 %v2344, %v2432
    %2434 = vmatmul.bf16.gmra.mxu0 %v1086
    %v2435 = vpop.f32.mrf.mxu0
    %v2436 = vadd.f32 %v2347, %v2435
    %v2437 = vpop.f32.mrf.mxu0
    %v2438 = vadd.f32 %v2349, %v2437
    %2439 = vmatmul.bf16.gmra.mxu0 %v1089
    %v2440 = vpop.f32.mrf.mxu0
    %v2441 = vadd.f32 %v2352, %v2440
    %v2442 = vpop.f32.mrf.mxu0
    %v2443 = vadd.f32 %v2354, %v2442
    %2444 = vmatmul.bf16.gmra.mxu0 %v1092
    %v2445 = vpop.f32.mrf.mxu0
    %v2446 = vadd.f32 %v2357, %v2445
    %v2447 = vpop.f32.mrf.mxu0
    %v2448 = vadd.f32 %v2359, %v2447
    %2449 = vmatmul.bf16.gmra.mxu0 %v2040
    %v2450 = vpop.f32.mrf.mxu0
    %v2451 = vadd.f32 %v2362, %v2450
    %v2452 = vpop.f32.mrf.mxu0
    %v2453 = vadd.f32 %v2364, %v2452
    %2454 = vdwg.mxu0
    %v2455 = vadd.f32 %v1900, %v2376
    %v2456 = vadd.f32 %v1902, %v2378
    %v2457 = vadd.f32 %v1905, %v2381
    %v2458 = vadd.f32 %v1907, %v2383
    %v2459 = vadd.f32 %v1910, %v2386
    %v2460 = vadd.f32 %v1912, %v2388
    %v2461 = vadd.f32 %v1915, %v2391
    %v2462 = vadd.f32 %v1917, %v2393
    %v2463 = vadd.f32 %v1920, %v2396
    %v2464 = vadd.f32 %v1922, %v2398
    %v2465 = vadd.f32 %v1925, %v2401
    %v2466 = vadd.f32 %v1927, %v2403
    %v2467 = vadd.f32 %v1930, %v2406
    %v2468 = vadd.f32 %v1932, %v2408
    %v2469 = vadd.f32 %v1935, %v2411
    %v2470 = vadd.f32 %v1937, %v2413
    %v2471 = vadd.f32 %v1940, %v2416
    %v2472 = vadd.f32 %v1942, %v2418
    %v2473 = vadd.f32 %v1945, %v2421
    %v2474 = vadd.f32 %v1947, %v2423
    %v2475 = vadd.f32 %v1950, %v2426
    %v2476 = vadd.f32 %v1952, %v2428
    %v2477 = vadd.f32 %v1955, %v2431
    %v2478 = vadd.f32 %v1957, %v2433
    %v2479 = vadd.f32 %v1960, %v2436
    %v2480 = vadd.f32 %v1962, %v2438
    %v2481 = vadd.f32 %v1965, %v2441
    %v2482 = vadd.f32 %v1967, %v2443
    %v2483 = vadd.f32 %v1970, %v2446
    %v2484 = vadd.f32 %v1972, %v2448
    %v2485 = vadd.f32 %v1975, %v2451
    %v2486 = vadd.f32 %v1977, %v2453
    %v2487 = vadd.f32 %v2455, %v2456
    %v2488 = vadd.f32 %v2487, %v2457
    %v2489 = vadd.f32 %v2488, %v2458
    %v2490 = vadd.f32 %v2489, %v2459
    %v2491 = vadd.f32 %v2490, %v2460
    %v2492 = vadd.f32 %v2491, %v2461
    %v2493 = vadd.f32 %v2492, %v2462
    %v2494 = vadd.f32 %v2493, %v2463
    %v2495 = vadd.f32 %v2494, %v2464
    %v2496 = vadd.f32 %v2495, %v2465
    %v2497 = vadd.f32 %v2496, %v2466
    %v2498 = vadd.f32 %v2497, %v2467
    %v2499 = vadd.f32 %v2498, %v2468
    %v2500 = vadd.f32 %v2499, %v2469
    %v2501 = vadd.f32 %v2500, %v2470
    %v2502 = vadd.f32 %v2501, %v2471
    %v2503 = vadd.f32 %v2502, %v2472
    %v2504 = vadd.f32 %v2503, %v2473
    %v2505 = vadd.f32 %v2504, %v2474
    %v2506 = vadd.f32 %v2505, %v2475
    %v2507 = vadd.f32 %v2506, %v2476
    %v2508 = vadd.f32 %v2507, %v2477
    %v2509 = vadd.f32 %v2508, %v2478
    %v2510 = vadd.f32 %v2509, %v2479
    %v2511 = vadd.f32 %v2510, %v2480
    %v2512 = vadd.f32 %v2511, %v2481
    %v2513 = vadd.f32 %v2512, %v2482
    %v2514 = vadd.f32 %v2513, %v2483
    %v2515 = vadd.f32 %v2514, %v2484
    %v2516 = vadd.f32 %v2515, %v2485
    %v2517 = vadd.f32 %v2516, %v2486
    %v2518 = vrot.slane %v2517, 4
    %v2519 = vadd.f32 %v2517, %v2518
    %v2520 = vrot.slane %v2519, 2
    %v2521 = vadd.f32 %v2519, %v2520
    %v2522 = vrot.slane %v2521, 1
    %v2523 = vadd.f32 %v2521, %v2522
    %v2524 = vmul.f32 %v2523, 0.00390625
    %v2525 = vmul.f32 %v2455, %v2455
    %v2526 = vmul.f32 %v2456, %v2456
    %v2527 = vmul.f32 %v2457, %v2457
    %v2528 = vmul.f32 %v2458, %v2458
    %v2529 = vmul.f32 %v2459, %v2459
    %v2530 = vmul.f32 %v2460, %v2460
    %v2531 = vmul.f32 %v2461, %v2461
    %v2532 = vmul.f32 %v2462, %v2462
    %v2533 = vmul.f32 %v2463, %v2463
    %v2534 = vmul.f32 %v2464, %v2464
    %v2535 = vmul.f32 %v2465, %v2465
    %v2536 = vmul.f32 %v2466, %v2466
    %v2537 = vmul.f32 %v2467, %v2467
    %v2538 = vmul.f32 %v2468, %v2468
    %v2539 = vmul.f32 %v2469, %v2469
    %v2540 = vmul.f32 %v2470, %v2470
    %v2541 = vmul.f32 %v2471, %v2471
    %v2542 = vmul.f32 %v2472, %v2472
    %v2543 = vmul.f32 %v2473, %v2473
    %v2544 = vmul.f32 %v2474, %v2474
    %v2545 = vmul.f32 %v2475, %v2475
    %v2546 = vmul.f32 %v2476, %v2476
    %v2547 = vmul.f32 %v2477, %v2477
    %v2548 = vmul.f32 %v2478, %v2478
    %v2549 = vmul.f32 %v2479, %v2479
    %v2550 = vmul.f32 %v2480, %v2480
    %v2551 = vmul.f32 %v2481, %v2481
    %v2552 = vmul.f32 %v2482, %v2482
    %v2553 = vmul.f32 %v2483, %v2483
    %v2554 = vmul.f32 %v2484, %v2484
    %v2555 = vmul.f32 %v2485, %v2485
    %v2556 = vmul.f32 %v2486, %v2486
    %v2557 = vadd.f32 %v2525, %v2526
    %v2558 = vadd.f32 %v2557, %v2527
    %v2559 = vadd.f32 %v2558, %v2528
    %v2560 = vadd.f32 %v2559, %v2529
    %v2561 = vadd.f32 %v2560, %v2530
    %v2562 = vadd.f32 %v2561, %v2531
    %v2563 = vadd.f32 %v2562, %v2532
    %v2564 = vadd.f32 %v2563, %v2533
    %v2565 = vadd.f32 %v2564, %v2534
    %v2566 = vadd.f32 %v2565, %v2535
    %v2567 = vadd.f32 %v2566, %v2536
    %v2568 = vadd.f32 %v2567, %v2537
    %v2569 = vadd.f32 %v2568, %v2538
    %v2570 = vadd.f32 %v2569, %v2539
    %v2571 = vadd.f32 %v2570, %v2540
    %v2572 = vadd.f32 %v2571, %v2541
    %v2573 = vadd.f32 %v2572, %v2542
    %v2574 = vadd.f32 %v2573, %v2543
    %v2575 = vadd.f32 %v2574, %v2544
    %v2576 = vadd.f32 %v2575, %v2545
    %v2577 = vadd.f32 %v2576, %v2546
    %v2578 = vadd.f32 %v2577, %v2547
    %v2579 = vadd.f32 %v2578, %v2548
    %v2580 = vadd.f32 %v2579, %v2549
    %v2581 = vadd.f32 %v2580, %v2550
    %v2582 = vadd.f32 %v2581, %v2551
    %v2583 = vadd.f32 %v2582, %v2552
    %v2584 = vadd.f32 %v2583, %v2553
    %v2585 = vadd.f32 %v2584, %v2554
    %v2586 = vadd.f32 %v2585, %v2555
    %v2587 = vadd.f32 %v2586, %v2556
    %v2588 = vrot.slane %v2587, 4
    %v2589 = vadd.f32 %v2587, %v2588
    %v2590 = vrot.slane %v2589, 2
    %v2591 = vadd.f32 %v2589, %v2590
    %v2592 = vrot.slane %v2591, 1
    %v2593 = vadd.f32 %v2591, %v2592
    %v2594 = vmul.f32 %v2593, 0.00390625
    %v2595 = vmul.f32 %v2524, %v2524
    %v2596 = vsub.f32 %v2594, %v2595
    %v2597 = vld [vmem:[%s2] sm:$0x1]
    %v2598 = vadd.f32 %v2596, 1e-05
    %v2599 = vrsqrt.pop %v2598
    %v2600 = vmul.f32 %v2599, %v2598
    %v2601 = vmul.f32 %v2600, %v2599
    %v2602 = vmul.f32 0.5, %v2601
    %v2603 = vsub.f32 1.5, %v2602
    %v2604 = vmul.f32 %v2599, %v2603
    %vm2605 = vweird.f32 %v2598
    %vm2606 = vweird.f32 %v2599
    %vm2607 = vmor %vm2605, %vm2606
    %v2608 = vsel %vm2607, %v2599, %v2604
    %v2609 = vmul.f32 %v2597, %v2608
    %v2610 = vld [vmem:[%s3] sm:$0x1]
    %v2611 = vmul.f32 %v2524, %v2609
    %v2612 = vsub.f32 %v2610, %v2611
    %v2614 = vperm.slane %v2609, 0
    %v2616 = vmul.f32 %v2455, %v2614
    %v2617 = vmul.f32 %v2456, %v2614
    %v2618 = vmul.f32 %v2457, %v2614
    %v2619 = vmul.f32 %v2458, %v2614
    %v2620 = vmul.f32 %v2459, %v2614
    %v2621 = vmul.f32 %v2460, %v2614
    %v2622 = vmul.f32 %v2461, %v2614
    %v2623 = vmul.f32 %v2462, %v2614
    %v2624 = vmul.f32 %v2463, %v2614
    %v2625 = vmul.f32 %v2464, %v2614
    %v2626 = vmul.f32 %v2465, %v2614
    %v2627 = vmul.f32 %v2466, %v2614
    %v2628 = vmul.f32 %v2467, %v2614
    %v2629 = vmul.f32 %v2468, %v2614
    %v2630 = vmul.f32 %v2469, %v2614
    %v2631 = vmul.f32 %v2470, %v2614
    %v2632 = vmul.f32 %v2471, %v2614
    %v2633 = vmul.f32 %v2472, %v2614
    %v2634 = vmul.f32 %v2473, %v2614
    %v2635 = vmul.f32 %v2474, %v2614
    %v2636 = vmul.f32 %v2475, %v2614
    %v2637 = vmul.f32 %v2476, %v2614
    %v2638 = vmul.f32 %v2477, %v2614
    %v2639 = vmul.f32 %v2478, %v2614
    %v2640 = vmul.f32 %v2479, %v2614
    %v2641 = vmul.f32 %v2480, %v2614
    %v2642 = vmul.f32 %v2481, %v2614
    %v2643 = vmul.f32 %v2482, %v2614
    %v2644 = vmul.f32 %v2483, %v2614
    %v2645 = vmul.f32 %v2484, %v2614
    %v2646 = vmul.f32 %v2485, %v2614
    %v2647 = vmul.f32 %v2486, %v2614
    %v2649 = vperm.slane %v2612, 0
    %v2651 = vadd.f32 %v2616, %v2649
    %v2652 = vadd.f32 %v2617, %v2649
    %v2653 = vadd.f32 %v2618, %v2649
    %v2654 = vadd.f32 %v2619, %v2649
    %v2655 = vadd.f32 %v2620, %v2649
    %v2656 = vadd.f32 %v2621, %v2649
    %v2657 = vadd.f32 %v2622, %v2649
    %v2658 = vadd.f32 %v2623, %v2649
    %v2659 = vadd.f32 %v2624, %v2649
    %v2660 = vadd.f32 %v2625, %v2649
    %v2661 = vadd.f32 %v2626, %v2649
    %v2662 = vadd.f32 %v2627, %v2649
    %v2663 = vadd.f32 %v2628, %v2649
    %v2664 = vadd.f32 %v2629, %v2649
    %v2665 = vadd.f32 %v2630, %v2649
    %v2666 = vadd.f32 %v2631, %v2649
    %v2667 = vadd.f32 %v2632, %v2649
    %v2668 = vadd.f32 %v2633, %v2649
    %v2669 = vadd.f32 %v2634, %v2649
    %v2670 = vadd.f32 %v2635, %v2649
    %v2671 = vadd.f32 %v2636, %v2649
    %v2672 = vadd.f32 %v2637, %v2649
    %v2673 = vadd.f32 %v2638, %v2649
    %v2674 = vadd.f32 %v2639, %v2649
    %v2675 = vadd.f32 %v2640, %v2649
    %v2676 = vadd.f32 %v2641, %v2649
    %v2677 = vadd.f32 %v2642, %v2649
    %v2678 = vadd.f32 %v2643, %v2649
    %v2679 = vadd.f32 %v2644, %v2649
    %v2680 = vadd.f32 %v2645, %v2649
    %v2681 = vadd.f32 %v2646, %v2649
    %v2682 = vadd.f32 %v2647, %v2649
    %v2683 = vmax.f32 %v2651, 0.0
    %v2684 = vmax.f32 %v2652, 0.0
    %v2685 = vmax.f32 %v2653, 0.0
    %v2686 = vmax.f32 %v2654, 0.0
    %v2687 = vmax.f32 %v2655, 0.0
    %v2688 = vmax.f32 %v2656, 0.0
    %v2689 = vmax.f32 %v2657, 0.0
    %v2690 = vmax.f32 %v2658, 0.0
    %v2691 = vmax.f32 %v2659, 0.0
    %v2692 = vmax.f32 %v2660, 0.0
    %v2693 = vmax.f32 %v2661, 0.0
    %v2694 = vmax.f32 %v2662, 0.0
    %v2695 = vmax.f32 %v2663, 0.0
    %v2696 = vmax.f32 %v2664, 0.0
    %v2697 = vmax.f32 %v2665, 0.0
    %v2698 = vmax.f32 %v2666, 0.0
    %v2699 = vmax.f32 %v2667, 0.0
    %v2700 = vmax.f32 %v2668, 0.0
    %v2701 = vmax.f32 %v2669, 0.0
    %v2702 = vmax.f32 %v2670, 0.0
    %v2703 = vmax.f32 %v2671, 0.0
    %v2704 = vmax.f32 %v2672, 0.0
    %v2705 = vmax.f32 %v2673, 0.0
    %v2706 = vmax.f32 %v2674, 0.0
    %v2707 = vmax.f32 %v2675, 0.0
    %v2708 = vmax.f32 %v2676, 0.0
    %v2709 = vmax.f32 %v2677, 0.0
    %v2710 = vmax.f32 %v2678, 0.0
    %v2711 = vmax.f32 %v2679, 0.0
    %v2712 = vmax.f32 %v2680, 0.0
    %v2713 = vmax.f32 %v2681, 0.0
    %v2714 = vmax.f32 %v2682, 0.0
    %v2715 = vpack.c.bf16 %v2683, %v2683
    %v2716 = vpack.c.bf16 %v2684, %v2684
    %v2717 = vpack.c.bf16 %v2685, %v2685
    %v2718 = vpack.c.bf16 %v2686, %v2686
    %v2719 = vpack.c.bf16 %v2687, %v2687
    %v2720 = vpack.c.bf16 %v2688, %v2688
    %v2721 = vpack.c.bf16 %v2689, %v2689
    %v2722 = vpack.c.bf16 %v2690, %v2690
    %v2723 = vpack.c.bf16 %v2691, %v2691
    %v2724 = vpack.c.bf16 %v2692, %v2692
    %v2725 = vpack.c.bf16 %v2693, %v2693
    %v2726 = vpack.c.bf16 %v2694, %v2694
    %v2727 = vpack.c.bf16 %v2695, %v2695
    %v2728 = vpack.c.bf16 %v2696, %v2696
    %v2729 = vpack.c.bf16 %v2697, %v2697
    %v2730 = vpack.c.bf16 %v2698, %v2698
    %v2731 = vpack.c.bf16 %v2699, %v2699
    %v2732 = vpack.c.bf16 %v2700, %v2700
    %v2733 = vpack.c.bf16 %v2701, %v2701
    %v2734 = vpack.c.bf16 %v2702, %v2702
    %v2735 = vpack.c.bf16 %v2703, %v2703
    %v2736 = vpack.c.bf16 %v2704, %v2704
    %v2737 = vpack.c.bf16 %v2705, %v2705
    %v2738 = vpack.c.bf16 %v2706, %v2706
    %v2739 = vpack.c.bf16 %v2707, %v2707
    %v2740 = vpack.c.bf16 %v2708, %v2708
    %v2741 = vpack.c.bf16 %v2709, %v2709
    %v2742 = vpack.c.bf16 %v2710, %v2710
    %v2743 = vpack.c.bf16 %v2711, %v2711
    %v2744 = vpack.c.bf16 %v2712, %v2712
    %v2745 = vpack.c.bf16 %v2713, %v2713
    %v2746 = vpack.c.bf16 %v2714, %v2714
    %v2779 = vunpack.c.l.b16 %v2715
    %v2780 = vunpack.c.l.b16 %v2716
    %v2781 = vunpack.c.l.b16 %v2717
    %v2782 = vunpack.c.l.b16 %v2718
    %v2783 = vunpack.c.l.b16 %v2719
    %v2784 = vunpack.c.l.b16 %v2720
    %v2785 = vunpack.c.l.b16 %v2721
    %v2786 = vunpack.c.l.b16 %v2722
    %v2787 = vunpack.c.l.b16 %v2723
    %v2788 = vunpack.c.l.b16 %v2724
    %v2789 = vunpack.c.l.b16 %v2725
    %v2790 = vunpack.c.l.b16 %v2726
    %v2791 = vunpack.c.l.b16 %v2727
    %v2792 = vunpack.c.l.b16 %v2728
    %v2793 = vunpack.c.l.b16 %v2729
    %v2794 = vunpack.c.l.b16 %v2730
    %v2795 = vunpack.c.l.b16 %v2731
    %v2796 = vunpack.c.l.b16 %v2732
    %v2797 = vunpack.c.l.b16 %v2733
    %v2798 = vunpack.c.l.b16 %v2734
    %v2799 = vunpack.c.l.b16 %v2735
    %v2800 = vunpack.c.l.b16 %v2736
    %v2801 = vunpack.c.l.b16 %v2737
    %v2802 = vunpack.c.l.b16 %v2738
    %v2803 = vunpack.c.l.b16 %v2739
    %v2804 = vunpack.c.l.b16 %v2740
    %v2805 = vunpack.c.l.b16 %v2741
    %v2806 = vunpack.c.l.b16 %v2742
    %v2807 = vunpack.c.l.b16 %v2743
    %v2808 = vunpack.c.l.b16 %v2744
    %v2809 = vunpack.c.l.b16 %v2745
    %v2810 = vunpack.c.l.b16 %v2746
    %v2811 = vpack.c.b16 %v2780, %v2779
    %v2812 = vpack.c.b16 %v2782, %v2781
    %v2813 = vpack.c.b16 %v2784, %v2783
    %v2814 = vpack.c.b16 %v2786, %v2785
    %v2815 = vpack.c.b16 %v2788, %v2787
    %v2816 = vpack.c.b16 %v2790, %v2789
    %v2817 = vpack.c.b16 %v2792, %v2791
    %v2818 = vpack.c.b16 %v2794, %v2793
    %v2819 = vpack.c.b16 %v2796, %v2795
    %v2820 = vpack.c.b16 %v2798, %v2797
    %v2821 = vpack.c.b16 %v2800, %v2799
    %v2822 = vpack.c.b16 %v2802, %v2801
    %v2823 = vpack.c.b16 %v2804, %v2803
    %v2824 = vpack.c.b16 %v2806, %v2805
    %v2825 = vpack.c.b16 %v2808, %v2807
    %v2826 = vpack.c.b16 %v2810, %v2809
    %v2828 = vshrl.u32 %v2811, 16
    %v2830 = vrot.slane %v2828, 7
    %v2831 = vshll.u32 %v2811, 16
    %v2833 = vor.u32 %v2830, %v2831
    %v2835 = vshrl.u32 %v2812, 16
    %v2837 = vrot.slane %v2835, 7
    %v2838 = vshll.u32 %v2812, 16
    %v2840 = vor.u32 %v2837, %v2838
    %v2842 = vshrl.u32 %v2813, 16
    %v2844 = vrot.slane %v2842, 7
    %v2845 = vshll.u32 %v2813, 16
    %v2847 = vor.u32 %v2844, %v2845
    %v2849 = vshrl.u32 %v2814, 16
    %v2851 = vrot.slane %v2849, 7
    %v2852 = vshll.u32 %v2814, 16
    %v2854 = vor.u32 %v2851, %v2852
    %v2856 = vshrl.u32 %v2815, 16
    %v2858 = vrot.slane %v2856, 7
    %v2859 = vshll.u32 %v2815, 16
    %v2861 = vor.u32 %v2858, %v2859
    %v2863 = vshrl.u32 %v2816, 16
    %v2865 = vrot.slane %v2863, 7
    %v2866 = vshll.u32 %v2816, 16
    %v2868 = vor.u32 %v2865, %v2866
    %v2870 = vshrl.u32 %v2817, 16
    %v2872 = vrot.slane %v2870, 7
    %v2873 = vshll.u32 %v2817, 16
    %v2875 = vor.u32 %v2872, %v2873
    %v2877 = vshrl.u32 %v2818, 16
    %v2879 = vrot.slane %v2877, 7
    %v2880 = vshll.u32 %v2818, 16
    %v2882 = vor.u32 %v2879, %v2880
    %v2884 = vshrl.u32 %v2819, 16
    %v2886 = vrot.slane %v2884, 7
    %v2887 = vshll.u32 %v2819, 16
    %v2889 = vor.u32 %v2886, %v2887
    %v2891 = vshrl.u32 %v2820, 16
    %v2893 = vrot.slane %v2891, 7
    %v2894 = vshll.u32 %v2820, 16
    %v2896 = vor.u32 %v2893, %v2894
    %v2898 = vshrl.u32 %v2821, 16
    %v2900 = vrot.slane %v2898, 7
    %v2901 = vshll.u32 %v2821, 16
    %v2903 = vor.u32 %v2900, %v2901
    %v2905 = vshrl.u32 %v2822, 16
    %v2907 = vrot.slane %v2905, 7
    %v2908 = vshll.u32 %v2822, 16
    %v2910 = vor.u32 %v2907, %v2908
    %v2912 = vshrl.u32 %v2823, 16
    %v2914 = vrot.slane %v2912, 7
    %v2915 = vshll.u32 %v2823, 16
    %v2917 = vor.u32 %v2914, %v2915
    %v2919 = vshrl.u32 %v2824, 16
    %v2921 = vrot.slane %v2919, 7
    %v2922 = vshll.u32 %v2824, 16
    %v2924 = vor.u32 %v2921, %v2922
    %v2926 = vshrl.u32 %v2825, 16
    %v2928 = vrot.slane %v2926, 7
    %v2929 = vshll.u32 %v2825, 16
    %v2931 = vor.u32 %v2928, %v2929
    %v2933 = vshrl.u32 %v2826, 16
    %v2935 = vrot.slane %v2933, 7
    %v2936 = vshll.u32 %v2826, 16
    %v2938 = vor.u32 %v2935, %v2936
    %v2955 = vsel %vm311, 0, %v2833
    %v2956 = vsel %vm311, 0, %v2840
    %v2957 = vsel %vm311, 0, %v2847
    %v2958 = vsel %vm311, 0, %v2854
    %v2959 = vsel %vm311, 0, %v2861
    %v2960 = vsel %vm311, 0, %v2868
    %v2961 = vsel %vm311, 0, %v2875
    %v2962 = vsel %vm311, 0, %v2882
    %v2963 = vsel %vm311, 0, %v2889
    %v2964 = vsel %vm311, 0, %v2896
    %v2965 = vsel %vm311, 0, %v2903
    %v2966 = vsel %vm311, 0, %v2910
    %v2967 = vsel %vm311, 0, %v2917
    %v2968 = vsel %vm311, 0, %v2924
    %v2969 = vsel %vm311, 0, %v2931
    %v2970 = vsel %vm311, 0, %v2938
    %v2971 = vrot.slane %v2831, 1
    %v2972 = vor.u32 %v2828, %v2971
    %v2973 = vrot.slane %v2838, 1
    %v2974 = vor.u32 %v2835, %v2973
    %v2975 = vrot.slane %v2845, 1
    %v2976 = vor.u32 %v2842, %v2975
    %v2977 = vrot.slane %v2852, 1
    %v2978 = vor.u32 %v2849, %v2977
    %v2979 = vrot.slane %v2859, 1
    %v2980 = vor.u32 %v2856, %v2979
    %v2981 = vrot.slane %v2866, 1
    %v2982 = vor.u32 %v2863, %v2981
    %v2983 = vrot.slane %v2873, 1
    %v2984 = vor.u32 %v2870, %v2983
    %v2985 = vrot.slane %v2880, 1
    %v2986 = vor.u32 %v2877, %v2985
    %v2987 = vrot.slane %v2887, 1
    %v2988 = vor.u32 %v2884, %v2987
    %v2989 = vrot.slane %v2894, 1
    %v2990 = vor.u32 %v2891, %v2989
    %v2991 = vrot.slane %v2901, 1
    %v2992 = vor.u32 %v2898, %v2991
    %v2993 = vrot.slane %v2908, 1
    %v2994 = vor.u32 %v2905, %v2993
    %v2995 = vrot.slane %v2915, 1
    %v2996 = vor.u32 %v2912, %v2995
    %v2997 = vrot.slane %v2922, 1
    %v2998 = vor.u32 %v2919, %v2997
    %v2999 = vrot.slane %v2929, 1
    %v3000 = vor.u32 %v2926, %v2999
    %v3001 = vrot.slane %v2936, 1
    %v3002 = vor.u32 %v2933, %v3001
    %v3019 = vsel %vm378, %v2972, 0
    %v3020 = vsel %vm378, %v2974, 0
    %v3021 = vsel %vm378, %v2976, 0
    %v3022 = vsel %vm378, %v2978, 0
    %v3023 = vsel %vm378, %v2980, 0
    %v3024 = vsel %vm378, %v2982, 0
    %v3025 = vsel %vm378, %v2984, 0
    %v3026 = vsel %vm378, %v2986, 0
    %v3027 = vsel %vm378, %v2988, 0
    %v3028 = vsel %vm378, %v2990, 0
    %v3029 = vsel %vm378, %v2992, 0
    %v3030 = vsel %vm378, %v2994, 0
    %v3031 = vsel %vm378, %v2996, 0
    %v3032 = vsel %vm378, %v2998, 0
    %v3033 = vsel %vm378, %v3000, 0
    %v3034 = vsel %vm378, %v3002, 0
    %v3051 = vunpack.c.l.b16 %v2955
    %v3052 = vunpack.c.h.b16 %v2955
    %v3053 = vunpack.c.l.b16 %v2956
    %v3054 = vunpack.c.h.b16 %v2956
    %v3055 = vunpack.c.l.b16 %v2957
    %v3056 = vunpack.c.h.b16 %v2957
    %v3057 = vunpack.c.l.b16 %v2958
    %v3058 = vunpack.c.h.b16 %v2958
    %v3059 = vunpack.c.l.b16 %v2959
    %v3060 = vunpack.c.h.b16 %v2959
    %v3061 = vunpack.c.l.b16 %v2960
    %v3062 = vunpack.c.h.b16 %v2960
    %v3063 = vunpack.c.l.b16 %v2961
    %v3064 = vunpack.c.h.b16 %v2961
    %v3065 = vunpack.c.l.b16 %v2962
    %v3066 = vunpack.c.h.b16 %v2962
    %v3067 = vunpack.c.l.b16 %v2963
    %v3068 = vunpack.c.h.b16 %v2963
    %v3069 = vunpack.c.l.b16 %v2964
    %v3070 = vunpack.c.h.b16 %v2964
    %v3071 = vunpack.c.l.b16 %v2965
    %v3072 = vunpack.c.h.b16 %v2965
    %v3073 = vunpack.c.l.b16 %v2966
    %v3074 = vunpack.c.h.b16 %v2966
    %v3075 = vunpack.c.l.b16 %v2967
    %v3076 = vunpack.c.h.b16 %v2967
    %v3077 = vunpack.c.l.b16 %v2968
    %v3078 = vunpack.c.h.b16 %v2968
    %v3079 = vunpack.c.l.b16 %v2969
    %v3080 = vunpack.c.h.b16 %v2969
    %v3081 = vunpack.c.l.b16 %v2970
    %v3082 = vunpack.c.h.b16 %v2970
    %v3083 = vpack.c.b16 %v3051, %v3051
    %v3084 = vpack.c.b16 %v3052, %v3052
    %v3085 = vpack.c.b16 %v3053, %v3053
    %v3086 = vpack.c.b16 %v3054, %v3054
    %v3087 = vpack.c.b16 %v3055, %v3055
    %v3088 = vpack.c.b16 %v3056, %v3056
    %v3089 = vpack.c.b16 %v3057, %v3057
    %v3090 = vpack.c.b16 %v3058, %v3058
    %v3091 = vpack.c.b16 %v3059, %v3059
    %v3092 = vpack.c.b16 %v3060, %v3060
    %v3093 = vpack.c.b16 %v3061, %v3061
    %v3094 = vpack.c.b16 %v3062, %v3062
    %v3095 = vpack.c.b16 %v3063, %v3063
    %v3096 = vpack.c.b16 %v3064, %v3064
    %v3097 = vpack.c.b16 %v3065, %v3065
    %v3098 = vpack.c.b16 %v3066, %v3066
    %v3099 = vpack.c.b16 %v3067, %v3067
    %v3100 = vpack.c.b16 %v3068, %v3068
    %v3101 = vpack.c.b16 %v3069, %v3069
    %v3102 = vpack.c.b16 %v3070, %v3070
    %v3103 = vpack.c.b16 %v3071, %v3071
    %v3104 = vpack.c.b16 %v3072, %v3072
    %v3105 = vpack.c.b16 %v3073, %v3073
    %v3106 = vpack.c.b16 %v3074, %v3074
    %v3107 = vpack.c.b16 %v3075, %v3075
    %v3108 = vpack.c.b16 %v3076, %v3076
    %v3109 = vpack.c.b16 %v3077, %v3077
    %v3110 = vpack.c.b16 %v3078, %v3078
    %v3111 = vpack.c.b16 %v3079, %v3079
    %v3112 = vpack.c.b16 %v3080, %v3080
    %v3113 = vpack.c.b16 %v3081, %v3081
    %v3114 = vpack.c.b16 %v3082, %v3082
    %3147 = vst [vmem:[%s507] sm:$0xf] %v3083
    %3148 = vst [vmem:[%s507 + $0xc] sm:$0xf] %v3084
    %3149 = vst [vmem:[%s507 + $0x18] sm:$0xf] %v3085
    %3150 = vst [vmem:[%s507 + $0x24] sm:$0xf] %v3086
    %3151 = vst [vmem:[%s507 + $0x30] sm:$0xf] %v3087
    %3152 = vst [vmem:[%s507 + $0x3c] sm:$0xf] %v3088
    %3153 = vst [vmem:[%s507 + $0x48] sm:$0xf] %v3089
    %3154 = vst [vmem:[%s507 + $0x54] sm:$0xf] %v3090
    %3155 = vst [vmem:[%s507 + $0x60] sm:$0xf] %v3091
    %3156 = vst [vmem:[%s507 + $0x6c] sm:$0xf] %v3092
    %3157 = vst [vmem:[%s507 + $0x78] sm:$0xf] %v3093
    %3158 = vst [vmem:[%s507 + $0x84] sm:$0xf] %v3094
    %3159 = vst [vmem:[%s507 + $0x90] sm:$0xf] %v3095
    %3160 = vst [vmem:[%s507 + $0x9c] sm:$0xf] %v3096
    %3161 = vst [vmem:[%s507 + $0xa8] sm:$0xf] %v3097
    %3162 = vst [vmem:[%s507 + $0xb4] sm:$0xf] %v3098
    %3163 = vst [vmem:[%s507 + $0xc0] sm:$0xf] %v3099
    %3164 = vst [vmem:[%s507 + $0xcc] sm:$0xf] %v3100
    %3165 = vst [vmem:[%s507 + $0xd8] sm:$0xf] %v3101
    %3166 = vst [vmem:[%s507 + $0xe4] sm:$0xf] %v3102
    %3167 = vst [vmem:[%s507 + $0xf0] sm:$0xf] %v3103
    %3168 = vst [vmem:[%s507 + $0xfc] sm:$0xf] %v3104
    %3169 = vst [vmem:[%s507 + $0x108] sm:$0xf] %v3105
    %3170 = vst [vmem:[%s507 + $0x114] sm:$0xf] %v3106
    %3171 = vst [vmem:[%s507 + $0x120] sm:$0xf] %v3107
    %3172 = vst [vmem:[%s507 + $0x12c] sm:$0xf] %v3108
    %3173 = vst [vmem:[%s507 + $0x138] sm:$0xf] %v3109
    %3174 = vst [vmem:[%s507 + $0x144] sm:$0xf] %v3110
    %3175 = vst [vmem:[%s507 + $0x150] sm:$0xf] %v3111
    %3176 = vst [vmem:[%s507 + $0x15c] sm:$0xf] %v3112
    %3177 = vst [vmem:[%s507 + $0x168] sm:$0xf] %v3113
    %3178 = vst [vmem:[%s507 + $0x174] sm:$0xf] %v3114
    %3179 = vst [vmem:[%s507 + $0x4] sm:$0xf] %v2715
    %3180 = vst [vmem:[%s507 + $0x10] sm:$0xf] %v2716
    %3181 = vst [vmem:[%s507 + $0x1c] sm:$0xf] %v2717
    %3182 = vst [vmem:[%s507 + $0x28] sm:$0xf] %v2718
    %3183 = vst [vmem:[%s507 + $0x34] sm:$0xf] %v2719
    %3184 = vst [vmem:[%s507 + $0x40] sm:$0xf] %v2720
    %3185 = vst [vmem:[%s507 + $0x4c] sm:$0xf] %v2721
    %3186 = vst [vmem:[%s507 + $0x58] sm:$0xf] %v2722
    %3187 = vst [vmem:[%s507 + $0x64] sm:$0xf] %v2723
    %3188 = vst [vmem:[%s507 + $0x70] sm:$0xf] %v2724
    %3189 = vst [vmem:[%s507 + $0x7c] sm:$0xf] %v2725
    %3190 = vst [vmem:[%s507 + $0x88] sm:$0xf] %v2726
    %3191 = vst [vmem:[%s507 + $0x94] sm:$0xf] %v2727
    %3192 = vst [vmem:[%s507 + $0xa0] sm:$0xf] %v2728
    %3193 = vst [vmem:[%s507 + $0xac] sm:$0xf] %v2729
    %3194 = vst [vmem:[%s507 + $0xb8] sm:$0xf] %v2730
    %3195 = vst [vmem:[%s507 + $0xc4] sm:$0xf] %v2731
    %3196 = vst [vmem:[%s507 + $0xd0] sm:$0xf] %v2732
    %3197 = vst [vmem:[%s507 + $0xdc] sm:$0xf] %v2733
    %3198 = vst [vmem:[%s507 + $0xe8] sm:$0xf] %v2734
    %3199 = vst [vmem:[%s507 + $0xf4] sm:$0xf] %v2735
    %3200 = vst [vmem:[%s507 + $0x100] sm:$0xf] %v2736
    %3201 = vst [vmem:[%s507 + $0x10c] sm:$0xf] %v2737
    %3202 = vst [vmem:[%s507 + $0x118] sm:$0xf] %v2738
    %3203 = vst [vmem:[%s507 + $0x124] sm:$0xf] %v2739
    %3204 = vst [vmem:[%s507 + $0x130] sm:$0xf] %v2740
    %3205 = vst [vmem:[%s507 + $0x13c] sm:$0xf] %v2741
    %3206 = vst [vmem:[%s507 + $0x148] sm:$0xf] %v2742
    %3207 = vst [vmem:[%s507 + $0x154] sm:$0xf] %v2743
    %3208 = vst [vmem:[%s507 + $0x160] sm:$0xf] %v2744
    %3209 = vst [vmem:[%s507 + $0x16c] sm:$0xf] %v2745
    %3210 = vst [vmem:[%s507 + $0x178] sm:$0xf] %v2746
    %v3227 = vunpack.c.l.b16 %v3019
    %v3228 = vunpack.c.h.b16 %v3019
    %v3229 = vunpack.c.l.b16 %v3020
    %v3230 = vunpack.c.h.b16 %v3020
    %v3231 = vunpack.c.l.b16 %v3021
    %v3232 = vunpack.c.h.b16 %v3021
    %v3233 = vunpack.c.l.b16 %v3022
    %v3234 = vunpack.c.h.b16 %v3022
    %v3235 = vunpack.c.l.b16 %v3023
    %v3236 = vunpack.c.h.b16 %v3023
    %v3237 = vunpack.c.l.b16 %v3024
    %v3238 = vunpack.c.h.b16 %v3024
    %v3239 = vunpack.c.l.b16 %v3025
    %v3240 = vunpack.c.h.b16 %v3025
    %v3241 = vunpack.c.l.b16 %v3026
    %v3242 = vunpack.c.h.b16 %v3026
    %v3243 = vunpack.c.l.b16 %v3027
    %v3244 = vunpack.c.h.b16 %v3027
    %v3245 = vunpack.c.l.b16 %v3028
    %v3246 = vunpack.c.h.b16 %v3028
    %v3247 = vunpack.c.l.b16 %v3029
    %v3248 = vunpack.c.h.b16 %v3029
    %v3249 = vunpack.c.l.b16 %v3030
    %v3250 = vunpack.c.h.b16 %v3030
    %v3251 = vunpack.c.l.b16 %v3031
    %v3252 = vunpack.c.h.b16 %v3031
    %v3253 = vunpack.c.l.b16 %v3032
    %v3254 = vunpack.c.h.b16 %v3032
    %v3255 = vunpack.c.l.b16 %v3033
    %v3256 = vunpack.c.h.b16 %v3033
    %v3257 = vunpack.c.l.b16 %v3034
    %v3258 = vunpack.c.h.b16 %v3034
    %v3259 = vpack.c.b16 %v3227, %v3227
    %v3260 = vpack.c.b16 %v3228, %v3228
    %v3261 = vpack.c.b16 %v3229, %v3229
    %v3262 = vpack.c.b16 %v3230, %v3230
    %v3263 = vpack.c.b16 %v3231, %v3231
    %v3264 = vpack.c.b16 %v3232, %v3232
    %v3265 = vpack.c.b16 %v3233, %v3233
    %v3266 = vpack.c.b16 %v3234, %v3234
    %v3267 = vpack.c.b16 %v3235, %v3235
    %v3268 = vpack.c.b16 %v3236, %v3236
    %v3269 = vpack.c.b16 %v3237, %v3237
    %v3270 = vpack.c.b16 %v3238, %v3238
    %v3271 = vpack.c.b16 %v3239, %v3239
    %v3272 = vpack.c.b16 %v3240, %v3240
    %v3273 = vpack.c.b16 %v3241, %v3241
    %v3274 = vpack.c.b16 %v3242, %v3242
    %v3275 = vpack.c.b16 %v3243, %v3243
    %v3276 = vpack.c.b16 %v3244, %v3244
    %v3277 = vpack.c.b16 %v3245, %v3245
    %v3278 = vpack.c.b16 %v3246, %v3246
    %v3279 = vpack.c.b16 %v3247, %v3247
    %v3280 = vpack.c.b16 %v3248, %v3248
    %v3281 = vpack.c.b16 %v3249, %v3249
    %v3282 = vpack.c.b16 %v3250, %v3250
    %v3283 = vpack.c.b16 %v3251, %v3251
    %v3284 = vpack.c.b16 %v3252, %v3252
    %v3285 = vpack.c.b16 %v3253, %v3253
    %v3286 = vpack.c.b16 %v3254, %v3254
    %v3287 = vpack.c.b16 %v3255, %v3255
    %v3288 = vpack.c.b16 %v3256, %v3256
    %v3289 = vpack.c.b16 %v3257, %v3257
    %v3290 = vpack.c.b16 %v3258, %v3258
    %3323 = vst [vmem:[%s507 + $0x8] sm:$0xf] %v3259
    %3324 = vst [vmem:[%s507 + $0x14] sm:$0xf] %v3260
    %3325 = vst [vmem:[%s507 + $0x20] sm:$0xf] %v3261
    %3326 = vst [vmem:[%s507 + $0x2c] sm:$0xf] %v3262
    %3327 = vst [vmem:[%s507 + $0x38] sm:$0xf] %v3263
    %3328 = vst [vmem:[%s507 + $0x44] sm:$0xf] %v3264
    %3329 = vst [vmem:[%s507 + $0x50] sm:$0xf] %v3265
    %3330 = vst [vmem:[%s507 + $0x5c] sm:$0xf] %v3266
    %3331 = vst [vmem:[%s507 + $0x68] sm:$0xf] %v3267
    %3332 = vst [vmem:[%s507 + $0x74] sm:$0xf] %v3268
    %3333 = vst [vmem:[%s507 + $0x80] sm:$0xf] %v3269
    %3334 = vst [vmem:[%s507 + $0x8c] sm:$0xf] %v3270
    %3335 = vst [vmem:[%s507 + $0x98] sm:$0xf] %v3271
    %3336 = vst [vmem:[%s507 + $0xa4] sm:$0xf] %v3272
    %3337 = vst [vmem:[%s507 + $0xb0] sm:$0xf] %v3273
    %3338 = vst [vmem:[%s507 + $0xbc] sm:$0xf] %v3274
    %3339 = vst [vmem:[%s507 + $0xc8] sm:$0xf] %v3275
    %3340 = vst [vmem:[%s507 + $0xd4] sm:$0xf] %v3276
    %3341 = vst [vmem:[%s507 + $0xe0] sm:$0xf] %v3277
    %3342 = vst [vmem:[%s507 + $0xec] sm:$0xf] %v3278
    %3343 = vst [vmem:[%s507 + $0xf8] sm:$0xf] %v3279
    %3344 = vst [vmem:[%s507 + $0x104] sm:$0xf] %v3280
    %3345 = vst [vmem:[%s507 + $0x110] sm:$0xf] %v3281
    %3346 = vst [vmem:[%s507 + $0x11c] sm:$0xf] %v3282
    %3347 = vst [vmem:[%s507 + $0x128] sm:$0xf] %v3283
    %3348 = vst [vmem:[%s507 + $0x134] sm:$0xf] %v3284
    %3349 = vst [vmem:[%s507 + $0x140] sm:$0xf] %v3285
    %3350 = vst [vmem:[%s507 + $0x14c] sm:$0xf] %v3286
    %3351 = vst [vmem:[%s507 + $0x158] sm:$0xf] %v3287
    %3352 = vst [vmem:[%s507 + $0x164] sm:$0xf] %v3288
    %3353 = vst [vmem:[%s507 + $0x170] sm:$0xf] %v3289
    %3354 = vst [vmem:[%s507 + $0x17c] sm:$0xf] %v3290
    %v3355 = vld [vmem:[#allocation2] sm:$0xff]
    %v3356 = vld [vmem:[#allocation2 + $0x8] sm:$0xf]
    %v3357 = vld [vmem:[#allocation2 + $0xc] sm:$0xff]
    %v3358 = vld [vmem:[#allocation2 + $0x14] sm:$0xf]
    %v3359 = vld [vmem:[#allocation2 + $0x18] sm:$0xff]
    %v3360 = vld [vmem:[#allocation2 + $0x20] sm:$0xf]
    %v3361 = vld [vmem:[#allocation2 + $0x24] sm:$0xff]
    %v3362 = vld [vmem:[#allocation2 + $0x2c] sm:$0xf]
    %v3363 = vld [vmem:[#allocation2 + $0x30] sm:$0xff]
    %v3364 = vld [vmem:[#allocation2 + $0x38] sm:$0xf]
    %v3365 = vld [vmem:[#allocation2 + $0x3c] sm:$0xff]
    %v3366 = vld [vmem:[#allocation2 + $0x44] sm:$0xf]
    %v3367 = vld [vmem:[#allocation2 + $0x48] sm:$0xff]
    %v3368 = vld [vmem:[#allocation2 + $0x50] sm:$0xf]
    %v3369 = vld [vmem:[#allocation2 + $0x54] sm:$0xff]
    %v3370 = vld [vmem:[#allocation2 + $0x5c] sm:$0xf]
    %v3371 = vld [vmem:[#allocation2 + $0x60] sm:$0xff]
    %v3372 = vld [vmem:[#allocation2 + $0x68] sm:$0xf]
    %v3373 = vld [vmem:[#allocation2 + $0x6c] sm:$0xff]
    %v3374 = vld [vmem:[#allocation2 + $0x74] sm:$0xf]
    %v3375 = vld [vmem:[#allocation2 + $0x78] sm:$0xff]
    %v3376 = vld [vmem:[#allocation2 + $0x80] sm:$0xf]
    %v3377 = vld [vmem:[#allocation2 + $0x84] sm:$0xff]
    %v3378 = vld [vmem:[#allocation2 + $0x8c] sm:$0xf]
    %v3379 = vld [vmem:[#allocation2 + $0x90] sm:$0xff]
    %v3380 = vld [vmem:[#allocation2 + $0x98] sm:$0xf]
    %v3381 = vld [vmem:[#allocation2 + $0x9c] sm:$0xff]
    %v3382 = vld [vmem:[#allocation2 + $0xa4] sm:$0xf]
    %v3383 = vld [vmem:[#allocation2 + $0xa8] sm:$0xff]
    %v3384 = vld [vmem:[#allocation2 + $0xb0] sm:$0xf]
    %v3385 = vld [vmem:[#allocation2 + $0xb4] sm:$0xff]
    %v3386 = vld [vmem:[#allocation2 + $0xbc] sm:$0xf]
    %v3387 = vld [vmem:[#allocation2 + $0xc0] sm:$0xff]
    %v3388 = vld [vmem:[#allocation2 + $0xc8] sm:$0xf]
    %v3389 = vld [vmem:[#allocation2 + $0xcc] sm:$0xff]
    %v3390 = vld [vmem:[#allocation2 + $0xd4] sm:$0xf]
    %v3391 = vld [vmem:[#allocation2 + $0xd8] sm:$0xff]
    %v3392 = vld [vmem:[#allocation2 + $0xe0] sm:$0xf]
    %v3393 = vld [vmem:[#allocation2 + $0xe4] sm:$0xff]
    %v3394 = vld [vmem:[#allocation2 + $0xec] sm:$0xf]
    %v3395 = vld [vmem:[#allocation2 + $0xf0] sm:$0xff]
    %v3396 = vld [vmem:[#allocation2 + $0xf8] sm:$0xf]
    %v3397 = vld [vmem:[#allocation2 + $0xfc] sm:$0xff]
    %v3398 = vld [vmem:[#allocation2 + $0x104] sm:$0xf]
    %v3399 = vld [vmem:[#allocation2 + $0x108] sm:$0xff]
    %v3400 = vld [vmem:[#allocation2 + $0x110] sm:$0xf]
    %v3401 = vld [vmem:[#allocation2 + $0x114] sm:$0xff]
    %v3402 = vld [vmem:[#allocation2 + $0x11c] sm:$0xf]
    %v3403 = vld [vmem:[#allocation2 + $0x120] sm:$0xff]
    %v3404 = vld [vmem:[#allocation2 + $0x128] sm:$0xf]
    %v3405 = vld [vmem:[#allocation2 + $0x12c] sm:$0xff]
    %v3406 = vld [vmem:[#allocation2 + $0x134] sm:$0xf]
    %v3407 = vld [vmem:[#allocation2 + $0x138] sm:$0xff]
    %v3408 = vld [vmem:[#allocation2 + $0x140] sm:$0xf]
    %v3409 = vld [vmem:[#allocation2 + $0x144] sm:$0xff]
    %v3410 = vld [vmem:[#allocation2 + $0x14c] sm:$0xf]
    %v3411 = vld [vmem:[#allocation2 + $0x150] sm:$0xff]
    %v3412 = vld [vmem:[#allocation2 + $0x158] sm:$0xf]
    %v3413 = vld [vmem:[#allocation2 + $0x15c] sm:$0xff]
    %v3414 = vld [vmem:[#allocation2 + $0x164] sm:$0xf]
    %v3415 = vld [vmem:[#allocation2 + $0x168] sm:$0xff]
    %v3416 = vld [vmem:[#allocation2 + $0x170] sm:$0xf]
    %v3417 = vld [vmem:[#allocation2 + $0x174] sm:$0xff]
    %v3418 = vld [vmem:[#allocation2 + $0x17c] sm:$0xf]
    %v3419 = vld [vmem:[#allocation2 + $0x180] sm:$0xff]
    %v3420 = vld [vmem:[#allocation2 + $0x188] sm:$0xf]
    %v3421 = vld [vmem:[#allocation2 + $0x18c] sm:$0xff]
    %v3422 = vld [vmem:[#allocation2 + $0x194] sm:$0xf]
    %v3423 = vld [vmem:[#allocation2 + $0x198] sm:$0xff]
    %v3424 = vld [vmem:[#allocation2 + $0x1a0] sm:$0xf]
    %v3425 = vld [vmem:[#allocation2 + $0x1a4] sm:$0xff]
    %v3426 = vld [vmem:[#allocation2 + $0x1ac] sm:$0xf]
    %v3427 = vld [vmem:[%s4] sm:$0xf]
    %v3428 = vld [vmem:[%s4 + $0x4] sm:$0xf]
    %v3429 = vld [vmem:[%s4 + $0x8] sm:$0xf]
    %v3430 = vld [vmem:[%s4 + $0xc] sm:$0xf]
    %v3431 = vld [vmem:[%s4 + $0x10] sm:$0xf]
    %v3432 = vld [vmem:[%s4 + $0x14] sm:$0xf]
    %v3433 = vld [vmem:[%s4 + $0x18] sm:$0xf]
    %v3434 = vld [vmem:[%s4 + $0x1c] sm:$0xf]
    %v3435 = vld [vmem:[%s4 + $0x20] sm:$0xf]
    %v3436 = vld [vmem:[%s4 + $0x24] sm:$0xf]
    %v3437 = vld [vmem:[%s4 + $0x28] sm:$0xf]
    %v3438 = vld [vmem:[%s4 + $0x2c] sm:$0xf]
    %v3439 = vld [vmem:[%s4 + $0x30] sm:$0xf]
    %v3440 = vld [vmem:[%s4 + $0x34] sm:$0xf]
    %v3441 = vld [vmem:[%s4 + $0x38] sm:$0xf]
    %v3442 = vld [vmem:[%s4 + $0x3c] sm:$0xf]
    %v3443 = vld [vmem:[%s4 + $0x40] sm:$0xf]
    %v3444 = vld [vmem:[%s4 + $0x44] sm:$0xf]
    %v3445 = vld [vmem:[%s4 + $0x48] sm:$0xf]
    %v3446 = vld [vmem:[%s4 + $0x4c] sm:$0xf]
    %v3447 = vld [vmem:[%s4 + $0x50] sm:$0xf]
    %v3448 = vld [vmem:[%s4 + $0x54] sm:$0xf]
    %v3449 = vld [vmem:[%s4 + $0x58] sm:$0xf]
    %v3450 = vld [vmem:[%s4 + $0x5c] sm:$0xf]
    %v3451 = vld [vmem:[%s4 + $0x60] sm:$0xf]
    %v3452 = vld [vmem:[%s4 + $0x64] sm:$0xf]
    %v3453 = vld [vmem:[%s4 + $0x68] sm:$0xf]
    %v3454 = vld [vmem:[%s4 + $0x6c] sm:$0xf]
    %v3455 = vld [vmem:[%s4 + $0x70] sm:$0xf]
    %v3456 = vld [vmem:[%s4 + $0x74] sm:$0xf]
    %v3457 = vld [vmem:[%s4 + $0x78] sm:$0xf]
    %v3458 = vld [vmem:[%s4 + $0x7c] sm:$0xf]
    %v3459 = vld [vmem:[%s4 + $0x80] sm:$0xf]
    %v3460 = vld [vmem:[%s4 + $0x84] sm:$0xf]
    %v3461 = vld [vmem:[%s4 + $0x88] sm:$0xf]
    %v3462 = vld [vmem:[%s4 + $0x8c] sm:$0xf]
    %v3463 = vld [vmem:[%s4 + $0x90] sm:$0xf]
    %v3464 = vld [vmem:[%s4 + $0x94] sm:$0xf]
    %v3465 = vld [vmem:[%s4 + $0x98] sm:$0xf]
    %v3466 = vld [vmem:[%s4 + $0x9c] sm:$0xf]
    %v3467 = vld [vmem:[%s4 + $0xa0] sm:$0xf]
    %v3468 = vld [vmem:[%s4 + $0xa4] sm:$0xf]
    %v3469 = vld [vmem:[%s4 + $0xa8] sm:$0xf]
    %v3470 = vld [vmem:[%s4 + $0xac] sm:$0xf]
    %v3471 = vld [vmem:[%s4 + $0xb0] sm:$0xf]
    %v3472 = vld [vmem:[%s4 + $0xb4] sm:$0xf]
    %v3473 = vld [vmem:[%s4 + $0xb8] sm:$0xf]
    %v3474 = vld [vmem:[%s4 + $0xbc] sm:$0xf]
    %s3475 = scalar_lea.vmem %s4, 192
    %v3476 = vld [vmem:[%s3475] sm:$0xf]
    %v3477 = vld [vmem:[%s3475 + $0x4] sm:$0xf]
    %v3478 = vld [vmem:[%s3475 + $0x8] sm:$0xf]
    %v3479 = vld [vmem:[%s3475 + $0xc] sm:$0xf]
    %v3480 = vld [vmem:[%s3475 + $0x10] sm:$0xf]
    %v3481 = vld [vmem:[%s3475 + $0x14] sm:$0xf]
    %v3482 = vld [vmem:[%s3475 + $0x18] sm:$0xf]
    %v3483 = vld [vmem:[%s3475 + $0x1c] sm:$0xf]
    %v3484 = vld [vmem:[%s3475 + $0x20] sm:$0xf]
    %v3485 = vld [vmem:[%s3475 + $0x24] sm:$0xf]
    %v3486 = vld [vmem:[%s3475 + $0x28] sm:$0xf]
    %v3487 = vld [vmem:[%s3475 + $0x2c] sm:$0xf]
    %v3488 = vld [vmem:[%s3475 + $0x30] sm:$0xf]
    %v3489 = vld [vmem:[%s3475 + $0x34] sm:$0xf]
    %v3490 = vld [vmem:[%s3475 + $0x38] sm:$0xf]
    %v3491 = vld [vmem:[%s3475 + $0x3c] sm:$0xf]
    %v3492 = vld [vmem:[%s3475 + $0x40] sm:$0xf]
    %v3493 = vld [vmem:[%s3475 + $0x44] sm:$0xf]
    %v3494 = vld [vmem:[%s3475 + $0x48] sm:$0xf]
    %v3495 = vld [vmem:[%s3475 + $0x4c] sm:$0xf]
    %v3496 = vld [vmem:[%s3475 + $0x50] sm:$0xf]
    %v3497 = vld [vmem:[%s3475 + $0x54] sm:$0xf]
    %v3498 = vld [vmem:[%s3475 + $0x58] sm:$0xf]
    %v3499 = vld [vmem:[%s3475 + $0x5c] sm:$0xf]
    %v3500 = vld [vmem:[%s3475 + $0x60] sm:$0xf]
    %v3501 = vld [vmem:[%s3475 + $0x64] sm:$0xf]
    %v3502 = vld [vmem:[%s3475 + $0x68] sm:$0xf]
    %v3503 = vld [vmem:[%s3475 + $0x6c] sm:$0xf]
    %v3504 = vld [vmem:[%s3475 + $0x70] sm:$0xf]
    %v3505 = vld [vmem:[%s3475 + $0x74] sm:$0xf]
    %v3506 = vld [vmem:[%s3475 + $0x78] sm:$0xf]
    %v3507 = vld [vmem:[%s3475 + $0x7c] sm:$0xf]
    %v3508 = vld [vmem:[%s3475 + $0x80] sm:$0xf]
    %v3509 = vld [vmem:[%s3475 + $0x84] sm:$0xf]
    %v3510 = vld [vmem:[%s3475 + $0x88] sm:$0xf]
    %v3511 = vld [vmem:[%s3475 + $0x8c] sm:$0xf]
    %v3512 = vld [vmem:[%s3475 + $0x90] sm:$0xf]
    %v3513 = vld [vmem:[%s3475 + $0x94] sm:$0xf]
    %v3514 = vld [vmem:[%s3475 + $0x98] sm:$0xf]
    %v3515 = vld [vmem:[%s3475 + $0x9c] sm:$0xf]
    %v3516 = vld [vmem:[%s3475 + $0xa0] sm:$0xf]
    %v3517 = vld [vmem:[%s3475 + $0xa4] sm:$0xf]
    %v3518 = vld [vmem:[%s3475 + $0xa8] sm:$0xf]
    %v3519 = vld [vmem:[%s3475 + $0xac] sm:$0xf]
    %v3520 = vld [vmem:[%s3475 + $0xb0] sm:$0xf]
    %v3521 = vld [vmem:[%s3475 + $0xb4] sm:$0xf]
    %v3522 = vld [vmem:[%s3475 + $0xb8] sm:$0xf]
    %v3523 = vld [vmem:[%s3475 + $0xbc] sm:$0xf]
    %v3588 = vunpack.c.l.b16 %v3359
    %v3589 = vunpack.c.h.b16 %v3359
    %v3590 = vunpack.c.l.b16 %v3360
    %v3591 = vunpack.c.l.b16 %v3361
    %v3592 = vunpack.c.h.b16 %v3361
    %v3593 = vunpack.c.l.b16 %v3362
    %v3594 = vunpack.c.l.b16 %v3363
    %v3595 = vunpack.c.h.b16 %v3363
    %v3596 = vunpack.c.l.b16 %v3364
    %v3597 = vunpack.c.l.b16 %v3365
    %v3598 = vunpack.c.h.b16 %v3365
    %v3599 = vunpack.c.l.b16 %v3366
    %v3600 = vunpack.c.l.b16 %v3367
    %v3601 = vunpack.c.h.b16 %v3367
    %v3602 = vunpack.c.l.b16 %v3368
    %v3603 = vunpack.c.l.b16 %v3369
    %v3604 = vunpack.c.h.b16 %v3369
    %v3605 = vunpack.c.l.b16 %v3370
    %v3606 = vunpack.c.l.b16 %v3371
    %v3607 = vunpack.c.h.b16 %v3371
    %v3608 = vunpack.c.l.b16 %v3372
    %v3609 = vunpack.c.l.b16 %v3373
    %v3610 = vunpack.c.h.b16 %v3373
    %v3611 = vunpack.c.l.b16 %v3374
    %v3612 = vunpack.c.l.b16 %v3375
    %v3613 = vunpack.c.h.b16 %v3375
    %v3614 = vunpack.c.l.b16 %v3376
    %v3615 = vunpack.c.l.b16 %v3377
    %v3616 = vunpack.c.h.b16 %v3377
    %v3617 = vunpack.c.l.b16 %v3378
    %v3618 = vunpack.c.l.b16 %v3379
    %v3619 = vunpack.c.h.b16 %v3379
    %v3620 = vunpack.c.l.b16 %v3380
    %v3621 = vunpack.c.l.b16 %v3381
    %v3622 = vunpack.c.h.b16 %v3381
    %v3623 = vunpack.c.l.b16 %v3382
    %v3624 = vunpack.c.l.b16 %v3383
    %v3625 = vunpack.c.h.b16 %v3383
    %v3626 = vunpack.c.l.b16 %v3384
    %v3627 = vunpack.c.l.b16 %v3385
    %v3628 = vunpack.c.h.b16 %v3385
    %v3629 = vunpack.c.l.b16 %v3386
    %v3630 = vunpack.c.l.b16 %v3387
    %v3631 = vunpack.c.h.b16 %v3387
    %v3632 = vunpack.c.l.b16 %v3388
    %v3633 = vunpack.c.l.b16 %v3389
    %v3634 = vunpack.c.h.b16 %v3389
    %v3635 = vunpack.c.l.b16 %v3390
    %v3636 = vunpack.c.l.b16 %v3391
    %v3637 = vunpack.c.h.b16 %v3391
    %v3638 = vunpack.c.l.b16 %v3392
    %v3639 = vunpack.c.l.b16 %v3393
    %v3640 = vunpack.c.h.b16 %v3393
    %v3641 = vunpack.c.l.b16 %v3394
    %v3642 = vunpack.c.l.b16 %v3395
    %v3643 = vunpack.c.h.b16 %v3395
    %v3644 = vunpack.c.l.b16 %v3396
    %v3645 = vunpack.c.l.b16 %v3397
    %v3646 = vunpack.c.h.b16 %v3397
    %v3647 = vunpack.c.l.b16 %v3398
    %v3648 = vunpack.c.l.b16 %v3399
    %v3649 = vunpack.c.h.b16 %v3399
    %v3650 = vunpack.c.l.b16 %v3400
    %v3651 = vunpack.c.l.b16 %v3401
    %v3652 = vunpack.c.h.b16 %v3401
    %v3653 = vunpack.c.l.b16 %v3402
    %v3654 = vunpack.c.l.b16 %v3403
    %v3655 = vunpack.c.h.b16 %v3403
    %v3656 = vunpack.c.l.b16 %v3404
    %v3657 = vunpack.c.l.b16 %v3405
    %v3658 = vunpack.c.h.b16 %v3405
    %v3659 = vunpack.c.l.b16 %v3406
    %v3660 = vunpack.c.l.b16 %v3407
    %v3661 = vunpack.c.h.b16 %v3407
    %v3662 = vunpack.c.l.b16 %v3408
    %v3663 = vunpack.c.l.b16 %v3409
    %v3664 = vunpack.c.h.b16 %v3409
    %v3665 = vunpack.c.l.b16 %v3410
    %v3666 = vunpack.c.l.b16 %v3411
    %v3667 = vunpack.c.h.b16 %v3411
    %v3668 = vunpack.c.l.b16 %v3412
    %v3669 = vunpack.c.l.b16 %v3413
    %v3670 = vunpack.c.h.b16 %v3413
    %v3671 = vunpack.c.l.b16 %v3414
    %v3672 = vunpack.c.l.b16 %v3415
    %v3673 = vunpack.c.h.b16 %v3415
    %v3674 = vunpack.c.l.b16 %v3416
    %v3675 = vunpack.c.l.b16 %v3417
    %v3676 = vunpack.c.h.b16 %v3417
    %v3677 = vunpack.c.l.b16 %v3418
    %v3678 = vunpack.c.l.b16 %v3419
    %v3679 = vunpack.c.h.b16 %v3419
    %v3680 = vunpack.c.l.b16 %v3420
    %v3681 = vunpack.c.l.b16 %v3421
    %v3682 = vunpack.c.h.b16 %v3421
    %v3683 = vunpack.c.l.b16 %v3422
    %v3684 = vpack.c.b16 %v3591, %v3588
    %v3685 = vpack.c.b16 %v3592, %v3589
    %v3686 = vpack.c.b16 %v3593, %v3590
    %v3687 = vpack.c.b16 %v3597, %v3594
    %v3688 = vpack.c.b16 %v3598, %v3595
    %v3689 = vpack.c.b16 %v3599, %v3596
    %v3690 = vpack.c.b16 %v3603, %v3600
    %v3691 = vpack.c.b16 %v3604, %v3601
    %v3692 = vpack.c.b16 %v3605, %v3602
    %v3693 = vpack.c.b16 %v3609, %v3606
    %v3694 = vpack.c.b16 %v3610, %v3607
    %v3695 = vpack.c.b16 %v3611, %v3608
    %v3696 = vpack.c.b16 %v3615, %v3612
    %v3697 = vpack.c.b16 %v3616, %v3613
    %v3698 = vpack.c.b16 %v3617, %v3614
    %v3699 = vpack.c.b16 %v3621, %v3618
    %v3700 = vpack.c.b16 %v3622, %v3619
    %v3701 = vpack.c.b16 %v3623, %v3620
    %v3702 = vpack.c.b16 %v3627, %v3624
    %v3703 = vpack.c.b16 %v3628, %v3625
    %v3704 = vpack.c.b16 %v3629, %v3626
    %v3705 = vpack.c.b16 %v3633, %v3630
    %v3706 = vpack.c.b16 %v3634, %v3631
    %v3707 = vpack.c.b16 %v3635, %v3632
    %v3708 = vpack.c.b16 %v3639, %v3636
    %v3709 = vpack.c.b16 %v3640, %v3637
    %v3710 = vpack.c.b16 %v3641, %v3638
    %v3711 = vpack.c.b16 %v3645, %v3642
    %v3712 = vpack.c.b16 %v3646, %v3643
    %v3713 = vpack.c.b16 %v3647, %v3644
    %v3714 = vpack.c.b16 %v3651, %v3648
    %v3715 = vpack.c.b16 %v3652, %v3649
    %v3716 = vpack.c.b16 %v3653, %v3650
    %v3717 = vpack.c.b16 %v3657, %v3654
    %v3718 = vpack.c.b16 %v3658, %v3655
    %v3719 = vpack.c.b16 %v3659, %v3656
    %v3720 = vpack.c.b16 %v3663, %v3660
    %v3721 = vpack.c.b16 %v3664, %v3661
    %v3722 = vpack.c.b16 %v3665, %v3662
    %v3723 = vpack.c.b16 %v3669, %v3666
    %v3724 = vpack.c.b16 %v3670, %v3667
    %v3725 = vpack.c.b16 %v3671, %v3668
    %v3726 = vpack.c.b16 %v3675, %v3672
    %v3727 = vpack.c.b16 %v3676, %v3673
    %v3728 = vpack.c.b16 %v3677, %v3674
    %v3729 = vpack.c.b16 %v3681, %v3678
    %v3730 = vpack.c.b16 %v3682, %v3679
    %v3731 = vpack.c.b16 %v3683, %v3680
    %v3828 = vunpack.c.l.b16 %v3476
    %v3829 = vunpack.c.l.b16 %v3477
    %v3830 = vunpack.c.l.b16 %v3478
    %v3831 = vunpack.c.l.b16 %v3479
    %v3832 = vunpack.c.l.b16 %v3480
    %v3833 = vunpack.c.l.b16 %v3481
    %v3834 = vunpack.c.l.b16 %v3482
    %v3835 = vunpack.c.l.b16 %v3483
    %v3836 = vunpack.c.l.b16 %v3484
    %v3837 = vunpack.c.l.b16 %v3485
    %v3838 = vunpack.c.l.b16 %v3486
    %v3839 = vunpack.c.l.b16 %v3487
    %v3840 = vunpack.c.l.b16 %v3488
    %v3841 = vunpack.c.l.b16 %v3489
    %v3842 = vunpack.c.l.b16 %v3490
    %v3843 = vunpack.c.l.b16 %v3491
    %v3844 = vunpack.c.l.b16 %v3492
    %v3845 = vunpack.c.l.b16 %v3493
    %v3846 = vunpack.c.l.b16 %v3494
    %v3847 = vunpack.c.l.b16 %v3495
    %v3848 = vunpack.c.l.b16 %v3496
    %v3849 = vunpack.c.l.b16 %v3497
    %v3850 = vunpack.c.l.b16 %v3498
    %v3851 = vunpack.c.l.b16 %v3499
    %v3852 = vunpack.c.l.b16 %v3500
    %v3853 = vunpack.c.l.b16 %v3501
    %v3854 = vunpack.c.l.b16 %v3502
    %v3855 = vunpack.c.l.b16 %v3503
    %v3856 = vunpack.c.l.b16 %v3504
    %v3857 = vunpack.c.l.b16 %v3505
    %v3858 = vunpack.c.l.b16 %v3506
    %v3859 = vunpack.c.l.b16 %v3507
    %v3860 = vunpack.c.l.b16 %v3508
    %v3861 = vunpack.c.l.b16 %v3509
    %v3862 = vunpack.c.l.b16 %v3510
    %v3863 = vunpack.c.l.b16 %v3511
    %v3864 = vunpack.c.l.b16 %v3512
    %v3865 = vunpack.c.l.b16 %v3513
    %v3866 = vunpack.c.l.b16 %v3514
    %v3867 = vunpack.c.l.b16 %v3515
    %v3868 = vunpack.c.l.b16 %v3516
    %v3869 = vunpack.c.l.b16 %v3517
    %v3870 = vunpack.c.l.b16 %v3518
    %v3871 = vunpack.c.l.b16 %v3519
    %v3872 = vunpack.c.l.b16 %v3520
    %v3873 = vunpack.c.l.b16 %v3521
    %v3874 = vunpack.c.l.b16 %v3522
    %v3875 = vunpack.c.l.b16 %v3523
    %v3876 = vpack.c.b16 %v3829, %v3828
    %v3877 = vpack.c.b16 %v3831, %v3830
    %v3878 = vpack.c.b16 %v3833, %v3832
    %v3879 = vpack.c.b16 %v3835, %v3834
    %v3880 = vpack.c.b16 %v3837, %v3836
    %v3881 = vpack.c.b16 %v3839, %v3838
    %v3882 = vpack.c.b16 %v3841, %v3840
    %v3883 = vpack.c.b16 %v3843, %v3842
    %v3884 = vpack.c.b16 %v3845, %v3844
    %v3885 = vpack.c.b16 %v3847, %v3846
    %v3886 = vpack.c.b16 %v3849, %v3848
    %v3887 = vpack.c.b16 %v3851, %v3850
    %v3888 = vpack.c.b16 %v3853, %v3852
    %v3889 = vpack.c.b16 %v3855, %v3854
    %v3890 = vpack.c.b16 %v3857, %v3856
    %v3891 = vpack.c.b16 %v3859, %v3858
    %v3892 = vpack.c.b16 %v3861, %v3860
    %v3893 = vpack.c.b16 %v3863, %v3862
    %v3894 = vpack.c.b16 %v3865, %v3864
    %v3895 = vpack.c.b16 %v3867, %v3866
    %v3896 = vpack.c.b16 %v3869, %v3868
    %v3897 = vpack.c.b16 %v3871, %v3870
    %v3898 = vpack.c.b16 %v3873, %v3872
    %v3899 = vpack.c.b16 %v3875, %v3874
    %3924 = vmatpush.bf16.msra.mxu0 %v3883
    %3925 = vmatpush.bf16.msra.mxu0 %v3882
    %3926 = vmatpush.bf16.msra.mxu0 %v3881
    %3927 = vmatpush.bf16.msra.mxu0 %v3880
    %3928 = vmatpush.bf16.msra.mxu0 %v3879
    %3929 = vmatpush.bf16.msra.mxu0 %v3878
    %3930 = vmatpush.bf16.msra.mxu0 %v3877
    %3931 = vmatpush.bf16.msra.mxu0 %v3876
    %3932 = vmatmul.bf16.gmra.mxu0 %v3684
    %v3933 = vpop.f32.mrf.mxu0
    %v3934 = vadd.f32 0.0, %v3933
    %v3935 = vpop.f32.mrf.mxu0
    %v3936 = vadd.f32 0.0, %v3935
    %3937 = vmatmul.bf16.gmra.mxu0 %v3687
    %v3938 = vpop.f32.mrf.mxu0
    %v3939 = vadd.f32 0.0, %v3938
    %v3940 = vpop.f32.mrf.mxu0
    %v3941 = vadd.f32 0.0, %v3940
    %3942 = vmatmul.bf16.gmra.mxu0 %v3690
    %v3943 = vpop.f32.mrf.mxu0
    %v3944 = vadd.f32 0.0, %v3943
    %v3945 = vpop.f32.mrf.mxu0
    %v3946 = vadd.f32 0.0, %v3945
    %3947 = vmatmul.bf16.gmra.mxu0 %v3693
    %v3948 = vpop.f32.mrf.mxu0
    %v3949 = vadd.f32 0.0, %v3948
    %v3950 = vpop.f32.mrf.mxu0
    %v3951 = vadd.f32 0.0, %v3950
    %3952 = vmatmul.bf16.gmra.mxu0 %v3696
    %v3953 = vpop.f32.mrf.mxu0
    %v3954 = vadd.f32 0.0, %v3953
    %v3955 = vpop.f32.mrf.mxu0
    %v3956 = vadd.f32 0.0, %v3955
    %3957 = vmatmul.bf16.gmra.mxu0 %v3699
    %v3958 = vpop.f32.mrf.mxu0
    %v3959 = vadd.f32 0.0, %v3958
    %v3960 = vpop.f32.mrf.mxu0
    %v3961 = vadd.f32 0.0, %v3960
    %3962 = vmatmul.bf16.gmra.mxu0 %v3702
    %v3963 = vpop.f32.mrf.mxu0
    %v3964 = vadd.f32 0.0, %v3963
    %v3965 = vpop.f32.mrf.mxu0
    %v3966 = vadd.f32 0.0, %v3965
    %3967 = vmatmul.bf16.gmra.mxu0 %v3705
    %v3968 = vpop.f32.mrf.mxu0
    %v3969 = vadd.f32 0.0, %v3968
    %v3970 = vpop.f32.mrf.mxu0
    %v3971 = vadd.f32 0.0, %v3970
    %3972 = vmatmul.bf16.gmra.mxu0 %v3708
    %v3973 = vpop.f32.mrf.mxu0
    %v3974 = vadd.f32 0.0, %v3973
    %v3975 = vpop.f32.mrf.mxu0
    %v3976 = vadd.f32 0.0, %v3975
    %3977 = vmatmul.bf16.gmra.mxu0 %v3711
    %v3978 = vpop.f32.mrf.mxu0
    %v3979 = vadd.f32 0.0, %v3978
    %v3980 = vpop.f32.mrf.mxu0
    %v3981 = vadd.f32 0.0, %v3980
    %3982 = vmatmul.bf16.gmra.mxu0 %v3714
    %v3983 = vpop.f32.mrf.mxu0
    %v3984 = vadd.f32 0.0, %v3983
    %v3985 = vpop.f32.mrf.mxu0
    %v3986 = vadd.f32 0.0, %v3985
    %3987 = vmatmul.bf16.gmra.mxu0 %v3717
    %v3988 = vpop.f32.mrf.mxu0
    %v3989 = vadd.f32 0.0, %v3988
    %v3990 = vpop.f32.mrf.mxu0
    %v3991 = vadd.f32 0.0, %v3990
    %3992 = vmatmul.bf16.gmra.mxu0 %v3720
    %v3993 = vpop.f32.mrf.mxu0
    %v3994 = vadd.f32 0.0, %v3993
    %v3995 = vpop.f32.mrf.mxu0
    %v3996 = vadd.f32 0.0, %v3995
    %3997 = vmatmul.bf16.gmra.mxu0 %v3723
    %v3998 = vpop.f32.mrf.mxu0
    %v3999 = vadd.f32 0.0, %v3998
    %v4000 = vpop.f32.mrf.mxu0
    %v4001 = vadd.f32 0.0, %v4000
    %4002 = vmatmul.bf16.gmra.mxu0 %v3726
    %v4003 = vpop.f32.mrf.mxu0
    %v4004 = vadd.f32 0.0, %v4003
    %v4005 = vpop.f32.mrf.mxu0
    %v4006 = vadd.f32 0.0, %v4005
    %4007 = vmatmul.bf16.gmra.mxu0 %v3729
    %v4008 = vpop.f32.mrf.mxu0
    %v4009 = vadd.f32 0.0, %v4008
    %v4010 = vpop.f32.mrf.mxu0
    %v4011 = vadd.f32 0.0, %v4010
    %4012 = vdwg.mxu0
    %4013 = vmatpush.bf16.msra.mxu0 %v3891
    %4014 = vmatpush.bf16.msra.mxu0 %v3890
    %4015 = vmatpush.bf16.msra.mxu0 %v3889
    %4016 = vmatpush.bf16.msra.mxu0 %v3888
    %4017 = vmatpush.bf16.msra.mxu0 %v3887
    %4018 = vmatpush.bf16.msra.mxu0 %v3886
    %4019 = vmatpush.bf16.msra.mxu0 %v3885
    %4020 = vmatpush.bf16.msra.mxu0 %v3884
    %4021 = vmatmul.bf16.gmra.mxu0 %v3685
    %v4022 = vpop.f32.mrf.mxu0
    %v4023 = vadd.f32 %v3934, %v4022
    %v4024 = vpop.f32.mrf.mxu0
    %v4025 = vadd.f32 %v3936, %v4024
    %4026 = vmatmul.bf16.gmra.mxu0 %v3688
    %v4027 = vpop.f32.mrf.mxu0
    %v4028 = vadd.f32 %v3939, %v4027
    %v4029 = vpop.f32.mrf.mxu0
    %v4030 = vadd.f32 %v3941, %v4029
    %4031 = vmatmul.bf16.gmra.mxu0 %v3691
    %v4032 = vpop.f32.mrf.mxu0
    %v4033 = vadd.f32 %v3944, %v4032
    %v4034 = vpop.f32.mrf.mxu0
    %v4035 = vadd.f32 %v3946, %v4034
    %4036 = vmatmul.bf16.gmra.mxu0 %v3694
    %v4037 = vpop.f32.mrf.mxu0
    %v4038 = vadd.f32 %v3949, %v4037
    %v4039 = vpop.f32.mrf.mxu0
    %v4040 = vadd.f32 %v3951, %v4039
    %4041 = vmatmul.bf16.gmra.mxu0 %v3697
    %v4042 = vpop.f32.mrf.mxu0
    %v4043 = vadd.f32 %v3954, %v4042
    %v4044 = vpop.f32.mrf.mxu0
    %v4045 = vadd.f32 %v3956, %v4044
    %4046 = vmatmul.bf16.gmra.mxu0 %v3700
    %v4047 = vpop.f32.mrf.mxu0
    %v4048 = vadd.f32 %v3959, %v4047
    %v4049 = vpop.f32.mrf.mxu0
    %v4050 = vadd.f32 %v3961, %v4049
    %4051 = vmatmul.bf16.gmra.mxu0 %v3703
    %v4052 = vpop.f32.mrf.mxu0
    %v4053 = vadd.f32 %v3964, %v4052
    %v4054 = vpop.f32.mrf.mxu0
    %v4055 = vadd.f32 %v3966, %v4054
    %4056 = vmatmul.bf16.gmra.mxu0 %v3706
    %v4057 = vpop.f32.mrf.mxu0
    %v4058 = vadd.f32 %v3969, %v4057
    %v4059 = vpop.f32.mrf.mxu0
    %v4060 = vadd.f32 %v3971, %v4059
    %4061 = vmatmul.bf16.gmra.mxu0 %v3709
    %v4062 = vpop.f32.mrf.mxu0
    %v4063 = vadd.f32 %v3974, %v4062
    %v4064 = vpop.f32.mrf.mxu0
    %v4065 = vadd.f32 %v3976, %v4064
    %4066 = vmatmul.bf16.gmra.mxu0 %v3712
    %v4067 = vpop.f32.mrf.mxu0
    %v4068 = vadd.f32 %v3979, %v4067
    %v4069 = vpop.f32.mrf.mxu0
    %v4070 = vadd.f32 %v3981, %v4069
    %4071 = vmatmul.bf16.gmra.mxu0 %v3715
    %v4072 = vpop.f32.mrf.mxu0
    %v4073 = vadd.f32 %v3984, %v4072
    %v4074 = vpop.f32.mrf.mxu0
    %v4075 = vadd.f32 %v3986, %v4074
    %4076 = vmatmul.bf16.gmra.mxu0 %v3718
    %v4077 = vpop.f32.mrf.mxu0
    %v4078 = vadd.f32 %v3989, %v4077
    %v4079 = vpop.f32.mrf.mxu0
    %v4080 = vadd.f32 %v3991, %v4079
    %4081 = vmatmul.bf16.gmra.mxu0 %v3721
    %v4082 = vpop.f32.mrf.mxu0
    %v4083 = vadd.f32 %v3994, %v4082
    %v4084 = vpop.f32.mrf.mxu0
    %v4085 = vadd.f32 %v3996, %v4084
    %4086 = vmatmul.bf16.gmra.mxu0 %v3724
    %v4087 = vpop.f32.mrf.mxu0
    %v4088 = vadd.f32 %v3999, %v4087
    %v4089 = vpop.f32.mrf.mxu0
    %v4090 = vadd.f32 %v4001, %v4089
    %4091 = vmatmul.bf16.gmra.mxu0 %v3727
    %v4092 = vpop.f32.mrf.mxu0
    %v4093 = vadd.f32 %v4004, %v4092
    %v4094 = vpop.f32.mrf.mxu0
    %v4095 = vadd.f32 %v4006, %v4094
    %4096 = vmatmul.bf16.gmra.mxu0 %v3730
    %v4097 = vpop.f32.mrf.mxu0
    %v4098 = vadd.f32 %v4009, %v4097
    %v4099 = vpop.f32.mrf.mxu0
    %v4100 = vadd.f32 %v4011, %v4099
    %4101 = vdwg.mxu0
    %4102 = vmatpush.bf16.msra.mxu0 %v3899
    %4103 = vmatpush.bf16.msra.mxu0 %v3898
    %4104 = vmatpush.bf16.msra.mxu0 %v3897
    %4105 = vmatpush.bf16.msra.mxu0 %v3896
    %4106 = vmatpush.bf16.msra.mxu0 %v3895
    %4107 = vmatpush.bf16.msra.mxu0 %v3894
    %4108 = vmatpush.bf16.msra.mxu0 %v3893
    %4109 = vmatpush.bf16.msra.mxu0 %v3892
    %4110 = vmatmul.bf16.gmra.mxu0 %v3686
    %v4111 = vpop.f32.mrf.mxu0
    %v4112 = vadd.f32 %v4023, %v4111
    %v4113 = vpop.f32.mrf.mxu0
    %v4114 = vadd.f32 %v4025, %v4113
    %4115 = vmatmul.bf16.gmra.mxu0 %v3689
    %v4116 = vpop.f32.mrf.mxu0
    %v4117 = vadd.f32 %v4028, %v4116
    %v4118 = vpop.f32.mrf.mxu0
    %v4119 = vadd.f32 %v4030, %v4118
    %4120 = vmatmul.bf16.gmra.mxu0 %v3692
    %v4121 = vpop.f32.mrf.mxu0
    %v4122 = vadd.f32 %v4033, %v4121
    %v4123 = vpop.f32.mrf.mxu0
    %v4124 = vadd.f32 %v4035, %v4123
    %4125 = vmatmul.bf16.gmra.mxu0 %v3695
    %v4126 = vpop.f32.mrf.mxu0
    %v4127 = vadd.f32 %v4038, %v4126
    %v4128 = vpop.f32.mrf.mxu0
    %v4129 = vadd.f32 %v4040, %v4128
    %4130 = vmatmul.bf16.gmra.mxu0 %v3698
    %v4131 = vpop.f32.mrf.mxu0
    %v4132 = vadd.f32 %v4043, %v4131
    %v4133 = vpop.f32.mrf.mxu0
    %v4134 = vadd.f32 %v4045, %v4133
    %4135 = vmatmul.bf16.gmra.mxu0 %v3701
    %v4136 = vpop.f32.mrf.mxu0
    %v4137 = vadd.f32 %v4048, %v4136
    %v4138 = vpop.f32.mrf.mxu0
    %v4139 = vadd.f32 %v4050, %v4138
    %4140 = vmatmul.bf16.gmra.mxu0 %v3704
    %v4141 = vpop.f32.mrf.mxu0
    %v4142 = vadd.f32 %v4053, %v4141
    %v4143 = vpop.f32.mrf.mxu0
    %v4144 = vadd.f32 %v4055, %v4143
    %4145 = vmatmul.bf16.gmra.mxu0 %v3707
    %v4146 = vpop.f32.mrf.mxu0
    %v4147 = vadd.f32 %v4058, %v4146
    %v4148 = vpop.f32.mrf.mxu0
    %v4149 = vadd.f32 %v4060, %v4148
    %4150 = vmatmul.bf16.gmra.mxu0 %v3710
    %v4151 = vpop.f32.mrf.mxu0
    %v4152 = vadd.f32 %v4063, %v4151
    %v4153 = vpop.f32.mrf.mxu0
    %v4154 = vadd.f32 %v4065, %v4153
    %4155 = vmatmul.bf16.gmra.mxu0 %v3713
    %v4156 = vpop.f32.mrf.mxu0
    %v4157 = vadd.f32 %v4068, %v4156
    %v4158 = vpop.f32.mrf.mxu0
    %v4159 = vadd.f32 %v4070, %v4158
    %4160 = vmatmul.bf16.gmra.mxu0 %v3716
    %v4161 = vpop.f32.mrf.mxu0
    %v4162 = vadd.f32 %v4073, %v4161
    %v4163 = vpop.f32.mrf.mxu0
    %v4164 = vadd.f32 %v4075, %v4163
    %4165 = vmatmul.bf16.gmra.mxu0 %v3719
    %v4166 = vpop.f32.mrf.mxu0
    %v4167 = vadd.f32 %v4078, %v4166
    %v4168 = vpop.f32.mrf.mxu0
    %v4169 = vadd.f32 %v4080, %v4168
    %4170 = vmatmul.bf16.gmra.mxu0 %v3722
    %v4171 = vpop.f32.mrf.mxu0
    %v4172 = vadd.f32 %v4083, %v4171
    %v4173 = vpop.f32.mrf.mxu0
    %v4174 = vadd.f32 %v4085, %v4173
    %4175 = vmatmul.bf16.gmra.mxu0 %v3725
    %v4176 = vpop.f32.mrf.mxu0
    %v4177 = vadd.f32 %v4088, %v4176
    %v4178 = vpop.f32.mrf.mxu0
    %v4179 = vadd.f32 %v4090, %v4178
    %4180 = vmatmul.bf16.gmra.mxu0 %v3728
    %v4181 = vpop.f32.mrf.mxu0
    %v4182 = vadd.f32 %v4093, %v4181
    %v4183 = vpop.f32.mrf.mxu0
    %v4184 = vadd.f32 %v4095, %v4183
    %4185 = vmatmul.bf16.gmra.mxu0 %v3731
    %v4186 = vpop.f32.mrf.mxu0
    %v4187 = vadd.f32 %v4098, %v4186
    %v4188 = vpop.f32.mrf.mxu0
    %v4189 = vadd.f32 %v4100, %v4188
    %4190 = vdwg.mxu0
    %v4195 = vunpack.c.l.b16 %v3355
    %v4196 = vunpack.c.h.b16 %v3355
    %v4197 = vunpack.c.l.b16 %v3356
    %v4198 = vunpack.c.l.b16 %v3357
    %v4199 = vunpack.c.h.b16 %v3357
    %v4200 = vunpack.c.l.b16 %v3358
    %v4201 = vpack.c.b16 %v4198, %v4195
    %v4202 = vpack.c.b16 %v4199, %v4196
    %v4203 = vpack.c.b16 %v4200, %v4197
    %v4255 = vunpack.c.l.b16 %v3427
    %v4256 = vunpack.c.l.b16 %v3428
    %v4257 = vunpack.c.l.b16 %v3429
    %v4258 = vunpack.c.l.b16 %v3430
    %v4259 = vunpack.c.l.b16 %v3431
    %v4260 = vunpack.c.l.b16 %v3432
    %v4261 = vunpack.c.l.b16 %v3433
    %v4262 = vunpack.c.l.b16 %v3434
    %v4263 = vunpack.c.l.b16 %v3435
    %v4264 = vunpack.c.l.b16 %v3436
    %v4265 = vunpack.c.l.b16 %v3437
    %v4266 = vunpack.c.l.b16 %v3438
    %v4267 = vunpack.c.l.b16 %v3439
    %v4268 = vunpack.c.l.b16 %v3440
    %v4269 = vunpack.c.l.b16 %v3441
    %v4270 = vunpack.c.l.b16 %v3442
    %v4271 = vunpack.c.l.b16 %v3443
    %v4272 = vunpack.c.l.b16 %v3444
    %v4273 = vunpack.c.l.b16 %v3445
    %v4274 = vunpack.c.l.b16 %v3446
    %v4275 = vunpack.c.l.b16 %v3447
    %v4276 = vunpack.c.l.b16 %v3448
    %v4277 = vunpack.c.l.b16 %v3449
    %v4278 = vunpack.c.l.b16 %v3450
    %v4279 = vunpack.c.l.b16 %v3451
    %v4280 = vunpack.c.l.b16 %v3452
    %v4281 = vunpack.c.l.b16 %v3453
    %v4282 = vunpack.c.l.b16 %v3454
    %v4283 = vunpack.c.l.b16 %v3455
    %v4284 = vunpack.c.l.b16 %v3456
    %v4285 = vunpack.c.l.b16 %v3457
    %v4286 = vunpack.c.l.b16 %v3458
    %v4287 = vunpack.c.l.b16 %v3459
    %v4288 = vunpack.c.l.b16 %v3460
    %v4289 = vunpack.c.l.b16 %v3461
    %v4290 = vunpack.c.l.b16 %v3462
    %v4291 = vunpack.c.l.b16 %v3463
    %v4292 = vunpack.c.l.b16 %v3464
    %v4293 = vunpack.c.l.b16 %v3465
    %v4294 = vunpack.c.l.b16 %v3466
    %v4295 = vunpack.c.l.b16 %v3467
    %v4296 = vunpack.c.l.b16 %v3468
    %v4297 = vunpack.c.l.b16 %v3469
    %v4298 = vunpack.c.l.b16 %v3470
    %v4299 = vunpack.c.l.b16 %v3471
    %v4300 = vunpack.c.l.b16 %v3472
    %v4301 = vunpack.c.l.b16 %v3473
    %v4302 = vunpack.c.l.b16 %v3474
    %v4303 = vpack.c.b16 %v4256, %v4255
    %v4304 = vpack.c.b16 %v4258, %v4257
    %v4305 = vpack.c.b16 %v4260, %v4259
    %v4306 = vpack.c.b16 %v4262, %v4261
    %v4307 = vpack.c.b16 %v4264, %v4263
    %v4308 = vpack.c.b16 %v4266, %v4265
    %v4309 = vpack.c.b16 %v4268, %v4267
    %v4310 = vpack.c.b16 %v4270, %v4269
    %v4311 = vpack.c.b16 %v4272, %v4271
    %v4312 = vpack.c.b16 %v4274, %v4273
    %v4313 = vpack.c.b16 %v4276, %v4275
    %v4314 = vpack.c.b16 %v4278, %v4277
    %v4315 = vpack.c.b16 %v4280, %v4279
    %v4316 = vpack.c.b16 %v4282, %v4281
    %v4317 = vpack.c.b16 %v4284, %v4283
    %v4318 = vpack.c.b16 %v4286, %v4285
    %v4319 = vpack.c.b16 %v4288, %v4287
    %v4320 = vpack.c.b16 %v4290, %v4289
    %v4321 = vpack.c.b16 %v4292, %v4291
    %v4322 = vpack.c.b16 %v4294, %v4293
    %v4323 = vpack.c.b16 %v4296, %v4295
    %v4324 = vpack.c.b16 %v4298, %v4297
    %v4325 = vpack.c.b16 %v4300, %v4299
    %v4326 = vpack.c.b16 %v4302, %v4301
    %4351 = vmatpush.bf16.msra.mxu0 %v4310
    %4352 = vmatpush.bf16.msra.mxu0 %v4309
    %4353 = vmatpush.bf16.msra.mxu0 %v4308
    %4354 = vmatpush.bf16.msra.mxu0 %v4307
    %4355 = vmatpush.bf16.msra.mxu0 %v4306
    %4356 = vmatpush.bf16.msra.mxu0 %v4305
    %4357 = vmatpush.bf16.msra.mxu0 %v4304
    %4358 = vmatpush.bf16.msra.mxu0 %v4303
    %4359 = vmatmul.bf16.gmra.mxu0 %v4201
    %v4360 = vpop.f32.mrf.mxu0
    %v4361 = vadd.f32 %v4112, %v4360
    %v4362 = vpop.f32.mrf.mxu0
    %v4363 = vadd.f32 %v4114, %v4362
    %4364 = vmatmul.bf16.gmra.mxu0 %v3684
    %v4365 = vpop.f32.mrf.mxu0
    %v4366 = vadd.f32 %v4117, %v4365
    %v4367 = vpop.f32.mrf.mxu0
    %v4368 = vadd.f32 %v4119, %v4367
    %4369 = vmatmul.bf16.gmra.mxu0 %v3687
    %v4370 = vpop.f32.mrf.mxu0
    %v4371 = vadd.f32 %v4122, %v4370
    %v4372 = vpop.f32.mrf.mxu0
    %v4373 = vadd.f32 %v4124, %v4372
    %4374 = vmatmul.bf16.gmra.mxu0 %v3690
    %v4375 = vpop.f32.mrf.mxu0
    %v4376 = vadd.f32 %v4127, %v4375
    %v4377 = vpop.f32.mrf.mxu0
    %v4378 = vadd.f32 %v4129, %v4377
    %4379 = vmatmul.bf16.gmra.mxu0 %v3693
    %v4380 = vpop.f32.mrf.mxu0
    %v4381 = vadd.f32 %v4132, %v4380
    %v4382 = vpop.f32.mrf.mxu0
    %v4383 = vadd.f32 %v4134, %v4382
    %4384 = vmatmul.bf16.gmra.mxu0 %v3696
    %v4385 = vpop.f32.mrf.mxu0
    %v4386 = vadd.f32 %v4137, %v4385
    %v4387 = vpop.f32.mrf.mxu0
    %v4388 = vadd.f32 %v4139, %v4387
    %4389 = vmatmul.bf16.gmra.mxu0 %v3699
    %v4390 = vpop.f32.mrf.mxu0
    %v4391 = vadd.f32 %v4142, %v4390
    %v4392 = vpop.f32.mrf.mxu0
    %v4393 = vadd.f32 %v4144, %v4392
    %4394 = vmatmul.bf16.gmra.mxu0 %v3702
    %v4395 = vpop.f32.mrf.mxu0
    %v4396 = vadd.f32 %v4147, %v4395
    %v4397 = vpop.f32.mrf.mxu0
    %v4398 = vadd.f32 %v4149, %v4397
    %4399 = vmatmul.bf16.gmra.mxu0 %v3705
    %v4400 = vpop.f32.mrf.mxu0
    %v4401 = vadd.f32 %v4152, %v4400
    %v4402 = vpop.f32.mrf.mxu0
    %v4403 = vadd.f32 %v4154, %v4402
    %4404 = vmatmul.bf16.gmra.mxu0 %v3708
    %v4405 = vpop.f32.mrf.mxu0
    %v4406 = vadd.f32 %v4157, %v4405
    %v4407 = vpop.f32.mrf.mxu0
    %v4408 = vadd.f32 %v4159, %v4407
    %4409 = vmatmul.bf16.gmra.mxu0 %v3711
    %v4410 = vpop.f32.mrf.mxu0
    %v4411 = vadd.f32 %v4162, %v4410
    %v4412 = vpop.f32.mrf.mxu0
    %v4413 = vadd.f32 %v4164, %v4412
    %4414 = vmatmul.bf16.gmra.mxu0 %v3714
    %v4415 = vpop.f32.mrf.mxu0
    %v4416 = vadd.f32 %v4167, %v4415
    %v4417 = vpop.f32.mrf.mxu0
    %v4418 = vadd.f32 %v4169, %v4417
    %4419 = vmatmul.bf16.gmra.mxu0 %v3717
    %v4420 = vpop.f32.mrf.mxu0
    %v4421 = vadd.f32 %v4172, %v4420
    %v4422 = vpop.f32.mrf.mxu0
    %v4423 = vadd.f32 %v4174, %v4422
    %4424 = vmatmul.bf16.gmra.mxu0 %v3720
    %v4425 = vpop.f32.mrf.mxu0
    %v4426 = vadd.f32 %v4177, %v4425
    %v4427 = vpop.f32.mrf.mxu0
    %v4428 = vadd.f32 %v4179, %v4427
    %4429 = vmatmul.bf16.gmra.mxu0 %v3723
    %v4430 = vpop.f32.mrf.mxu0
    %v4431 = vadd.f32 %v4182, %v4430
    %v4432 = vpop.f32.mrf.mxu0
    %v4433 = vadd.f32 %v4184, %v4432
    %4434 = vmatmul.bf16.gmra.mxu0 %v3726
    %v4435 = vpop.f32.mrf.mxu0
    %v4436 = vadd.f32 %v4187, %v4435
    %v4437 = vpop.f32.mrf.mxu0
    %v4438 = vadd.f32 %v4189, %v4437
    %4439 = vdwg.mxu0
    %4440 = vmatpush.bf16.msra.mxu0 %v4318
    %4441 = vmatpush.bf16.msra.mxu0 %v4317
    %4442 = vmatpush.bf16.msra.mxu0 %v4316
    %4443 = vmatpush.bf16.msra.mxu0 %v4315
    %4444 = vmatpush.bf16.msra.mxu0 %v4314
    %4445 = vmatpush.bf16.msra.mxu0 %v4313
    %4446 = vmatpush.bf16.msra.mxu0 %v4312
    %4447 = vmatpush.bf16.msra.mxu0 %v4311
    %4448 = vmatmul.bf16.gmra.mxu0 %v4202
    %v4449 = vpop.f32.mrf.mxu0
    %v4450 = vadd.f32 %v4361, %v4449
    %v4451 = vpop.f32.mrf.mxu0
    %v4452 = vadd.f32 %v4363, %v4451
    %4453 = vmatmul.bf16.gmra.mxu0 %v3685
    %v4454 = vpop.f32.mrf.mxu0
    %v4455 = vadd.f32 %v4366, %v4454
    %v4456 = vpop.f32.mrf.mxu0
    %v4457 = vadd.f32 %v4368, %v4456
    %4458 = vmatmul.bf16.gmra.mxu0 %v3688
    %v4459 = vpop.f32.mrf.mxu0
    %v4460 = vadd.f32 %v4371, %v4459
    %v4461 = vpop.f32.mrf.mxu0
    %v4462 = vadd.f32 %v4373, %v4461
    %4463 = vmatmul.bf16.gmra.mxu0 %v3691
    %v4464 = vpop.f32.mrf.mxu0
    %v4465 = vadd.f32 %v4376, %v4464
    %v4466 = vpop.f32.mrf.mxu0
    %v4467 = vadd.f32 %v4378, %v4466
    %4468 = vmatmul.bf16.gmra.mxu0 %v3694
    %v4469 = vpop.f32.mrf.mxu0
    %v4470 = vadd.f32 %v4381, %v4469
    %v4471 = vpop.f32.mrf.mxu0
    %v4472 = vadd.f32 %v4383, %v4471
    %4473 = vmatmul.bf16.gmra.mxu0 %v3697
    %v4474 = vpop.f32.mrf.mxu0
    %v4475 = vadd.f32 %v4386, %v4474
    %v4476 = vpop.f32.mrf.mxu0
    %v4477 = vadd.f32 %v4388, %v4476
    %4478 = vmatmul.bf16.gmra.mxu0 %v3700
    %v4479 = vpop.f32.mrf.mxu0
    %v4480 = vadd.f32 %v4391, %v4479
    %v4481 = vpop.f32.mrf.mxu0
    %v4482 = vadd.f32 %v4393, %v4481
    %4483 = vmatmul.bf16.gmra.mxu0 %v3703
    %v4484 = vpop.f32.mrf.mxu0
    %v4485 = vadd.f32 %v4396, %v4484
    %v4486 = vpop.f32.mrf.mxu0
    %v4487 = vadd.f32 %v4398, %v4486
    %4488 = vmatmul.bf16.gmra.mxu0 %v3706
    %v4489 = vpop.f32.mrf.mxu0
    %v4490 = vadd.f32 %v4401, %v4489
    %v4491 = vpop.f32.mrf.mxu0
    %v4492 = vadd.f32 %v4403, %v4491
    %4493 = vmatmul.bf16.gmra.mxu0 %v3709
    %v4494 = vpop.f32.mrf.mxu0
    %v4495 = vadd.f32 %v4406, %v4494
    %v4496 = vpop.f32.mrf.mxu0
    %v4497 = vadd.f32 %v4408, %v4496
    %4498 = vmatmul.bf16.gmra.mxu0 %v3712
    %v4499 = vpop.f32.mrf.mxu0
    %v4500 = vadd.f32 %v4411, %v4499
    %v4501 = vpop.f32.mrf.mxu0
    %v4502 = vadd.f32 %v4413, %v4501
    %4503 = vmatmul.bf16.gmra.mxu0 %v3715
    %v4504 = vpop.f32.mrf.mxu0
    %v4505 = vadd.f32 %v4416, %v4504
    %v4506 = vpop.f32.mrf.mxu0
    %v4507 = vadd.f32 %v4418, %v4506
    %4508 = vmatmul.bf16.gmra.mxu0 %v3718
    %v4509 = vpop.f32.mrf.mxu0
    %v4510 = vadd.f32 %v4421, %v4509
    %v4511 = vpop.f32.mrf.mxu0
    %v4512 = vadd.f32 %v4423, %v4511
    %4513 = vmatmul.bf16.gmra.mxu0 %v3721
    %v4514 = vpop.f32.mrf.mxu0
    %v4515 = vadd.f32 %v4426, %v4514
    %v4516 = vpop.f32.mrf.mxu0
    %v4517 = vadd.f32 %v4428, %v4516
    %4518 = vmatmul.bf16.gmra.mxu0 %v3724
    %v4519 = vpop.f32.mrf.mxu0
    %v4520 = vadd.f32 %v4431, %v4519
    %v4521 = vpop.f32.mrf.mxu0
    %v4522 = vadd.f32 %v4433, %v4521
    %4523 = vmatmul.bf16.gmra.mxu0 %v3727
    %v4524 = vpop.f32.mrf.mxu0
    %v4525 = vadd.f32 %v4436, %v4524
    %v4526 = vpop.f32.mrf.mxu0
    %v4527 = vadd.f32 %v4438, %v4526
    %4528 = vdwg.mxu0
    %4529 = vmatpush.bf16.msra.mxu0 %v4326
    %4530 = vmatpush.bf16.msra.mxu0 %v4325
    %4531 = vmatpush.bf16.msra.mxu0 %v4324
    %4532 = vmatpush.bf16.msra.mxu0 %v4323
    %4533 = vmatpush.bf16.msra.mxu0 %v4322
    %4534 = vmatpush.bf16.msra.mxu0 %v4321
    %4535 = vmatpush.bf16.msra.mxu0 %v4320
    %4536 = vmatpush.bf16.msra.mxu0 %v4319
    %4537 = vmatmul.bf16.gmra.mxu0 %v4203
    %v4538 = vpop.f32.mrf.mxu0
    %v4539 = vadd.f32 %v4450, %v4538
    %v4540 = vpop.f32.mrf.mxu0
    %v4541 = vadd.f32 %v4452, %v4540
    %4542 = vmatmul.bf16.gmra.mxu0 %v3686
    %v4543 = vpop.f32.mrf.mxu0
    %v4544 = vadd.f32 %v4455, %v4543
    %v4545 = vpop.f32.mrf.mxu0
    %v4546 = vadd.f32 %v4457, %v4545
    %4547 = vmatmul.bf16.gmra.mxu0 %v3689
    %v4548 = vpop.f32.mrf.mxu0
    %v4549 = vadd.f32 %v4460, %v4548
    %v4550 = vpop.f32.mrf.mxu0
    %v4551 = vadd.f32 %v4462, %v4550
    %4552 = vmatmul.bf16.gmra.mxu0 %v3692
    %v4553 = vpop.f32.mrf.mxu0
    %v4554 = vadd.f32 %v4465, %v4553
    %v4555 = vpop.f32.mrf.mxu0
    %v4556 = vadd.f32 %v4467, %v4555
    %4557 = vmatmul.bf16.gmra.mxu0 %v3695
    %v4558 = vpop.f32.mrf.mxu0
    %v4559 = vadd.f32 %v4470, %v4558
    %v4560 = vpop.f32.mrf.mxu0
    %v4561 = vadd.f32 %v4472, %v4560
    %4562 = vmatmul.bf16.gmra.mxu0 %v3698
    %v4563 = vpop.f32.mrf.mxu0
    %v4564 = vadd.f32 %v4475, %v4563
    %v4565 = vpop.f32.mrf.mxu0
    %v4566 = vadd.f32 %v4477, %v4565
    %4567 = vmatmul.bf16.gmra.mxu0 %v3701
    %v4568 = vpop.f32.mrf.mxu0
    %v4569 = vadd.f32 %v4480, %v4568
    %v4570 = vpop.f32.mrf.mxu0
    %v4571 = vadd.f32 %v4482, %v4570
    %4572 = vmatmul.bf16.gmra.mxu0 %v3704
    %v4573 = vpop.f32.mrf.mxu0
    %v4574 = vadd.f32 %v4485, %v4573
    %v4575 = vpop.f32.mrf.mxu0
    %v4576 = vadd.f32 %v4487, %v4575
    %4577 = vmatmul.bf16.gmra.mxu0 %v3707
    %v4578 = vpop.f32.mrf.mxu0
    %v4579 = vadd.f32 %v4490, %v4578
    %v4580 = vpop.f32.mrf.mxu0
    %v4581 = vadd.f32 %v4492, %v4580
    %4582 = vmatmul.bf16.gmra.mxu0 %v3710
    %v4583 = vpop.f32.mrf.mxu0
    %v4584 = vadd.f32 %v4495, %v4583
    %v4585 = vpop.f32.mrf.mxu0
    %v4586 = vadd.f32 %v4497, %v4585
    %4587 = vmatmul.bf16.gmra.mxu0 %v3713
    %v4588 = vpop.f32.mrf.mxu0
    %v4589 = vadd.f32 %v4500, %v4588
    %v4590 = vpop.f32.mrf.mxu0
    %v4591 = vadd.f32 %v4502, %v4590
    %4592 = vmatmul.bf16.gmra.mxu0 %v3716
    %v4593 = vpop.f32.mrf.mxu0
    %v4594 = vadd.f32 %v4505, %v4593
    %v4595 = vpop.f32.mrf.mxu0
    %v4596 = vadd.f32 %v4507, %v4595
    %4597 = vmatmul.bf16.gmra.mxu0 %v3719
    %v4598 = vpop.f32.mrf.mxu0
    %v4599 = vadd.f32 %v4510, %v4598
    %v4600 = vpop.f32.mrf.mxu0
    %v4601 = vadd.f32 %v4512, %v4600
    %4602 = vmatmul.bf16.gmra.mxu0 %v3722
    %v4603 = vpop.f32.mrf.mxu0
    %v4604 = vadd.f32 %v4515, %v4603
    %v4605 = vpop.f32.mrf.mxu0
    %v4606 = vadd.f32 %v4517, %v4605
    %4607 = vmatmul.bf16.gmra.mxu0 %v3725
    %v4608 = vpop.f32.mrf.mxu0
    %v4609 = vadd.f32 %v4520, %v4608
    %v4610 = vpop.f32.mrf.mxu0
    %v4611 = vadd.f32 %v4522, %v4610
    %4612 = vmatmul.bf16.gmra.mxu0 %v3728
    %v4613 = vpop.f32.mrf.mxu0
    %v4614 = vadd.f32 %v4525, %v4613
    %v4615 = vpop.f32.mrf.mxu0
    %v4616 = vadd.f32 %v4527, %v4615
    %4617 = vdwg.mxu0
    %s4618 = scalar_lea.vmem %s4, 384
    %v4619 = vld [vmem:[%s4618] sm:$0xf]
    %v4620 = vld [vmem:[%s4618 + $0x4] sm:$0xf]
    %v4621 = vld [vmem:[%s4618 + $0x8] sm:$0xf]
    %v4622 = vld [vmem:[%s4618 + $0xc] sm:$0xf]
    %v4623 = vld [vmem:[%s4618 + $0x10] sm:$0xf]
    %v4624 = vld [vmem:[%s4618 + $0x14] sm:$0xf]
    %v4625 = vld [vmem:[%s4618 + $0x18] sm:$0xf]
    %v4626 = vld [vmem:[%s4618 + $0x1c] sm:$0xf]
    %v4627 = vld [vmem:[%s4618 + $0x20] sm:$0xf]
    %v4628 = vld [vmem:[%s4618 + $0x24] sm:$0xf]
    %v4629 = vld [vmem:[%s4618 + $0x28] sm:$0xf]
    %v4630 = vld [vmem:[%s4618 + $0x2c] sm:$0xf]
    %v4631 = vld [vmem:[%s4618 + $0x30] sm:$0xf]
    %v4632 = vld [vmem:[%s4618 + $0x34] sm:$0xf]
    %v4633 = vld [vmem:[%s4618 + $0x38] sm:$0xf]
    %v4634 = vld [vmem:[%s4618 + $0x3c] sm:$0xf]
    %v4635 = vld [vmem:[%s4618 + $0x40] sm:$0xf]
    %v4636 = vld [vmem:[%s4618 + $0x44] sm:$0xf]
    %v4637 = vld [vmem:[%s4618 + $0x48] sm:$0xf]
    %v4638 = vld [vmem:[%s4618 + $0x4c] sm:$0xf]
    %v4639 = vld [vmem:[%s4618 + $0x50] sm:$0xf]
    %v4640 = vld [vmem:[%s4618 + $0x54] sm:$0xf]
    %v4641 = vld [vmem:[%s4618 + $0x58] sm:$0xf]
    %v4642 = vld [vmem:[%s4618 + $0x5c] sm:$0xf]
    %v4643 = vld [vmem:[%s4618 + $0x60] sm:$0xf]
    %v4644 = vld [vmem:[%s4618 + $0x64] sm:$0xf]
    %v4645 = vld [vmem:[%s4618 + $0x68] sm:$0xf]
    %v4646 = vld [vmem:[%s4618 + $0x6c] sm:$0xf]
    %v4647 = vld [vmem:[%s4618 + $0x70] sm:$0xf]
    %v4648 = vld [vmem:[%s4618 + $0x74] sm:$0xf]
    %v4649 = vld [vmem:[%s4618 + $0x78] sm:$0xf]
    %v4650 = vld [vmem:[%s4618 + $0x7c] sm:$0xf]
    %v4651 = vld [vmem:[%s4618 + $0x80] sm:$0xf]
    %v4652 = vld [vmem:[%s4618 + $0x84] sm:$0xf]
    %v4653 = vld [vmem:[%s4618 + $0x88] sm:$0xf]
    %v4654 = vld [vmem:[%s4618 + $0x8c] sm:$0xf]
    %v4655 = vld [vmem:[%s4618 + $0x90] sm:$0xf]
    %v4656 = vld [vmem:[%s4618 + $0x94] sm:$0xf]
    %v4657 = vld [vmem:[%s4618 + $0x98] sm:$0xf]
    %v4658 = vld [vmem:[%s4618 + $0x9c] sm:$0xf]
    %v4659 = vld [vmem:[%s4618 + $0xa0] sm:$0xf]
    %v4660 = vld [vmem:[%s4618 + $0xa4] sm:$0xf]
    %v4661 = vld [vmem:[%s4618 + $0xa8] sm:$0xf]
    %v4662 = vld [vmem:[%s4618 + $0xac] sm:$0xf]
    %v4663 = vld [vmem:[%s4618 + $0xb0] sm:$0xf]
    %v4664 = vld [vmem:[%s4618 + $0xb4] sm:$0xf]
    %v4665 = vld [vmem:[%s4618 + $0xb8] sm:$0xf]
    %v4666 = vld [vmem:[%s4618 + $0xbc] sm:$0xf]
    %v4671 = vunpack.c.l.b16 %v3423
    %v4672 = vunpack.c.h.b16 %v3423
    %v4673 = vunpack.c.l.b16 %v3424
    %v4674 = vunpack.c.l.b16 %v3425
    %v4675 = vunpack.c.h.b16 %v3425
    %v4676 = vunpack.c.l.b16 %v3426
    %v4677 = vpack.c.b16 %v4674, %v4671
    %v4678 = vpack.c.b16 %v4675, %v4672
    %v4679 = vpack.c.b16 %v4676, %v4673
    %v4731 = vunpack.c.l.b16 %v4619
    %v4732 = vunpack.c.l.b16 %v4620
    %v4733 = vunpack.c.l.b16 %v4621
    %v4734 = vunpack.c.l.b16 %v4622
    %v4735 = vunpack.c.l.b16 %v4623
    %v4736 = vunpack.c.l.b16 %v4624
    %v4737 = vunpack.c.l.b16 %v4625
    %v4738 = vunpack.c.l.b16 %v4626
    %v4739 = vunpack.c.l.b16 %v4627
    %v4740 = vunpack.c.l.b16 %v4628
    %v4741 = vunpack.c.l.b16 %v4629
    %v4742 = vunpack.c.l.b16 %v4630
    %v4743 = vunpack.c.l.b16 %v4631
    %v4744 = vunpack.c.l.b16 %v4632
    %v4745 = vunpack.c.l.b16 %v4633
    %v4746 = vunpack.c.l.b16 %v4634
    %v4747 = vunpack.c.l.b16 %v4635
    %v4748 = vunpack.c.l.b16 %v4636
    %v4749 = vunpack.c.l.b16 %v4637
    %v4750 = vunpack.c.l.b16 %v4638
    %v4751 = vunpack.c.l.b16 %v4639
    %v4752 = vunpack.c.l.b16 %v4640
    %v4753 = vunpack.c.l.b16 %v4641
    %v4754 = vunpack.c.l.b16 %v4642
    %v4755 = vunpack.c.l.b16 %v4643
    %v4756 = vunpack.c.l.b16 %v4644
    %v4757 = vunpack.c.l.b16 %v4645
    %v4758 = vunpack.c.l.b16 %v4646
    %v4759 = vunpack.c.l.b16 %v4647
    %v4760 = vunpack.c.l.b16 %v4648
    %v4761 = vunpack.c.l.b16 %v4649
    %v4762 = vunpack.c.l.b16 %v4650
    %v4763 = vunpack.c.l.b16 %v4651
    %v4764 = vunpack.c.l.b16 %v4652
    %v4765 = vunpack.c.l.b16 %v4653
    %v4766 = vunpack.c.l.b16 %v4654
    %v4767 = vunpack.c.l.b16 %v4655
    %v4768 = vunpack.c.l.b16 %v4656
    %v4769 = vunpack.c.l.b16 %v4657
    %v4770 = vunpack.c.l.b16 %v4658
    %v4771 = vunpack.c.l.b16 %v4659
    %v4772 = vunpack.c.l.b16 %v4660
    %v4773 = vunpack.c.l.b16 %v4661
    %v4774 = vunpack.c.l.b16 %v4662
    %v4775 = vunpack.c.l.b16 %v4663
    %v4776 = vunpack.c.l.b16 %v4664
    %v4777 = vunpack.c.l.b16 %v4665
    %v4778 = vunpack.c.l.b16 %v4666
    %v4779 = vpack.c.b16 %v4732, %v4731
    %v4780 = vpack.c.b16 %v4734, %v4733
    %v4781 = vpack.c.b16 %v4736, %v4735
    %v4782 = vpack.c.b16 %v4738, %v4737
    %v4783 = vpack.c.b16 %v4740, %v4739
    %v4784 = vpack.c.b16 %v4742, %v4741
    %v4785 = vpack.c.b16 %v4744, %v4743
    %v4786 = vpack.c.b16 %v4746, %v4745
    %v4787 = vpack.c.b16 %v4748, %v4747
    %v4788 = vpack.c.b16 %v4750, %v4749
    %v4789 = vpack.c.b16 %v4752, %v4751
    %v4790 = vpack.c.b16 %v4754, %v4753
    %v4791 = vpack.c.b16 %v4756, %v4755
    %v4792 = vpack.c.b16 %v4758, %v4757
    %v4793 = vpack.c.b16 %v4760, %v4759
    %v4794 = vpack.c.b16 %v4762, %v4761
    %v4795 = vpack.c.b16 %v4764, %v4763
    %v4796 = vpack.c.b16 %v4766, %v4765
    %v4797 = vpack.c.b16 %v4768, %v4767
    %v4798 = vpack.c.b16 %v4770, %v4769
    %v4799 = vpack.c.b16 %v4772, %v4771
    %v4800 = vpack.c.b16 %v4774, %v4773
    %v4801 = vpack.c.b16 %v4776, %v4775
    %v4802 = vpack.c.b16 %v4778, %v4777
    %4827 = vmatpush.bf16.msra.mxu0 %v4786
    %4828 = vmatpush.bf16.msra.mxu0 %v4785
    %4829 = vmatpush.bf16.msra.mxu0 %v4784
    %4830 = vmatpush.bf16.msra.mxu0 %v4783
    %4831 = vmatpush.bf16.msra.mxu0 %v4782
    %4832 = vmatpush.bf16.msra.mxu0 %v4781
    %4833 = vmatpush.bf16.msra.mxu0 %v4780
    %4834 = vmatpush.bf16.msra.mxu0 %v4779
    %4835 = vmatmul.bf16.gmra.mxu0 %v3687
    %v4836 = vpop.f32.mrf.mxu0
    %v4837 = vadd.f32 0.0, %v4836
    %v4838 = vpop.f32.mrf.mxu0
    %v4839 = vadd.f32 0.0, %v4838
    %4840 = vmatmul.bf16.gmra.mxu0 %v3690
    %v4841 = vpop.f32.mrf.mxu0
    %v4842 = vadd.f32 0.0, %v4841
    %v4843 = vpop.f32.mrf.mxu0
    %v4844 = vadd.f32 0.0, %v4843
    %4845 = vmatmul.bf16.gmra.mxu0 %v3693
    %v4846 = vpop.f32.mrf.mxu0
    %v4847 = vadd.f32 0.0, %v4846
    %v4848 = vpop.f32.mrf.mxu0
    %v4849 = vadd.f32 0.0, %v4848
    %4850 = vmatmul.bf16.gmra.mxu0 %v3696
    %v4851 = vpop.f32.mrf.mxu0
    %v4852 = vadd.f32 0.0, %v4851
    %v4853 = vpop.f32.mrf.mxu0
    %v4854 = vadd.f32 0.0, %v4853
    %4855 = vmatmul.bf16.gmra.mxu0 %v3699
    %v4856 = vpop.f32.mrf.mxu0
    %v4857 = vadd.f32 0.0, %v4856
    %v4858 = vpop.f32.mrf.mxu0
    %v4859 = vadd.f32 0.0, %v4858
    %4860 = vmatmul.bf16.gmra.mxu0 %v3702
    %v4861 = vpop.f32.mrf.mxu0
    %v4862 = vadd.f32 0.0, %v4861
    %v4863 = vpop.f32.mrf.mxu0
    %v4864 = vadd.f32 0.0, %v4863
    %4865 = vmatmul.bf16.gmra.mxu0 %v3705
    %v4866 = vpop.f32.mrf.mxu0
    %v4867 = vadd.f32 0.0, %v4866
    %v4868 = vpop.f32.mrf.mxu0
    %v4869 = vadd.f32 0.0, %v4868
    %4870 = vmatmul.bf16.gmra.mxu0 %v3708
    %v4871 = vpop.f32.mrf.mxu0
    %v4872 = vadd.f32 0.0, %v4871
    %v4873 = vpop.f32.mrf.mxu0
    %v4874 = vadd.f32 0.0, %v4873
    %4875 = vmatmul.bf16.gmra.mxu0 %v3711
    %v4876 = vpop.f32.mrf.mxu0
    %v4877 = vadd.f32 0.0, %v4876
    %v4878 = vpop.f32.mrf.mxu0
    %v4879 = vadd.f32 0.0, %v4878
    %4880 = vmatmul.bf16.gmra.mxu0 %v3714
    %v4881 = vpop.f32.mrf.mxu0
    %v4882 = vadd.f32 0.0, %v4881
    %v4883 = vpop.f32.mrf.mxu0
    %v4884 = vadd.f32 0.0, %v4883
    %4885 = vmatmul.bf16.gmra.mxu0 %v3717
    %v4886 = vpop.f32.mrf.mxu0
    %v4887 = vadd.f32 0.0, %v4886
    %v4888 = vpop.f32.mrf.mxu0
    %v4889 = vadd.f32 0.0, %v4888
    %4890 = vmatmul.bf16.gmra.mxu0 %v3720
    %v4891 = vpop.f32.mrf.mxu0
    %v4892 = vadd.f32 0.0, %v4891
    %v4893 = vpop.f32.mrf.mxu0
    %v4894 = vadd.f32 0.0, %v4893
    %4895 = vmatmul.bf16.gmra.mxu0 %v3723
    %v4896 = vpop.f32.mrf.mxu0
    %v4897 = vadd.f32 0.0, %v4896
    %v4898 = vpop.f32.mrf.mxu0
    %v4899 = vadd.f32 0.0, %v4898
    %4900 = vmatmul.bf16.gmra.mxu0 %v3726
    %v4901 = vpop.f32.mrf.mxu0
    %v4902 = vadd.f32 0.0, %v4901
    %v4903 = vpop.f32.mrf.mxu0
    %v4904 = vadd.f32 0.0, %v4903
    %4905 = vmatmul.bf16.gmra.mxu0 %v3729
    %v4906 = vpop.f32.mrf.mxu0
    %v4907 = vadd.f32 0.0, %v4906
    %v4908 = vpop.f32.mrf.mxu0
    %v4909 = vadd.f32 0.0, %v4908
    %4910 = vmatmul.bf16.gmra.mxu0 %v4677
    %v4911 = vpop.f32.mrf.mxu0
    %v4912 = vadd.f32 0.0, %v4911
    %v4913 = vpop.f32.mrf.mxu0
    %v4914 = vadd.f32 0.0, %v4913
    %4915 = vdwg.mxu0
    %4916 = vmatpush.bf16.msra.mxu0 %v4794
    %4917 = vmatpush.bf16.msra.mxu0 %v4793
    %4918 = vmatpush.bf16.msra.mxu0 %v4792
    %4919 = vmatpush.bf16.msra.mxu0 %v4791
    %4920 = vmatpush.bf16.msra.mxu0 %v4790
    %4921 = vmatpush.bf16.msra.mxu0 %v4789
    %4922 = vmatpush.bf16.msra.mxu0 %v4788
    %4923 = vmatpush.bf16.msra.mxu0 %v4787
    %4924 = vmatmul.bf16.gmra.mxu0 %v3688
    %v4925 = vpop.f32.mrf.mxu0
    %v4926 = vadd.f32 %v4837, %v4925
    %v4927 = vpop.f32.mrf.mxu0
    %v4928 = vadd.f32 %v4839, %v4927
    %4929 = vmatmul.bf16.gmra.mxu0 %v3691
    %v4930 = vpop.f32.mrf.mxu0
    %v4931 = vadd.f32 %v4842, %v4930
    %v4932 = vpop.f32.mrf.mxu0
    %v4933 = vadd.f32 %v4844, %v4932
    %4934 = vmatmul.bf16.gmra.mxu0 %v3694
    %v4935 = vpop.f32.mrf.mxu0
    %v4936 = vadd.f32 %v4847, %v4935
    %v4937 = vpop.f32.mrf.mxu0
    %v4938 = vadd.f32 %v4849, %v4937
    %4939 = vmatmul.bf16.gmra.mxu0 %v3697
    %v4940 = vpop.f32.mrf.mxu0
    %v4941 = vadd.f32 %v4852, %v4940
    %v4942 = vpop.f32.mrf.mxu0
    %v4943 = vadd.f32 %v4854, %v4942
    %4944 = vmatmul.bf16.gmra.mxu0 %v3700
    %v4945 = vpop.f32.mrf.mxu0
    %v4946 = vadd.f32 %v4857, %v4945
    %v4947 = vpop.f32.mrf.mxu0
    %v4948 = vadd.f32 %v4859, %v4947
    %4949 = vmatmul.bf16.gmra.mxu0 %v3703
    %v4950 = vpop.f32.mrf.mxu0
    %v4951 = vadd.f32 %v4862, %v4950
    %v4952 = vpop.f32.mrf.mxu0
    %v4953 = vadd.f32 %v4864, %v4952
    %4954 = vmatmul.bf16.gmra.mxu0 %v3706
    %v4955 = vpop.f32.mrf.mxu0
    %v4956 = vadd.f32 %v4867, %v4955
    %v4957 = vpop.f32.mrf.mxu0
    %v4958 = vadd.f32 %v4869, %v4957
    %4959 = vmatmul.bf16.gmra.mxu0 %v3709
    %v4960 = vpop.f32.mrf.mxu0
    %v4961 = vadd.f32 %v4872, %v4960
    %v4962 = vpop.f32.mrf.mxu0
    %v4963 = vadd.f32 %v4874, %v4962
    %4964 = vmatmul.bf16.gmra.mxu0 %v3712
    %v4965 = vpop.f32.mrf.mxu0
    %v4966 = vadd.f32 %v4877, %v4965
    %v4967 = vpop.f32.mrf.mxu0
    %v4968 = vadd.f32 %v4879, %v4967
    %4969 = vmatmul.bf16.gmra.mxu0 %v3715
    %v4970 = vpop.f32.mrf.mxu0
    %v4971 = vadd.f32 %v4882, %v4970
    %v4972 = vpop.f32.mrf.mxu0
    %v4973 = vadd.f32 %v4884, %v4972
    %4974 = vmatmul.bf16.gmra.mxu0 %v3718
    %v4975 = vpop.f32.mrf.mxu0
    %v4976 = vadd.f32 %v4887, %v4975
    %v4977 = vpop.f32.mrf.mxu0
    %v4978 = vadd.f32 %v4889, %v4977
    %4979 = vmatmul.bf16.gmra.mxu0 %v3721
    %v4980 = vpop.f32.mrf.mxu0
    %v4981 = vadd.f32 %v4892, %v4980
    %v4982 = vpop.f32.mrf.mxu0
    %v4983 = vadd.f32 %v4894, %v4982
    %4984 = vmatmul.bf16.gmra.mxu0 %v3724
    %v4985 = vpop.f32.mrf.mxu0
    %v4986 = vadd.f32 %v4897, %v4985
    %v4987 = vpop.f32.mrf.mxu0
    %v4988 = vadd.f32 %v4899, %v4987
    %4989 = vmatmul.bf16.gmra.mxu0 %v3727
    %v4990 = vpop.f32.mrf.mxu0
    %v4991 = vadd.f32 %v4902, %v4990
    %v4992 = vpop.f32.mrf.mxu0
    %v4993 = vadd.f32 %v4904, %v4992
    %4994 = vmatmul.bf16.gmra.mxu0 %v3730
    %v4995 = vpop.f32.mrf.mxu0
    %v4996 = vadd.f32 %v4907, %v4995
    %v4997 = vpop.f32.mrf.mxu0
    %v4998 = vadd.f32 %v4909, %v4997
    %4999 = vmatmul.bf16.gmra.mxu0 %v4678
    %v5000 = vpop.f32.mrf.mxu0
    %v5001 = vadd.f32 %v4912, %v5000
    %v5002 = vpop.f32.mrf.mxu0
    %v5003 = vadd.f32 %v4914, %v5002
    %5004 = vdwg.mxu0
    %5005 = vmatpush.bf16.msra.mxu0 %v4802
    %5006 = vmatpush.bf16.msra.mxu0 %v4801
    %5007 = vmatpush.bf16.msra.mxu0 %v4800
    %5008 = vmatpush.bf16.msra.mxu0 %v4799
    %5009 = vmatpush.bf16.msra.mxu0 %v4798
    %5010 = vmatpush.bf16.msra.mxu0 %v4797
    %5011 = vmatpush.bf16.msra.mxu0 %v4796
    %5012 = vmatpush.bf16.msra.mxu0 %v4795
    %5013 = vmatmul.bf16.gmra.mxu0 %v3689
    %v5014 = vpop.f32.mrf.mxu0
    %v5015 = vadd.f32 %v4926, %v5014
    %v5016 = vpop.f32.mrf.mxu0
    %v5017 = vadd.f32 %v4928, %v5016
    %5018 = vmatmul.bf16.gmra.mxu0 %v3692
    %v5019 = vpop.f32.mrf.mxu0
    %v5020 = vadd.f32 %v4931, %v5019
    %v5021 = vpop.f32.mrf.mxu0
    %v5022 = vadd.f32 %v4933, %v5021
    %5023 = vmatmul.bf16.gmra.mxu0 %v3695
    %v5024 = vpop.f32.mrf.mxu0
    %v5025 = vadd.f32 %v4936, %v5024
    %v5026 = vpop.f32.mrf.mxu0
    %v5027 = vadd.f32 %v4938, %v5026
    %5028 = vmatmul.bf16.gmra.mxu0 %v3698
    %v5029 = vpop.f32.mrf.mxu0
    %v5030 = vadd.f32 %v4941, %v5029
    %v5031 = vpop.f32.mrf.mxu0
    %v5032 = vadd.f32 %v4943, %v5031
    %5033 = vmatmul.bf16.gmra.mxu0 %v3701
    %v5034 = vpop.f32.mrf.mxu0
    %v5035 = vadd.f32 %v4946, %v5034
    %v5036 = vpop.f32.mrf.mxu0
    %v5037 = vadd.f32 %v4948, %v5036
    %5038 = vmatmul.bf16.gmra.mxu0 %v3704
    %v5039 = vpop.f32.mrf.mxu0
    %v5040 = vadd.f32 %v4951, %v5039
    %v5041 = vpop.f32.mrf.mxu0
    %v5042 = vadd.f32 %v4953, %v5041
    %5043 = vmatmul.bf16.gmra.mxu0 %v3707
    %v5044 = vpop.f32.mrf.mxu0
    %v5045 = vadd.f32 %v4956, %v5044
    %v5046 = vpop.f32.mrf.mxu0
    %v5047 = vadd.f32 %v4958, %v5046
    %5048 = vmatmul.bf16.gmra.mxu0 %v3710
    %v5049 = vpop.f32.mrf.mxu0
    %v5050 = vadd.f32 %v4961, %v5049
    %v5051 = vpop.f32.mrf.mxu0
    %v5052 = vadd.f32 %v4963, %v5051
    %5053 = vmatmul.bf16.gmra.mxu0 %v3713
    %v5054 = vpop.f32.mrf.mxu0
    %v5055 = vadd.f32 %v4966, %v5054
    %v5056 = vpop.f32.mrf.mxu0
    %v5057 = vadd.f32 %v4968, %v5056
    %5058 = vmatmul.bf16.gmra.mxu0 %v3716
    %v5059 = vpop.f32.mrf.mxu0
    %v5060 = vadd.f32 %v4971, %v5059
    %v5061 = vpop.f32.mrf.mxu0
    %v5062 = vadd.f32 %v4973, %v5061
    %5063 = vmatmul.bf16.gmra.mxu0 %v3719
    %v5064 = vpop.f32.mrf.mxu0
    %v5065 = vadd.f32 %v4976, %v5064
    %v5066 = vpop.f32.mrf.mxu0
    %v5067 = vadd.f32 %v4978, %v5066
    %5068 = vmatmul.bf16.gmra.mxu0 %v3722
    %v5069 = vpop.f32.mrf.mxu0
    %v5070 = vadd.f32 %v4981, %v5069
    %v5071 = vpop.f32.mrf.mxu0
    %v5072 = vadd.f32 %v4983, %v5071
    %5073 = vmatmul.bf16.gmra.mxu0 %v3725
    %v5074 = vpop.f32.mrf.mxu0
    %v5075 = vadd.f32 %v4986, %v5074
    %v5076 = vpop.f32.mrf.mxu0
    %v5077 = vadd.f32 %v4988, %v5076
    %5078 = vmatmul.bf16.gmra.mxu0 %v3728
    %v5079 = vpop.f32.mrf.mxu0
    %v5080 = vadd.f32 %v4991, %v5079
    %v5081 = vpop.f32.mrf.mxu0
    %v5082 = vadd.f32 %v4993, %v5081
    %5083 = vmatmul.bf16.gmra.mxu0 %v3731
    %v5084 = vpop.f32.mrf.mxu0
    %v5085 = vadd.f32 %v4996, %v5084
    %v5086 = vpop.f32.mrf.mxu0
    %v5087 = vadd.f32 %v4998, %v5086
    %5088 = vmatmul.bf16.gmra.mxu0 %v4679
    %v5089 = vpop.f32.mrf.mxu0
    %v5090 = vadd.f32 %v5001, %v5089
    %v5091 = vpop.f32.mrf.mxu0
    %v5092 = vadd.f32 %v5003, %v5091
    %5093 = vdwg.mxu0
    %v5094 = vadd.f32 %v4539, %v5015
    %v5095 = vadd.f32 %v4541, %v5017
    %v5096 = vadd.f32 %v4544, %v5020
    %v5097 = vadd.f32 %v4546, %v5022
    %v5098 = vadd.f32 %v4549, %v5025
    %v5099 = vadd.f32 %v4551, %v5027
    %v5100 = vadd.f32 %v4554, %v5030
    %v5101 = vadd.f32 %v4556, %v5032
    %v5102 = vadd.f32 %v4559, %v5035
    %v5103 = vadd.f32 %v4561, %v5037
    %v5104 = vadd.f32 %v4564, %v5040
    %v5105 = vadd.f32 %v4566, %v5042
    %v5106 = vadd.f32 %v4569, %v5045
    %v5107 = vadd.f32 %v4571, %v5047
    %v5108 = vadd.f32 %v4574, %v5050
    %v5109 = vadd.f32 %v4576, %v5052
    %v5110 = vadd.f32 %v4579, %v5055
    %v5111 = vadd.f32 %v4581, %v5057
    %v5112 = vadd.f32 %v4584, %v5060
    %v5113 = vadd.f32 %v4586, %v5062
    %v5114 = vadd.f32 %v4589, %v5065
    %v5115 = vadd.f32 %v4591, %v5067
    %v5116 = vadd.f32 %v4594, %v5070
    %v5117 = vadd.f32 %v4596, %v5072
    %v5118 = vadd.f32 %v4599, %v5075
    %v5119 = vadd.f32 %v4601, %v5077
    %v5120 = vadd.f32 %v4604, %v5080
    %v5121 = vadd.f32 %v4606, %v5082
    %v5122 = vadd.f32 %v4609, %v5085
    %v5123 = vadd.f32 %v4611, %v5087
    %v5124 = vadd.f32 %v4614, %v5090
    %v5125 = vadd.f32 %v4616, %v5092
    %v5126 = vadd.f32 %v5094, %v5095
    %v5127 = vadd.f32 %v5126, %v5096
    %v5128 = vadd.f32 %v5127, %v5097
    %v5129 = vadd.f32 %v5128, %v5098
    %v5130 = vadd.f32 %v5129, %v5099
    %v5131 = vadd.f32 %v5130, %v5100
    %v5132 = vadd.f32 %v5131, %v5101
    %v5133 = vadd.f32 %v5132, %v5102
    %v5134 = vadd.f32 %v5133, %v5103
    %v5135 = vadd.f32 %v5134, %v5104
    %v5136 = vadd.f32 %v5135, %v5105
    %v5137 = vadd.f32 %v5136, %v5106
    %v5138 = vadd.f32 %v5137, %v5107
    %v5139 = vadd.f32 %v5138, %v5108
    %v5140 = vadd.f32 %v5139, %v5109
    %v5141 = vadd.f32 %v5140, %v5110
    %v5142 = vadd.f32 %v5141, %v5111
    %v5143 = vadd.f32 %v5142, %v5112
    %v5144 = vadd.f32 %v5143, %v5113
    %v5145 = vadd.f32 %v5144, %v5114
    %v5146 = vadd.f32 %v5145, %v5115
    %v5147 = vadd.f32 %v5146, %v5116
    %v5148 = vadd.f32 %v5147, %v5117
    %v5149 = vadd.f32 %v5148, %v5118
    %v5150 = vadd.f32 %v5149, %v5119
    %v5151 = vadd.f32 %v5150, %v5120
    %v5152 = vadd.f32 %v5151, %v5121
    %v5153 = vadd.f32 %v5152, %v5122
    %v5154 = vadd.f32 %v5153, %v5123
    %v5155 = vadd.f32 %v5154, %v5124
    %v5156 = vadd.f32 %v5155, %v5125
    %v5157 = vrot.slane %v5156, 4
    %v5158 = vadd.f32 %v5156, %v5157
    %v5159 = vrot.slane %v5158, 2
    %v5160 = vadd.f32 %v5158, %v5159
    %v5161 = vrot.slane %v5160, 1
    %v5162 = vadd.f32 %v5160, %v5161
    %v5163 = vmul.f32 %v5162, 0.00390625
    %v5164 = vmul.f32 %v5094, %v5094
    %v5165 = vmul.f32 %v5095, %v5095
    %v5166 = vmul.f32 %v5096, %v5096
    %v5167 = vmul.f32 %v5097, %v5097
    %v5168 = vmul.f32 %v5098, %v5098
    %v5169 = vmul.f32 %v5099, %v5099
    %v5170 = vmul.f32 %v5100, %v5100
    %v5171 = vmul.f32 %v5101, %v5101
    %v5172 = vmul.f32 %v5102, %v5102
    %v5173 = vmul.f32 %v5103, %v5103
    %v5174 = vmul.f32 %v5104, %v5104
    %v5175 = vmul.f32 %v5105, %v5105
    %v5176 = vmul.f32 %v5106, %v5106
    %v5177 = vmul.f32 %v5107, %v5107
    %v5178 = vmul.f32 %v5108, %v5108
    %v5179 = vmul.f32 %v5109, %v5109
    %v5180 = vmul.f32 %v5110, %v5110
    %v5181 = vmul.f32 %v5111, %v5111
    %v5182 = vmul.f32 %v5112, %v5112
    %v5183 = vmul.f32 %v5113, %v5113
    %v5184 = vmul.f32 %v5114, %v5114
    %v5185 = vmul.f32 %v5115, %v5115
    %v5186 = vmul.f32 %v5116, %v5116
    %v5187 = vmul.f32 %v5117, %v5117
    %v5188 = vmul.f32 %v5118, %v5118
    %v5189 = vmul.f32 %v5119, %v5119
    %v5190 = vmul.f32 %v5120, %v5120
    %v5191 = vmul.f32 %v5121, %v5121
    %v5192 = vmul.f32 %v5122, %v5122
    %v5193 = vmul.f32 %v5123, %v5123
    %v5194 = vmul.f32 %v5124, %v5124
    %v5195 = vmul.f32 %v5125, %v5125
    %v5196 = vadd.f32 %v5164, %v5165
    %v5197 = vadd.f32 %v5196, %v5166
    %v5198 = vadd.f32 %v5197, %v5167
    %v5199 = vadd.f32 %v5198, %v5168
    %v5200 = vadd.f32 %v5199, %v5169
    %v5201 = vadd.f32 %v5200, %v5170
    %v5202 = vadd.f32 %v5201, %v5171
    %v5203 = vadd.f32 %v5202, %v5172
    %v5204 = vadd.f32 %v5203, %v5173
    %v5205 = vadd.f32 %v5204, %v5174
    %v5206 = vadd.f32 %v5205, %v5175
    %v5207 = vadd.f32 %v5206, %v5176
    %v5208 = vadd.f32 %v5207, %v5177
    %v5209 = vadd.f32 %v5208, %v5178
    %v5210 = vadd.f32 %v5209, %v5179
    %v5211 = vadd.f32 %v5210, %v5180
    %v5212 = vadd.f32 %v5211, %v5181
    %v5213 = vadd.f32 %v5212, %v5182
    %v5214 = vadd.f32 %v5213, %v5183
    %v5215 = vadd.f32 %v5214, %v5184
    %v5216 = vadd.f32 %v5215, %v5185
    %v5217 = vadd.f32 %v5216, %v5186
    %v5218 = vadd.f32 %v5217, %v5187
    %v5219 = vadd.f32 %v5218, %v5188
    %v5220 = vadd.f32 %v5219, %v5189
    %v5221 = vadd.f32 %v5220, %v5190
    %v5222 = vadd.f32 %v5221, %v5191
    %v5223 = vadd.f32 %v5222, %v5192
    %v5224 = vadd.f32 %v5223, %v5193
    %v5225 = vadd.f32 %v5224, %v5194
    %v5226 = vadd.f32 %v5225, %v5195
    %v5227 = vrot.slane %v5226, 4
    %v5228 = vadd.f32 %v5226, %v5227
    %v5229 = vrot.slane %v5228, 2
    %v5230 = vadd.f32 %v5228, %v5229
    %v5231 = vrot.slane %v5230, 1
    %v5232 = vadd.f32 %v5230, %v5231
    %v5233 = vmul.f32 %v5232, 0.00390625
    %v5234 = vmul.f32 %v5163, %v5163
    %v5235 = vsub.f32 %v5233, %v5234
    %v5236 = vld [vmem:[%s5] sm:$0x1]
    %v5237 = vadd.f32 %v5235, 1e-05
    %v5238 = vrsqrt.pop %v5237
    %v5239 = vmul.f32 %v5238, %v5237
    %v5240 = vmul.f32 %v5239, %v5238
    %v5241 = vmul.f32 0.5, %v5240
    %v5242 = vsub.f32 1.5, %v5241
    %v5243 = vmul.f32 %v5238, %v5242
    %vm5244 = vweird.f32 %v5237
    %vm5245 = vweird.f32 %v5238
    %vm5246 = vmor %vm5244, %vm5245
    %v5247 = vsel %vm5246, %v5238, %v5243
    %v5248 = vmul.f32 %v5236, %v5247
    %v5249 = vld [vmem:[%s6] sm:$0x1]
    %v5250 = vmul.f32 %v5163, %v5248
    %v5251 = vsub.f32 %v5249, %v5250
    %v5253 = vperm.slane %v5248, 0
    %v5255 = vmul.f32 %v5094, %v5253
    %v5256 = vmul.f32 %v5095, %v5253
    %v5257 = vmul.f32 %v5096, %v5253
    %v5258 = vmul.f32 %v5097, %v5253
    %v5259 = vmul.f32 %v5098, %v5253
    %v5260 = vmul.f32 %v5099, %v5253
    %v5261 = vmul.f32 %v5100, %v5253
    %v5262 = vmul.f32 %v5101, %v5253
    %v5263 = vmul.f32 %v5102, %v5253
    %v5264 = vmul.f32 %v5103, %v5253
    %v5265 = vmul.f32 %v5104, %v5253
    %v5266 = vmul.f32 %v5105, %v5253
    %v5267 = vmul.f32 %v5106, %v5253
    %v5268 = vmul.f32 %v5107, %v5253
    %v5269 = vmul.f32 %v5108, %v5253
    %v5270 = vmul.f32 %v5109, %v5253
    %v5271 = vmul.f32 %v5110, %v5253
    %v5272 = vmul.f32 %v5111, %v5253
    %v5273 = vmul.f32 %v5112, %v5253
    %v5274 = vmul.f32 %v5113, %v5253
    %v5275 = vmul.f32 %v5114, %v5253
    %v5276 = vmul.f32 %v5115, %v5253
    %v5277 = vmul.f32 %v5116, %v5253
    %v5278 = vmul.f32 %v5117, %v5253
    %v5279 = vmul.f32 %v5118, %v5253
    %v5280 = vmul.f32 %v5119, %v5253
    %v5281 = vmul.f32 %v5120, %v5253
    %v5282 = vmul.f32 %v5121, %v5253
    %v5283 = vmul.f32 %v5122, %v5253
    %v5284 = vmul.f32 %v5123, %v5253
    %v5285 = vmul.f32 %v5124, %v5253
    %v5286 = vmul.f32 %v5125, %v5253
    %v5288 = vperm.slane %v5251, 0
    %v5290 = vadd.f32 %v5255, %v5288
    %v5291 = vadd.f32 %v5256, %v5288
    %v5292 = vadd.f32 %v5257, %v5288
    %v5293 = vadd.f32 %v5258, %v5288
    %v5294 = vadd.f32 %v5259, %v5288
    %v5295 = vadd.f32 %v5260, %v5288
    %v5296 = vadd.f32 %v5261, %v5288
    %v5297 = vadd.f32 %v5262, %v5288
    %v5298 = vadd.f32 %v5263, %v5288
    %v5299 = vadd.f32 %v5264, %v5288
    %v5300 = vadd.f32 %v5265, %v5288
    %v5301 = vadd.f32 %v5266, %v5288
    %v5302 = vadd.f32 %v5267, %v5288
    %v5303 = vadd.f32 %v5268, %v5288
    %v5304 = vadd.f32 %v5269, %v5288
    %v5305 = vadd.f32 %v5270, %v5288
    %v5306 = vadd.f32 %v5271, %v5288
    %v5307 = vadd.f32 %v5272, %v5288
    %v5308 = vadd.f32 %v5273, %v5288
    %v5309 = vadd.f32 %v5274, %v5288
    %v5310 = vadd.f32 %v5275, %v5288
    %v5311 = vadd.f32 %v5276, %v5288
    %v5312 = vadd.f32 %v5277, %v5288
    %v5313 = vadd.f32 %v5278, %v5288
    %v5314 = vadd.f32 %v5279, %v5288
    %v5315 = vadd.f32 %v5280, %v5288
    %v5316 = vadd.f32 %v5281, %v5288
    %v5317 = vadd.f32 %v5282, %v5288
    %v5318 = vadd.f32 %v5283, %v5288
    %v5319 = vadd.f32 %v5284, %v5288
    %v5320 = vadd.f32 %v5285, %v5288
    %v5321 = vadd.f32 %v5286, %v5288
    %v5322 = vmax.f32 %v5290, 0.0
    %v5323 = vmax.f32 %v5291, 0.0
    %v5324 = vmax.f32 %v5292, 0.0
    %v5325 = vmax.f32 %v5293, 0.0
    %v5326 = vmax.f32 %v5294, 0.0
    %v5327 = vmax.f32 %v5295, 0.0
    %v5328 = vmax.f32 %v5296, 0.0
    %v5329 = vmax.f32 %v5297, 0.0
    %v5330 = vmax.f32 %v5298, 0.0
    %v5331 = vmax.f32 %v5299, 0.0
    %v5332 = vmax.f32 %v5300, 0.0
    %v5333 = vmax.f32 %v5301, 0.0
    %v5334 = vmax.f32 %v5302, 0.0
    %v5335 = vmax.f32 %v5303, 0.0
    %v5336 = vmax.f32 %v5304, 0.0
    %v5337 = vmax.f32 %v5305, 0.0
    %v5338 = vmax.f32 %v5306, 0.0
    %v5339 = vmax.f32 %v5307, 0.0
    %v5340 = vmax.f32 %v5308, 0.0
    %v5341 = vmax.f32 %v5309, 0.0
    %v5342 = vmax.f32 %v5310, 0.0
    %v5343 = vmax.f32 %v5311, 0.0
    %v5344 = vmax.f32 %v5312, 0.0
    %v5345 = vmax.f32 %v5313, 0.0
    %v5346 = vmax.f32 %v5314, 0.0
    %v5347 = vmax.f32 %v5315, 0.0
    %v5348 = vmax.f32 %v5316, 0.0
    %v5349 = vmax.f32 %v5317, 0.0
    %v5350 = vmax.f32 %v5318, 0.0
    %v5351 = vmax.f32 %v5319, 0.0
    %v5352 = vmax.f32 %v5320, 0.0
    %v5353 = vmax.f32 %v5321, 0.0
    %v5354 = vadd.f32 %v5322, %v37
    %v5355 = vadd.f32 %v5323, %v38
    %v5356 = vadd.f32 %v5324, %v39
    %v5357 = vadd.f32 %v5325, %v40
    %v5358 = vadd.f32 %v5326, %v41
    %v5359 = vadd.f32 %v5327, %v42
    %v5360 = vadd.f32 %v5328, %v43
    %v5361 = vadd.f32 %v5329, %v44
    %v5362 = vadd.f32 %v5330, %v45
    %v5363 = vadd.f32 %v5331, %v46
    %v5364 = vadd.f32 %v5332, %v47
    %v5365 = vadd.f32 %v5333, %v48
    %v5366 = vadd.f32 %v5334, %v49
    %v5367 = vadd.f32 %v5335, %v50
    %v5368 = vadd.f32 %v5336, %v51
    %v5369 = vadd.f32 %v5337, %v52
    %v5370 = vadd.f32 %v5338, %v53
    %v5371 = vadd.f32 %v5339, %v54
    %v5372 = vadd.f32 %v5340, %v55
    %v5373 = vadd.f32 %v5341, %v56
    %v5374 = vadd.f32 %v5342, %v57
    %v5375 = vadd.f32 %v5343, %v58
    %v5376 = vadd.f32 %v5344, %v59
    %v5377 = vadd.f32 %v5345, %v60
    %v5378 = vadd.f32 %v5346, %v61
    %v5379 = vadd.f32 %v5347, %v62
    %v5380 = vadd.f32 %v5348, %v63
    %v5381 = vadd.f32 %v5349, %v64
    %v5382 = vadd.f32 %v5350, %v65
    %v5383 = vadd.f32 %v5351, %v66
    %v5384 = vadd.f32 %v5352, %v67
    %v5385 = vadd.f32 %v5353, %v68
    %5386 = vst [vmem:[#allocation3] sm:$0xff] %v5354
    %5387 = vst [vmem:[#allocation3 + $0x8] sm:$0xff] %v5355
    %5388 = vst [vmem:[#allocation3 + $0x10] sm:$0xff] %v5356
    %5389 = vst [vmem:[#allocation3 + $0x18] sm:$0xff] %v5357
    %5390 = vst [vmem:[#allocation3 + $0x20] sm:$0xff] %v5358
    %5391 = vst [vmem:[#allocation3 + $0x28] sm:$0xff] %v5359
    %5392 = vst [vmem:[#allocation3 + $0x30] sm:$0xff] %v5360
    %5393 = vst [vmem:[#allocation3 + $0x38] sm:$0xff] %v5361
    %5394 = vst [vmem:[#allocation3 + $0x40] sm:$0xff] %v5362
    %5395 = vst [vmem:[#allocation3 + $0x48] sm:$0xff] %v5363
    %5396 = vst [vmem:[#allocation3 + $0x50] sm:$0xff] %v5364
    %5397 = vst [vmem:[#allocation3 + $0x58] sm:$0xff] %v5365
    %5398 = vst [vmem:[#allocation3 + $0x60] sm:$0xff] %v5366
    %5399 = vst [vmem:[#allocation3 + $0x68] sm:$0xff] %v5367
    %5400 = vst [vmem:[#allocation3 + $0x70] sm:$0xff] %v5368
    %5401 = vst [vmem:[#allocation3 + $0x78] sm:$0xff] %v5369
    %5402 = vst [vmem:[#allocation3 + $0x80] sm:$0xff] %v5370
    %5403 = vst [vmem:[#allocation3 + $0x88] sm:$0xff] %v5371
    %5404 = vst [vmem:[#allocation3 + $0x90] sm:$0xff] %v5372
    %5405 = vst [vmem:[#allocation3 + $0x98] sm:$0xff] %v5373
    %5406 = vst [vmem:[#allocation3 + $0xa0] sm:$0xff] %v5374
    %5407 = vst [vmem:[#allocation3 + $0xa8] sm:$0xff] %v5375
    %5408 = vst [vmem:[#allocation3 + $0xb0] sm:$0xff] %v5376
    %5409 = vst [vmem:[#allocation3 + $0xb8] sm:$0xff] %v5377
    %5410 = vst [vmem:[#allocation3 + $0xc0] sm:$0xff] %v5378
    %5411 = vst [vmem:[#allocation3 + $0xc8] sm:$0xff] %v5379
    %5412 = vst [vmem:[#allocation3 + $0xd0] sm:$0xff] %v5380
    %5413 = vst [vmem:[#allocation3 + $0xd8] sm:$0xff] %v5381
    %5414 = vst [vmem:[#allocation3 + $0xe0] sm:$0xff] %v5382
    %5415 = vst [vmem:[#allocation3 + $0xe8] sm:$0xff] %v5383
    %5416 = vst [vmem:[#allocation3 + $0xf0] sm:$0xff] %v5384
    %5417 = vst [vmem:[#allocation3 + $0xf8] sm:$0xff] %v5385
    %s5418 = scalar_lea.vmem %s0, 256
    %v5419 = vld [vmem:[%s5418] sm:$0xff]
    %v5420 = vld [vmem:[%s5418 + $0x8] sm:$0xff]
    %v5421 = vld [vmem:[%s5418 + $0x10] sm:$0xff]
    %v5422 = vld [vmem:[%s5418 + $0x18] sm:$0xff]
    %v5423 = vld [vmem:[%s5418 + $0x20] sm:$0xff]
    %v5424 = vld [vmem:[%s5418 + $0x28] sm:$0xff]
    %v5425 = vld [vmem:[%s5418 + $0x30] sm:$0xff]
    %v5426 = vld [vmem:[%s5418 + $0x38] sm:$0xff]
    %v5427 = vld [vmem:[%s5418 + $0x40] sm:$0xff]
    %v5428 = vld [vmem:[%s5418 + $0x48] sm:$0xff]
    %v5429 = vld [vmem:[%s5418 + $0x50] sm:$0xff]
    %v5430 = vld [vmem:[%s5418 + $0x58] sm:$0xff]
    %v5431 = vld [vmem:[%s5418 + $0x60] sm:$0xff]
    %v5432 = vld [vmem:[%s5418 + $0x68] sm:$0xff]
    %v5433 = vld [vmem:[%s5418 + $0x70] sm:$0xff]
    %v5434 = vld [vmem:[%s5418 + $0x78] sm:$0xff]
    %v5435 = vld [vmem:[%s5418 + $0x80] sm:$0xff]
    %v5436 = vld [vmem:[%s5418 + $0x88] sm:$0xff]
    %v5437 = vld [vmem:[%s5418 + $0x90] sm:$0xff]
    %v5438 = vld [vmem:[%s5418 + $0x98] sm:$0xff]
    %v5439 = vld [vmem:[%s5418 + $0xa0] sm:$0xff]
    %v5440 = vld [vmem:[%s5418 + $0xa8] sm:$0xff]
    %v5441 = vld [vmem:[%s5418 + $0xb0] sm:$0xff]
    %v5442 = vld [vmem:[%s5418 + $0xb8] sm:$0xff]
    %v5443 = vld [vmem:[%s5418 + $0xc0] sm:$0xff]
    %v5444 = vld [vmem:[%s5418 + $0xc8] sm:$0xff]
    %v5445 = vld [vmem:[%s5418 + $0xd0] sm:$0xff]
    %v5446 = vld [vmem:[%s5418 + $0xd8] sm:$0xff]
    %v5447 = vld [vmem:[%s5418 + $0xe0] sm:$0xff]
    %v5448 = vld [vmem:[%s5418 + $0xe8] sm:$0xff]
    %v5449 = vld [vmem:[%s5418 + $0xf0] sm:$0xff]
    %v5450 = vld [vmem:[%s5418 + $0xf8] sm:$0xff]
    %v5451 = vpack.c.bf16 %v5419, %v5419
    %v5452 = vpack.c.bf16 %v5420, %v5420
    %v5453 = vpack.c.bf16 %v5421, %v5421
    %v5454 = vpack.c.bf16 %v5422, %v5422
    %v5455 = vpack.c.bf16 %v5423, %v5423
    %v5456 = vpack.c.bf16 %v5424, %v5424
    %v5457 = vpack.c.bf16 %v5425, %v5425
    %v5458 = vpack.c.bf16 %v5426, %v5426
    %v5459 = vpack.c.bf16 %v5427, %v5427
    %v5460 = vpack.c.bf16 %v5428, %v5428
    %v5461 = vpack.c.bf16 %v5429, %v5429
    %v5462 = vpack.c.bf16 %v5430, %v5430
    %v5463 = vpack.c.bf16 %v5431, %v5431
    %v5464 = vpack.c.bf16 %v5432, %v5432
    %v5465 = vpack.c.bf16 %v5433, %v5433
    %v5466 = vpack.c.bf16 %v5434, %v5434
    %v5467 = vpack.c.bf16 %v5435, %v5435
    %v5468 = vpack.c.bf16 %v5436, %v5436
    %v5469 = vpack.c.bf16 %v5437, %v5437
    %v5470 = vpack.c.bf16 %v5438, %v5438
    %v5471 = vpack.c.bf16 %v5439, %v5439
    %v5472 = vpack.c.bf16 %v5440, %v5440
    %v5473 = vpack.c.bf16 %v5441, %v5441
    %v5474 = vpack.c.bf16 %v5442, %v5442
    %v5475 = vpack.c.bf16 %v5443, %v5443
    %v5476 = vpack.c.bf16 %v5444, %v5444
    %v5477 = vpack.c.bf16 %v5445, %v5445
    %v5478 = vpack.c.bf16 %v5446, %v5446
    %v5479 = vpack.c.bf16 %v5447, %v5447
    %v5480 = vpack.c.bf16 %v5448, %v5448
    %v5481 = vpack.c.bf16 %v5449, %v5449
    %v5482 = vpack.c.bf16 %v5450, %v5450
    %v5515 = vunpack.c.l.b16 %v5451
    %v5516 = vunpack.c.l.b16 %v5452
    %v5517 = vunpack.c.l.b16 %v5453
    %v5518 = vunpack.c.l.b16 %v5454
    %v5519 = vunpack.c.l.b16 %v5455
    %v5520 = vunpack.c.l.b16 %v5456
    %v5521 = vunpack.c.l.b16 %v5457
    %v5522 = vunpack.c.l.b16 %v5458
    %v5523 = vunpack.c.l.b16 %v5459
    %v5524 = vunpack.c.l.b16 %v5460
    %v5525 = vunpack.c.l.b16 %v5461
    %v5526 = vunpack.c.l.b16 %v5462
    %v5527 = vunpack.c.l.b16 %v5463
    %v5528 = vunpack.c.l.b16 %v5464
    %v5529 = vunpack.c.l.b16 %v5465
    %v5530 = vunpack.c.l.b16 %v5466
    %v5531 = vunpack.c.l.b16 %v5467
    %v5532 = vunpack.c.l.b16 %v5468
    %v5533 = vunpack.c.l.b16 %v5469
    %v5534 = vunpack.c.l.b16 %v5470
    %v5535 = vunpack.c.l.b16 %v5471
    %v5536 = vunpack.c.l.b16 %v5472
    %v5537 = vunpack.c.l.b16 %v5473
    %v5538 = vunpack.c.l.b16 %v5474
    %v5539 = vunpack.c.l.b16 %v5475
    %v5540 = vunpack.c.l.b16 %v5476
    %v5541 = vunpack.c.l.b16 %v5477
    %v5542 = vunpack.c.l.b16 %v5478
    %v5543 = vunpack.c.l.b16 %v5479
    %v5544 = vunpack.c.l.b16 %v5480
    %v5545 = vunpack.c.l.b16 %v5481
    %v5546 = vunpack.c.l.b16 %v5482
    %v5547 = vpack.c.b16 %v5516, %v5515
    %v5548 = vpack.c.b16 %v5518, %v5517
    %v5549 = vpack.c.b16 %v5520, %v5519
    %v5550 = vpack.c.b16 %v5522, %v5521
    %v5551 = vpack.c.b16 %v5524, %v5523
    %v5552 = vpack.c.b16 %v5526, %v5525
    %v5553 = vpack.c.b16 %v5528, %v5527
    %v5554 = vpack.c.b16 %v5530, %v5529
    %v5555 = vpack.c.b16 %v5532, %v5531
    %v5556 = vpack.c.b16 %v5534, %v5533
    %v5557 = vpack.c.b16 %v5536, %v5535
    %v5558 = vpack.c.b16 %v5538, %v5537
    %v5559 = vpack.c.b16 %v5540, %v5539
    %v5560 = vpack.c.b16 %v5542, %v5541
    %v5561 = vpack.c.b16 %v5544, %v5543
    %v5562 = vpack.c.b16 %v5546, %v5545
    %v5564 = vshrl.u32 %v5547, 16
    %v5566 = vrot.slane %v5564, 7
    %v5567 = vshll.u32 %v5547, 16
    %v5569 = vor.u32 %v5566, %v5567
    %v5571 = vshrl.u32 %v5548, 16
    %v5573 = vrot.slane %v5571, 7
    %v5574 = vshll.u32 %v5548, 16
    %v5576 = vor.u32 %v5573, %v5574
    %v5578 = vshrl.u32 %v5549, 16
    %v5580 = vrot.slane %v5578, 7
    %v5581 = vshll.u32 %v5549, 16
    %v5583 = vor.u32 %v5580, %v5581
    %v5585 = vshrl.u32 %v5550, 16
    %v5587 = vrot.slane %v5585, 7
    %v5588 = vshll.u32 %v5550, 16
    %v5590 = vor.u32 %v5587, %v5588
    %v5592 = vshrl.u32 %v5551, 16
    %v5594 = vrot.slane %v5592, 7
    %v5595 = vshll.u32 %v5551, 16
    %v5597 = vor.u32 %v5594, %v5595
    %v5599 = vshrl.u32 %v5552, 16
    %v5601 = vrot.slane %v5599, 7
    %v5602 = vshll.u32 %v5552, 16
    %v5604 = vor.u32 %v5601, %v5602
    %v5606 = vshrl.u32 %v5553, 16
    %v5608 = vrot.slane %v5606, 7
    %v5609 = vshll.u32 %v5553, 16
    %v5611 = vor.u32 %v5608, %v5609
    %v5613 = vshrl.u32 %v5554, 16
    %v5615 = vrot.slane %v5613, 7
    %v5616 = vshll.u32 %v5554, 16
    %v5618 = vor.u32 %v5615, %v5616
    %v5620 = vshrl.u32 %v5555, 16
    %v5622 = vrot.slane %v5620, 7
    %v5623 = vshll.u32 %v5555, 16
    %v5625 = vor.u32 %v5622, %v5623
    %v5627 = vshrl.u32 %v5556, 16
    %v5629 = vrot.slane %v5627, 7
    %v5630 = vshll.u32 %v5556, 16
    %v5632 = vor.u32 %v5629, %v5630
    %v5634 = vshrl.u32 %v5557, 16
    %v5636 = vrot.slane %v5634, 7
    %v5637 = vshll.u32 %v5557, 16
    %v5639 = vor.u32 %v5636, %v5637
    %v5641 = vshrl.u32 %v5558, 16
    %v5643 = vrot.slane %v5641, 7
    %v5644 = vshll.u32 %v5558, 16
    %v5646 = vor.u32 %v5643, %v5644
    %v5648 = vshrl.u32 %v5559, 16
    %v5650 = vrot.slane %v5648, 7
    %v5651 = vshll.u32 %v5559, 16
    %v5653 = vor.u32 %v5650, %v5651
    %v5655 = vshrl.u32 %v5560, 16
    %v5657 = vrot.slane %v5655, 7
    %v5658 = vshll.u32 %v5560, 16
    %v5660 = vor.u32 %v5657, %v5658
    %v5662 = vshrl.u32 %v5561, 16
    %v5664 = vrot.slane %v5662, 7
    %v5665 = vshll.u32 %v5561, 16
    %v5667 = vor.u32 %v5664, %v5665
    %v5669 = vshrl.u32 %v5562, 16
    %v5671 = vrot.slane %v5669, 7
    %v5672 = vshll.u32 %v5562, 16
    %v5674 = vor.u32 %v5671, %v5672
    %v5691 = vsel %vm311, 0, %v5569
    %v5692 = vsel %vm311, 0, %v5576
    %v5693 = vsel %vm311, 0, %v5583
    %v5694 = vsel %vm311, 0, %v5590
    %v5695 = vsel %vm311, 0, %v5597
    %v5696 = vsel %vm311, 0, %v5604
    %v5697 = vsel %vm311, 0, %v5611
    %v5698 = vsel %vm311, 0, %v5618
    %v5699 = vsel %vm311, 0, %v5625
    %v5700 = vsel %vm311, 0, %v5632
    %v5701 = vsel %vm311, 0, %v5639
    %v5702 = vsel %vm311, 0, %v5646
    %v5703 = vsel %vm311, 0, %v5653
    %v5704 = vsel %vm311, 0, %v5660
    %v5705 = vsel %vm311, 0, %v5667
    %v5706 = vsel %vm311, 0, %v5674
    %v5707 = vrot.slane %v5567, 1
    %v5708 = vor.u32 %v5564, %v5707
    %v5709 = vrot.slane %v5574, 1
    %v5710 = vor.u32 %v5571, %v5709
    %v5711 = vrot.slane %v5581, 1
    %v5712 = vor.u32 %v5578, %v5711
    %v5713 = vrot.slane %v5588, 1
    %v5714 = vor.u32 %v5585, %v5713
    %v5715 = vrot.slane %v5595, 1
    %v5716 = vor.u32 %v5592, %v5715
    %v5717 = vrot.slane %v5602, 1
    %v5718 = vor.u32 %v5599, %v5717
    %v5719 = vrot.slane %v5609, 1
    %v5720 = vor.u32 %v5606, %v5719
    %v5721 = vrot.slane %v5616, 1
    %v5722 = vor.u32 %v5613, %v5721
    %v5723 = vrot.slane %v5623, 1
    %v5724 = vor.u32 %v5620, %v5723
    %v5725 = vrot.slane %v5630, 1
    %v5726 = vor.u32 %v5627, %v5725
    %v5727 = vrot.slane %v5637, 1
    %v5728 = vor.u32 %v5634, %v5727
    %v5729 = vrot.slane %v5644, 1
    %v5730 = vor.u32 %v5641, %v5729
    %v5731 = vrot.slane %v5651, 1
    %v5732 = vor.u32 %v5648, %v5731
    %v5733 = vrot.slane %v5658, 1
    %v5734 = vor.u32 %v5655, %v5733
    %v5735 = vrot.slane %v5665, 1
    %v5736 = vor.u32 %v5662, %v5735
    %v5737 = vrot.slane %v5672, 1
    %v5738 = vor.u32 %v5669, %v5737
    %v5755 = vsel %vm378, %v5708, 0
    %v5756 = vsel %vm378, %v5710, 0
    %v5757 = vsel %vm378, %v5712, 0
    %v5758 = vsel %vm378, %v5714, 0
    %v5759 = vsel %vm378, %v5716, 0
    %v5760 = vsel %vm378, %v5718, 0
    %v5761 = vsel %vm378, %v5720, 0
    %v5762 = vsel %vm378, %v5722, 0
    %v5763 = vsel %vm378, %v5724, 0
    %v5764 = vsel %vm378, %v5726, 0
    %v5765 = vsel %vm378, %v5728, 0
    %v5766 = vsel %vm378, %v5730, 0
    %v5767 = vsel %vm378, %v5732, 0
    %v5768 = vsel %vm378, %v5734, 0
    %v5769 = vsel %vm378, %v5736, 0
    %v5770 = vsel %vm378, %v5738, 0
    %v5787 = vunpack.c.l.b16 %v5691
    %v5788 = vunpack.c.h.b16 %v5691
    %v5789 = vunpack.c.l.b16 %v5692
    %v5790 = vunpack.c.h.b16 %v5692
    %v5791 = vunpack.c.l.b16 %v5693
    %v5792 = vunpack.c.h.b16 %v5693
    %v5793 = vunpack.c.l.b16 %v5694
    %v5794 = vunpack.c.h.b16 %v5694
    %v5795 = vunpack.c.l.b16 %v5695
    %v5796 = vunpack.c.h.b16 %v5695
    %v5797 = vunpack.c.l.b16 %v5696
    %v5798 = vunpack.c.h.b16 %v5696
    %v5799 = vunpack.c.l.b16 %v5697
    %v5800 = vunpack.c.h.b16 %v5697
    %v5801 = vunpack.c.l.b16 %v5698
    %v5802 = vunpack.c.h.b16 %v5698
    %v5803 = vunpack.c.l.b16 %v5699
    %v5804 = vunpack.c.h.b16 %v5699
    %v5805 = vunpack.c.l.b16 %v5700
    %v5806 = vunpack.c.h.b16 %v5700
    %v5807 = vunpack.c.l.b16 %v5701
    %v5808 = vunpack.c.h.b16 %v5701
    %v5809 = vunpack.c.l.b16 %v5702
    %v5810 = vunpack.c.h.b16 %v5702
    %v5811 = vunpack.c.l.b16 %v5703
    %v5812 = vunpack.c.h.b16 %v5703
    %v5813 = vunpack.c.l.b16 %v5704
    %v5814 = vunpack.c.h.b16 %v5704
    %v5815 = vunpack.c.l.b16 %v5705
    %v5816 = vunpack.c.h.b16 %v5705
    %v5817 = vunpack.c.l.b16 %v5706
    %v5818 = vunpack.c.h.b16 %v5706
    %v5819 = vpack.c.b16 %v5787, %v5787
    %v5820 = vpack.c.b16 %v5788, %v5788
    %v5821 = vpack.c.b16 %v5789, %v5789
    %v5822 = vpack.c.b16 %v5790, %v5790
    %v5823 = vpack.c.b16 %v5791, %v5791
    %v5824 = vpack.c.b16 %v5792, %v5792
    %v5825 = vpack.c.b16 %v5793, %v5793
    %v5826 = vpack.c.b16 %v5794, %v5794
    %v5827 = vpack.c.b16 %v5795, %v5795
    %v5828 = vpack.c.b16 %v5796, %v5796
    %v5829 = vpack.c.b16 %v5797, %v5797
    %v5830 = vpack.c.b16 %v5798, %v5798
    %v5831 = vpack.c.b16 %v5799, %v5799
    %v5832 = vpack.c.b16 %v5800, %v5800
    %v5833 = vpack.c.b16 %v5801, %v5801
    %v5834 = vpack.c.b16 %v5802, %v5802
    %v5835 = vpack.c.b16 %v5803, %v5803
    %v5836 = vpack.c.b16 %v5804, %v5804
    %v5837 = vpack.c.b16 %v5805, %v5805
    %v5838 = vpack.c.b16 %v5806, %v5806
    %v5839 = vpack.c.b16 %v5807, %v5807
    %v5840 = vpack.c.b16 %v5808, %v5808
    %v5841 = vpack.c.b16 %v5809, %v5809
    %v5842 = vpack.c.b16 %v5810, %v5810
    %v5843 = vpack.c.b16 %v5811, %v5811
    %v5844 = vpack.c.b16 %v5812, %v5812
    %v5845 = vpack.c.b16 %v5813, %v5813
    %v5846 = vpack.c.b16 %v5814, %v5814
    %v5847 = vpack.c.b16 %v5815, %v5815
    %v5848 = vpack.c.b16 %v5816, %v5816
    %v5849 = vpack.c.b16 %v5817, %v5817
    %v5850 = vpack.c.b16 %v5818, %v5818
    %5883 = vst [vmem:[%s507] sm:$0xf] %v5819
    %5884 = vst [vmem:[%s507 + $0xc] sm:$0xf] %v5820
    %5885 = vst [vmem:[%s507 + $0x18] sm:$0xf] %v5821
    %5886 = vst [vmem:[%s507 + $0x24] sm:$0xf] %v5822
    %5887 = vst [vmem:[%s507 + $0x30] sm:$0xf] %v5823
    %5888 = vst [vmem:[%s507 + $0x3c] sm:$0xf] %v5824
    %5889 = vst [vmem:[%s507 + $0x48] sm:$0xf] %v5825
    %5890 = vst [vmem:[%s507 + $0x54] sm:$0xf] %v5826
    %5891 = vst [vmem:[%s507 + $0x60] sm:$0xf] %v5827
    %5892 = vst [vmem:[%s507 + $0x6c] sm:$0xf] %v5828
    %5893 = vst [vmem:[%s507 + $0x78] sm:$0xf] %v5829
    %5894 = vst [vmem:[%s507 + $0x84] sm:$0xf] %v5830
    %5895 = vst [vmem:[%s507 + $0x90] sm:$0xf] %v5831
    %5896 = vst [vmem:[%s507 + $0x9c] sm:$0xf] %v5832
    %5897 = vst [vmem:[%s507 + $0xa8] sm:$0xf] %v5833
    %5898 = vst [vmem:[%s507 + $0xb4] sm:$0xf] %v5834
    %5899 = vst [vmem:[%s507 + $0xc0] sm:$0xf] %v5835
    %5900 = vst [vmem:[%s507 + $0xcc] sm:$0xf] %v5836
    %5901 = vst [vmem:[%s507 + $0xd8] sm:$0xf] %v5837
    %5902 = vst [vmem:[%s507 + $0xe4] sm:$0xf] %v5838
    %5903 = vst [vmem:[%s507 + $0xf0] sm:$0xf] %v5839
    %5904 = vst [vmem:[%s507 + $0xfc] sm:$0xf] %v5840
    %5905 = vst [vmem:[%s507 + $0x108] sm:$0xf] %v5841
    %5906 = vst [vmem:[%s507 + $0x114] sm:$0xf] %v5842
    %5907 = vst [vmem:[%s507 + $0x120] sm:$0xf] %v5843
    %5908 = vst [vmem:[%s507 + $0x12c] sm:$0xf] %v5844
    %5909 = vst [vmem:[%s507 + $0x138] sm:$0xf] %v5845
    %5910 = vst [vmem:[%s507 + $0x144] sm:$0xf] %v5846
    %5911 = vst [vmem:[%s507 + $0x150] sm:$0xf] %v5847
    %5912 = vst [vmem:[%s507 + $0x15c] sm:$0xf] %v5848
    %5913 = vst [vmem:[%s507 + $0x168] sm:$0xf] %v5849
    %5914 = vst [vmem:[%s507 + $0x174] sm:$0xf] %v5850
    %5915 = vst [vmem:[%s507 + $0x4] sm:$0xf] %v5451
    %5916 = vst [vmem:[%s507 + $0x10] sm:$0xf] %v5452
    %5917 = vst [vmem:[%s507 + $0x1c] sm:$0xf] %v5453
    %5918 = vst [vmem:[%s507 + $0x28] sm:$0xf] %v5454
    %5919 = vst [vmem:[%s507 + $0x34] sm:$0xf] %v5455
    %5920 = vst [vmem:[%s507 + $0x40] sm:$0xf] %v5456
    %5921 = vst [vmem:[%s507 + $0x4c] sm:$0xf] %v5457
    %5922 = vst [vmem:[%s507 + $0x58] sm:$0xf] %v5458
    %5923 = vst [vmem:[%s507 + $0x64] sm:$0xf] %v5459
    %5924 = vst [vmem:[%s507 + $0x70] sm:$0xf] %v5460
    %5925 = vst [vmem:[%s507 + $0x7c] sm:$0xf] %v5461
    %5926 = vst [vmem:[%s507 + $0x88] sm:$0xf] %v5462
    %5927 = vst [vmem:[%s507 + $0x94] sm:$0xf] %v5463
    %5928 = vst [vmem:[%s507 + $0xa0] sm:$0xf] %v5464
    %5929 = vst [vmem:[%s507 + $0xac] sm:$0xf] %v5465
    %5930 = vst [vmem:[%s507 + $0xb8] sm:$0xf] %v5466
    %5931 = vst [vmem:[%s507 + $0xc4] sm:$0xf] %v5467
    %5932 = vst [vmem:[%s507 + $0xd0] sm:$0xf] %v5468
    %5933 = vst [vmem:[%s507 + $0xdc] sm:$0xf] %v5469
    %5934 = vst [vmem:[%s507 + $0xe8] sm:$0xf] %v5470
    %5935 = vst [vmem:[%s507 + $0xf4] sm:$0xf] %v5471
    %5936 = vst [vmem:[%s507 + $0x100] sm:$0xf] %v5472
    %5937 = vst [vmem:[%s507 + $0x10c] sm:$0xf] %v5473
    %5938 = vst [vmem:[%s507 + $0x118] sm:$0xf] %v5474
    %5939 = vst [vmem:[%s507 + $0x124] sm:$0xf] %v5475
    %5940 = vst [vmem:[%s507 + $0x130] sm:$0xf] %v5476
    %5941 = vst [vmem:[%s507 + $0x13c] sm:$0xf] %v5477
    %5942 = vst [vmem:[%s507 + $0x148] sm:$0xf] %v5478
    %5943 = vst [vmem:[%s507 + $0x154] sm:$0xf] %v5479
    %5944 = vst [vmem:[%s507 + $0x160] sm:$0xf] %v5480
    %5945 = vst [vmem:[%s507 + $0x16c] sm:$0xf] %v5481
    %5946 = vst [vmem:[%s507 + $0x178] sm:$0xf] %v5482
    %v5963 = vunpack.c.l.b16 %v5755
    %v5964 = vunpack.c.h.b16 %v5755
    %v5965 = vunpack.c.l.b16 %v5756
    %v5966 = vunpack.c.h.b16 %v5756
    %v5967 = vunpack.c.l.b16 %v5757
    %v5968 = vunpack.c.h.b16 %v5757
    %v5969 = vunpack.c.l.b16 %v5758
    %v5970 = vunpack.c.h.b16 %v5758
    %v5971 = vunpack.c.l.b16 %v5759
    %v5972 = vunpack.c.h.b16 %v5759
    %v5973 = vunpack.c.l.b16 %v5760
    %v5974 = vunpack.c.h.b16 %v5760
    %v5975 = vunpack.c.l.b16 %v5761
    %v5976 = vunpack.c.h.b16 %v5761
    %v5977 = vunpack.c.l.b16 %v5762
    %v5978 = vunpack.c.h.b16 %v5762
    %v5979 = vunpack.c.l.b16 %v5763
    %v5980 = vunpack.c.h.b16 %v5763
    %v5981 = vunpack.c.l.b16 %v5764
    %v5982 = vunpack.c.h.b16 %v5764
    %v5983 = vunpack.c.l.b16 %v5765
    %v5984 = vunpack.c.h.b16 %v5765
    %v5985 = vunpack.c.l.b16 %v5766
    %v5986 = vunpack.c.h.b16 %v5766
    %v5987 = vunpack.c.l.b16 %v5767
    %v5988 = vunpack.c.h.b16 %v5767
    %v5989 = vunpack.c.l.b16 %v5768
    %v5990 = vunpack.c.h.b16 %v5768
    %v5991 = vunpack.c.l.b16 %v5769
    %v5992 = vunpack.c.h.b16 %v5769
    %v5993 = vunpack.c.l.b16 %v5770
    %v5994 = vunpack.c.h.b16 %v5770
    %v5995 = vpack.c.b16 %v5963, %v5963
    %v5996 = vpack.c.b16 %v5964, %v5964
    %v5997 = vpack.c.b16 %v5965, %v5965
    %v5998 = vpack.c.b16 %v5966, %v5966
    %v5999 = vpack.c.b16 %v5967, %v5967
    %v6000 = vpack.c.b16 %v5968, %v5968
    %v6001 = vpack.c.b16 %v5969, %v5969
    %v6002 = vpack.c.b16 %v5970, %v5970
    %v6003 = vpack.c.b16 %v5971, %v5971
    %v6004 = vpack.c.b16 %v5972, %v5972
    %v6005 = vpack.c.b16 %v5973, %v5973
    %v6006 = vpack.c.b16 %v5974, %v5974
    %v6007 = vpack.c.b16 %v5975, %v5975
    %v6008 = vpack.c.b16 %v5976, %v5976
    %v6009 = vpack.c.b16 %v5977, %v5977
    %v6010 = vpack.c.b16 %v5978, %v5978
    %v6011 = vpack.c.b16 %v5979, %v5979
    %v6012 = vpack.c.b16 %v5980, %v5980
    %v6013 = vpack.c.b16 %v5981, %v5981
    %v6014 = vpack.c.b16 %v5982, %v5982
    %v6015 = vpack.c.b16 %v5983, %v5983
    %v6016 = vpack.c.b16 %v5984, %v5984
    %v6017 = vpack.c.b16 %v5985, %v5985
    %v6018 = vpack.c.b16 %v5986, %v5986
    %v6019 = vpack.c.b16 %v5987, %v5987
    %v6020 = vpack.c.b16 %v5988, %v5988
    %v6021 = vpack.c.b16 %v5989, %v5989
    %v6022 = vpack.c.b16 %v5990, %v5990
    %v6023 = vpack.c.b16 %v5991, %v5991
    %v6024 = vpack.c.b16 %v5992, %v5992
    %v6025 = vpack.c.b16 %v5993, %v5993
    %v6026 = vpack.c.b16 %v5994, %v5994
    %6059 = vst [vmem:[%s507 + $0x8] sm:$0xf] %v5995
    %6060 = vst [vmem:[%s507 + $0x14] sm:$0xf] %v5996
    %6061 = vst [vmem:[%s507 + $0x20] sm:$0xf] %v5997
    %6062 = vst [vmem:[%s507 + $0x2c] sm:$0xf] %v5998
    %6063 = vst [vmem:[%s507 + $0x38] sm:$0xf] %v5999
    %6064 = vst [vmem:[%s507 + $0x44] sm:$0xf] %v6000
    %6065 = vst [vmem:[%s507 + $0x50] sm:$0xf] %v6001
    %6066 = vst [vmem:[%s507 + $0x5c] sm:$0xf] %v6002
    %6067 = vst [vmem:[%s507 + $0x68] sm:$0xf] %v6003
    %6068 = vst [vmem:[%s507 + $0x74] sm:$0xf] %v6004
    %6069 = vst [vmem:[%s507 + $0x80] sm:$0xf] %v6005
    %6070 = vst [vmem:[%s507 + $0x8c] sm:$0xf] %v6006
    %6071 = vst [vmem:[%s507 + $0x98] sm:$0xf] %v6007
    %6072 = vst [vmem:[%s507 + $0xa4] sm:$0xf] %v6008
    %6073 = vst [vmem:[%s507 + $0xb0] sm:$0xf] %v6009
    %6074 = vst [vmem:[%s507 + $0xbc] sm:$0xf] %v6010
    %6075 = vst [vmem:[%s507 + $0xc8] sm:$0xf] %v6011
    %6076 = vst [vmem:[%s507 + $0xd4] sm:$0xf] %v6012
    %6077 = vst [vmem:[%s507 + $0xe0] sm:$0xf] %v6013
    %6078 = vst [vmem:[%s507 + $0xec] sm:$0xf] %v6014
    %6079 = vst [vmem:[%s507 + $0xf8] sm:$0xf] %v6015
    %6080 = vst [vmem:[%s507 + $0x104] sm:$0xf] %v6016
    %6081 = vst [vmem:[%s507 + $0x110] sm:$0xf] %v6017
    %6082 = vst [vmem:[%s507 + $0x11c] sm:$0xf] %v6018
    %6083 = vst [vmem:[%s507 + $0x128] sm:$0xf] %v6019
    %6084 = vst [vmem:[%s507 + $0x134] sm:$0xf] %v6020
    %6085 = vst [vmem:[%s507 + $0x140] sm:$0xf] %v6021
    %6086 = vst [vmem:[%s507 + $0x14c] sm:$0xf] %v6022
    %6087 = vst [vmem:[%s507 + $0x158] sm:$0xf] %v6023
    %6088 = vst [vmem:[%s507 + $0x164] sm:$0xf] %v6024
    %6089 = vst [vmem:[%s507 + $0x170] sm:$0xf] %v6025
    %6090 = vst [vmem:[%s507 + $0x17c] sm:$0xf] %v6026
    %v6091 = vld [vmem:[#allocation2] sm:$0xff]
    %v6092 = vld [vmem:[#allocation2 + $0x8] sm:$0xf]
    %v6093 = vld [vmem:[#allocation2 + $0xc] sm:$0xff]
    %v6094 = vld [vmem:[#allocation2 + $0x14] sm:$0xf]
    %v6095 = vld [vmem:[#allocation2 + $0x18] sm:$0xff]
    %v6096 = vld [vmem:[#allocation2 + $0x20] sm:$0xf]
    %v6097 = vld [vmem:[#allocation2 + $0x24] sm:$0xff]
    %v6098 = vld [vmem:[#allocation2 + $0x2c] sm:$0xf]
    %v6099 = vld [vmem:[#allocation2 + $0x30] sm:$0xff]
    %v6100 = vld [vmem:[#allocation2 + $0x38] sm:$0xf]
    %v6101 = vld [vmem:[#allocation2 + $0x3c] sm:$0xff]
    %v6102 = vld [vmem:[#allocation2 + $0x44] sm:$0xf]
    %v6103 = vld [vmem:[#allocation2 + $0x48] sm:$0xff]
    %v6104 = vld [vmem:[#allocation2 + $0x50] sm:$0xf]
    %v6105 = vld [vmem:[#allocation2 + $0x54] sm:$0xff]
    %v6106 = vld [vmem:[#allocation2 + $0x5c] sm:$0xf]
    %v6107 = vld [vmem:[#allocation2 + $0x60] sm:$0xff]
    %v6108 = vld [vmem:[#allocation2 + $0x68] sm:$0xf]
    %v6109 = vld [vmem:[#allocation2 + $0x6c] sm:$0xff]
    %v6110 = vld [vmem:[#allocation2 + $0x74] sm:$0xf]
    %v6111 = vld [vmem:[#allocation2 + $0x78] sm:$0xff]
    %v6112 = vld [vmem:[#allocation2 + $0x80] sm:$0xf]
    %v6113 = vld [vmem:[#allocation2 + $0x84] sm:$0xff]
    %v6114 = vld [vmem:[#allocation2 + $0x8c] sm:$0xf]
    %v6115 = vld [vmem:[#allocation2 + $0x90] sm:$0xff]
    %v6116 = vld [vmem:[#allocation2 + $0x98] sm:$0xf]
    %v6117 = vld [vmem:[#allocation2 + $0x9c] sm:$0xff]
    %v6118 = vld [vmem:[#allocation2 + $0xa4] sm:$0xf]
    %v6119 = vld [vmem:[#allocation2 + $0xa8] sm:$0xff]
    %v6120 = vld [vmem:[#allocation2 + $0xb0] sm:$0xf]
    %v6121 = vld [vmem:[#allocation2 + $0xb4] sm:$0xff]
    %v6122 = vld [vmem:[#allocation2 + $0xbc] sm:$0xf]
    %v6123 = vld [vmem:[#allocation2 + $0xc0] sm:$0xff]
    %v6124 = vld [vmem:[#allocation2 + $0xc8] sm:$0xf]
    %v6125 = vld [vmem:[#allocation2 + $0xcc] sm:$0xff]
    %v6126 = vld [vmem:[#allocation2 + $0xd4] sm:$0xf]
    %v6127 = vld [vmem:[#allocation2 + $0xd8] sm:$0xff]
    %v6128 = vld [vmem:[#allocation2 + $0xe0] sm:$0xf]
    %v6129 = vld [vmem:[#allocation2 + $0xe4] sm:$0xff]
    %v6130 = vld [vmem:[#allocation2 + $0xec] sm:$0xf]
    %v6131 = vld [vmem:[#allocation2 + $0xf0] sm:$0xff]
    %v6132 = vld [vmem:[#allocation2 + $0xf8] sm:$0xf]
    %v6133 = vld [vmem:[#allocation2 + $0xfc] sm:$0xff]
    %v6134 = vld [vmem:[#allocation2 + $0x104] sm:$0xf]
    %v6135 = vld [vmem:[#allocation2 + $0x108] sm:$0xff]
    %v6136 = vld [vmem:[#allocation2 + $0x110] sm:$0xf]
    %v6137 = vld [vmem:[#allocation2 + $0x114] sm:$0xff]
    %v6138 = vld [vmem:[#allocation2 + $0x11c] sm:$0xf]
    %v6139 = vld [vmem:[#allocation2 + $0x120] sm:$0xff]
    %v6140 = vld [vmem:[#allocation2 + $0x128] sm:$0xf]
    %v6141 = vld [vmem:[#allocation2 + $0x12c] sm:$0xff]
    %v6142 = vld [vmem:[#allocation2 + $0x134] sm:$0xf]
    %v6143 = vld [vmem:[#allocation2 + $0x138] sm:$0xff]
    %v6144 = vld [vmem:[#allocation2 + $0x140] sm:$0xf]
    %v6145 = vld [vmem:[#allocation2 + $0x144] sm:$0xff]
    %v6146 = vld [vmem:[#allocation2 + $0x14c] sm:$0xf]
    %v6147 = vld [vmem:[#allocation2 + $0x150] sm:$0xff]
    %v6148 = vld [vmem:[#allocation2 + $0x158] sm:$0xf]
    %v6149 = vld [vmem:[#allocation2 + $0x15c] sm:$0xff]
    %v6150 = vld [vmem:[#allocation2 + $0x164] sm:$0xf]
    %v6151 = vld [vmem:[#allocation2 + $0x168] sm:$0xff]
    %v6152 = vld [vmem:[#allocation2 + $0x170] sm:$0xf]
    %v6153 = vld [vmem:[#allocation2 + $0x174] sm:$0xff]
    %v6154 = vld [vmem:[#allocation2 + $0x17c] sm:$0xf]
    %v6155 = vld [vmem:[#allocation2 + $0x180] sm:$0xff]
    %v6156 = vld [vmem:[#allocation2 + $0x188] sm:$0xf]
    %v6157 = vld [vmem:[#allocation2 + $0x18c] sm:$0xff]
    %v6158 = vld [vmem:[#allocation2 + $0x194] sm:$0xf]
    %v6159 = vld [vmem:[#allocation2 + $0x198] sm:$0xff]
    %v6160 = vld [vmem:[#allocation2 + $0x1a0] sm:$0xf]
    %v6161 = vld [vmem:[#allocation2 + $0x1a4] sm:$0xff]
    %v6162 = vld [vmem:[#allocation2 + $0x1ac] sm:$0xf]
    %v6163 = vld [vmem:[%s1] sm:$0xf]
    %v6164 = vld [vmem:[%s1 + $0x4] sm:$0xf]
    %v6165 = vld [vmem:[%s1 + $0x8] sm:$0xf]
    %v6166 = vld [vmem:[%s1 + $0xc] sm:$0xf]
    %v6167 = vld [vmem:[%s1 + $0x10] sm:$0xf]
    %v6168 = vld [vmem:[%s1 + $0x14] sm:$0xf]
    %v6169 = vld [vmem:[%s1 + $0x18] sm:$0xf]
    %v6170 = vld [vmem:[%s1 + $0x1c] sm:$0xf]
    %v6171 = vld [vmem:[%s1 + $0x20] sm:$0xf]
    %v6172 = vld [vmem:[%s1 + $0x24] sm:$0xf]
    %v6173 = vld [vmem:[%s1 + $0x28] sm:$0xf]
    %v6174 = vld [vmem:[%s1 + $0x2c] sm:$0xf]
    %v6175 = vld [vmem:[%s1 + $0x30] sm:$0xf]
    %v6176 = vld [vmem:[%s1 + $0x34] sm:$0xf]
    %v6177 = vld [vmem:[%s1 + $0x38] sm:$0xf]
    %v6178 = vld [vmem:[%s1 + $0x3c] sm:$0xf]
    %v6179 = vld [vmem:[%s1 + $0x40] sm:$0xf]
    %v6180 = vld [vmem:[%s1 + $0x44] sm:$0xf]
    %v6181 = vld [vmem:[%s1 + $0x48] sm:$0xf]
    %v6182 = vld [vmem:[%s1 + $0x4c] sm:$0xf]
    %v6183 = vld [vmem:[%s1 + $0x50] sm:$0xf]
    %v6184 = vld [vmem:[%s1 + $0x54] sm:$0xf]
    %v6185 = vld [vmem:[%s1 + $0x58] sm:$0xf]
    %v6186 = vld [vmem:[%s1 + $0x5c] sm:$0xf]
    %v6187 = vld [vmem:[%s1 + $0x60] sm:$0xf]
    %v6188 = vld [vmem:[%s1 + $0x64] sm:$0xf]
    %v6189 = vld [vmem:[%s1 + $0x68] sm:$0xf]
    %v6190 = vld [vmem:[%s1 + $0x6c] sm:$0xf]
    %v6191 = vld [vmem:[%s1 + $0x70] sm:$0xf]
    %v6192 = vld [vmem:[%s1 + $0x74] sm:$0xf]
    %v6193 = vld [vmem:[%s1 + $0x78] sm:$0xf]
    %v6194 = vld [vmem:[%s1 + $0x7c] sm:$0xf]
    %v6195 = vld [vmem:[%s1 + $0x80] sm:$0xf]
    %v6196 = vld [vmem:[%s1 + $0x84] sm:$0xf]
    %v6197 = vld [vmem:[%s1 + $0x88] sm:$0xf]
    %v6198 = vld [vmem:[%s1 + $0x8c] sm:$0xf]
    %v6199 = vld [vmem:[%s1 + $0x90] sm:$0xf]
    %v6200 = vld [vmem:[%s1 + $0x94] sm:$0xf]
    %v6201 = vld [vmem:[%s1 + $0x98] sm:$0xf]
    %v6202 = vld [vmem:[%s1 + $0x9c] sm:$0xf]
    %v6203 = vld [vmem:[%s1 + $0xa0] sm:$0xf]
    %v6204 = vld [vmem:[%s1 + $0xa4] sm:$0xf]
    %v6205 = vld [vmem:[%s1 + $0xa8] sm:$0xf]
    %v6206 = vld [vmem:[%s1 + $0xac] sm:$0xf]
    %v6207 = vld [vmem:[%s1 + $0xb0] sm:$0xf]
    %v6208 = vld [vmem:[%s1 + $0xb4] sm:$0xf]
    %v6209 = vld [vmem:[%s1 + $0xb8] sm:$0xf]
    %v6210 = vld [vmem:[%s1 + $0xbc] sm:$0xf]
    %v6211 = vld [vmem:[%s836] sm:$0xf]
    %v6212 = vld [vmem:[%s836 + $0x4] sm:$0xf]
    %v6213 = vld [vmem:[%s836 + $0x8] sm:$0xf]
    %v6214 = vld [vmem:[%s836 + $0xc] sm:$0xf]
    %v6215 = vld [vmem:[%s836 + $0x10] sm:$0xf]
    %v6216 = vld [vmem:[%s836 + $0x14] sm:$0xf]
    %v6217 = vld [vmem:[%s836 + $0x18] sm:$0xf]
    %v6218 = vld [vmem:[%s836 + $0x1c] sm:$0xf]
    %v6219 = vld [vmem:[%s836 + $0x20] sm:$0xf]
    %v6220 = vld [vmem:[%s836 + $0x24] sm:$0xf]
    %v6221 = vld [vmem:[%s836 + $0x28] sm:$0xf]
    %v6222 = vld [vmem:[%s836 + $0x2c] sm:$0xf]
    %v6223 = vld [vmem:[%s836 + $0x30] sm:$0xf]
    %v6224 = vld [vmem:[%s836 + $0x34] sm:$0xf]
    %v6225 = vld [vmem:[%s836 + $0x38] sm:$0xf]
    %v6226 = vld [vmem:[%s836 + $0x3c] sm:$0xf]
    %v6227 = vld [vmem:[%s836 + $0x40] sm:$0xf]
    %v6228 = vld [vmem:[%s836 + $0x44] sm:$0xf]
    %v6229 = vld [vmem:[%s836 + $0x48] sm:$0xf]
    %v6230 = vld [vmem:[%s836 + $0x4c] sm:$0xf]
    %v6231 = vld [vmem:[%s836 + $0x50] sm:$0xf]
    %v6232 = vld [vmem:[%s836 + $0x54] sm:$0xf]
    %v6233 = vld [vmem:[%s836 + $0x58] sm:$0xf]
    %v6234 = vld [vmem:[%s836 + $0x5c] sm:$0xf]
    %v6235 = vld [vmem:[%s836 + $0x60] sm:$0xf]
    %v6236 = vld [vmem:[%s836 + $0x64] sm:$0xf]
    %v6237 = vld [vmem:[%s836 + $0x68] sm:$0xf]
    %v6238 = vld [vmem:[%s836 + $0x6c] sm:$0xf]
    %v6239 = vld [vmem:[%s836 + $0x70] sm:$0xf]
    %v6240 = vld [vmem:[%s836 + $0x74] sm:$0xf]
    %v6241 = vld [vmem:[%s836 + $0x78] sm:$0xf]
    %v6242 = vld [vmem:[%s836 + $0x7c] sm:$0xf]
    %v6243 = vld [vmem:[%s836 + $0x80] sm:$0xf]
    %v6244 = vld [vmem:[%s836 + $0x84] sm:$0xf]
    %v6245 = vld [vmem:[%s836 + $0x88] sm:$0xf]
    %v6246 = vld [vmem:[%s836 + $0x8c] sm:$0xf]
    %v6247 = vld [vmem:[%s836 + $0x90] sm:$0xf]
    %v6248 = vld [vmem:[%s836 + $0x94] sm:$0xf]
    %v6249 = vld [vmem:[%s836 + $0x98] sm:$0xf]
    %v6250 = vld [vmem:[%s836 + $0x9c] sm:$0xf]
    %v6251 = vld [vmem:[%s836 + $0xa0] sm:$0xf]
    %v6252 = vld [vmem:[%s836 + $0xa4] sm:$0xf]
    %v6253 = vld [vmem:[%s836 + $0xa8] sm:$0xf]
    %v6254 = vld [vmem:[%s836 + $0xac] sm:$0xf]
    %v6255 = vld [vmem:[%s836 + $0xb0] sm:$0xf]
    %v6256 = vld [vmem:[%s836 + $0xb4] sm:$0xf]
    %v6257 = vld [vmem:[%s836 + $0xb8] sm:$0xf]
    %v6258 = vld [vmem:[%s836 + $0xbc] sm:$0xf]
    %v6323 = vunpack.c.l.b16 %v6095
    %v6324 = vunpack.c.h.b16 %v6095
    %v6325 = vunpack.c.l.b16 %v6096
    %v6326 = vunpack.c.l.b16 %v6097
    %v6327 = vunpack.c.h.b16 %v6097
    %v6328 = vunpack.c.l.b16 %v6098
    %v6329 = vunpack.c.l.b16 %v6099
    %v6330 = vunpack.c.h.b16 %v6099
    %v6331 = vunpack.c.l.b16 %v6100
    %v6332 = vunpack.c.l.b16 %v6101
    %v6333 = vunpack.c.h.b16 %v6101
    %v6334 = vunpack.c.l.b16 %v6102
    %v6335 = vunpack.c.l.b16 %v6103
    %v6336 = vunpack.c.h.b16 %v6103
    %v6337 = vunpack.c.l.b16 %v6104
    %v6338 = vunpack.c.l.b16 %v6105
    %v6339 = vunpack.c.h.b16 %v6105
    %v6340 = vunpack.c.l.b16 %v6106
    %v6341 = vunpack.c.l.b16 %v6107
    %v6342 = vunpack.c.h.b16 %v6107
    %v6343 = vunpack.c.l.b16 %v6108
    %v6344 = vunpack.c.l.b16 %v6109
    %v6345 = vunpack.c.h.b16 %v6109
    %v6346 = vunpack.c.l.b16 %v6110
    %v6347 = vunpack.c.l.b16 %v6111
    %v6348 = vunpack.c.h.b16 %v6111
    %v6349 = vunpack.c.l.b16 %v6112
    %v6350 = vunpack.c.l.b16 %v6113
    %v6351 = vunpack.c.h.b16 %v6113
    %v6352 = vunpack.c.l.b16 %v6114
    %v6353 = vunpack.c.l.b16 %v6115
    %v6354 = vunpack.c.h.b16 %v6115
    %v6355 = vunpack.c.l.b16 %v6116
    %v6356 = vunpack.c.l.b16 %v6117
    %v6357 = vunpack.c.h.b16 %v6117
    %v6358 = vunpack.c.l.b16 %v6118
    %v6359 = vunpack.c.l.b16 %v6119
    %v6360 = vunpack.c.h.b16 %v6119
    %v6361 = vunpack.c.l.b16 %v6120
    %v6362 = vunpack.c.l.b16 %v6121
    %v6363 = vunpack.c.h.b16 %v6121
    %v6364 = vunpack.c.l.b16 %v6122
    %v6365 = vunpack.c.l.b16 %v6123
    %v6366 = vunpack.c.h.b16 %v6123
    %v6367 = vunpack.c.l.b16 %v6124
    %v6368 = vunpack.c.l.b16 %v6125
    %v6369 = vunpack.c.h.b16 %v6125
    %v6370 = vunpack.c.l.b16 %v6126
    %v6371 = vunpack.c.l.b16 %v6127
    %v6372 = vunpack.c.h.b16 %v6127
    %v6373 = vunpack.c.l.b16 %v6128
    %v6374 = vunpack.c.l.b16 %v6129
    %v6375 = vunpack.c.h.b16 %v6129
    %v6376 = vunpack.c.l.b16 %v6130
    %v6377 = vunpack.c.l.b16 %v6131
    %v6378 = vunpack.c.h.b16 %v6131
    %v6379 = vunpack.c.l.b16 %v6132
    %v6380 = vunpack.c.l.b16 %v6133
    %v6381 = vunpack.c.h.b16 %v6133
    %v6382 = vunpack.c.l.b16 %v6134
    %v6383 = vunpack.c.l.b16 %v6135
    %v6384 = vunpack.c.h.b16 %v6135
    %v6385 = vunpack.c.l.b16 %v6136
    %v6386 = vunpack.c.l.b16 %v6137
    %v6387 = vunpack.c.h.b16 %v6137
    %v6388 = vunpack.c.l.b16 %v6138
    %v6389 = vunpack.c.l.b16 %v6139
    %v6390 = vunpack.c.h.b16 %v6139
    %v6391 = vunpack.c.l.b16 %v6140
    %v6392 = vunpack.c.l.b16 %v6141
    %v6393 = vunpack.c.h.b16 %v6141
    %v6394 = vunpack.c.l.b16 %v6142
    %v6395 = vunpack.c.l.b16 %v6143
    %v6396 = vunpack.c.h.b16 %v6143
    %v6397 = vunpack.c.l.b16 %v6144
    %v6398 = vunpack.c.l.b16 %v6145
    %v6399 = vunpack.c.h.b16 %v6145
    %v6400 = vunpack.c.l.b16 %v6146
    %v6401 = vunpack.c.l.b16 %v6147
    %v6402 = vunpack.c.h.b16 %v6147
    %v6403 = vunpack.c.l.b16 %v6148
    %v6404 = vunpack.c.l.b16 %v6149
    %v6405 = vunpack.c.h.b16 %v6149
    %v6406 = vunpack.c.l.b16 %v6150
    %v6407 = vunpack.c.l.b16 %v6151
    %v6408 = vunpack.c.h.b16 %v6151
    %v6409 = vunpack.c.l.b16 %v6152
    %v6410 = vunpack.c.l.b16 %v6153
    %v6411 = vunpack.c.h.b16 %v6153
    %v6412 = vunpack.c.l.b16 %v6154
    %v6413 = vunpack.c.l.b16 %v6155
    %v6414 = vunpack.c.h.b16 %v6155
    %v6415 = vunpack.c.l.b16 %v6156
    %v6416 = vunpack.c.l.b16 %v6157
    %v6417 = vunpack.c.h.b16 %v6157
    %v6418 = vunpack.c.l.b16 %v6158
    %v6419 = vpack.c.b16 %v6326, %v6323
    %v6420 = vpack.c.b16 %v6327, %v6324
    %v6421 = vpack.c.b16 %v6328, %v6325
    %v6422 = vpack.c.b16 %v6332, %v6329
    %v6423 = vpack.c.b16 %v6333, %v6330
    %v6424 = vpack.c.b16 %v6334, %v6331
    %v6425 = vpack.c.b16 %v6338, %v6335
    %v6426 = vpack.c.b16 %v6339, %v6336
    %v6427 = vpack.c.b16 %v6340, %v6337
    %v6428 = vpack.c.b16 %v6344, %v6341
    %v6429 = vpack.c.b16 %v6345, %v6342
    %v6430 = vpack.c.b16 %v6346, %v6343
    %v6431 = vpack.c.b16 %v6350, %v6347
    %v6432 = vpack.c.b16 %v6351, %v6348
    %v6433 = vpack.c.b16 %v6352, %v6349
    %v6434 = vpack.c.b16 %v6356, %v6353
    %v6435 = vpack.c.b16 %v6357, %v6354
    %v6436 = vpack.c.b16 %v6358, %v6355
    %v6437 = vpack.c.b16 %v6362, %v6359
    %v6438 = vpack.c.b16 %v6363, %v6360
    %v6439 = vpack.c.b16 %v6364, %v6361
    %v6440 = vpack.c.b16 %v6368, %v6365
    %v6441 = vpack.c.b16 %v6369, %v6366
    %v6442 = vpack.c.b16 %v6370, %v6367
    %v6443 = vpack.c.b16 %v6374, %v6371
    %v6444 = vpack.c.b16 %v6375, %v6372
    %v6445 = vpack.c.b16 %v6376, %v6373
    %v6446 = vpack.c.b16 %v6380, %v6377
    %v6447 = vpack.c.b16 %v6381, %v6378
    %v6448 = vpack.c.b16 %v6382, %v6379
    %v6449 = vpack.c.b16 %v6386, %v6383
    %v6450 = vpack.c.b16 %v6387, %v6384
    %v6451 = vpack.c.b16 %v6388, %v6385
    %v6452 = vpack.c.b16 %v6392, %v6389
    %v6453 = vpack.c.b16 %v6393, %v6390
    %v6454 = vpack.c.b16 %v6394, %v6391
    %v6455 = vpack.c.b16 %v6398, %v6395
    %v6456 = vpack.c.b16 %v6399, %v6396
    %v6457 = vpack.c.b16 %v6400, %v6397
    %v6458 = vpack.c.b16 %v6404, %v6401
    %v6459 = vpack.c.b16 %v6405, %v6402
    %v6460 = vpack.c.b16 %v6406, %v6403
    %v6461 = vpack.c.b16 %v6410, %v6407
    %v6462 = vpack.c.b16 %v6411, %v6408
    %v6463 = vpack.c.b16 %v6412, %v6409
    %v6464 = vpack.c.b16 %v6416, %v6413
    %v6465 = vpack.c.b16 %v6417, %v6414
    %v6466 = vpack.c.b16 %v6418, %v6415
    %v6563 = vunpack.c.l.b16 %v6211
    %v6564 = vunpack.c.l.b16 %v6212
    %v6565 = vunpack.c.l.b16 %v6213
    %v6566 = vunpack.c.l.b16 %v6214
    %v6567 = vunpack.c.l.b16 %v6215
    %v6568 = vunpack.c.l.b16 %v6216
    %v6569 = vunpack.c.l.b16 %v6217
    %v6570 = vunpack.c.l.b16 %v6218
    %v6571 = vunpack.c.l.b16 %v6219
    %v6572 = vunpack.c.l.b16 %v6220
    %v6573 = vunpack.c.l.b16 %v6221
    %v6574 = vunpack.c.l.b16 %v6222
    %v6575 = vunpack.c.l.b16 %v6223
    %v6576 = vunpack.c.l.b16 %v6224
    %v6577 = vunpack.c.l.b16 %v6225
    %v6578 = vunpack.c.l.b16 %v6226
    %v6579 = vunpack.c.l.b16 %v6227
    %v6580 = vunpack.c.l.b16 %v6228
    %v6581 = vunpack.c.l.b16 %v6229
    %v6582 = vunpack.c.l.b16 %v6230
    %v6583 = vunpack.c.l.b16 %v6231
    %v6584 = vunpack.c.l.b16 %v6232
    %v6585 = vunpack.c.l.b16 %v6233
    %v6586 = vunpack.c.l.b16 %v6234
    %v6587 = vunpack.c.l.b16 %v6235
    %v6588 = vunpack.c.l.b16 %v6236
    %v6589 = vunpack.c.l.b16 %v6237
    %v6590 = vunpack.c.l.b16 %v6238
    %v6591 = vunpack.c.l.b16 %v6239
    %v6592 = vunpack.c.l.b16 %v6240
    %v6593 = vunpack.c.l.b16 %v6241
    %v6594 = vunpack.c.l.b16 %v6242
    %v6595 = vunpack.c.l.b16 %v6243
    %v6596 = vunpack.c.l.b16 %v6244
    %v6597 = vunpack.c.l.b16 %v6245
    %v6598 = vunpack.c.l.b16 %v6246
    %v6599 = vunpack.c.l.b16 %v6247
    %v6600 = vunpack.c.l.b16 %v6248
    %v6601 = vunpack.c.l.b16 %v6249
    %v6602 = vunpack.c.l.b16 %v6250
    %v6603 = vunpack.c.l.b16 %v6251
    %v6604 = vunpack.c.l.b16 %v6252
    %v6605 = vunpack.c.l.b16 %v6253
    %v6606 = vunpack.c.l.b16 %v6254
    %v6607 = vunpack.c.l.b16 %v6255
    %v6608 = vunpack.c.l.b16 %v6256
    %v6609 = vunpack.c.l.b16 %v6257
    %v6610 = vunpack.c.l.b16 %v6258
    %v6611 = vpack.c.b16 %v6564, %v6563
    %v6612 = vpack.c.b16 %v6566, %v6565
    %v6613 = vpack.c.b16 %v6568, %v6567
    %v6614 = vpack.c.b16 %v6570, %v6569
    %v6615 = vpack.c.b16 %v6572, %v6571
    %v6616 = vpack.c.b16 %v6574, %v6573
    %v6617 = vpack.c.b16 %v6576, %v6575
    %v6618 = vpack.c.b16 %v6578, %v6577
    %v6619 = vpack.c.b16 %v6580, %v6579
    %v6620 = vpack.c.b16 %v6582, %v6581
    %v6621 = vpack.c.b16 %v6584, %v6583
    %v6622 = vpack.c.b16 %v6586, %v6585
    %v6623 = vpack.c.b16 %v6588, %v6587
    %v6624 = vpack.c.b16 %v6590, %v6589
    %v6625 = vpack.c.b16 %v6592, %v6591
    %v6626 = vpack.c.b16 %v6594, %v6593
    %v6627 = vpack.c.b16 %v6596, %v6595
    %v6628 = vpack.c.b16 %v6598, %v6597
    %v6629 = vpack.c.b16 %v6600, %v6599
    %v6630 = vpack.c.b16 %v6602, %v6601
    %v6631 = vpack.c.b16 %v6604, %v6603
    %v6632 = vpack.c.b16 %v6606, %v6605
    %v6633 = vpack.c.b16 %v6608, %v6607
    %v6634 = vpack.c.b16 %v6610, %v6609
    %6659 = vmatpush.bf16.msra.mxu0 %v6618
    %6660 = vmatpush.bf16.msra.mxu0 %v6617
    %6661 = vmatpush.bf16.msra.mxu0 %v6616
    %6662 = vmatpush.bf16.msra.mxu0 %v6615
    %6663 = vmatpush.bf16.msra.mxu0 %v6614
    %6664 = vmatpush.bf16.msra.mxu0 %v6613
    %6665 = vmatpush.bf16.msra.mxu0 %v6612
    %6666 = vmatpush.bf16.msra.mxu0 %v6611
    %6667 = vmatmul.bf16.gmra.mxu0 %v6419
    %v6668 = vpop.f32.mrf.mxu0
    %v6669 = vadd.f32 0.0, %v6668
    %v6670 = vpop.f32.mrf.mxu0
    %v6671 = vadd.f32 0.0, %v6670
    %6672 = vmatmul.bf16.gmra.mxu0 %v6422
    %v6673 = vpop.f32.mrf.mxu0
    %v6674 = vadd.f32 0.0, %v6673
    %v6675 = vpop.f32.mrf.mxu0
    %v6676 = vadd.f32 0.0, %v6675
    %6677 = vmatmul.bf16.gmra.mxu0 %v6425
    %v6678 = vpop.f32.mrf.mxu0
    %v6679 = vadd.f32 0.0, %v6678
    %v6680 = vpop.f32.mrf.mxu0
    %v6681 = vadd.f32 0.0, %v6680
    %6682 = vmatmul.bf16.gmra.mxu0 %v6428
    %v6683 = vpop.f32.mrf.mxu0
    %v6684 = vadd.f32 0.0, %v6683
    %v6685 = vpop.f32.mrf.mxu0
    %v6686 = vadd.f32 0.0, %v6685
    %6687 = vmatmul.bf16.gmra.mxu0 %v6431
    %v6688 = vpop.f32.mrf.mxu0
    %v6689 = vadd.f32 0.0, %v6688
    %v6690 = vpop.f32.mrf.mxu0
    %v6691 = vadd.f32 0.0, %v6690
    %6692 = vmatmul.bf16.gmra.mxu0 %v6434
    %v6693 = vpop.f32.mrf.mxu0
    %v6694 = vadd.f32 0.0, %v6693
    %v6695 = vpop.f32.mrf.mxu0
    %v6696 = vadd.f32 0.0, %v6695
    %6697 = vmatmul.bf16.gmra.mxu0 %v6437
    %v6698 = vpop.f32.mrf.mxu0
    %v6699 = vadd.f32 0.0, %v6698
    %v6700 = vpop.f32.mrf.mxu0
    %v6701 = vadd.f32 0.0, %v6700
    %6702 = vmatmul.bf16.gmra.mxu0 %v6440
    %v6703 = vpop.f32.mrf.mxu0
    %v6704 = vadd.f32 0.0, %v6703
    %v6705 = vpop.f32.mrf.mxu0
    %v6706 = vadd.f32 0.0, %v6705
    %6707 = vmatmul.bf16.gmra.mxu0 %v6443
    %v6708 = vpop.f32.mrf.mxu0
    %v6709 = vadd.f32 0.0, %v6708
    %v6710 = vpop.f32.mrf.mxu0
    %v6711 = vadd.f32 0.0, %v6710
    %6712 = vmatmul.bf16.gmra.mxu0 %v6446
    %v6713 = vpop.f32.mrf.mxu0
    %v6714 = vadd.f32 0.0, %v6713
    %v6715 = vpop.f32.mrf.mxu0
    %v6716 = vadd.f32 0.0, %v6715
    %6717 = vmatmul.bf16.gmra.mxu0 %v6449
    %v6718 = vpop.f32.mrf.mxu0
    %v6719 = vadd.f32 0.0, %v6718
    %v6720 = vpop.f32.mrf.mxu0
    %v6721 = vadd.f32 0.0, %v6720
    %6722 = vmatmul.bf16.gmra.mxu0 %v6452
    %v6723 = vpop.f32.mrf.mxu0
    %v6724 = vadd.f32 0.0, %v6723
    %v6725 = vpop.f32.mrf.mxu0
    %v6726 = vadd.f32 0.0, %v6725
    %6727 = vmatmul.bf16.gmra.mxu0 %v6455
    %v6728 = vpop.f32.mrf.mxu0
    %v6729 = vadd.f32 0.0, %v6728
    %v6730 = vpop.f32.mrf.mxu0
    %v6731 = vadd.f32 0.0, %v6730
    %6732 = vmatmul.bf16.gmra.mxu0 %v6458
    %v6733 = vpop.f32.mrf.mxu0
    %v6734 = vadd.f32 0.0, %v6733
    %v6735 = vpop.f32.mrf.mxu0
    %v6736 = vadd.f32 0.0, %v6735
    %6737 = vmatmul.bf16.gmra.mxu0 %v6461
    %v6738 = vpop.f32.mrf.mxu0
    %v6739 = vadd.f32 0.0, %v6738
    %v6740 = vpop.f32.mrf.mxu0
    %v6741 = vadd.f32 0.0, %v6740
    %6742 = vmatmul.bf16.gmra.mxu0 %v6464
    %v6743 = vpop.f32.mrf.mxu0
    %v6744 = vadd.f32 0.0, %v6743
    %v6745 = vpop.f32.mrf.mxu0
    %v6746 = vadd.f32 0.0, %v6745
    %6747 = vdwg.mxu0
    %6748 = vmatpush.bf16.msra.mxu0 %v6626
    %6749 = vmatpush.bf16.msra.mxu0 %v6625
    %6750 = vmatpush.bf16.msra.mxu0 %v6624
    %6751 = vmatpush.bf16.msra.mxu0 %v6623
    %6752 = vmatpush.bf16.msra.mxu0 %v6622
    %6753 = vmatpush.bf16.msra.mxu0 %v6621
    %6754 = vmatpush.bf16.msra.mxu0 %v6620
    %6755 = vmatpush.bf16.msra.mxu0 %v6619
    %6756 = vmatmul.bf16.gmra.mxu0 %v6420
    %v6757 = vpop.f32.mrf.mxu0
    %v6758 = vadd.f32 %v6669, %v6757
    %v6759 = vpop.f32.mrf.mxu0
    %v6760 = vadd.f32 %v6671, %v6759
    %6761 = vmatmul.bf16.gmra.mxu0 %v6423
    %v6762 = vpop.f32.mrf.mxu0
    %v6763 = vadd.f32 %v6674, %v6762
    %v6764 = vpop.f32.mrf.mxu0
    %v6765 = vadd.f32 %v6676, %v6764
    %6766 = vmatmul.bf16.gmra.mxu0 %v6426
    %v6767 = vpop.f32.mrf.mxu0
    %v6768 = vadd.f32 %v6679, %v6767
    %v6769 = vpop.f32.mrf.mxu0
    %v6770 = vadd.f32 %v6681, %v6769
    %6771 = vmatmul.bf16.gmra.mxu0 %v6429
    %v6772 = vpop.f32.mrf.mxu0
    %v6773 = vadd.f32 %v6684, %v6772
    %v6774 = vpop.f32.mrf.mxu0
    %v6775 = vadd.f32 %v6686, %v6774
    %6776 = vmatmul.bf16.gmra.mxu0 %v6432
    %v6777 = vpop.f32.mrf.mxu0
    %v6778 = vadd.f32 %v6689, %v6777
    %v6779 = vpop.f32.mrf.mxu0
    %v6780 = vadd.f32 %v6691, %v6779
    %6781 = vmatmul.bf16.gmra.mxu0 %v6435
    %v6782 = vpop.f32.mrf.mxu0
    %v6783 = vadd.f32 %v6694, %v6782
    %v6784 = vpop.f32.mrf.mxu0
    %v6785 = vadd.f32 %v6696, %v6784
    %6786 = vmatmul.bf16.gmra.mxu0 %v6438
    %v6787 = vpop.f32.mrf.mxu0
    %v6788 = vadd.f32 %v6699, %v6787
    %v6789 = vpop.f32.mrf.mxu0
    %v6790 = vadd.f32 %v6701, %v6789
    %6791 = vmatmul.bf16.gmra.mxu0 %v6441
    %v6792 = vpop.f32.mrf.mxu0
    %v6793 = vadd.f32 %v6704, %v6792
    %v6794 = vpop.f32.mrf.mxu0
    %v6795 = vadd.f32 %v6706, %v6794
    %6796 = vmatmul.bf16.gmra.mxu0 %v6444
    %v6797 = vpop.f32.mrf.mxu0
    %v6798 = vadd.f32 %v6709, %v6797
    %v6799 = vpop.f32.mrf.mxu0
    %v6800 = vadd.f32 %v6711, %v6799
    %6801 = vmatmul.bf16.gmra.mxu0 %v6447
    %v6802 = vpop.f32.mrf.mxu0
    %v6803 = vadd.f32 %v6714, %v6802
    %v6804 = vpop.f32.mrf.mxu0
    %v6805 = vadd.f32 %v6716, %v6804
    %6806 = vmatmul.bf16.gmra.mxu0 %v6450
    %v6807 = vpop.f32.mrf.mxu0
    %v6808 = vadd.f32 %v6719, %v6807
    %v6809 = vpop.f32.mrf.mxu0
    %v6810 = vadd.f32 %v6721, %v6809
    %6811 = vmatmul.bf16.gmra.mxu0 %v6453
    %v6812 = vpop.f32.mrf.mxu0
    %v6813 = vadd.f32 %v6724, %v6812
    %v6814 = vpop.f32.mrf.mxu0
    %v6815 = vadd.f32 %v6726, %v6814
    %6816 = vmatmul.bf16.gmra.mxu0 %v6456
    %v6817 = vpop.f32.mrf.mxu0
    %v6818 = vadd.f32 %v6729, %v6817
    %v6819 = vpop.f32.mrf.mxu0
    %v6820 = vadd.f32 %v6731, %v6819
    %6821 = vmatmul.bf16.gmra.mxu0 %v6459
    %v6822 = vpop.f32.mrf.mxu0
    %v6823 = vadd.f32 %v6734, %v6822
    %v6824 = vpop.f32.mrf.mxu0
    %v6825 = vadd.f32 %v6736, %v6824
    %6826 = vmatmul.bf16.gmra.mxu0 %v6462
    %v6827 = vpop.f32.mrf.mxu0
    %v6828 = vadd.f32 %v6739, %v6827
    %v6829 = vpop.f32.mrf.mxu0
    %v6830 = vadd.f32 %v6741, %v6829
    %6831 = vmatmul.bf16.gmra.mxu0 %v6465
    %v6832 = vpop.f32.mrf.mxu0
    %v6833 = vadd.f32 %v6744, %v6832
    %v6834 = vpop.f32.mrf.mxu0
    %v6835 = vadd.f32 %v6746, %v6834
    %6836 = vdwg.mxu0
    %6837 = vmatpush.bf16.msra.mxu0 %v6634
    %6838 = vmatpush.bf16.msra.mxu0 %v6633
    %6839 = vmatpush.bf16.msra.mxu0 %v6632
    %6840 = vmatpush.bf16.msra.mxu0 %v6631
    %6841 = vmatpush.bf16.msra.mxu0 %v6630
    %6842 = vmatpush.bf16.msra.mxu0 %v6629
    %6843 = vmatpush.bf16.msra.mxu0 %v6628
    %6844 = vmatpush.bf16.msra.mxu0 %v6627
    %6845 = vmatmul.bf16.gmra.mxu0 %v6421
    %v6846 = vpop.f32.mrf.mxu0
    %v6847 = vadd.f32 %v6758, %v6846
    %v6848 = vpop.f32.mrf.mxu0
    %v6849 = vadd.f32 %v6760, %v6848
    %6850 = vmatmul.bf16.gmra.mxu0 %v6424
    %v6851 = vpop.f32.mrf.mxu0
    %v6852 = vadd.f32 %v6763, %v6851
    %v6853 = vpop.f32.mrf.mxu0
    %v6854 = vadd.f32 %v6765, %v6853
    %6855 = vmatmul.bf16.gmra.mxu0 %v6427
    %v6856 = vpop.f32.mrf.mxu0
    %v6857 = vadd.f32 %v6768, %v6856
    %v6858 = vpop.f32.mrf.mxu0
    %v6859 = vadd.f32 %v6770, %v6858
    %6860 = vmatmul.bf16.gmra.mxu0 %v6430
    %v6861 = vpop.f32.mrf.mxu0
    %v6862 = vadd.f32 %v6773, %v6861
    %v6863 = vpop.f32.mrf.mxu0
    %v6864 = vadd.f32 %v6775, %v6863
    %6865 = vmatmul.bf16.gmra.mxu0 %v6433
    %v6866 = vpop.f32.mrf.mxu0
    %v6867 = vadd.f32 %v6778, %v6866
    %v6868 = vpop.f32.mrf.mxu0
    %v6869 = vadd.f32 %v6780, %v6868
    %6870 = vmatmul.bf16.gmra.mxu0 %v6436
    %v6871 = vpop.f32.mrf.mxu0
    %v6872 = vadd.f32 %v6783, %v6871
    %v6873 = vpop.f32.mrf.mxu0
    %v6874 = vadd.f32 %v6785, %v6873
    %6875 = vmatmul.bf16.gmra.mxu0 %v6439
    %v6876 = vpop.f32.mrf.mxu0
    %v6877 = vadd.f32 %v6788, %v6876
    %v6878 = vpop.f32.mrf.mxu0
    %v6879 = vadd.f32 %v6790, %v6878
    %6880 = vmatmul.bf16.gmra.mxu0 %v6442
    %v6881 = vpop.f32.mrf.mxu0
    %v6882 = vadd.f32 %v6793, %v6881
    %v6883 = vpop.f32.mrf.mxu0
    %v6884 = vadd.f32 %v6795, %v6883
    %6885 = vmatmul.bf16.gmra.mxu0 %v6445
    %v6886 = vpop.f32.mrf.mxu0
    %v6887 = vadd.f32 %v6798, %v6886
    %v6888 = vpop.f32.mrf.mxu0
    %v6889 = vadd.f32 %v6800, %v6888
    %6890 = vmatmul.bf16.gmra.mxu0 %v6448
    %v6891 = vpop.f32.mrf.mxu0
    %v6892 = vadd.f32 %v6803, %v6891
    %v6893 = vpop.f32.mrf.mxu0
    %v6894 = vadd.f32 %v6805, %v6893
    %6895 = vmatmul.bf16.gmra.mxu0 %v6451
    %v6896 = vpop.f32.mrf.mxu0
    %v6897 = vadd.f32 %v6808, %v6896
    %v6898 = vpop.f32.mrf.mxu0
    %v6899 = vadd.f32 %v6810, %v6898
    %6900 = vmatmul.bf16.gmra.mxu0 %v6454
    %v6901 = vpop.f32.mrf.mxu0
    %v6902 = vadd.f32 %v6813, %v6901
    %v6903 = vpop.f32.mrf.mxu0
    %v6904 = vadd.f32 %v6815, %v6903
    %6905 = vmatmul.bf16.gmra.mxu0 %v6457
    %v6906 = vpop.f32.mrf.mxu0
    %v6907 = vadd.f32 %v6818, %v6906
    %v6908 = vpop.f32.mrf.mxu0
    %v6909 = vadd.f32 %v6820, %v6908
    %6910 = vmatmul.bf16.gmra.mxu0 %v6460
    %v6911 = vpop.f32.mrf.mxu0
    %v6912 = vadd.f32 %v6823, %v6911
    %v6913 = vpop.f32.mrf.mxu0
    %v6914 = vadd.f32 %v6825, %v6913
    %6915 = vmatmul.bf16.gmra.mxu0 %v6463
    %v6916 = vpop.f32.mrf.mxu0
    %v6917 = vadd.f32 %v6828, %v6916
    %v6918 = vpop.f32.mrf.mxu0
    %v6919 = vadd.f32 %v6830, %v6918
    %6920 = vmatmul.bf16.gmra.mxu0 %v6466
    %v6921 = vpop.f32.mrf.mxu0
    %v6922 = vadd.f32 %v6833, %v6921
    %v6923 = vpop.f32.mrf.mxu0
    %v6924 = vadd.f32 %v6835, %v6923
    %6925 = vdwg.mxu0
    %v6930 = vunpack.c.l.b16 %v6091
    %v6931 = vunpack.c.h.b16 %v6091
    %v6932 = vunpack.c.l.b16 %v6092
    %v6933 = vunpack.c.l.b16 %v6093
    %v6934 = vunpack.c.h.b16 %v6093
    %v6935 = vunpack.c.l.b16 %v6094
    %v6936 = vpack.c.b16 %v6933, %v6930
    %v6937 = vpack.c.b16 %v6934, %v6931
    %v6938 = vpack.c.b16 %v6935, %v6932
    %v6990 = vunpack.c.l.b16 %v6163
    %v6991 = vunpack.c.l.b16 %v6164
    %v6992 = vunpack.c.l.b16 %v6165
    %v6993 = vunpack.c.l.b16 %v6166
    %v6994 = vunpack.c.l.b16 %v6167
    %v6995 = vunpack.c.l.b16 %v6168
    %v6996 = vunpack.c.l.b16 %v6169
    %v6997 = vunpack.c.l.b16 %v6170
    %v6998 = vunpack.c.l.b16 %v6171
    %v6999 = vunpack.c.l.b16 %v6172
    %v7000 = vunpack.c.l.b16 %v6173
    %v7001 = vunpack.c.l.b16 %v6174
    %v7002 = vunpack.c.l.b16 %v6175
    %v7003 = vunpack.c.l.b16 %v6176
    %v7004 = vunpack.c.l.b16 %v6177
    %v7005 = vunpack.c.l.b16 %v6178
    %v7006 = vunpack.c.l.b16 %v6179
    %v7007 = vunpack.c.l.b16 %v6180
    %v7008 = vunpack.c.l.b16 %v6181
    %v7009 = vunpack.c.l.b16 %v6182
    %v7010 = vunpack.c.l.b16 %v6183
    %v7011 = vunpack.c.l.b16 %v6184
    %v7012 = vunpack.c.l.b16 %v6185
    %v7013 = vunpack.c.l.b16 %v6186
    %v7014 = vunpack.c.l.b16 %v6187
    %v7015 = vunpack.c.l.b16 %v6188
    %v7016 = vunpack.c.l.b16 %v6189
    %v7017 = vunpack.c.l.b16 %v6190
    %v7018 = vunpack.c.l.b16 %v6191
    %v7019 = vunpack.c.l.b16 %v6192
    %v7020 = vunpack.c.l.b16 %v6193
    %v7021 = vunpack.c.l.b16 %v6194
    %v7022 = vunpack.c.l.b16 %v6195
    %v7023 = vunpack.c.l.b16 %v6196
    %v7024 = vunpack.c.l.b16 %v6197
    %v7025 = vunpack.c.l.b16 %v6198
    %v7026 = vunpack.c.l.b16 %v6199
    %v7027 = vunpack.c.l.b16 %v6200
    %v7028 = vunpack.c.l.b16 %v6201
    %v7029 = vunpack.c.l.b16 %v6202
    %v7030 = vunpack.c.l.b16 %v6203
    %v7031 = vunpack.c.l.b16 %v6204
    %v7032 = vunpack.c.l.b16 %v6205
    %v7033 = vunpack.c.l.b16 %v6206
    %v7034 = vunpack.c.l.b16 %v6207
    %v7035 = vunpack.c.l.b16 %v6208
    %v7036 = vunpack.c.l.b16 %v6209
    %v7037 = vunpack.c.l.b16 %v6210
    %v7038 = vpack.c.b16 %v6991, %v6990
    %v7039 = vpack.c.b16 %v6993, %v6992
    %v7040 = vpack.c.b16 %v6995, %v6994
    %v7041 = vpack.c.b16 %v6997, %v6996
    %v7042 = vpack.c.b16 %v6999, %v6998
    %v7043 = vpack.c.b16 %v7001, %v7000
    %v7044 = vpack.c.b16 %v7003, %v7002
    %v7045 = vpack.c.b16 %v7005, %v7004
    %v7046 = vpack.c.b16 %v7007, %v7006
    %v7047 = vpack.c.b16 %v7009, %v7008
    %v7048 = vpack.c.b16 %v7011, %v7010
    %v7049 = vpack.c.b16 %v7013, %v7012
    %v7050 = vpack.c.b16 %v7015, %v7014
    %v7051 = vpack.c.b16 %v7017, %v7016
    %v7052 = vpack.c.b16 %v7019, %v7018
    %v7053 = vpack.c.b16 %v7021, %v7020
    %v7054 = vpack.c.b16 %v7023, %v7022
    %v7055 = vpack.c.b16 %v7025, %v7024
    %v7056 = vpack.c.b16 %v7027, %v7026
    %v7057 = vpack.c.b16 %v7029, %v7028
    %v7058 = vpack.c.b16 %v7031, %v7030
    %v7059 = vpack.c.b16 %v7033, %v7032
    %v7060 = vpack.c.b16 %v7035, %v7034
    %v7061 = vpack.c.b16 %v7037, %v7036
    %7086 = vmatpush.bf16.msra.mxu0 %v7045
    %7087 = vmatpush.bf16.msra.mxu0 %v7044
    %7088 = vmatpush.bf16.msra.mxu0 %v7043
    %7089 = vmatpush.bf16.msra.mxu0 %v7042
    %7090 = vmatpush.bf16.msra.mxu0 %v7041
    %7091 = vmatpush.bf16.msra.mxu0 %v7040
    %7092 = vmatpush.bf16.msra.mxu0 %v7039
    %7093 = vmatpush.bf16.msra.mxu0 %v7038
    %7094 = vmatmul.bf16.gmra.mxu0 %v6936
    %v7095 = vpop.f32.mrf.mxu0
    %v7096 = vadd.f32 %v6847, %v7095
    %v7097 = vpop.f32.mrf.mxu0
    %v7098 = vadd.f32 %v6849, %v7097
    %7099 = vmatmul.bf16.gmra.mxu0 %v6419
    %v7100 = vpop.f32.mrf.mxu0
    %v7101 = vadd.f32 %v6852, %v7100
    %v7102 = vpop.f32.mrf.mxu0
    %v7103 = vadd.f32 %v6854, %v7102
    %7104 = vmatmul.bf16.gmra.mxu0 %v6422
    %v7105 = vpop.f32.mrf.mxu0
    %v7106 = vadd.f32 %v6857, %v7105
    %v7107 = vpop.f32.mrf.mxu0
    %v7108 = vadd.f32 %v6859, %v7107
    %7109 = vmatmul.bf16.gmra.mxu0 %v6425
    %v7110 = vpop.f32.mrf.mxu0
    %v7111 = vadd.f32 %v6862, %v7110
    %v7112 = vpop.f32.mrf.mxu0
    %v7113 = vadd.f32 %v6864, %v7112
    %7114 = vmatmul.bf16.gmra.mxu0 %v6428
    %v7115 = vpop.f32.mrf.mxu0
    %v7116 = vadd.f32 %v6867, %v7115
    %v7117 = vpop.f32.mrf.mxu0
    %v7118 = vadd.f32 %v6869, %v7117
    %7119 = vmatmul.bf16.gmra.mxu0 %v6431
    %v7120 = vpop.f32.mrf.mxu0
    %v7121 = vadd.f32 %v6872, %v7120
    %v7122 = vpop.f32.mrf.mxu0
    %v7123 = vadd.f32 %v6874, %v7122
    %7124 = vmatmul.bf16.gmra.mxu0 %v6434
    %v7125 = vpop.f32.mrf.mxu0
    %v7126 = vadd.f32 %v6877, %v7125
    %v7127 = vpop.f32.mrf.mxu0
    %v7128 = vadd.f32 %v6879, %v7127
    %7129 = vmatmul.bf16.gmra.mxu0 %v6437
    %v7130 = vpop.f32.mrf.mxu0
    %v7131 = vadd.f32 %v6882, %v7130
    %v7132 = vpop.f32.mrf.mxu0
    %v7133 = vadd.f32 %v6884, %v7132
    %7134 = vmatmul.bf16.gmra.mxu0 %v6440
    %v7135 = vpop.f32.mrf.mxu0
    %v7136 = vadd.f32 %v6887, %v7135
    %v7137 = vpop.f32.mrf.mxu0
    %v7138 = vadd.f32 %v6889, %v7137
    %7139 = vmatmul.bf16.gmra.mxu0 %v6443
    %v7140 = vpop.f32.mrf.mxu0
    %v7141 = vadd.f32 %v6892, %v7140
    %v7142 = vpop.f32.mrf.mxu0
    %v7143 = vadd.f32 %v6894, %v7142
    %7144 = vmatmul.bf16.gmra.mxu0 %v6446
    %v7145 = vpop.f32.mrf.mxu0
    %v7146 = vadd.f32 %v6897, %v7145
    %v7147 = vpop.f32.mrf.mxu0
    %v7148 = vadd.f32 %v6899, %v7147
    %7149 = vmatmul.bf16.gmra.mxu0 %v6449
    %v7150 = vpop.f32.mrf.mxu0
    %v7151 = vadd.f32 %v6902, %v7150
    %v7152 = vpop.f32.mrf.mxu0
    %v7153 = vadd.f32 %v6904, %v7152
    %7154 = vmatmul.bf16.gmra.mxu0 %v6452
    %v7155 = vpop.f32.mrf.mxu0
    %v7156 = vadd.f32 %v6907, %v7155
    %v7157 = vpop.f32.mrf.mxu0
    %v7158 = vadd.f32 %v6909, %v7157
    %7159 = vmatmul.bf16.gmra.mxu0 %v6455
    %v7160 = vpop.f32.mrf.mxu0
    %v7161 = vadd.f32 %v6912, %v7160
    %v7162 = vpop.f32.mrf.mxu0
    %v7163 = vadd.f32 %v6914, %v7162
    %7164 = vmatmul.bf16.gmra.mxu0 %v6458
    %v7165 = vpop.f32.mrf.mxu0
    %v7166 = vadd.f32 %v6917, %v7165
    %v7167 = vpop.f32.mrf.mxu0
    %v7168 = vadd.f32 %v6919, %v7167
    %7169 = vmatmul.bf16.gmra.mxu0 %v6461
    %v7170 = vpop.f32.mrf.mxu0
    %v7171 = vadd.f32 %v6922, %v7170
    %v7172 = vpop.f32.mrf.mxu0
    %v7173 = vadd.f32 %v6924, %v7172
    %7174 = vdwg.mxu0
    %7175 = vmatpush.bf16.msra.mxu0 %v7053
    %7176 = vmatpush.bf16.msra.mxu0 %v7052
    %7177 = vmatpush.bf16.msra.mxu0 %v7051
    %7178 = vmatpush.bf16.msra.mxu0 %v7050
    %7179 = vmatpush.bf16.msra.mxu0 %v7049
    %7180 = vmatpush.bf16.msra.mxu0 %v7048
    %7181 = vmatpush.bf16.msra.mxu0 %v7047
    %7182 = vmatpush.bf16.msra.mxu0 %v7046
    %7183 = vmatmul.bf16.gmra.mxu0 %v6937
    %v7184 = vpop.f32.mrf.mxu0
    %v7185 = vadd.f32 %v7096, %v7184
    %v7186 = vpop.f32.mrf.mxu0
    %v7187 = vadd.f32 %v7098, %v7186
    %7188 = vmatmul.bf16.gmra.mxu0 %v6420
    %v7189 = vpop.f32.mrf.mxu0
    %v7190 = vadd.f32 %v7101, %v7189
    %v7191 = vpop.f32.mrf.mxu0
    %v7192 = vadd.f32 %v7103, %v7191
    %7193 = vmatmul.bf16.gmra.mxu0 %v6423
    %v7194 = vpop.f32.mrf.mxu0
    %v7195 = vadd.f32 %v7106, %v7194
    %v7196 = vpop.f32.mrf.mxu0
    %v7197 = vadd.f32 %v7108, %v7196
    %7198 = vmatmul.bf16.gmra.mxu0 %v6426
    %v7199 = vpop.f32.mrf.mxu0
    %v7200 = vadd.f32 %v7111, %v7199
    %v7201 = vpop.f32.mrf.mxu0
    %v7202 = vadd.f32 %v7113, %v7201
    %7203 = vmatmul.bf16.gmra.mxu0 %v6429
    %v7204 = vpop.f32.mrf.mxu0
    %v7205 = vadd.f32 %v7116, %v7204
    %v7206 = vpop.f32.mrf.mxu0
    %v7207 = vadd.f32 %v7118, %v7206
    %7208 = vmatmul.bf16.gmra.mxu0 %v6432
    %v7209 = vpop.f32.mrf.mxu0
    %v7210 = vadd.f32 %v7121, %v7209
    %v7211 = vpop.f32.mrf.mxu0
    %v7212 = vadd.f32 %v7123, %v7211
    %7213 = vmatmul.bf16.gmra.mxu0 %v6435
    %v7214 = vpop.f32.mrf.mxu0
    %v7215 = vadd.f32 %v7126, %v7214
    %v7216 = vpop.f32.mrf.mxu0
    %v7217 = vadd.f32 %v7128, %v7216
    %7218 = vmatmul.bf16.gmra.mxu0 %v6438
    %v7219 = vpop.f32.mrf.mxu0
    %v7220 = vadd.f32 %v7131, %v7219
    %v7221 = vpop.f32.mrf.mxu0
    %v7222 = vadd.f32 %v7133, %v7221
    %7223 = vmatmul.bf16.gmra.mxu0 %v6441
    %v7224 = vpop.f32.mrf.mxu0
    %v7225 = vadd.f32 %v7136, %v7224
    %v7226 = vpop.f32.mrf.mxu0
    %v7227 = vadd.f32 %v7138, %v7226
    %7228 = vmatmul.bf16.gmra.mxu0 %v6444
    %v7229 = vpop.f32.mrf.mxu0
    %v7230 = vadd.f32 %v7141, %v7229
    %v7231 = vpop.f32.mrf.mxu0
    %v7232 = vadd.f32 %v7143, %v7231
    %7233 = vmatmul.bf16.gmra.mxu0 %v6447
    %v7234 = vpop.f32.mrf.mxu0
    %v7235 = vadd.f32 %v7146, %v7234
    %v7236 = vpop.f32.mrf.mxu0
    %v7237 = vadd.f32 %v7148, %v7236
    %7238 = vmatmul.bf16.gmra.mxu0 %v6450
    %v7239 = vpop.f32.mrf.mxu0
    %v7240 = vadd.f32 %v7151, %v7239
    %v7241 = vpop.f32.mrf.mxu0
    %v7242 = vadd.f32 %v7153, %v7241
    %7243 = vmatmul.bf16.gmra.mxu0 %v6453
    %v7244 = vpop.f32.mrf.mxu0
    %v7245 = vadd.f32 %v7156, %v7244
    %v7246 = vpop.f32.mrf.mxu0
    %v7247 = vadd.f32 %v7158, %v7246
    %7248 = vmatmul.bf16.gmra.mxu0 %v6456
    %v7249 = vpop.f32.mrf.mxu0
    %v7250 = vadd.f32 %v7161, %v7249
    %v7251 = vpop.f32.mrf.mxu0
    %v7252 = vadd.f32 %v7163, %v7251
    %7253 = vmatmul.bf16.gmra.mxu0 %v6459
    %v7254 = vpop.f32.mrf.mxu0
    %v7255 = vadd.f32 %v7166, %v7254
    %v7256 = vpop.f32.mrf.mxu0
    %v7257 = vadd.f32 %v7168, %v7256
    %7258 = vmatmul.bf16.gmra.mxu0 %v6462
    %v7259 = vpop.f32.mrf.mxu0
    %v7260 = vadd.f32 %v7171, %v7259
    %v7261 = vpop.f32.mrf.mxu0
    %v7262 = vadd.f32 %v7173, %v7261
    %7263 = vdwg.mxu0
    %7264 = vmatpush.bf16.msra.mxu0 %v7061
    %7265 = vmatpush.bf16.msra.mxu0 %v7060
    %7266 = vmatpush.bf16.msra.mxu0 %v7059
    %7267 = vmatpush.bf16.msra.mxu0 %v7058
    %7268 = vmatpush.bf16.msra.mxu0 %v7057
    %7269 = vmatpush.bf16.msra.mxu0 %v7056
    %7270 = vmatpush.bf16.msra.mxu0 %v7055
    %7271 = vmatpush.bf16.msra.mxu0 %v7054
    %7272 = vmatmul.bf16.gmra.mxu0 %v6938
    %v7273 = vpop.f32.mrf.mxu0
    %v7274 = vadd.f32 %v7185, %v7273
    %v7275 = vpop.f32.mrf.mxu0
    %v7276 = vadd.f32 %v7187, %v7275
    %7277 = vmatmul.bf16.gmra.mxu0 %v6421
    %v7278 = vpop.f32.mrf.mxu0
    %v7279 = vadd.f32 %v7190, %v7278
    %v7280 = vpop.f32.mrf.mxu0
    %v7281 = vadd.f32 %v7192, %v7280
    %7282 = vmatmul.bf16.gmra.mxu0 %v6424
    %v7283 = vpop.f32.mrf.mxu0
    %v7284 = vadd.f32 %v7195, %v7283
    %v7285 = vpop.f32.mrf.mxu0
    %v7286 = vadd.f32 %v7197, %v7285
    %7287 = vmatmul.bf16.gmra.mxu0 %v6427
    %v7288 = vpop.f32.mrf.mxu0
    %v7289 = vadd.f32 %v7200, %v7288
    %v7290 = vpop.f32.mrf.mxu0
    %v7291 = vadd.f32 %v7202, %v7290
    %7292 = vmatmul.bf16.gmra.mxu0 %v6430
    %v7293 = vpop.f32.mrf.mxu0
    %v7294 = vadd.f32 %v7205, %v7293
    %v7295 = vpop.f32.mrf.mxu0
    %v7296 = vadd.f32 %v7207, %v7295
    %7297 = vmatmul.bf16.gmra.mxu0 %v6433
    %v7298 = vpop.f32.mrf.mxu0
    %v7299 = vadd.f32 %v7210, %v7298
    %v7300 = vpop.f32.mrf.mxu0
    %v7301 = vadd.f32 %v7212, %v7300
    %7302 = vmatmul.bf16.gmra.mxu0 %v6436
    %v7303 = vpop.f32.mrf.mxu0
    %v7304 = vadd.f32 %v7215, %v7303
    %v7305 = vpop.f32.mrf.mxu0
    %v7306 = vadd.f32 %v7217, %v7305
    %7307 = vmatmul.bf16.gmra.mxu0 %v6439
    %v7308 = vpop.f32.mrf.mxu0
    %v7309 = vadd.f32 %v7220, %v7308
    %v7310 = vpop.f32.mrf.mxu0
    %v7311 = vadd.f32 %v7222, %v7310
    %7312 = vmatmul.bf16.gmra.mxu0 %v6442
    %v7313 = vpop.f32.mrf.mxu0
    %v7314 = vadd.f32 %v7225, %v7313
    %v7315 = vpop.f32.mrf.mxu0
    %v7316 = vadd.f32 %v7227, %v7315
    %7317 = vmatmul.bf16.gmra.mxu0 %v6445
    %v7318 = vpop.f32.mrf.mxu0
    %v7319 = vadd.f32 %v7230, %v7318
    %v7320 = vpop.f32.mrf.mxu0
    %v7321 = vadd.f32 %v7232, %v7320
    %7322 = vmatmul.bf16.gmra.mxu0 %v6448
    %v7323 = vpop.f32.mrf.mxu0
    %v7324 = vadd.f32 %v7235, %v7323
    %v7325 = vpop.f32.mrf.mxu0
    %v7326 = vadd.f32 %v7237, %v7325
    %7327 = vmatmul.bf16.gmra.mxu0 %v6451
    %v7328 = vpop.f32.mrf.mxu0
    %v7329 = vadd.f32 %v7240, %v7328
    %v7330 = vpop.f32.mrf.mxu0
    %v7331 = vadd.f32 %v7242, %v7330
    %7332 = vmatmul.bf16.gmra.mxu0 %v6454
    %v7333 = vpop.f32.mrf.mxu0
    %v7334 = vadd.f32 %v7245, %v7333
    %v7335 = vpop.f32.mrf.mxu0
    %v7336 = vadd.f32 %v7247, %v7335
    %7337 = vmatmul.bf16.gmra.mxu0 %v6457
    %v7338 = vpop.f32.mrf.mxu0
    %v7339 = vadd.f32 %v7250, %v7338
    %v7340 = vpop.f32.mrf.mxu0
    %v7341 = vadd.f32 %v7252, %v7340
    %7342 = vmatmul.bf16.gmra.mxu0 %v6460
    %v7343 = vpop.f32.mrf.mxu0
    %v7344 = vadd.f32 %v7255, %v7343
    %v7345 = vpop.f32.mrf.mxu0
    %v7346 = vadd.f32 %v7257, %v7345
    %7347 = vmatmul.bf16.gmra.mxu0 %v6463
    %v7348 = vpop.f32.mrf.mxu0
    %v7349 = vadd.f32 %v7260, %v7348
    %v7350 = vpop.f32.mrf.mxu0
    %v7351 = vadd.f32 %v7262, %v7350
    %7352 = vdwg.mxu0
    %v7353 = vld [vmem:[%s1979] sm:$0xf]
    %v7354 = vld [vmem:[%s1979 + $0x4] sm:$0xf]
    %v7355 = vld [vmem:[%s1979 + $0x8] sm:$0xf]
    %v7356 = vld [vmem:[%s1979 + $0xc] sm:$0xf]
    %v7357 = vld [vmem:[%s1979 + $0x10] sm:$0xf]
    %v7358 = vld [vmem:[%s1979 + $0x14] sm:$0xf]
    %v7359 = vld [vmem:[%s1979 + $0x18] sm:$0xf]
    %v7360 = vld [vmem:[%s1979 + $0x1c] sm:$0xf]
    %v7361 = vld [vmem:[%s1979 + $0x20] sm:$0xf]
    %v7362 = vld [vmem:[%s1979 + $0x24] sm:$0xf]
    %v7363 = vld [vmem:[%s1979 + $0x28] sm:$0xf]
    %v7364 = vld [vmem:[%s1979 + $0x2c] sm:$0xf]
    %v7365 = vld [vmem:[%s1979 + $0x30] sm:$0xf]
    %v7366 = vld [vmem:[%s1979 + $0x34] sm:$0xf]
    %v7367 = vld [vmem:[%s1979 + $0x38] sm:$0xf]
    %v7368 = vld [vmem:[%s1979 + $0x3c] sm:$0xf]
    %v7369 = vld [vmem:[%s1979 + $0x40] sm:$0xf]
    %v7370 = vld [vmem:[%s1979 + $0x44] sm:$0xf]
    %v7371 = vld [vmem:[%s1979 + $0x48] sm:$0xf]
    %v7372 = vld [vmem:[%s1979 + $0x4c] sm:$0xf]
    %v7373 = vld [vmem:[%s1979 + $0x50] sm:$0xf]
    %v7374 = vld [vmem:[%s1979 + $0x54] sm:$0xf]
    %v7375 = vld [vmem:[%s1979 + $0x58] sm:$0xf]
    %v7376 = vld [vmem:[%s1979 + $0x5c] sm:$0xf]
    %v7377 = vld [vmem:[%s1979 + $0x60] sm:$0xf]
    %v7378 = vld [vmem:[%s1979 + $0x64] sm:$0xf]
    %v7379 = vld [vmem:[%s1979 + $0x68] sm:$0xf]
    %v7380 = vld [vmem:[%s1979 + $0x6c] sm:$0xf]
    %v7381 = vld [vmem:[%s1979 + $0x70] sm:$0xf]
    %v7382 = vld [vmem:[%s1979 + $0x74] sm:$0xf]
    %v7383 = vld [vmem:[%s1979 + $0x78] sm:$0xf]
    %v7384 = vld [vmem:[%s1979 + $0x7c] sm:$0xf]
    %v7385 = vld [vmem:[%s1979 + $0x80] sm:$0xf]
    %v7386 = vld [vmem:[%s1979 + $0x84] sm:$0xf]
    %v7387 = vld [vmem:[%s1979 + $0x88] sm:$0xf]
    %v7388 = vld [vmem:[%s1979 + $0x8c] sm:$0xf]
    %v7389 = vld [vmem:[%s1979 + $0x90] sm:$0xf]
    %v7390 = vld [vmem:[%s1979 + $0x94] sm:$0xf]
    %v7391 = vld [vmem:[%s1979 + $0x98] sm:$0xf]
    %v7392 = vld [vmem:[%s1979 + $0x9c] sm:$0xf]
    %v7393 = vld [vmem:[%s1979 + $0xa0] sm:$0xf]
    %v7394 = vld [vmem:[%s1979 + $0xa4] sm:$0xf]
    %v7395 = vld [vmem:[%s1979 + $0xa8] sm:$0xf]
    %v7396 = vld [vmem:[%s1979 + $0xac] sm:$0xf]
    %v7397 = vld [vmem:[%s1979 + $0xb0] sm:$0xf]
    %v7398 = vld [vmem:[%s1979 + $0xb4] sm:$0xf]
    %v7399 = vld [vmem:[%s1979 + $0xb8] sm:$0xf]
    %v7400 = vld [vmem:[%s1979 + $0xbc] sm:$0xf]
    %v7405 = vunpack.c.l.b16 %v6159
    %v7406 = vunpack.c.h.b16 %v6159
    %v7407 = vunpack.c.l.b16 %v6160
    %v7408 = vunpack.c.l.b16 %v6161
    %v7409 = vunpack.c.h.b16 %v6161
    %v7410 = vunpack.c.l.b16 %v6162
    %v7411 = vpack.c.b16 %v7408, %v7405
    %v7412 = vpack.c.b16 %v7409, %v7406
    %v7413 = vpack.c.b16 %v7410, %v7407
    %v7465 = vunpack.c.l.b16 %v7353
    %v7466 = vunpack.c.l.b16 %v7354
    %v7467 = vunpack.c.l.b16 %v7355
    %v7468 = vunpack.c.l.b16 %v7356
    %v7469 = vunpack.c.l.b16 %v7357
    %v7470 = vunpack.c.l.b16 %v7358
    %v7471 = vunpack.c.l.b16 %v7359
    %v7472 = vunpack.c.l.b16 %v7360
    %v7473 = vunpack.c.l.b16 %v7361
    %v7474 = vunpack.c.l.b16 %v7362
    %v7475 = vunpack.c.l.b16 %v7363
    %v7476 = vunpack.c.l.b16 %v7364
    %v7477 = vunpack.c.l.b16 %v7365
    %v7478 = vunpack.c.l.b16 %v7366
    %v7479 = vunpack.c.l.b16 %v7367
    %v7480 = vunpack.c.l.b16 %v7368
    %v7481 = vunpack.c.l.b16 %v7369
    %v7482 = vunpack.c.l.b16 %v7370
    %v7483 = vunpack.c.l.b16 %v7371
    %v7484 = vunpack.c.l.b16 %v7372
    %v7485 = vunpack.c.l.b16 %v7373
    %v7486 = vunpack.c.l.b16 %v7374
    %v7487 = vunpack.c.l.b16 %v7375
    %v7488 = vunpack.c.l.b16 %v7376
    %v7489 = vunpack.c.l.b16 %v7377
    %v7490 = vunpack.c.l.b16 %v7378
    %v7491 = vunpack.c.l.b16 %v7379
    %v7492 = vunpack.c.l.b16 %v7380
    %v7493 = vunpack.c.l.b16 %v7381
    %v7494 = vunpack.c.l.b16 %v7382
    %v7495 = vunpack.c.l.b16 %v7383
    %v7496 = vunpack.c.l.b16 %v7384
    %v7497 = vunpack.c.l.b16 %v7385
    %v7498 = vunpack.c.l.b16 %v7386
    %v7499 = vunpack.c.l.b16 %v7387
    %v7500 = vunpack.c.l.b16 %v7388
    %v7501 = vunpack.c.l.b16 %v7389
    %v7502 = vunpack.c.l.b16 %v7390
    %v7503 = vunpack.c.l.b16 %v7391
    %v7504 = vunpack.c.l.b16 %v7392
    %v7505 = vunpack.c.l.b16 %v7393
    %v7506 = vunpack.c.l.b16 %v7394
    %v7507 = vunpack.c.l.b16 %v7395
    %v7508 = vunpack.c.l.b16 %v7396
    %v7509 = vunpack.c.l.b16 %v7397
    %v7510 = vunpack.c.l.b16 %v7398
    %v7511 = vunpack.c.l.b16 %v7399
    %v7512 = vunpack.c.l.b16 %v7400
    %v7513 = vpack.c.b16 %v7466, %v7465
    %v7514 = vpack.c.b16 %v7468, %v7467
    %v7515 = vpack.c.b16 %v7470, %v7469
    %v7516 = vpack.c.b16 %v7472, %v7471
    %v7517 = vpack.c.b16 %v7474, %v7473
    %v7518 = vpack.c.b16 %v7476, %v7475
    %v7519 = vpack.c.b16 %v7478, %v7477
    %v7520 = vpack.c.b16 %v7480, %v7479
    %v7521 = vpack.c.b16 %v7482, %v7481
    %v7522 = vpack.c.b16 %v7484, %v7483
    %v7523 = vpack.c.b16 %v7486, %v7485
    %v7524 = vpack.c.b16 %v7488, %v7487
    %v7525 = vpack.c.b16 %v7490, %v7489
    %v7526 = vpack.c.b16 %v7492, %v7491
    %v7527 = vpack.c.b16 %v7494, %v7493
    %v7528 = vpack.c.b16 %v7496, %v7495
    %v7529 = vpack.c.b16 %v7498, %v7497
    %v7530 = vpack.c.b16 %v7500, %v7499
    %v7531 = vpack.c.b16 %v7502, %v7501
    %v7532 = vpack.c.b16 %v7504, %v7503
    %v7533 = vpack.c.b16 %v7506, %v7505
    %v7534 = vpack.c.b16 %v7508, %v7507
    %v7535 = vpack.c.b16 %v7510, %v7509
    %v7536 = vpack.c.b16 %v7512, %v7511
    %7561 = vmatpush.bf16.msra.mxu0 %v7520
    %7562 = vmatpush.bf16.msra.mxu0 %v7519
    %7563 = vmatpush.bf16.msra.mxu0 %v7518
    %7564 = vmatpush.bf16.msra.mxu0 %v7517
    %7565 = vmatpush.bf16.msra.mxu0 %v7516
    %7566 = vmatpush.bf16.msra.mxu0 %v7515
    %7567 = vmatpush.bf16.msra.mxu0 %v7514
    %7568 = vmatpush.bf16.msra.mxu0 %v7513
    %7569 = vmatmul.bf16.gmra.mxu0 %v6422
    %v7570 = vpop.f32.mrf.mxu0
    %v7571 = vadd.f32 0.0, %v7570
    %v7572 = vpop.f32.mrf.mxu0
    %v7573 = vadd.f32 0.0, %v7572
    %7574 = vmatmul.bf16.gmra.mxu0 %v6425
    %v7575 = vpop.f32.mrf.mxu0
    %v7576 = vadd.f32 0.0, %v7575
    %v7577 = vpop.f32.mrf.mxu0
    %v7578 = vadd.f32 0.0, %v7577
    %7579 = vmatmul.bf16.gmra.mxu0 %v6428
    %v7580 = vpop.f32.mrf.mxu0
    %v7581 = vadd.f32 0.0, %v7580
    %v7582 = vpop.f32.mrf.mxu0
    %v7583 = vadd.f32 0.0, %v7582
    %7584 = vmatmul.bf16.gmra.mxu0 %v6431
    %v7585 = vpop.f32.mrf.mxu0
    %v7586 = vadd.f32 0.0, %v7585
    %v7587 = vpop.f32.mrf.mxu0
    %v7588 = vadd.f32 0.0, %v7587
    %7589 = vmatmul.bf16.gmra.mxu0 %v6434
    %v7590 = vpop.f32.mrf.mxu0
    %v7591 = vadd.f32 0.0, %v7590
    %v7592 = vpop.f32.mrf.mxu0
    %v7593 = vadd.f32 0.0, %v7592
    %7594 = vmatmul.bf16.gmra.mxu0 %v6437
    %v7595 = vpop.f32.mrf.mxu0
    %v7596 = vadd.f32 0.0, %v7595
    %v7597 = vpop.f32.mrf.mxu0
    %v7598 = vadd.f32 0.0, %v7597
    %7599 = vmatmul.bf16.gmra.mxu0 %v6440
    %v7600 = vpop.f32.mrf.mxu0
    %v7601 = vadd.f32 0.0, %v7600
    %v7602 = vpop.f32.mrf.mxu0
    %v7603 = vadd.f32 0.0, %v7602
    %7604 = vmatmul.bf16.gmra.mxu0 %v6443
    %v7605 = vpop.f32.mrf.mxu0
    %v7606 = vadd.f32 0.0, %v7605
    %v7607 = vpop.f32.mrf.mxu0
    %v7608 = vadd.f32 0.0, %v7607
    %7609 = vmatmul.bf16.gmra.mxu0 %v6446
    %v7610 = vpop.f32.mrf.mxu0
    %v7611 = vadd.f32 0.0, %v7610
    %v7612 = vpop.f32.mrf.mxu0
    %v7613 = vadd.f32 0.0, %v7612
    %7614 = vmatmul.bf16.gmra.mxu0 %v6449
    %v7615 = vpop.f32.mrf.mxu0
    %v7616 = vadd.f32 0.0, %v7615
    %v7617 = vpop.f32.mrf.mxu0
    %v7618 = vadd.f32 0.0, %v7617
    %7619 = vmatmul.bf16.gmra.mxu0 %v6452
    %v7620 = vpop.f32.mrf.mxu0
    %v7621 = vadd.f32 0.0, %v7620
    %v7622 = vpop.f32.mrf.mxu0
    %v7623 = vadd.f32 0.0, %v7622
    %7624 = vmatmul.bf16.gmra.mxu0 %v6455
    %v7625 = vpop.f32.mrf.mxu0
    %v7626 = vadd.f32 0.0, %v7625
    %v7627 = vpop.f32.mrf.mxu0
    %v7628 = vadd.f32 0.0, %v7627
    %7629 = vmatmul.bf16.gmra.mxu0 %v6458
    %v7630 = vpop.f32.mrf.mxu0
    %v7631 = vadd.f32 0.0, %v7630
    %v7632 = vpop.f32.mrf.mxu0
    %v7633 = vadd.f32 0.0, %v7632
    %7634 = vmatmul.bf16.gmra.mxu0 %v6461
    %v7635 = vpop.f32.mrf.mxu0
    %v7636 = vadd.f32 0.0, %v7635
    %v7637 = vpop.f32.mrf.mxu0
    %v7638 = vadd.f32 0.0, %v7637
    %7639 = vmatmul.bf16.gmra.mxu0 %v6464
    %v7640 = vpop.f32.mrf.mxu0
    %v7641 = vadd.f32 0.0, %v7640
    %v7642 = vpop.f32.mrf.mxu0
    %v7643 = vadd.f32 0.0, %v7642
    %7644 = vmatmul.bf16.gmra.mxu0 %v7411
    %v7645 = vpop.f32.mrf.mxu0
    %v7646 = vadd.f32 0.0, %v7645
    %v7647 = vpop.f32.mrf.mxu0
    %v7648 = vadd.f32 0.0, %v7647
    %7649 = vdwg.mxu0
    %7650 = vmatpush.bf16.msra.mxu0 %v7528
    %7651 = vmatpush.bf16.msra.mxu0 %v7527
    %7652 = vmatpush.bf16.msra.mxu0 %v7526
    %7653 = vmatpush.bf16.msra.mxu0 %v7525
    %7654 = vmatpush.bf16.msra.mxu0 %v7524
    %7655 = vmatpush.bf16.msra.mxu0 %v7523
    %7656 = vmatpush.bf16.msra.mxu0 %v7522
    %7657 = vmatpush.bf16.msra.mxu0 %v7521
    %7658 = vmatmul.bf16.gmra.mxu0 %v6423
    %v7659 = vpop.f32.mrf.mxu0
    %v7660 = vadd.f32 %v7571, %v7659
    %v7661 = vpop.f32.mrf.mxu0
    %v7662 = vadd.f32 %v7573, %v7661
    %7663 = vmatmul.bf16.gmra.mxu0 %v6426
    %v7664 = vpop.f32.mrf.mxu0
    %v7665 = vadd.f32 %v7576, %v7664
    %v7666 = vpop.f32.mrf.mxu0
    %v7667 = vadd.f32 %v7578, %v7666
    %7668 = vmatmul.bf16.gmra.mxu0 %v6429
    %v7669 = vpop.f32.mrf.mxu0
    %v7670 = vadd.f32 %v7581, %v7669
    %v7671 = vpop.f32.mrf.mxu0
    %v7672 = vadd.f32 %v7583, %v7671
    %7673 = vmatmul.bf16.gmra.mxu0 %v6432
    %v7674 = vpop.f32.mrf.mxu0
    %v7675 = vadd.f32 %v7586, %v7674
    %v7676 = vpop.f32.mrf.mxu0
    %v7677 = vadd.f32 %v7588, %v7676
    %7678 = vmatmul.bf16.gmra.mxu0 %v6435
    %v7679 = vpop.f32.mrf.mxu0
    %v7680 = vadd.f32 %v7591, %v7679
    %v7681 = vpop.f32.mrf.mxu0
    %v7682 = vadd.f32 %v7593, %v7681
    %7683 = vmatmul.bf16.gmra.mxu0 %v6438
    %v7684 = vpop.f32.mrf.mxu0
    %v7685 = vadd.f32 %v7596, %v7684
    %v7686 = vpop.f32.mrf.mxu0
    %v7687 = vadd.f32 %v7598, %v7686
    %7688 = vmatmul.bf16.gmra.mxu0 %v6441
    %v7689 = vpop.f32.mrf.mxu0
    %v7690 = vadd.f32 %v7601, %v7689
    %v7691 = vpop.f32.mrf.mxu0
    %v7692 = vadd.f32 %v7603, %v7691
    %7693 = vmatmul.bf16.gmra.mxu0 %v6444
    %v7694 = vpop.f32.mrf.mxu0
    %v7695 = vadd.f32 %v7606, %v7694
    %v7696 = vpop.f32.mrf.mxu0
    %v7697 = vadd.f32 %v7608, %v7696
    %7698 = vmatmul.bf16.gmra.mxu0 %v6447
    %v7699 = vpop.f32.mrf.mxu0
    %v7700 = vadd.f32 %v7611, %v7699
    %v7701 = vpop.f32.mrf.mxu0
    %v7702 = vadd.f32 %v7613, %v7701
    %7703 = vmatmul.bf16.gmra.mxu0 %v6450
    %v7704 = vpop.f32.mrf.mxu0
    %v7705 = vadd.f32 %v7616, %v7704
    %v7706 = vpop.f32.mrf.mxu0
    %v7707 = vadd.f32 %v7618, %v7706
    %7708 = vmatmul.bf16.gmra.mxu0 %v6453
    %v7709 = vpop.f32.mrf.mxu0
    %v7710 = vadd.f32 %v7621, %v7709
    %v7711 = vpop.f32.mrf.mxu0
    %v7712 = vadd.f32 %v7623, %v7711
    %7713 = vmatmul.bf16.gmra.mxu0 %v6456
    %v7714 = vpop.f32.mrf.mxu0
    %v7715 = vadd.f32 %v7626, %v7714
    %v7716 = vpop.f32.mrf.mxu0
    %v7717 = vadd.f32 %v7628, %v7716
    %7718 = vmatmul.bf16.gmra.mxu0 %v6459
    %v7719 = vpop.f32.mrf.mxu0
    %v7720 = vadd.f32 %v7631, %v7719
    %v7721 = vpop.f32.mrf.mxu0
    %v7722 = vadd.f32 %v7633, %v7721
    %7723 = vmatmul.bf16.gmra.mxu0 %v6462
    %v7724 = vpop.f32.mrf.mxu0
    %v7725 = vadd.f32 %v7636, %v7724
    %v7726 = vpop.f32.mrf.mxu0
    %v7727 = vadd.f32 %v7638, %v7726
    %7728 = vmatmul.bf16.gmra.mxu0 %v6465
    %v7729 = vpop.f32.mrf.mxu0
    %v7730 = vadd.f32 %v7641, %v7729
    %v7731 = vpop.f32.mrf.mxu0
    %v7732 = vadd.f32 %v7643, %v7731
    %7733 = vmatmul.bf16.gmra.mxu0 %v7412
    %v7734 = vpop.f32.mrf.mxu0
    %v7735 = vadd.f32 %v7646, %v7734
    %v7736 = vpop.f32.mrf.mxu0
    %v7737 = vadd.f32 %v7648, %v7736
    %7738 = vdwg.mxu0
    %7739 = vmatpush.bf16.msra.mxu0 %v7536
    %7740 = vmatpush.bf16.msra.mxu0 %v7535
    %7741 = vmatpush.bf16.msra.mxu0 %v7534
    %7742 = vmatpush.bf16.msra.mxu0 %v7533
    %7743 = vmatpush.bf16.msra.mxu0 %v7532
    %7744 = vmatpush.bf16.msra.mxu0 %v7531
    %7745 = vmatpush.bf16.msra.mxu0 %v7530
    %7746 = vmatpush.bf16.msra.mxu0 %v7529
    %7747 = vmatmul.bf16.gmra.mxu0 %v6424
    %v7748 = vpop.f32.mrf.mxu0
    %v7749 = vadd.f32 %v7660, %v7748
    %v7750 = vpop.f32.mrf.mxu0
    %v7751 = vadd.f32 %v7662, %v7750
    %7752 = vmatmul.bf16.gmra.mxu0 %v6427
    %v7753 = vpop.f32.mrf.mxu0
    %v7754 = vadd.f32 %v7665, %v7753
    %v7755 = vpop.f32.mrf.mxu0
    %v7756 = vadd.f32 %v7667, %v7755
    %7757 = vmatmul.bf16.gmra.mxu0 %v6430
    %v7758 = vpop.f32.mrf.mxu0
    %v7759 = vadd.f32 %v7670, %v7758
    %v7760 = vpop.f32.mrf.mxu0
    %v7761 = vadd.f32 %v7672, %v7760
    %7762 = vmatmul.bf16.gmra.mxu0 %v6433
    %v7763 = vpop.f32.mrf.mxu0
    %v7764 = vadd.f32 %v7675, %v7763
    %v7765 = vpop.f32.mrf.mxu0
    %v7766 = vadd.f32 %v7677, %v7765
    %7767 = vmatmul.bf16.gmra.mxu0 %v6436
    %v7768 = vpop.f32.mrf.mxu0
    %v7769 = vadd.f32 %v7680, %v7768
    %v7770 = vpop.f32.mrf.mxu0
    %v7771 = vadd.f32 %v7682, %v7770
    %7772 = vmatmul.bf16.gmra.mxu0 %v6439
    %v7773 = vpop.f32.mrf.mxu0
    %v7774 = vadd.f32 %v7685, %v7773
    %v7775 = vpop.f32.mrf.mxu0
    %v7776 = vadd.f32 %v7687, %v7775
    %7777 = vmatmul.bf16.gmra.mxu0 %v6442
    %v7778 = vpop.f32.mrf.mxu0
    %v7779 = vadd.f32 %v7690, %v7778
    %v7780 = vpop.f32.mrf.mxu0
    %v7781 = vadd.f32 %v7692, %v7780
    %7782 = vmatmul.bf16.gmra.mxu0 %v6445
    %v7783 = vpop.f32.mrf.mxu0
    %v7784 = vadd.f32 %v7695, %v7783
    %v7785 = vpop.f32.mrf.mxu0
    %v7786 = vadd.f32 %v7697, %v7785
    %7787 = vmatmul.bf16.gmra.mxu0 %v6448
    %v7788 = vpop.f32.mrf.mxu0
    %v7789 = vadd.f32 %v7700, %v7788
    %v7790 = vpop.f32.mrf.mxu0
    %v7791 = vadd.f32 %v7702, %v7790
    %7792 = vmatmul.bf16.gmra.mxu0 %v6451
    %v7793 = vpop.f32.mrf.mxu0
    %v7794 = vadd.f32 %v7705, %v7793
    %v7795 = vpop.f32.mrf.mxu0
    %v7796 = vadd.f32 %v7707, %v7795
    %7797 = vmatmul.bf16.gmra.mxu0 %v6454
    %v7798 = vpop.f32.mrf.mxu0
    %v7799 = vadd.f32 %v7710, %v7798
    %v7800 = vpop.f32.mrf.mxu0
    %v7801 = vadd.f32 %v7712, %v7800
    %7802 = vmatmul.bf16.gmra.mxu0 %v6457
    %v7803 = vpop.f32.mrf.mxu0
    %v7804 = vadd.f32 %v7715, %v7803
    %v7805 = vpop.f32.mrf.mxu0
    %v7806 = vadd.f32 %v7717, %v7805
    %7807 = vmatmul.bf16.gmra.mxu0 %v6460
    %v7808 = vpop.f32.mrf.mxu0
    %v7809 = vadd.f32 %v7720, %v7808
    %v7810 = vpop.f32.mrf.mxu0
    %v7811 = vadd.f32 %v7722, %v7810
    %7812 = vmatmul.bf16.gmra.mxu0 %v6463
    %v7813 = vpop.f32.mrf.mxu0
    %v7814 = vadd.f32 %v7725, %v7813
    %v7815 = vpop.f32.mrf.mxu0
    %v7816 = vadd.f32 %v7727, %v7815
    %7817 = vmatmul.bf16.gmra.mxu0 %v6466
    %v7818 = vpop.f32.mrf.mxu0
    %v7819 = vadd.f32 %v7730, %v7818
    %v7820 = vpop.f32.mrf.mxu0
    %v7821 = vadd.f32 %v7732, %v7820
    %7822 = vmatmul.bf16.gmra.mxu0 %v7413
    %v7823 = vpop.f32.mrf.mxu0
    %v7824 = vadd.f32 %v7735, %v7823
    %v7825 = vpop.f32.mrf.mxu0
    %v7826 = vadd.f32 %v7737, %v7825
    %7827 = vdwg.mxu0
    %v7828 = vadd.f32 %v7274, %v7749
    %v7829 = vadd.f32 %v7276, %v7751
    %v7830 = vadd.f32 %v7279, %v7754
    %v7831 = vadd.f32 %v7281, %v7756
    %v7832 = vadd.f32 %v7284, %v7759
    %v7833 = vadd.f32 %v7286, %v7761
    %v7834 = vadd.f32 %v7289, %v7764
    %v7835 = vadd.f32 %v7291, %v7766
    %v7836 = vadd.f32 %v7294, %v7769
    %v7837 = vadd.f32 %v7296, %v7771
    %v7838 = vadd.f32 %v7299, %v7774
    %v7839 = vadd.f32 %v7301, %v7776
    %v7840 = vadd.f32 %v7304, %v7779
    %v7841 = vadd.f32 %v7306, %v7781
    %v7842 = vadd.f32 %v7309, %v7784
    %v7843 = vadd.f32 %v7311, %v7786
    %v7844 = vadd.f32 %v7314, %v7789
    %v7845 = vadd.f32 %v7316, %v7791
    %v7846 = vadd.f32 %v7319, %v7794
    %v7847 = vadd.f32 %v7321, %v7796
    %v7848 = vadd.f32 %v7324, %v7799
    %v7849 = vadd.f32 %v7326, %v7801
    %v7850 = vadd.f32 %v7329, %v7804
    %v7851 = vadd.f32 %v7331, %v7806
    %v7852 = vadd.f32 %v7334, %v7809
    %v7853 = vadd.f32 %v7336, %v7811
    %v7854 = vadd.f32 %v7339, %v7814
    %v7855 = vadd.f32 %v7341, %v7816
    %v7856 = vadd.f32 %v7344, %v7819
    %v7857 = vadd.f32 %v7346, %v7821
    %v7858 = vadd.f32 %v7349, %v7824
    %v7859 = vadd.f32 %v7351, %v7826
    %v7860 = vadd.f32 %v7828, %v7829
    %v7861 = vadd.f32 %v7860, %v7830
    %v7862 = vadd.f32 %v7861, %v7831
    %v7863 = vadd.f32 %v7862, %v7832
    %v7864 = vadd.f32 %v7863, %v7833
    %v7865 = vadd.f32 %v7864, %v7834
    %v7866 = vadd.f32 %v7865, %v7835
    %v7867 = vadd.f32 %v7866, %v7836
    %v7868 = vadd.f32 %v7867, %v7837
    %v7869 = vadd.f32 %v7868, %v7838
    %v7870 = vadd.f32 %v7869, %v7839
    %v7871 = vadd.f32 %v7870, %v7840
    %v7872 = vadd.f32 %v7871, %v7841
    %v7873 = vadd.f32 %v7872, %v7842
    %v7874 = vadd.f32 %v7873, %v7843
    %v7875 = vadd.f32 %v7874, %v7844
    %v7876 = vadd.f32 %v7875, %v7845
    %v7877 = vadd.f32 %v7876, %v7846
    %v7878 = vadd.f32 %v7877, %v7847
    %v7879 = vadd.f32 %v7878, %v7848
    %v7880 = vadd.f32 %v7879, %v7849
    %v7881 = vadd.f32 %v7880, %v7850
    %v7882 = vadd.f32 %v7881, %v7851
    %v7883 = vadd.f32 %v7882, %v7852
    %v7884 = vadd.f32 %v7883, %v7853
    %v7885 = vadd.f32 %v7884, %v7854
    %v7886 = vadd.f32 %v7885, %v7855
    %v7887 = vadd.f32 %v7886, %v7856
    %v7888 = vadd.f32 %v7887, %v7857
    %v7889 = vadd.f32 %v7888, %v7858
    %v7890 = vadd.f32 %v7889, %v7859
    %v7891 = vrot.slane %v7890, 4
    %v7892 = vadd.f32 %v7890, %v7891
    %v7893 = vrot.slane %v7892, 2
    %v7894 = vadd.f32 %v7892, %v7893
    %v7895 = vrot.slane %v7894, 1
    %v7896 = vadd.f32 %v7894, %v7895
    %v7897 = vmul.f32 %v7896, 0.00390625
    %v7898 = vmul.f32 %v7828, %v7828
    %v7899 = vmul.f32 %v7829, %v7829
    %v7900 = vmul.f32 %v7830, %v7830
    %v7901 = vmul.f32 %v7831, %v7831
    %v7902 = vmul.f32 %v7832, %v7832
    %v7903 = vmul.f32 %v7833, %v7833
    %v7904 = vmul.f32 %v7834, %v7834
    %v7905 = vmul.f32 %v7835, %v7835
    %v7906 = vmul.f32 %v7836, %v7836
    %v7907 = vmul.f32 %v7837, %v7837
    %v7908 = vmul.f32 %v7838, %v7838
    %v7909 = vmul.f32 %v7839, %v7839
    %v7910 = vmul.f32 %v7840, %v7840
    %v7911 = vmul.f32 %v7841, %v7841
    %v7912 = vmul.f32 %v7842, %v7842
    %v7913 = vmul.f32 %v7843, %v7843
    %v7914 = vmul.f32 %v7844, %v7844
    %v7915 = vmul.f32 %v7845, %v7845
    %v7916 = vmul.f32 %v7846, %v7846
    %v7917 = vmul.f32 %v7847, %v7847
    %v7918 = vmul.f32 %v7848, %v7848
    %v7919 = vmul.f32 %v7849, %v7849
    %v7920 = vmul.f32 %v7850, %v7850
    %v7921 = vmul.f32 %v7851, %v7851
    %v7922 = vmul.f32 %v7852, %v7852
    %v7923 = vmul.f32 %v7853, %v7853
    %v7924 = vmul.f32 %v7854, %v7854
    %v7925 = vmul.f32 %v7855, %v7855
    %v7926 = vmul.f32 %v7856, %v7856
    %v7927 = vmul.f32 %v7857, %v7857
    %v7928 = vmul.f32 %v7858, %v7858
    %v7929 = vmul.f32 %v7859, %v7859
    %v7930 = vadd.f32 %v7898, %v7899
    %v7931 = vadd.f32 %v7930, %v7900
    %v7932 = vadd.f32 %v7931, %v7901
    %v7933 = vadd.f32 %v7932, %v7902
    %v7934 = vadd.f32 %v7933, %v7903
    %v7935 = vadd.f32 %v7934, %v7904
    %v7936 = vadd.f32 %v7935, %v7905
    %v7937 = vadd.f32 %v7936, %v7906
    %v7938 = vadd.f32 %v7937, %v7907
    %v7939 = vadd.f32 %v7938, %v7908
    %v7940 = vadd.f32 %v7939, %v7909
    %v7941 = vadd.f32 %v7940, %v7910
    %v7942 = vadd.f32 %v7941, %v7911
    %v7943 = vadd.f32 %v7942, %v7912
    %v7944 = vadd.f32 %v7943, %v7913
    %v7945 = vadd.f32 %v7944, %v7914
    %v7946 = vadd.f32 %v7945, %v7915
    %v7947 = vadd.f32 %v7946, %v7916
    %v7948 = vadd.f32 %v7947, %v7917
    %v7949 = vadd.f32 %v7948, %v7918
    %v7950 = vadd.f32 %v7949, %v7919
    %v7951 = vadd.f32 %v7950, %v7920
    %v7952 = vadd.f32 %v7951, %v7921
    %v7953 = vadd.f32 %v7952, %v7922
    %v7954 = vadd.f32 %v7953, %v7923
    %v7955 = vadd.f32 %v7954, %v7924
    %v7956 = vadd.f32 %v7955, %v7925
    %v7957 = vadd.f32 %v7956, %v7926
    %v7958 = vadd.f32 %v7957, %v7927
    %v7959 = vadd.f32 %v7958, %v7928
    %v7960 = vadd.f32 %v7959, %v7929
    %v7961 = vrot.slane %v7960, 4
    %v7962 = vadd.f32 %v7960, %v7961
    %v7963 = vrot.slane %v7962, 2
    %v7964 = vadd.f32 %v7962, %v7963
    %v7965 = vrot.slane %v7964, 1
    %v7966 = vadd.f32 %v7964, %v7965
    %v7967 = vmul.f32 %v7966, 0.00390625
    %v7968 = vmul.f32 %v7897, %v7897
    %v7969 = vsub.f32 %v7967, %v7968
    %v7970 = vld [vmem:[%s2] sm:$0x1]
    %v7971 = vadd.f32 %v7969, 1e-05
    %v7972 = vrsqrt.pop %v7971
    %v7973 = vmul.f32 %v7972, %v7971
    %v7974 = vmul.f32 %v7973, %v7972
    %v7975 = vmul.f32 0.5, %v7974
    %v7976 = vsub.f32 1.5, %v7975
    %v7977 = vmul.f32 %v7972, %v7976
    %vm7978 = vweird.f32 %v7971
    %vm7979 = vweird.f32 %v7972
    %vm7980 = vmor %vm7978, %vm7979
    %v7981 = vsel %vm7980, %v7972, %v7977
    %v7982 = vmul.f32 %v7970, %v7981
    %v7983 = vld [vmem:[%s3] sm:$0x1]
    %v7984 = vmul.f32 %v7897, %v7982
    %v7985 = vsub.f32 %v7983, %v7984
    %v7987 = vperm.slane %v7982, 0
    %v7989 = vmul.f32 %v7828, %v7987
    %v7990 = vmul.f32 %v7829, %v7987
    %v7991 = vmul.f32 %v7830, %v7987
    %v7992 = vmul.f32 %v7831, %v7987
    %v7993 = vmul.f32 %v7832, %v7987
    %v7994 = vmul.f32 %v7833, %v7987
    %v7995 = vmul.f32 %v7834, %v7987
    %v7996 = vmul.f32 %v7835, %v7987
    %v7997 = vmul.f32 %v7836, %v7987
    %v7998 = vmul.f32 %v7837, %v7987
    %v7999 = vmul.f32 %v7838, %v7987
    %v8000 = vmul.f32 %v7839, %v7987
    %v8001 = vmul.f32 %v7840, %v7987
    %v8002 = vmul.f32 %v7841, %v7987
    %v8003 = vmul.f32 %v7842, %v7987
    %v8004 = vmul.f32 %v7843, %v7987
    %v8005 = vmul.f32 %v7844, %v7987
    %v8006 = vmul.f32 %v7845, %v7987
    %v8007 = vmul.f32 %v7846, %v7987
    %v8008 = vmul.f32 %v7847, %v7987
    %v8009 = vmul.f32 %v7848, %v7987
    %v8010 = vmul.f32 %v7849, %v7987
    %v8011 = vmul.f32 %v7850, %v7987
    %v8012 = vmul.f32 %v7851, %v7987
    %v8013 = vmul.f32 %v7852, %v7987
    %v8014 = vmul.f32 %v7853, %v7987
    %v8015 = vmul.f32 %v7854, %v7987
    %v8016 = vmul.f32 %v7855, %v7987
    %v8017 = vmul.f32 %v7856, %v7987
    %v8018 = vmul.f32 %v7857, %v7987
    %v8019 = vmul.f32 %v7858, %v7987
    %v8020 = vmul.f32 %v7859, %v7987
    %v8022 = vperm.slane %v7985, 0
    %v8024 = vadd.f32 %v7989, %v8022
    %v8025 = vadd.f32 %v7990, %v8022
    %v8026 = vadd.f32 %v7991, %v8022
    %v8027 = vadd.f32 %v7992, %v8022
    %v8028 = vadd.f32 %v7993, %v8022
    %v8029 = vadd.f32 %v7994, %v8022
    %v8030 = vadd.f32 %v7995, %v8022
    %v8031 = vadd.f32 %v7996, %v8022
    %v8032 = vadd.f32 %v7997, %v8022
    %v8033 = vadd.f32 %v7998, %v8022
    %v8034 = vadd.f32 %v7999, %v8022
    %v8035 = vadd.f32 %v8000, %v8022
    %v8036 = vadd.f32 %v8001, %v8022
    %v8037 = vadd.f32 %v8002, %v8022
    %v8038 = vadd.f32 %v8003, %v8022
    %v8039 = vadd.f32 %v8004, %v8022
    %v8040 = vadd.f32 %v8005, %v8022
    %v8041 = vadd.f32 %v8006, %v8022
    %v8042 = vadd.f32 %v8007, %v8022
    %v8043 = vadd.f32 %v8008, %v8022
    %v8044 = vadd.f32 %v8009, %v8022
    %v8045 = vadd.f32 %v8010, %v8022
    %v8046 = vadd.f32 %v8011, %v8022
    %v8047 = vadd.f32 %v8012, %v8022
    %v8048 = vadd.f32 %v8013, %v8022
    %v8049 = vadd.f32 %v8014, %v8022
    %v8050 = vadd.f32 %v8015, %v8022
    %v8051 = vadd.f32 %v8016, %v8022
    %v8052 = vadd.f32 %v8017, %v8022
    %v8053 = vadd.f32 %v8018, %v8022
    %v8054 = vadd.f32 %v8019, %v8022
    %v8055 = vadd.f32 %v8020, %v8022
    %v8056 = vmax.f32 %v8024, 0.0
    %v8057 = vmax.f32 %v8025, 0.0
    %v8058 = vmax.f32 %v8026, 0.0
    %v8059 = vmax.f32 %v8027, 0.0
    %v8060 = vmax.f32 %v8028, 0.0
    %v8061 = vmax.f32 %v8029, 0.0
    %v8062 = vmax.f32 %v8030, 0.0
    %v8063 = vmax.f32 %v8031, 0.0
    %v8064 = vmax.f32 %v8032, 0.0
    %v8065 = vmax.f32 %v8033, 0.0
    %v8066 = vmax.f32 %v8034, 0.0
    %v8067 = vmax.f32 %v8035, 0.0
    %v8068 = vmax.f32 %v8036, 0.0
    %v8069 = vmax.f32 %v8037, 0.0
    %v8070 = vmax.f32 %v8038, 0.0
    %v8071 = vmax.f32 %v8039, 0.0
    %v8072 = vmax.f32 %v8040, 0.0
    %v8073 = vmax.f32 %v8041, 0.0
    %v8074 = vmax.f32 %v8042, 0.0
    %v8075 = vmax.f32 %v8043, 0.0
    %v8076 = vmax.f32 %v8044, 0.0
    %v8077 = vmax.f32 %v8045, 0.0
    %v8078 = vmax.f32 %v8046, 0.0
    %v8079 = vmax.f32 %v8047, 0.0
    %v8080 = vmax.f32 %v8048, 0.0
    %v8081 = vmax.f32 %v8049, 0.0
    %v8082 = vmax.f32 %v8050, 0.0
    %v8083 = vmax.f32 %v8051, 0.0
    %v8084 = vmax.f32 %v8052, 0.0
    %v8085 = vmax.f32 %v8053, 0.0
    %v8086 = vmax.f32 %v8054, 0.0
    %v8087 = vmax.f32 %v8055, 0.0
    %v8088 = vpack.c.bf16 %v8056, %v8056
    %v8089 = vpack.c.bf16 %v8057, %v8057
    %v8090 = vpack.c.bf16 %v8058, %v8058
    %v8091 = vpack.c.bf16 %v8059, %v8059
    %v8092 = vpack.c.bf16 %v8060, %v8060
    %v8093 = vpack.c.bf16 %v8061, %v8061
    %v8094 = vpack.c.bf16 %v8062, %v8062
    %v8095 = vpack.c.bf16 %v8063, %v8063
    %v8096 = vpack.c.bf16 %v8064, %v8064
    %v8097 = vpack.c.bf16 %v8065, %v8065
    %v8098 = vpack.c.bf16 %v8066, %v8066
    %v8099 = vpack.c.bf16 %v8067, %v8067
    %v8100 = vpack.c.bf16 %v8068, %v8068
    %v8101 = vpack.c.bf16 %v8069, %v8069
    %v8102 = vpack.c.bf16 %v8070, %v8070
    %v8103 = vpack.c.bf16 %v8071, %v8071
    %v8104 = vpack.c.bf16 %v8072, %v8072
    %v8105 = vpack.c.bf16 %v8073, %v8073
    %v8106 = vpack.c.bf16 %v8074, %v8074
    %v8107 = vpack.c.bf16 %v8075, %v8075
    %v8108 = vpack.c.bf16 %v8076, %v8076
    %v8109 = vpack.c.bf16 %v8077, %v8077
    %v8110 = vpack.c.bf16 %v8078, %v8078
    %v8111 = vpack.c.bf16 %v8079, %v8079
    %v8112 = vpack.c.bf16 %v8080, %v8080
    %v8113 = vpack.c.bf16 %v8081, %v8081
    %v8114 = vpack.c.bf16 %v8082, %v8082
    %v8115 = vpack.c.bf16 %v8083, %v8083
    %v8116 = vpack.c.bf16 %v8084, %v8084
    %v8117 = vpack.c.bf16 %v8085, %v8085
    %v8118 = vpack.c.bf16 %v8086, %v8086
    %v8119 = vpack.c.bf16 %v8087, %v8087
    %v8152 = vunpack.c.l.b16 %v8088
    %v8153 = vunpack.c.l.b16 %v8089
    %v8154 = vunpack.c.l.b16 %v8090
    %v8155 = vunpack.c.l.b16 %v8091
    %v8156 = vunpack.c.l.b16 %v8092
    %v8157 = vunpack.c.l.b16 %v8093
    %v8158 = vunpack.c.l.b16 %v8094
    %v8159 = vunpack.c.l.b16 %v8095
    %v8160 = vunpack.c.l.b16 %v8096
    %v8161 = vunpack.c.l.b16 %v8097
    %v8162 = vunpack.c.l.b16 %v8098
    %v8163 = vunpack.c.l.b16 %v8099
    %v8164 = vunpack.c.l.b16 %v8100
    %v8165 = vunpack.c.l.b16 %v8101
    %v8166 = vunpack.c.l.b16 %v8102
    %v8167 = vunpack.c.l.b16 %v8103
    %v8168 = vunpack.c.l.b16 %v8104
    %v8169 = vunpack.c.l.b16 %v8105
    %v8170 = vunpack.c.l.b16 %v8106
    %v8171 = vunpack.c.l.b16 %v8107
    %v8172 = vunpack.c.l.b16 %v8108
    %v8173 = vunpack.c.l.b16 %v8109
    %v8174 = vunpack.c.l.b16 %v8110
    %v8175 = vunpack.c.l.b16 %v8111
    %v8176 = vunpack.c.l.b16 %v8112
    %v8177 = vunpack.c.l.b16 %v8113
    %v8178 = vunpack.c.l.b16 %v8114
    %v8179 = vunpack.c.l.b16 %v8115
    %v8180 = vunpack.c.l.b16 %v8116
    %v8181 = vunpack.c.l.b16 %v8117
    %v8182 = vunpack.c.l.b16 %v8118
    %v8183 = vunpack.c.l.b16 %v8119
    %v8184 = vpack.c.b16 %v8153, %v8152
    %v8185 = vpack.c.b16 %v8155, %v8154
    %v8186 = vpack.c.b16 %v8157, %v8156
    %v8187 = vpack.c.b16 %v8159, %v8158
    %v8188 = vpack.c.b16 %v8161, %v8160
    %v8189 = vpack.c.b16 %v8163, %v8162
    %v8190 = vpack.c.b16 %v8165, %v8164
    %v8191 = vpack.c.b16 %v8167, %v8166
    %v8192 = vpack.c.b16 %v8169, %v8168
    %v8193 = vpack.c.b16 %v8171, %v8170
    %v8194 = vpack.c.b16 %v8173, %v8172
    %v8195 = vpack.c.b16 %v8175, %v8174
    %v8196 = vpack.c.b16 %v8177, %v8176
    %v8197 = vpack.c.b16 %v8179, %v8178
    %v8198 = vpack.c.b16 %v8181, %v8180
    %v8199 = vpack.c.b16 %v8183, %v8182
    %v8201 = vshrl.u32 %v8184, 16
    %v8203 = vrot.slane %v8201, 7
    %v8204 = vshll.u32 %v8184, 16
    %v8206 = vor.u32 %v8203, %v8204
    %v8208 = vshrl.u32 %v8185, 16
    %v8210 = vrot.slane %v8208, 7
    %v8211 = vshll.u32 %v8185, 16
    %v8213 = vor.u32 %v8210, %v8211
    %v8215 = vshrl.u32 %v8186, 16
    %v8217 = vrot.slane %v8215, 7
    %v8218 = vshll.u32 %v8186, 16
    %v8220 = vor.u32 %v8217, %v8218
    %v8222 = vshrl.u32 %v8187, 16
    %v8224 = vrot.slane %v8222, 7
    %v8225 = vshll.u32 %v8187, 16
    %v8227 = vor.u32 %v8224, %v8225
    %v8229 = vshrl.u32 %v8188, 16
    %v8231 = vrot.slane %v8229, 7
    %v8232 = vshll.u32 %v8188, 16
    %v8234 = vor.u32 %v8231, %v8232
    %v8236 = vshrl.u32 %v8189, 16
    %v8238 = vrot.slane %v8236, 7
    %v8239 = vshll.u32 %v8189, 16
    %v8241 = vor.u32 %v8238, %v8239
    %v8243 = vshrl.u32 %v8190, 16
    %v8245 = vrot.slane %v8243, 7
    %v8246 = vshll.u32 %v8190, 16
    %v8248 = vor.u32 %v8245, %v8246
    %v8250 = vshrl.u32 %v8191, 16
    %v8252 = vrot.slane %v8250, 7
    %v8253 = vshll.u32 %v8191, 16
    %v8255 = vor.u32 %v8252, %v8253
    %v8257 = vshrl.u32 %v8192, 16
    %v8259 = vrot.slane %v8257, 7
    %v8260 = vshll.u32 %v8192, 16
    %v8262 = vor.u32 %v8259, %v8260
    %v8264 = vshrl.u32 %v8193, 16
    %v8266 = vrot.slane %v8264, 7
    %v8267 = vshll.u32 %v8193, 16
    %v8269 = vor.u32 %v8266, %v8267
    %v8271 = vshrl.u32 %v8194, 16
    %v8273 = vrot.slane %v8271, 7
    %v8274 = vshll.u32 %v8194, 16
    %v8276 = vor.u32 %v8273, %v8274
    %v8278 = vshrl.u32 %v8195, 16
    %v8280 = vrot.slane %v8278, 7
    %v8281 = vshll.u32 %v8195, 16
    %v8283 = vor.u32 %v8280, %v8281
    %v8285 = vshrl.u32 %v8196, 16
    %v8287 = vrot.slane %v8285, 7
    %v8288 = vshll.u32 %v8196, 16
    %v8290 = vor.u32 %v8287, %v8288
    %v8292 = vshrl.u32 %v8197, 16
    %v8294 = vrot.slane %v8292, 7
    %v8295 = vshll.u32 %v8197, 16
    %v8297 = vor.u32 %v8294, %v8295
    %v8299 = vshrl.u32 %v8198, 16
    %v8301 = vrot.slane %v8299, 7
    %v8302 = vshll.u32 %v8198, 16
    %v8304 = vor.u32 %v8301, %v8302
    %v8306 = vshrl.u32 %v8199, 16
    %v8308 = vrot.slane %v8306, 7
    %v8309 = vshll.u32 %v8199, 16
    %v8311 = vor.u32 %v8308, %v8309
    %v8328 = vsel %vm311, 0, %v8206
    %v8329 = vsel %vm311, 0, %v8213
    %v8330 = vsel %vm311, 0, %v8220
    %v8331 = vsel %vm311, 0, %v8227
    %v8332 = vsel %vm311, 0, %v8234
    %v8333 = vsel %vm311, 0, %v8241
    %v8334 = vsel %vm311, 0, %v8248
    %v8335 = vsel %vm311, 0, %v8255
    %v8336 = vsel %vm311, 0, %v8262
    %v8337 = vsel %vm311, 0, %v8269
    %v8338 = vsel %vm311, 0, %v8276
    %v8339 = vsel %vm311, 0, %v8283
    %v8340 = vsel %vm311, 0, %v8290
    %v8341 = vsel %vm311, 0, %v8297
    %v8342 = vsel %vm311, 0, %v8304
    %v8343 = vsel %vm311, 0, %v8311
    %v8344 = vrot.slane %v8204, 1
    %v8345 = vor.u32 %v8201, %v8344
    %v8346 = vrot.slane %v8211, 1
    %v8347 = vor.u32 %v8208, %v8346
    %v8348 = vrot.slane %v8218, 1
    %v8349 = vor.u32 %v8215, %v8348
    %v8350 = vrot.slane %v8225, 1
    %v8351 = vor.u32 %v8222, %v8350
    %v8352 = vrot.slane %v8232, 1
    %v8353 = vor.u32 %v8229, %v8352
    %v8354 = vrot.slane %v8239, 1
    %v8355 = vor.u32 %v8236, %v8354
    %v8356 = vrot.slane %v8246, 1
    %v8357 = vor.u32 %v8243, %v8356
    %v8358 = vrot.slane %v8253, 1
    %v8359 = vor.u32 %v8250, %v8358
    %v8360 = vrot.slane %v8260, 1
    %v8361 = vor.u32 %v8257, %v8360
    %v8362 = vrot.slane %v8267, 1
    %v8363 = vor.u32 %v8264, %v8362
    %v8364 = vrot.slane %v8274, 1
    %v8365 = vor.u32 %v8271, %v8364
    %v8366 = vrot.slane %v8281, 1
    %v8367 = vor.u32 %v8278, %v8366
    %v8368 = vrot.slane %v8288, 1
    %v8369 = vor.u32 %v8285, %v8368
    %v8370 = vrot.slane %v8295, 1
    %v8371 = vor.u32 %v8292, %v8370
    %v8372 = vrot.slane %v8302, 1
    %v8373 = vor.u32 %v8299, %v8372
    %v8374 = vrot.slane %v8309, 1
    %v8375 = vor.u32 %v8306, %v8374
    %v8392 = vsel %vm378, %v8345, 0
    %v8393 = vsel %vm378, %v8347, 0
    %v8394 = vsel %vm378, %v8349, 0
    %v8395 = vsel %vm378, %v8351, 0
    %v8396 = vsel %vm378, %v8353, 0
    %v8397 = vsel %vm378, %v8355, 0
    %v8398 = vsel %vm378, %v8357, 0
    %v8399 = vsel %vm378, %v8359, 0
    %v8400 = vsel %vm378, %v8361, 0
    %v8401 = vsel %vm378, %v8363, 0
    %v8402 = vsel %vm378, %v8365, 0
    %v8403 = vsel %vm378, %v8367, 0
    %v8404 = vsel %vm378, %v8369, 0
    %v8405 = vsel %vm378, %v8371, 0
    %v8406 = vsel %vm378, %v8373, 0
    %v8407 = vsel %vm378, %v8375, 0
    %v8424 = vunpack.c.l.b16 %v8328
    %v8425 = vunpack.c.h.b16 %v8328
    %v8426 = vunpack.c.l.b16 %v8329
    %v8427 = vunpack.c.h.b16 %v8329
    %v8428 = vunpack.c.l.b16 %v8330
    %v8429 = vunpack.c.h.b16 %v8330
    %v8430 = vunpack.c.l.b16 %v8331
    %v8431 = vunpack.c.h.b16 %v8331
    %v8432 = vunpack.c.l.b16 %v8332
    %v8433 = vunpack.c.h.b16 %v8332
    %v8434 = vunpack.c.l.b16 %v8333
    %v8435 = vunpack.c.h.b16 %v8333
    %v8436 = vunpack.c.l.b16 %v8334
    %v8437 = vunpack.c.h.b16 %v8334
    %v8438 = vunpack.c.l.b16 %v8335
    %v8439 = vunpack.c.h.b16 %v8335
    %v8440 = vunpack.c.l.b16 %v8336
    %v8441 = vunpack.c.h.b16 %v8336
    %v8442 = vunpack.c.l.b16 %v8337
    %v8443 = vunpack.c.h.b16 %v8337
    %v8444 = vunpack.c.l.b16 %v8338
    %v8445 = vunpack.c.h.b16 %v8338
    %v8446 = vunpack.c.l.b16 %v8339
    %v8447 = vunpack.c.h.b16 %v8339
    %v8448 = vunpack.c.l.b16 %v8340
    %v8449 = vunpack.c.h.b16 %v8340
    %v8450 = vunpack.c.l.b16 %v8341
    %v8451 = vunpack.c.h.b16 %v8341
    %v8452 = vunpack.c.l.b16 %v8342
    %v8453 = vunpack.c.h.b16 %v8342
    %v8454 = vunpack.c.l.b16 %v8343
    %v8455 = vunpack.c.h.b16 %v8343
    %v8456 = vpack.c.b16 %v8424, %v8424
    %v8457 = vpack.c.b16 %v8425, %v8425
    %v8458 = vpack.c.b16 %v8426, %v8426
    %v8459 = vpack.c.b16 %v8427, %v8427
    %v8460 = vpack.c.b16 %v8428, %v8428
    %v8461 = vpack.c.b16 %v8429, %v8429
    %v8462 = vpack.c.b16 %v8430, %v8430
    %v8463 = vpack.c.b16 %v8431, %v8431
    %v8464 = vpack.c.b16 %v8432, %v8432
    %v8465 = vpack.c.b16 %v8433, %v8433
    %v8466 = vpack.c.b16 %v8434, %v8434
    %v8467 = vpack.c.b16 %v8435, %v8435
    %v8468 = vpack.c.b16 %v8436, %v8436
    %v8469 = vpack.c.b16 %v8437, %v8437
    %v8470 = vpack.c.b16 %v8438, %v8438
    %v8471 = vpack.c.b16 %v8439, %v8439
    %v8472 = vpack.c.b16 %v8440, %v8440
    %v8473 = vpack.c.b16 %v8441, %v8441
    %v8474 = vpack.c.b16 %v8442, %v8442
    %v8475 = vpack.c.b16 %v8443, %v8443
    %v8476 = vpack.c.b16 %v8444, %v8444
    %v8477 = vpack.c.b16 %v8445, %v8445
    %v8478 = vpack.c.b16 %v8446, %v8446
    %v8479 = vpack.c.b16 %v8447, %v8447
    %v8480 = vpack.c.b16 %v8448, %v8448
    %v8481 = vpack.c.b16 %v8449, %v8449
    %v8482 = vpack.c.b16 %v8450, %v8450
    %v8483 = vpack.c.b16 %v8451, %v8451
    %v8484 = vpack.c.b16 %v8452, %v8452
    %v8485 = vpack.c.b16 %v8453, %v8453
    %v8486 = vpack.c.b16 %v8454, %v8454
    %v8487 = vpack.c.b16 %v8455, %v8455
    %8520 = vst [vmem:[%s507] sm:$0xf] %v8456
    %8521 = vst [vmem:[%s507 + $0xc] sm:$0xf] %v8457
    %8522 = vst [vmem:[%s507 + $0x18] sm:$0xf] %v8458
    %8523 = vst [vmem:[%s507 + $0x24] sm:$0xf] %v8459
    %8524 = vst [vmem:[%s507 + $0x30] sm:$0xf] %v8460
    %8525 = vst [vmem:[%s507 + $0x3c] sm:$0xf] %v8461
    %8526 = vst [vmem:[%s507 + $0x48] sm:$0xf] %v8462
    %8527 = vst [vmem:[%s507 + $0x54] sm:$0xf] %v8463
    %8528 = vst [vmem:[%s507 + $0x60] sm:$0xf] %v8464
    %8529 = vst [vmem:[%s507 + $0x6c] sm:$0xf] %v8465
    %8530 = vst [vmem:[%s507 + $0x78] sm:$0xf] %v8466
    %8531 = vst [vmem:[%s507 + $0x84] sm:$0xf] %v8467
    %8532 = vst [vmem:[%s507 + $0x90] sm:$0xf] %v8468
    %8533 = vst [vmem:[%s507 + $0x9c] sm:$0xf] %v8469
    %8534 = vst [vmem:[%s507 + $0xa8] sm:$0xf] %v8470
    %8535 = vst [vmem:[%s507 + $0xb4] sm:$0xf] %v8471
    %8536 = vst [vmem:[%s507 + $0xc0] sm:$0xf] %v8472
    %8537 = vst [vmem:[%s507 + $0xcc] sm:$0xf] %v8473
    %8538 = vst [vmem:[%s507 + $0xd8] sm:$0xf] %v8474
    %8539 = vst [vmem:[%s507 + $0xe4] sm:$0xf] %v8475
    %8540 = vst [vmem:[%s507 + $0xf0] sm:$0xf] %v8476
    %8541 = vst [vmem:[%s507 + $0xfc] sm:$0xf] %v8477
    %8542 = vst [vmem:[%s507 + $0x108] sm:$0xf] %v8478
    %8543 = vst [vmem:[%s507 + $0x114] sm:$0xf] %v8479
    %8544 = vst [vmem:[%s507 + $0x120] sm:$0xf] %v8480
    %8545 = vst [vmem:[%s507 + $0x12c] sm:$0xf] %v8481
    %8546 = vst [vmem:[%s507 + $0x138] sm:$0xf] %v8482
    %8547 = vst [vmem:[%s507 + $0x144] sm:$0xf] %v8483
    %8548 = vst [vmem:[%s507 + $0x150] sm:$0xf] %v8484
    %8549 = vst [vmem:[%s507 + $0x15c] sm:$0xf] %v8485
    %8550 = vst [vmem:[%s507 + $0x168] sm:$0xf] %v8486
    %8551 = vst [vmem:[%s507 + $0x174] sm:$0xf] %v8487
    %8552 = vst [vmem:[%s507 + $0x4] sm:$0xf] %v8088
    %8553 = vst [vmem:[%s507 + $0x10] sm:$0xf] %v8089
    %8554 = vst [vmem:[%s507 + $0x1c] sm:$0xf] %v8090
    %8555 = vst [vmem:[%s507 + $0x28] sm:$0xf] %v8091
    %8556 = vst [vmem:[%s507 + $0x34] sm:$0xf] %v8092
    %8557 = vst [vmem:[%s507 + $0x40] sm:$0xf] %v8093
    %8558 = vst [vmem:[%s507 + $0x4c] sm:$0xf] %v8094
    %8559 = vst [vmem:[%s507 + $0x58] sm:$0xf] %v8095
    %8560 = vst [vmem:[%s507 + $0x64] sm:$0xf] %v8096
    %8561 = vst [vmem:[%s507 + $0x70] sm:$0xf] %v8097
    %8562 = vst [vmem:[%s507 + $0x7c] sm:$0xf] %v8098
    %8563 = vst [vmem:[%s507 + $0x88] sm:$0xf] %v8099
    %8564 = vst [vmem:[%s507 + $0x94] sm:$0xf] %v8100
    %8565 = vst [vmem:[%s507 + $0xa0] sm:$0xf] %v8101
    %8566 = vst [vmem:[%s507 + $0xac] sm:$0xf] %v8102
    %8567 = vst [vmem:[%s507 + $0xb8] sm:$0xf] %v8103
    %8568 = vst [vmem:[%s507 + $0xc4] sm:$0xf] %v8104
    %8569 = vst [vmem:[%s507 + $0xd0] sm:$0xf] %v8105
    %8570 = vst [vmem:[%s507 + $0xdc] sm:$0xf] %v8106
    %8571 = vst [vmem:[%s507 + $0xe8] sm:$0xf] %v8107
    %8572 = vst [vmem:[%s507 + $0xf4] sm:$0xf] %v8108
    %8573 = vst [vmem:[%s507 + $0x100] sm:$0xf] %v8109
    %8574 = vst [vmem:[%s507 + $0x10c] sm:$0xf] %v8110
    %8575 = vst [vmem:[%s507 + $0x118] sm:$0xf] %v8111
    %8576 = vst [vmem:[%s507 + $0x124] sm:$0xf] %v8112
    %8577 = vst [vmem:[%s507 + $0x130] sm:$0xf] %v8113
    %8578 = vst [vmem:[%s507 + $0x13c] sm:$0xf] %v8114
    %8579 = vst [vmem:[%s507 + $0x148] sm:$0xf] %v8115
    %8580 = vst [vmem:[%s507 + $0x154] sm:$0xf] %v8116
    %8581 = vst [vmem:[%s507 + $0x160] sm:$0xf] %v8117
    %8582 = vst [vmem:[%s507 + $0x16c] sm:$0xf] %v8118
    %8583 = vst [vmem:[%s507 + $0x178] sm:$0xf] %v8119
    %v8600 = vunpack.c.l.b16 %v8392
    %v8601 = vunpack.c.h.b16 %v8392
    %v8602 = vunpack.c.l.b16 %v8393
    %v8603 = vunpack.c.h.b16 %v8393
    %v8604 = vunpack.c.l.b16 %v8394
    %v8605 = vunpack.c.h.b16 %v8394
    %v8606 = vunpack.c.l.b16 %v8395
    %v8607 = vunpack.c.h.b16 %v8395
    %v8608 = vunpack.c.l.b16 %v8396
    %v8609 = vunpack.c.h.b16 %v8396
    %v8610 = vunpack.c.l.b16 %v8397
    %v8611 = vunpack.c.h.b16 %v8397
    %v8612 = vunpack.c.l.b16 %v8398
    %v8613 = vunpack.c.h.b16 %v8398
    %v8614 = vunpack.c.l.b16 %v8399
    %v8615 = vunpack.c.h.b16 %v8399
    %v8616 = vunpack.c.l.b16 %v8400
    %v8617 = vunpack.c.h.b16 %v8400
    %v8618 = vunpack.c.l.b16 %v8401
    %v8619 = vunpack.c.h.b16 %v8401
    %v8620 = vunpack.c.l.b16 %v8402
    %v8621 = vunpack.c.h.b16 %v8402
    %v8622 = vunpack.c.l.b16 %v8403
    %v8623 = vunpack.c.h.b16 %v8403
    %v8624 = vunpack.c.l.b16 %v8404
    %v8625 = vunpack.c.h.b16 %v8404
    %v8626 = vunpack.c.l.b16 %v8405
    %v8627 = vunpack.c.h.b16 %v8405
    %v8628 = vunpack.c.l.b16 %v8406
    %v8629 = vunpack.c.h.b16 %v8406
    %v8630 = vunpack.c.l.b16 %v8407
    %v8631 = vunpack.c.h.b16 %v8407
    %v8632 = vpack.c.b16 %v8600, %v8600
    %v8633 = vpack.c.b16 %v8601, %v8601
    %v8634 = vpack.c.b16 %v8602, %v8602
    %v8635 = vpack.c.b16 %v8603, %v8603
    %v8636 = vpack.c.b16 %v8604, %v8604
    %v8637 = vpack.c.b16 %v8605, %v8605
    %v8638 = vpack.c.b16 %v8606, %v8606
    %v8639 = vpack.c.b16 %v8607, %v8607
    %v8640 = vpack.c.b16 %v8608, %v8608
    %v8641 = vpack.c.b16 %v8609, %v8609
    %v8642 = vpack.c.b16 %v8610, %v8610
    %v8643 = vpack.c.b16 %v8611, %v8611
    %v8644 = vpack.c.b16 %v8612, %v8612
    %v8645 = vpack.c.b16 %v8613, %v8613
    %v8646 = vpack.c.b16 %v8614, %v8614
    %v8647 = vpack.c.b16 %v8615, %v8615
    %v8648 = vpack.c.b16 %v8616, %v8616
    %v8649 = vpack.c.b16 %v8617, %v8617
    %v8650 = vpack.c.b16 %v8618, %v8618
    %v8651 = vpack.c.b16 %v8619, %v8619
    %v8652 = vpack.c.b16 %v8620, %v8620
    %v8653 = vpack.c.b16 %v8621, %v8621
    %v8654 = vpack.c.b16 %v8622, %v8622
    %v8655 = vpack.c.b16 %v8623, %v8623
    %v8656 = vpack.c.b16 %v8624, %v8624
    %v8657 = vpack.c.b16 %v8625, %v8625
    %v8658 = vpack.c.b16 %v8626, %v8626
    %v8659 = vpack.c.b16 %v8627, %v8627
    %v8660 = vpack.c.b16 %v8628, %v8628
    %v8661 = vpack.c.b16 %v8629, %v8629
    %v8662 = vpack.c.b16 %v8630, %v8630
    %v8663 = vpack.c.b16 %v8631, %v8631
    %8696 = vst [vmem:[%s507 + $0x8] sm:$0xf] %v8632
    %8697 = vst [vmem:[%s507 + $0x14] sm:$0xf] %v8633
    %8698 = vst [vmem:[%s507 + $0x20] sm:$0xf] %v8634
    %8699 = vst [vmem:[%s507 + $0x2c] sm:$0xf] %v8635
    %8700 = vst [vmem:[%s507 + $0x38] sm:$0xf] %v8636
    %8701 = vst [vmem:[%s507 + $0x44] sm:$0xf] %v8637
    %8702 = vst [vmem:[%s507 + $0x50] sm:$0xf] %v8638
    %8703 = vst [vmem:[%s507 + $0x5c] sm:$0xf] %v8639
    %8704 = vst [vmem:[%s507 + $0x68] sm:$0xf] %v8640
    %8705 = vst [vmem:[%s507 + $0x74] sm:$0xf] %v8641
    %8706 = vst [vmem:[%s507 + $0x80] sm:$0xf] %v8642
    %8707 = vst [vmem:[%s507 + $0x8c] sm:$0xf] %v8643
    %8708 = vst [vmem:[%s507 + $0x98] sm:$0xf] %v8644
    %8709 = vst [vmem:[%s507 + $0xa4] sm:$0xf] %v8645
    %8710 = vst [vmem:[%s507 + $0xb0] sm:$0xf] %v8646
    %8711 = vst [vmem:[%s507 + $0xbc] sm:$0xf] %v8647
    %8712 = vst [vmem:[%s507 + $0xc8] sm:$0xf] %v8648
    %8713 = vst [vmem:[%s507 + $0xd4] sm:$0xf] %v8649
    %8714 = vst [vmem:[%s507 + $0xe0] sm:$0xf] %v8650
    %8715 = vst [vmem:[%s507 + $0xec] sm:$0xf] %v8651
    %8716 = vst [vmem:[%s507 + $0xf8] sm:$0xf] %v8652
    %8717 = vst [vmem:[%s507 + $0x104] sm:$0xf] %v8653
    %8718 = vst [vmem:[%s507 + $0x110] sm:$0xf] %v8654
    %8719 = vst [vmem:[%s507 + $0x11c] sm:$0xf] %v8655
    %8720 = vst [vmem:[%s507 + $0x128] sm:$0xf] %v8656
    %8721 = vst [vmem:[%s507 + $0x134] sm:$0xf] %v8657
    %8722 = vst [vmem:[%s507 + $0x140] sm:$0xf] %v8658
    %8723 = vst [vmem:[%s507 + $0x14c] sm:$0xf] %v8659
    %8724 = vst [vmem:[%s507 + $0x158] sm:$0xf] %v8660
    %8725 = vst [vmem:[%s507 + $0x164] sm:$0xf] %v8661
    %8726 = vst [vmem:[%s507 + $0x170] sm:$0xf] %v8662
    %8727 = vst [vmem:[%s507 + $0x17c] sm:$0xf] %v8663
    %v8728 = vld [vmem:[#allocation2] sm:$0xff]
    %v8729 = vld [vmem:[#allocation2 + $0x8] sm:$0xf]
    %v8730 = vld [vmem:[#allocation2 + $0xc] sm:$0xff]
    %v8731 = vld [vmem:[#allocation2 + $0x14] sm:$0xf]
    %v8732 = vld [vmem:[#allocation2 + $0x18] sm:$0xff]
    %v8733 = vld [vmem:[#allocation2 + $0x20] sm:$0xf]
    %v8734 = vld [vmem:[#allocation2 + $0x24] sm:$0xff]
    %v8735 = vld [vmem:[#allocation2 + $0x2c] sm:$0xf]
    %v8736 = vld [vmem:[#allocation2 + $0x30] sm:$0xff]
    %v8737 = vld [vmem:[#allocation2 + $0x38] sm:$0xf]
    %v8738 = vld [vmem:[#allocation2 + $0x3c] sm:$0xff]
    %v8739 = vld [vmem:[#allocation2 + $0x44] sm:$0xf]
    %v8740 = vld [vmem:[#allocation2 + $0x48] sm:$0xff]
    %v8741 = vld [vmem:[#allocation2 + $0x50] sm:$0xf]
    %v8742 = vld [vmem:[#allocation2 + $0x54] sm:$0xff]
    %v8743 = vld [vmem:[#allocation2 + $0x5c] sm:$0xf]
    %v8744 = vld [vmem:[#allocation2 + $0x60] sm:$0xff]
    %v8745 = vld [vmem:[#allocation2 + $0x68] sm:$0xf]
    %v8746 = vld [vmem:[#allocation2 + $0x6c] sm:$0xff]
    %v8747 = vld [vmem:[#allocation2 + $0x74] sm:$0xf]
    %v8748 = vld [vmem:[#allocation2 + $0x78] sm:$0xff]
    %v8749 = vld [vmem:[#allocation2 + $0x80] sm:$0xf]
    %v8750 = vld [vmem:[#allocation2 + $0x84] sm:$0xff]
    %v8751 = vld [vmem:[#allocation2 + $0x8c] sm:$0xf]
    %v8752 = vld [vmem:[#allocation2 + $0x90] sm:$0xff]
    %v8753 = vld [vmem:[#allocation2 + $0x98] sm:$0xf]
    %v8754 = vld [vmem:[#allocation2 + $0x9c] sm:$0xff]
    %v8755 = vld [vmem:[#allocation2 + $0xa4] sm:$0xf]
    %v8756 = vld [vmem:[#allocation2 + $0xa8] sm:$0xff]
    %v8757 = vld [vmem:[#allocation2 + $0xb0] sm:$0xf]
    %v8758 = vld [vmem:[#allocation2 + $0xb4] sm:$0xff]
    %v8759 = vld [vmem:[#allocation2 + $0xbc] sm:$0xf]
    %v8760 = vld [vmem:[#allocation2 + $0xc0] sm:$0xff]
    %v8761 = vld [vmem:[#allocation2 + $0xc8] sm:$0xf]
    %v8762 = vld [vmem:[#allocation2 + $0xcc] sm:$0xff]
    %v8763 = vld [vmem:[#allocation2 + $0xd4] sm:$0xf]
    %v8764 = vld [vmem:[#allocation2 + $0xd8] sm:$0xff]
    %v8765 = vld [vmem:[#allocation2 + $0xe0] sm:$0xf]
    %v8766 = vld [vmem:[#allocation2 + $0xe4] sm:$0xff]
    %v8767 = vld [vmem:[#allocation2 + $0xec] sm:$0xf]
    %v8768 = vld [vmem:[#allocation2 + $0xf0] sm:$0xff]
    %v8769 = vld [vmem:[#allocation2 + $0xf8] sm:$0xf]
    %v8770 = vld [vmem:[#allocation2 + $0xfc] sm:$0xff]
    %v8771 = vld [vmem:[#allocation2 + $0x104] sm:$0xf]
    %v8772 = vld [vmem:[#allocation2 + $0x108] sm:$0xff]
    %v8773 = vld [vmem:[#allocation2 + $0x110] sm:$0xf]
    %v8774 = vld [vmem:[#allocation2 + $0x114] sm:$0xff]
    %v8775 = vld [vmem:[#allocation2 + $0x11c] sm:$0xf]
    %v8776 = vld [vmem:[#allocation2 + $0x120] sm:$0xff]
    %v8777 = vld [vmem:[#allocation2 + $0x128] sm:$0xf]
    %v8778 = vld [vmem:[#allocation2 + $0x12c] sm:$0xff]
    %v8779 = vld [vmem:[#allocation2 + $0x134] sm:$0xf]
    %v8780 = vld [vmem:[#allocation2 + $0x138] sm:$0xff]
    %v8781 = vld [vmem:[#allocation2 + $0x140] sm:$0xf]
    %v8782 = vld [vmem:[#allocation2 + $0x144] sm:$0xff]
    %v8783 = vld [vmem:[#allocation2 + $0x14c] sm:$0xf]
    %v8784 = vld [vmem:[#allocation2 + $0x150] sm:$0xff]
    %v8785 = vld [vmem:[#allocation2 + $0x158] sm:$0xf]
    %v8786 = vld [vmem:[#allocation2 + $0x15c] sm:$0xff]
    %v8787 = vld [vmem:[#allocation2 + $0x164] sm:$0xf]
    %v8788 = vld [vmem:[#allocation2 + $0x168] sm:$0xff]
    %v8789 = vld [vmem:[#allocation2 + $0x170] sm:$0xf]
    %v8790 = vld [vmem:[#allocation2 + $0x174] sm:$0xff]
    %v8791 = vld [vmem:[#allocation2 + $0x17c] sm:$0xf]
    %v8792 = vld [vmem:[#allocation2 + $0x180] sm:$0xff]
    %v8793 = vld [vmem:[#allocation2 + $0x188] sm:$0xf]
    %v8794 = vld [vmem:[#allocation2 + $0x18c] sm:$0xff]
    %v8795 = vld [vmem:[#allocation2 + $0x194] sm:$0xf]
    %v8796 = vld [vmem:[#allocation2 + $0x198] sm:$0xff]
    %v8797 = vld [vmem:[#allocation2 + $0x1a0] sm:$0xf]
    %v8798 = vld [vmem:[#allocation2 + $0x1a4] sm:$0xff]
    %v8799 = vld [vmem:[#allocation2 + $0x1ac] sm:$0xf]
    %v8800 = vld [vmem:[%s4] sm:$0xf]
    %v8801 = vld [vmem:[%s4 + $0x4] sm:$0xf]
    %v8802 = vld [vmem:[%s4 + $0x8] sm:$0xf]
    %v8803 = vld [vmem:[%s4 + $0xc] sm:$0xf]
    %v8804 = vld [vmem:[%s4 + $0x10] sm:$0xf]
    %v8805 = vld [vmem:[%s4 + $0x14] sm:$0xf]
    %v8806 = vld [vmem:[%s4 + $0x18] sm:$0xf]
    %v8807 = vld [vmem:[%s4 + $0x1c] sm:$0xf]
    %v8808 = vld [vmem:[%s4 + $0x20] sm:$0xf]
    %v8809 = vld [vmem:[%s4 + $0x24] sm:$0xf]
    %v8810 = vld [vmem:[%s4 + $0x28] sm:$0xf]
    %v8811 = vld [vmem:[%s4 + $0x2c] sm:$0xf]
    %v8812 = vld [vmem:[%s4 + $0x30] sm:$0xf]
    %v8813 = vld [vmem:[%s4 + $0x34] sm:$0xf]
    %v8814 = vld [vmem:[%s4 + $0x38] sm:$0xf]
    %v8815 = vld [vmem:[%s4 + $0x3c] sm:$0xf]
    %v8816 = vld [vmem:[%s4 + $0x40] sm:$0xf]
    %v8817 = vld [vmem:[%s4 + $0x44] sm:$0xf]
    %v8818 = vld [vmem:[%s4 + $0x48] sm:$0xf]
    %v8819 = vld [vmem:[%s4 + $0x4c] sm:$0xf]
    %v8820 = vld [vmem:[%s4 + $0x50] sm:$0xf]
    %v8821 = vld [vmem:[%s4 + $0x54] sm:$0xf]
    %v8822 = vld [vmem:[%s4 + $0x58] sm:$0xf]
    %v8823 = vld [vmem:[%s4 + $0x5c] sm:$0xf]
    %v8824 = vld [vmem:[%s4 + $0x60] sm:$0xf]
    %v8825 = vld [vmem:[%s4 + $0x64] sm:$0xf]
    %v8826 = vld [vmem:[%s4 + $0x68] sm:$0xf]
    %v8827 = vld [vmem:[%s4 + $0x6c] sm:$0xf]
    %v8828 = vld [vmem:[%s4 + $0x70] sm:$0xf]
    %v8829 = vld [vmem:[%s4 + $0x74] sm:$0xf]
    %v8830 = vld [vmem:[%s4 + $0x78] sm:$0xf]
    %v8831 = vld [vmem:[%s4 + $0x7c] sm:$0xf]
    %v8832 = vld [vmem:[%s4 + $0x80] sm:$0xf]
    %v8833 = vld [vmem:[%s4 + $0x84] sm:$0xf]
    %v8834 = vld [vmem:[%s4 + $0x88] sm:$0xf]
    %v8835 = vld [vmem:[%s4 + $0x8c] sm:$0xf]
    %v8836 = vld [vmem:[%s4 + $0x90] sm:$0xf]
    %v8837 = vld [vmem:[%s4 + $0x94] sm:$0xf]
    %v8838 = vld [vmem:[%s4 + $0x98] sm:$0xf]
    %v8839 = vld [vmem:[%s4 + $0x9c] sm:$0xf]
    %v8840 = vld [vmem:[%s4 + $0xa0] sm:$0xf]
    %v8841 = vld [vmem:[%s4 + $0xa4] sm:$0xf]
    %v8842 = vld [vmem:[%s4 + $0xa8] sm:$0xf]
    %v8843 = vld [vmem:[%s4 + $0xac] sm:$0xf]
    %v8844 = vld [vmem:[%s4 + $0xb0] sm:$0xf]
    %v8845 = vld [vmem:[%s4 + $0xb4] sm:$0xf]
    %v8846 = vld [vmem:[%s4 + $0xb8] sm:$0xf]
    %v8847 = vld [vmem:[%s4 + $0xbc] sm:$0xf]
    %v8848 = vld [vmem:[%s3475] sm:$0xf]
    %v8849 = vld [vmem:[%s3475 + $0x4] sm:$0xf]
    %v8850 = vld [vmem:[%s3475 + $0x8] sm:$0xf]
    %v8851 = vld [vmem:[%s3475 + $0xc] sm:$0xf]
    %v8852 = vld [vmem:[%s3475 + $0x10] sm:$0xf]
    %v8853 = vld [vmem:[%s3475 + $0x14] sm:$0xf]
    %v8854 = vld [vmem:[%s3475 + $0x18] sm:$0xf]
    %v8855 = vld [vmem:[%s3475 + $0x1c] sm:$0xf]
    %v8856 = vld [vmem:[%s3475 + $0x20] sm:$0xf]
    %v8857 = vld [vmem:[%s3475 + $0x24] sm:$0xf]
    %v8858 = vld [vmem:[%s3475 + $0x28] sm:$0xf]
    %v8859 = vld [vmem:[%s3475 + $0x2c] sm:$0xf]
    %v8860 = vld [vmem:[%s3475 + $0x30] sm:$0xf]
    %v8861 = vld [vmem:[%s3475 + $0x34] sm:$0xf]
    %v8862 = vld [vmem:[%s3475 + $0x38] sm:$0xf]
    %v8863 = vld [vmem:[%s3475 + $0x3c] sm:$0xf]
    %v8864 = vld [vmem:[%s3475 + $0x40] sm:$0xf]
    %v8865 = vld [vmem:[%s3475 + $0x44] sm:$0xf]
    %v8866 = vld [vmem:[%s3475 + $0x48] sm:$0xf]
    %v8867 = vld [vmem:[%s3475 + $0x4c] sm:$0xf]
    %v8868 = vld [vmem:[%s3475 + $0x50] sm:$0xf]
    %v8869 = vld [vmem:[%s3475 + $0x54] sm:$0xf]
    %v8870 = vld [vmem:[%s3475 + $0x58] sm:$0xf]
    %v8871 = vld [vmem:[%s3475 + $0x5c] sm:$0xf]
    %v8872 = vld [vmem:[%s3475 + $0x60] sm:$0xf]
    %v8873 = vld [vmem:[%s3475 + $0x64] sm:$0xf]
    %v8874 = vld [vmem:[%s3475 + $0x68] sm:$0xf]
    %v8875 = vld [vmem:[%s3475 + $0x6c] sm:$0xf]
    %v8876 = vld [vmem:[%s3475 + $0x70] sm:$0xf]
    %v8877 = vld [vmem:[%s3475 + $0x74] sm:$0xf]
    %v8878 = vld [vmem:[%s3475 + $0x78] sm:$0xf]
    %v8879 = vld [vmem:[%s3475 + $0x7c] sm:$0xf]
    %v8880 = vld [vmem:[%s3475 + $0x80] sm:$0xf]
    %v8881 = vld [vmem:[%s3475 + $0x84] sm:$0xf]
    %v8882 = vld [vmem:[%s3475 + $0x88] sm:$0xf]
    %v8883 = vld [vmem:[%s3475 + $0x8c] sm:$0xf]
    %v8884 = vld [vmem:[%s3475 + $0x90] sm:$0xf]
    %v8885 = vld [vmem:[%s3475 + $0x94] sm:$0xf]
    %v8886 = vld [vmem:[%s3475 + $0x98] sm:$0xf]
    %v8887 = vld [vmem:[%s3475 + $0x9c] sm:$0xf]
    %v8888 = vld [vmem:[%s3475 + $0xa0] sm:$0xf]
    %v8889 = vld [vmem:[%s3475 + $0xa4] sm:$0xf]
    %v8890 = vld [vmem:[%s3475 + $0xa8] sm:$0xf]
    %v8891 = vld [vmem:[%s3475 + $0xac] sm:$0xf]
    %v8892 = vld [vmem:[%s3475 + $0xb0] sm:$0xf]
    %v8893 = vld [vmem:[%s3475 + $0xb4] sm:$0xf]
    %v8894 = vld [vmem:[%s3475 + $0xb8] sm:$0xf]
    %v8895 = vld [vmem:[%s3475 + $0xbc] sm:$0xf]
    %v8960 = vunpack.c.l.b16 %v8732
    %v8961 = vunpack.c.h.b16 %v8732
    %v8962 = vunpack.c.l.b16 %v8733
    %v8963 = vunpack.c.l.b16 %v8734
    %v8964 = vunpack.c.h.b16 %v8734
    %v8965 = vunpack.c.l.b16 %v8735
    %v8966 = vunpack.c.l.b16 %v8736
    %v8967 = vunpack.c.h.b16 %v8736
    %v8968 = vunpack.c.l.b16 %v8737
    %v8969 = vunpack.c.l.b16 %v8738
    %v8970 = vunpack.c.h.b16 %v8738
    %v8971 = vunpack.c.l.b16 %v8739
    %v8972 = vunpack.c.l.b16 %v8740
    %v8973 = vunpack.c.h.b16 %v8740
    %v8974 = vunpack.c.l.b16 %v8741
    %v8975 = vunpack.c.l.b16 %v8742
    %v8976 = vunpack.c.h.b16 %v8742
    %v8977 = vunpack.c.l.b16 %v8743
    %v8978 = vunpack.c.l.b16 %v8744
    %v8979 = vunpack.c.h.b16 %v8744
    %v8980 = vunpack.c.l.b16 %v8745
    %v8981 = vunpack.c.l.b16 %v8746
    %v8982 = vunpack.c.h.b16 %v8746
    %v8983 = vunpack.c.l.b16 %v8747
    %v8984 = vunpack.c.l.b16 %v8748
    %v8985 = vunpack.c.h.b16 %v8748
    %v8986 = vunpack.c.l.b16 %v8749
    %v8987 = vunpack.c.l.b16 %v8750
    %v8988 = vunpack.c.h.b16 %v8750
    %v8989 = vunpack.c.l.b16 %v8751
    %v8990 = vunpack.c.l.b16 %v8752
    %v8991 = vunpack.c.h.b16 %v8752
    %v8992 = vunpack.c.l.b16 %v8753
    %v8993 = vunpack.c.l.b16 %v8754
    %v8994 = vunpack.c.h.b16 %v8754
    %v8995 = vunpack.c.l.b16 %v8755
    %v8996 = vunpack.c.l.b16 %v8756
    %v8997 = vunpack.c.h.b16 %v8756
    %v8998 = vunpack.c.l.b16 %v8757
    %v8999 = vunpack.c.l.b16 %v8758
    %v9000 = vunpack.c.h.b16 %v8758
    %v9001 = vunpack.c.l.b16 %v8759
    %v9002 = vunpack.c.l.b16 %v8760
    %v9003 = vunpack.c.h.b16 %v8760
    %v9004 = vunpack.c.l.b16 %v8761
    %v9005 = vunpack.c.l.b16 %v8762
    %v9006 = vunpack.c.h.b16 %v8762
    %v9007 = vunpack.c.l.b16 %v8763
    %v9008 = vunpack.c.l.b16 %v8764
    %v9009 = vunpack.c.h.b16 %v8764
    %v9010 = vunpack.c.l.b16 %v8765
    %v9011 = vunpack.c.l.b16 %v8766
    %v9012 = vunpack.c.h.b16 %v8766
    %v9013 = vunpack.c.l.b16 %v8767
    %v9014 = vunpack.c.l.b16 %v8768
    %v9015 = vunpack.c.h.b16 %v8768
    %v9016 = vunpack.c.l.b16 %v8769
    %v9017 = vunpack.c.l.b16 %v8770
    %v9018 = vunpack.c.h.b16 %v8770
    %v9019 = vunpack.c.l.b16 %v8771
    %v9020 = vunpack.c.l.b16 %v8772
    %v9021 = vunpack.c.h.b16 %v8772
    %v9022 = vunpack.c.l.b16 %v8773
    %v9023 = vunpack.c.l.b16 %v8774
    %v9024 = vunpack.c.h.b16 %v8774
    %v9025 = vunpack.c.l.b16 %v8775
    %v9026 = vunpack.c.l.b16 %v8776
    %v9027 = vunpack.c.h.b16 %v8776
    %v9028 = vunpack.c.l.b16 %v8777
    %v9029 = vunpack.c.l.b16 %v8778
    %v9030 = vunpack.c.h.b16 %v8778
    %v9031 = vunpack.c.l.b16 %v8779
    %v9032 = vunpack.c.l.b16 %v8780
    %v9033 = vunpack.c.h.b16 %v8780
    %v9034 = vunpack.c.l.b16 %v8781
    %v9035 = vunpack.c.l.b16 %v8782
    %v9036 = vunpack.c.h.b16 %v8782
    %v9037 = vunpack.c.l.b16 %v8783
    %v9038 = vunpack.c.l.b16 %v8784
    %v9039 = vunpack.c.h.b16 %v8784
    %v9040 = vunpack.c.l.b16 %v8785
    %v9041 = vunpack.c.l.b16 %v8786
    %v9042 = vunpack.c.h.b16 %v8786
    %v9043 = vunpack.c.l.b16 %v8787
    %v9044 = vunpack.c.l.b16 %v8788
    %v9045 = vunpack.c.h.b16 %v8788
    %v9046 = vunpack.c.l.b16 %v8789
    %v9047 = vunpack.c.l.b16 %v8790
    %v9048 = vunpack.c.h.b16 %v8790
    %v9049 = vunpack.c.l.b16 %v8791
    %v9050 = vunpack.c.l.b16 %v8792
    %v9051 = vunpack.c.h.b16 %v8792
    %v9052 = vunpack.c.l.b16 %v8793
    %v9053 = vunpack.c.l.b16 %v8794
    %v9054 = vunpack.c.h.b16 %v8794
    %v9055 = vunpack.c.l.b16 %v8795
    %v9056 = vpack.c.b16 %v8963, %v8960
    %v9057 = vpack.c.b16 %v8964, %v8961
    %v9058 = vpack.c.b16 %v8965, %v8962
    %v9059 = vpack.c.b16 %v8969, %v8966
    %v9060 = vpack.c.b16 %v8970, %v8967
    %v9061 = vpack.c.b16 %v8971, %v8968
    %v9062 = vpack.c.b16 %v8975, %v8972
    %v9063 = vpack.c.b16 %v8976, %v8973
    %v9064 = vpack.c.b16 %v8977, %v8974
    %v9065 = vpack.c.b16 %v8981, %v8978
    %v9066 = vpack.c.b16 %v8982, %v8979
    %v9067 = vpack.c.b16 %v8983, %v8980
    %v9068 = vpack.c.b16 %v8987, %v8984
    %v9069 = vpack.c.b16 %v8988, %v8985
    %v9070 = vpack.c.b16 %v8989, %v8986
    %v9071 = vpack.c.b16 %v8993, %v8990
    %v9072 = vpack.c.b16 %v8994, %v8991
    %v9073 = vpack.c.b16 %v8995, %v8992
    %v9074 = vpack.c.b16 %v8999, %v8996
    %v9075 = vpack.c.b16 %v9000, %v8997
    %v9076 = vpack.c.b16 %v9001, %v8998
    %v9077 = vpack.c.b16 %v9005, %v9002
    %v9078 = vpack.c.b16 %v9006, %v9003
    %v9079 = vpack.c.b16 %v9007, %v9004
    %v9080 = vpack.c.b16 %v9011, %v9008
    %v9081 = vpack.c.b16 %v9012, %v9009
    %v9082 = vpack.c.b16 %v9013, %v9010
    %v9083 = vpack.c.b16 %v9017, %v9014
    %v9084 = vpack.c.b16 %v9018, %v9015
    %v9085 = vpack.c.b16 %v9019, %v9016
    %v9086 = vpack.c.b16 %v9023, %v9020
    %v9087 = vpack.c.b16 %v9024, %v9021
    %v9088 = vpack.c.b16 %v9025, %v9022
    %v9089 = vpack.c.b16 %v9029, %v9026
    %v9090 = vpack.c.b16 %v9030, %v9027
    %v9091 = vpack.c.b16 %v9031, %v9028
    %v9092 = vpack.c.b16 %v9035, %v9032
    %v9093 = vpack.c.b16 %v9036, %v9033
    %v9094 = vpack.c.b16 %v9037, %v9034
    %v9095 = vpack.c.b16 %v9041, %v9038
    %v9096 = vpack.c.b16 %v9042, %v9039
    %v9097 = vpack.c.b16 %v9043, %v9040
    %v9098 = vpack.c.b16 %v9047, %v9044
    %v9099 = vpack.c.b16 %v9048, %v9045
    %v9100 = vpack.c.b16 %v9049, %v9046
    %v9101 = vpack.c.b16 %v9053, %v9050
    %v9102 = vpack.c.b16 %v9054, %v9051
    %v9103 = vpack.c.b16 %v9055, %v9052
    %v9200 = vunpack.c.l.b16 %v8848
    %v9201 = vunpack.c.l.b16 %v8849
    %v9202 = vunpack.c.l.b16 %v8850
    %v9203 = vunpack.c.l.b16 %v8851
    %v9204 = vunpack.c.l.b16 %v8852
    %v9205 = vunpack.c.l.b16 %v8853
    %v9206 = vunpack.c.l.b16 %v8854
    %v9207 = vunpack.c.l.b16 %v8855
    %v9208 = vunpack.c.l.b16 %v8856
    %v9209 = vunpack.c.l.b16 %v8857
    %v9210 = vunpack.c.l.b16 %v8858
    %v9211 = vunpack.c.l.b16 %v8859
    %v9212 = vunpack.c.l.b16 %v8860
    %v9213 = vunpack.c.l.b16 %v8861
    %v9214 = vunpack.c.l.b16 %v8862
    %v9215 = vunpack.c.l.b16 %v8863
    %v9216 = vunpack.c.l.b16 %v8864
    %v9217 = vunpack.c.l.b16 %v8865
    %v9218 = vunpack.c.l.b16 %v8866
    %v9219 = vunpack.c.l.b16 %v8867
    %v9220 = vunpack.c.l.b16 %v8868
    %v9221 = vunpack.c.l.b16 %v8869
    %v9222 = vunpack.c.l.b16 %v8870
    %v9223 = vunpack.c.l.b16 %v8871
    %v9224 = vunpack.c.l.b16 %v8872
    %v9225 = vunpack.c.l.b16 %v8873
    %v9226 = vunpack.c.l.b16 %v8874
    %v9227 = vunpack.c.l.b16 %v8875
    %v9228 = vunpack.c.l.b16 %v8876
    %v9229 = vunpack.c.l.b16 %v8877
    %v9230 = vunpack.c.l.b16 %v8878
    %v9231 = vunpack.c.l.b16 %v8879
    %v9232 = vunpack.c.l.b16 %v8880
    %v9233 = vunpack.c.l.b16 %v8881
    %v9234 = vunpack.c.l.b16 %v8882
    %v9235 = vunpack.c.l.b16 %v8883
    %v9236 = vunpack.c.l.b16 %v8884
    %v9237 = vunpack.c.l.b16 %v8885
    %v9238 = vunpack.c.l.b16 %v8886
    %v9239 = vunpack.c.l.b16 %v8887
    %v9240 = vunpack.c.l.b16 %v8888
    %v9241 = vunpack.c.l.b16 %v8889
    %v9242 = vunpack.c.l.b16 %v8890
    %v9243 = vunpack.c.l.b16 %v8891
    %v9244 = vunpack.c.l.b16 %v8892
    %v9245 = vunpack.c.l.b16 %v8893
    %v9246 = vunpack.c.l.b16 %v8894
    %v9247 = vunpack.c.l.b16 %v8895
    %v9248 = vpack.c.b16 %v9201, %v9200
    %v9249 = vpack.c.b16 %v9203, %v9202
    %v9250 = vpack.c.b16 %v9205, %v9204
    %v9251 = vpack.c.b16 %v9207, %v9206
    %v9252 = vpack.c.b16 %v9209, %v9208
    %v9253 = vpack.c.b16 %v9211, %v9210
    %v9254 = vpack.c.b16 %v9213, %v9212
    %v9255 = vpack.c.b16 %v9215, %v9214
    %v9256 = vpack.c.b16 %v9217, %v9216
    %v9257 = vpack.c.b16 %v9219, %v9218
    %v9258 = vpack.c.b16 %v9221, %v9220
    %v9259 = vpack.c.b16 %v9223, %v9222
    %v9260 = vpack.c.b16 %v9225, %v9224
    %v9261 = vpack.c.b16 %v9227, %v9226
    %v9262 = vpack.c.b16 %v9229, %v9228
    %v9263 = vpack.c.b16 %v9231, %v9230
    %v9264 = vpack.c.b16 %v9233, %v9232
    %v9265 = vpack.c.b16 %v9235, %v9234
    %v9266 = vpack.c.b16 %v9237, %v9236
    %v9267 = vpack.c.b16 %v9239, %v9238
    %v9268 = vpack.c.b16 %v9241, %v9240
    %v9269 = vpack.c.b16 %v9243, %v9242
    %v9270 = vpack.c.b16 %v9245, %v9244
    %v9271 = vpack.c.b16 %v9247, %v9246
    %9296 = vmatpush.bf16.msra.mxu0 %v9255
    %9297 = vmatpush.bf16.msra.mxu0 %v9254
    %9298 = vmatpush.bf16.msra.mxu0 %v9253
    %9299 = vmatpush.bf16.msra.mxu0 %v9252
    %9300 = vmatpush.bf16.msra.mxu0 %v9251
    %9301 = vmatpush.bf16.msra.mxu0 %v9250
    %9302 = vmatpush.bf16.msra.mxu0 %v9249
    %9303 = vmatpush.bf16.msra.mxu0 %v9248
    %9304 = vmatmul.bf16.gmra.mxu0 %v9056
    %v9305 = vpop.f32.mrf.mxu0
    %v9306 = vadd.f32 0.0, %v9305
    %v9307 = vpop.f32.mrf.mxu0
    %v9308 = vadd.f32 0.0, %v9307
    %9309 = vmatmul.bf16.gmra.mxu0 %v9059
    %v9310 = vpop.f32.mrf.mxu0
    %v9311 = vadd.f32 0.0, %v9310
    %v9312 = vpop.f32.mrf.mxu0
    %v9313 = vadd.f32 0.0, %v9312
    %9314 = vmatmul.bf16.gmra.mxu0 %v9062
    %v9315 = vpop.f32.mrf.mxu0
    %v9316 = vadd.f32 0.0, %v9315
    %v9317 = vpop.f32.mrf.mxu0
    %v9318 = vadd.f32 0.0, %v9317
    %9319 = vmatmul.bf16.gmra.mxu0 %v9065
    %v9320 = vpop.f32.mrf.mxu0
    %v9321 = vadd.f32 0.0, %v9320
    %v9322 = vpop.f32.mrf.mxu0
    %v9323 = vadd.f32 0.0, %v9322
    %9324 = vmatmul.bf16.gmra.mxu0 %v9068
    %v9325 = vpop.f32.mrf.mxu0
    %v9326 = vadd.f32 0.0, %v9325
    %v9327 = vpop.f32.mrf.mxu0
    %v9328 = vadd.f32 0.0, %v9327
    %9329 = vmatmul.bf16.gmra.mxu0 %v9071
    %v9330 = vpop.f32.mrf.mxu0
    %v9331 = vadd.f32 0.0, %v9330
    %v9332 = vpop.f32.mrf.mxu0
    %v9333 = vadd.f32 0.0, %v9332
    %9334 = vmatmul.bf16.gmra.mxu0 %v9074
    %v9335 = vpop.f32.mrf.mxu0
    %v9336 = vadd.f32 0.0, %v9335
    %v9337 = vpop.f32.mrf.mxu0
    %v9338 = vadd.f32 0.0, %v9337
    %9339 = vmatmul.bf16.gmra.mxu0 %v9077
    %v9340 = vpop.f32.mrf.mxu0
    %v9341 = vadd.f32 0.0, %v9340
    %v9342 = vpop.f32.mrf.mxu0
    %v9343 = vadd.f32 0.0, %v9342
    %9344 = vmatmul.bf16.gmra.mxu0 %v9080
    %v9345 = vpop.f32.mrf.mxu0
    %v9346 = vadd.f32 0.0, %v9345
    %v9347 = vpop.f32.mrf.mxu0
    %v9348 = vadd.f32 0.0, %v9347
    %9349 = vmatmul.bf16.gmra.mxu0 %v9083
    %v9350 = vpop.f32.mrf.mxu0
    %v9351 = vadd.f32 0.0, %v9350
    %v9352 = vpop.f32.mrf.mxu0
    %v9353 = vadd.f32 0.0, %v9352
    %9354 = vmatmul.bf16.gmra.mxu0 %v9086
    %v9355 = vpop.f32.mrf.mxu0
    %v9356 = vadd.f32 0.0, %v9355
    %v9357 = vpop.f32.mrf.mxu0
    %v9358 = vadd.f32 0.0, %v9357
    %9359 = vmatmul.bf16.gmra.mxu0 %v9089
    %v9360 = vpop.f32.mrf.mxu0
    %v9361 = vadd.f32 0.0, %v9360
    %v9362 = vpop.f32.mrf.mxu0
    %v9363 = vadd.f32 0.0, %v9362
    %9364 = vmatmul.bf16.gmra.mxu0 %v9092
    %v9365 = vpop.f32.mrf.mxu0
    %v9366 = vadd.f32 0.0, %v9365
    %v9367 = vpop.f32.mrf.mxu0
    %v9368 = vadd.f32 0.0, %v9367
    %9369 = vmatmul.bf16.gmra.mxu0 %v9095
    %v9370 = vpop.f32.mrf.mxu0
    %v9371 = vadd.f32 0.0, %v9370
    %v9372 = vpop.f32.mrf.mxu0
    %v9373 = vadd.f32 0.0, %v9372
    %9374 = vmatmul.bf16.gmra.mxu0 %v9098
    %v9375 = vpop.f32.mrf.mxu0
    %v9376 = vadd.f32 0.0, %v9375
    %v9377 = vpop.f32.mrf.mxu0
    %v9378 = vadd.f32 0.0, %v9377
    %9379 = vmatmul.bf16.gmra.mxu0 %v9101
    %v9380 = vpop.f32.mrf.mxu0
    %v9381 = vadd.f32 0.0, %v9380
    %v9382 = vpop.f32.mrf.mxu0
    %v9383 = vadd.f32 0.0, %v9382
    %9384 = vdwg.mxu0
    %9385 = vmatpush.bf16.msra.mxu0 %v9263
    %9386 = vmatpush.bf16.msra.mxu0 %v9262
    %9387 = vmatpush.bf16.msra.mxu0 %v9261
    %9388 = vmatpush.bf16.msra.mxu0 %v9260
    %9389 = vmatpush.bf16.msra.mxu0 %v9259
    %9390 = vmatpush.bf16.msra.mxu0 %v9258
    %9391 = vmatpush.bf16.msra.mxu0 %v9257
    %9392 = vmatpush.bf16.msra.mxu0 %v9256
    %9393 = vmatmul.bf16.gmra.mxu0 %v9057
    %v9394 = vpop.f32.mrf.mxu0
    %v9395 = vadd.f32 %v9306, %v9394
    %v9396 = vpop.f32.mrf.mxu0
    %v9397 = vadd.f32 %v9308, %v9396
    %9398 = vmatmul.bf16.gmra.mxu0 %v9060
    %v9399 = vpop.f32.mrf.mxu0
    %v9400 = vadd.f32 %v9311, %v9399
    %v9401 = vpop.f32.mrf.mxu0
    %v9402 = vadd.f32 %v9313, %v9401
    %9403 = vmatmul.bf16.gmra.mxu0 %v9063
    %v9404 = vpop.f32.mrf.mxu0
    %v9405 = vadd.f32 %v9316, %v9404
    %v9406 = vpop.f32.mrf.mxu0
    %v9407 = vadd.f32 %v9318, %v9406
    %9408 = vmatmul.bf16.gmra.mxu0 %v9066
    %v9409 = vpop.f32.mrf.mxu0
    %v9410 = vadd.f32 %v9321, %v9409
    %v9411 = vpop.f32.mrf.mxu0
    %v9412 = vadd.f32 %v9323, %v9411
    %9413 = vmatmul.bf16.gmra.mxu0 %v9069
    %v9414 = vpop.f32.mrf.mxu0
    %v9415 = vadd.f32 %v9326, %v9414
    %v9416 = vpop.f32.mrf.mxu0
    %v9417 = vadd.f32 %v9328, %v9416
    %9418 = vmatmul.bf16.gmra.mxu0 %v9072
    %v9419 = vpop.f32.mrf.mxu0
    %v9420 = vadd.f32 %v9331, %v9419
    %v9421 = vpop.f32.mrf.mxu0
    %v9422 = vadd.f32 %v9333, %v9421
    %9423 = vmatmul.bf16.gmra.mxu0 %v9075
    %v9424 = vpop.f32.mrf.mxu0
    %v9425 = vadd.f32 %v9336, %v9424
    %v9426 = vpop.f32.mrf.mxu0
    %v9427 = vadd.f32 %v9338, %v9426
    %9428 = vmatmul.bf16.gmra.mxu0 %v9078
    %v9429 = vpop.f32.mrf.mxu0
    %v9430 = vadd.f32 %v9341, %v9429
    %v9431 = vpop.f32.mrf.mxu0
    %v9432 = vadd.f32 %v9343, %v9431
    %9433 = vmatmul.bf16.gmra.mxu0 %v9081
    %v9434 = vpop.f32.mrf.mxu0
    %v9435 = vadd.f32 %v9346, %v9434
    %v9436 = vpop.f32.mrf.mxu0
    %v9437 = vadd.f32 %v9348, %v9436
    %9438 = vmatmul.bf16.gmra.mxu0 %v9084
    %v9439 = vpop.f32.mrf.mxu0
    %v9440 = vadd.f32 %v9351, %v9439
    %v9441 = vpop.f32.mrf.mxu0
    %v9442 = vadd.f32 %v9353, %v9441
    %9443 = vmatmul.bf16.gmra.mxu0 %v9087
    %v9444 = vpop.f32.mrf.mxu0
    %v9445 = vadd.f32 %v9356, %v9444
    %v9446 = vpop.f32.mrf.mxu0
    %v9447 = vadd.f32 %v9358, %v9446
    %9448 = vmatmul.bf16.gmra.mxu0 %v9090
    %v9449 = vpop.f32.mrf.mxu0
    %v9450 = vadd.f32 %v9361, %v9449
    %v9451 = vpop.f32.mrf.mxu0
    %v9452 = vadd.f32 %v9363, %v9451
    %9453 = vmatmul.bf16.gmra.mxu0 %v9093
    %v9454 = vpop.f32.mrf.mxu0
    %v9455 = vadd.f32 %v9366, %v9454
    %v9456 = vpop.f32.mrf.mxu0
    %v9457 = vadd.f32 %v9368, %v9456
    %9458 = vmatmul.bf16.gmra.mxu0 %v9096
    %v9459 = vpop.f32.mrf.mxu0
    %v9460 = vadd.f32 %v9371, %v9459
    %v9461 = vpop.f32.mrf.mxu0
    %v9462 = vadd.f32 %v9373, %v9461
    %9463 = vmatmul.bf16.gmra.mxu0 %v9099
    %v9464 = vpop.f32.mrf.mxu0
    %v9465 = vadd.f32 %v9376, %v9464
    %v9466 = vpop.f32.mrf.mxu0
    %v9467 = vadd.f32 %v9378, %v9466
    %9468 = vmatmul.bf16.gmra.mxu0 %v9102
    %v9469 = vpop.f32.mrf.mxu0
    %v9470 = vadd.f32 %v9381, %v9469
    %v9471 = vpop.f32.mrf.mxu0
    %v9472 = vadd.f32 %v9383, %v9471
    %9473 = vdwg.mxu0
    %9474 = vmatpush.bf16.msra.mxu0 %v9271
    %9475 = vmatpush.bf16.msra.mxu0 %v9270
    %9476 = vmatpush.bf16.msra.mxu0 %v9269
    %9477 = vmatpush.bf16.msra.mxu0 %v9268
    %9478 = vmatpush.bf16.msra.mxu0 %v9267
    %9479 = vmatpush.bf16.msra.mxu0 %v9266
    %9480 = vmatpush.bf16.msra.mxu0 %v9265
    %9481 = vmatpush.bf16.msra.mxu0 %v9264
    %9482 = vmatmul.bf16.gmra.mxu0 %v9058
    %v9483 = vpop.f32.mrf.mxu0
    %v9484 = vadd.f32 %v9395, %v9483
    %v9485 = vpop.f32.mrf.mxu0
    %v9486 = vadd.f32 %v9397, %v9485
    %9487 = vmatmul.bf16.gmra.mxu0 %v9061
    %v9488 = vpop.f32.mrf.mxu0
    %v9489 = vadd.f32 %v9400, %v9488
    %v9490 = vpop.f32.mrf.mxu0
    %v9491 = vadd.f32 %v9402, %v9490
    %9492 = vmatmul.bf16.gmra.mxu0 %v9064
    %v9493 = vpop.f32.mrf.mxu0
    %v9494 = vadd.f32 %v9405, %v9493
    %v9495 = vpop.f32.mrf.mxu0
    %v9496 = vadd.f32 %v9407, %v9495
    %9497 = vmatmul.bf16.gmra.mxu0 %v9067
    %v9498 = vpop.f32.mrf.mxu0
    %v9499 = vadd.f32 %v9410, %v9498
    %v9500 = vpop.f32.mrf.mxu0
    %v9501 = vadd.f32 %v9412, %v9500
    %9502 = vmatmul.bf16.gmra.mxu0 %v9070
    %v9503 = vpop.f32.mrf.mxu0
    %v9504 = vadd.f32 %v9415, %v9503
    %v9505 = vpop.f32.mrf.mxu0
    %v9506 = vadd.f32 %v9417, %v9505
    %9507 = vmatmul.bf16.gmra.mxu0 %v9073
    %v9508 = vpop.f32.mrf.mxu0
    %v9509 = vadd.f32 %v9420, %v9508
    %v9510 = vpop.f32.mrf.mxu0
    %v9511 = vadd.f32 %v9422, %v9510
    %9512 = vmatmul.bf16.gmra.mxu0 %v9076
    %v9513 = vpop.f32.mrf.mxu0
    %v9514 = vadd.f32 %v9425, %v9513
    %v9515 = vpop.f32.mrf.mxu0
    %v9516 = vadd.f32 %v9427, %v9515
    %9517 = vmatmul.bf16.gmra.mxu0 %v9079
    %v9518 = vpop.f32.mrf.mxu0
    %v9519 = vadd.f32 %v9430, %v9518
    %v9520 = vpop.f32.mrf.mxu0
    %v9521 = vadd.f32 %v9432, %v9520
    %9522 = vmatmul.bf16.gmra.mxu0 %v9082
    %v9523 = vpop.f32.mrf.mxu0
    %v9524 = vadd.f32 %v9435, %v9523
    %v9525 = vpop.f32.mrf.mxu0
    %v9526 = vadd.f32 %v9437, %v9525
    %9527 = vmatmul.bf16.gmra.mxu0 %v9085
    %v9528 = vpop.f32.mrf.mxu0
    %v9529 = vadd.f32 %v9440, %v9528
    %v9530 = vpop.f32.mrf.mxu0
    %v9531 = vadd.f32 %v9442, %v9530
    %9532 = vmatmul.bf16.gmra.mxu0 %v9088
    %v9533 = vpop.f32.mrf.mxu0
    %v9534 = vadd.f32 %v9445, %v9533
    %v9535 = vpop.f32.mrf.mxu0
    %v9536 = vadd.f32 %v9447, %v9535
    %9537 = vmatmul.bf16.gmra.mxu0 %v9091
    %v9538 = vpop.f32.mrf.mxu0
    %v9539 = vadd.f32 %v9450, %v9538
    %v9540 = vpop.f32.mrf.mxu0
    %v9541 = vadd.f32 %v9452, %v9540
    %9542 = vmatmul.bf16.gmra.mxu0 %v9094
    %v9543 = vpop.f32.mrf.mxu0
    %v9544 = vadd.f32 %v9455, %v9543
    %v9545 = vpop.f32.mrf.mxu0
    %v9546 = vadd.f32 %v9457, %v9545
    %9547 = vmatmul.bf16.gmra.mxu0 %v9097
    %v9548 = vpop.f32.mrf.mxu0
    %v9549 = vadd.f32 %v9460, %v9548
    %v9550 = vpop.f32.mrf.mxu0
    %v9551 = vadd.f32 %v9462, %v9550
    %9552 = vmatmul.bf16.gmra.mxu0 %v9100
    %v9553 = vpop.f32.mrf.mxu0
    %v9554 = vadd.f32 %v9465, %v9553
    %v9555 = vpop.f32.mrf.mxu0
    %v9556 = vadd.f32 %v9467, %v9555
    %9557 = vmatmul.bf16.gmra.mxu0 %v9103
    %v9558 = vpop.f32.mrf.mxu0
    %v9559 = vadd.f32 %v9470, %v9558
    %v9560 = vpop.f32.mrf.mxu0
    %v9561 = vadd.f32 %v9472, %v9560
    %9562 = vdwg.mxu0
    %v9567 = vunpack.c.l.b16 %v8728
    %v9568 = vunpack.c.h.b16 %v8728
    %v9569 = vunpack.c.l.b16 %v8729
    %v9570 = vunpack.c.l.b16 %v8730
    %v9571 = vunpack.c.h.b16 %v8730
    %v9572 = vunpack.c.l.b16 %v8731
    %v9573 = vpack.c.b16 %v9570, %v9567
    %v9574 = vpack.c.b16 %v9571, %v9568
    %v9575 = vpack.c.b16 %v9572, %v9569
    %v9627 = vunpack.c.l.b16 %v8800
    %v9628 = vunpack.c.l.b16 %v8801
    %v9629 = vunpack.c.l.b16 %v8802
    %v9630 = vunpack.c.l.b16 %v8803
    %v9631 = vunpack.c.l.b16 %v8804
    %v9632 = vunpack.c.l.b16 %v8805
    %v9633 = vunpack.c.l.b16 %v8806
    %v9634 = vunpack.c.l.b16 %v8807
    %v9635 = vunpack.c.l.b16 %v8808
    %v9636 = vunpack.c.l.b16 %v8809
    %v9637 = vunpack.c.l.b16 %v8810
    %v9638 = vunpack.c.l.b16 %v8811
    %v9639 = vunpack.c.l.b16 %v8812
    %v9640 = vunpack.c.l.b16 %v8813
    %v9641 = vunpack.c.l.b16 %v8814
    %v9642 = vunpack.c.l.b16 %v8815
    %v9643 = vunpack.c.l.b16 %v8816
    %v9644 = vunpack.c.l.b16 %v8817
    %v9645 = vunpack.c.l.b16 %v8818
    %v9646 = vunpack.c.l.b16 %v8819
    %v9647 = vunpack.c.l.b16 %v8820
    %v9648 = vunpack.c.l.b16 %v8821
    %v9649 = vunpack.c.l.b16 %v8822
    %v9650 = vunpack.c.l.b16 %v8823
    %v9651 = vunpack.c.l.b16 %v8824
    %v9652 = vunpack.c.l.b16 %v8825
    %v9653 = vunpack.c.l.b16 %v8826
    %v9654 = vunpack.c.l.b16 %v8827
    %v9655 = vunpack.c.l.b16 %v8828
    %v9656 = vunpack.c.l.b16 %v8829
    %v9657 = vunpack.c.l.b16 %v8830
    %v9658 = vunpack.c.l.b16 %v8831
    %v9659 = vunpack.c.l.b16 %v8832
    %v9660 = vunpack.c.l.b16 %v8833
    %v9661 = vunpack.c.l.b16 %v8834
    %v9662 = vunpack.c.l.b16 %v8835
    %v9663 = vunpack.c.l.b16 %v8836
    %v9664 = vunpack.c.l.b16 %v8837
    %v9665 = vunpack.c.l.b16 %v8838
    %v9666 = vunpack.c.l.b16 %v8839
    %v9667 = vunpack.c.l.b16 %v8840
    %v9668 = vunpack.c.l.b16 %v8841
    %v9669 = vunpack.c.l.b16 %v8842
    %v9670 = vunpack.c.l.b16 %v8843
    %v9671 = vunpack.c.l.b16 %v8844
    %v9672 = vunpack.c.l.b16 %v8845
    %v9673 = vunpack.c.l.b16 %v8846
    %v9674 = vunpack.c.l.b16 %v8847
    %v9675 = vpack.c.b16 %v9628, %v9627
    %v9676 = vpack.c.b16 %v9630, %v9629
    %v9677 = vpack.c.b16 %v9632, %v9631
    %v9678 = vpack.c.b16 %v9634, %v9633
    %v9679 = vpack.c.b16 %v9636, %v9635
    %v9680 = vpack.c.b16 %v9638, %v9637
    %v9681 = vpack.c.b16 %v9640, %v9639
    %v9682 = vpack.c.b16 %v9642, %v9641
    %v9683 = vpack.c.b16 %v9644, %v9643
    %v9684 = vpack.c.b16 %v9646, %v9645
    %v9685 = vpack.c.b16 %v9648, %v9647
    %v9686 = vpack.c.b16 %v9650, %v9649
    %v9687 = vpack.c.b16 %v9652, %v9651
    %v9688 = vpack.c.b16 %v9654, %v9653
    %v9689 = vpack.c.b16 %v9656, %v9655
    %v9690 = vpack.c.b16 %v9658, %v9657
    %v9691 = vpack.c.b16 %v9660, %v9659
    %v9692 = vpack.c.b16 %v9662, %v9661
    %v9693 = vpack.c.b16 %v9664, %v9663
    %v9694 = vpack.c.b16 %v9666, %v9665
    %v9695 = vpack.c.b16 %v9668, %v9667
    %v9696 = vpack.c.b16 %v9670, %v9669
    %v9697 = vpack.c.b16 %v9672, %v9671
    %v9698 = vpack.c.b16 %v9674, %v9673
    %9723 = vmatpush.bf16.msra.mxu0 %v9682
    %9724 = vmatpush.bf16.msra.mxu0 %v9681
    %9725 = vmatpush.bf16.msra.mxu0 %v9680
    %9726 = vmatpush.bf16.msra.mxu0 %v9679
    %9727 = vmatpush.bf16.msra.mxu0 %v9678
    %9728 = vmatpush.bf16.msra.mxu0 %v9677
    %9729 = vmatpush.bf16.msra.mxu0 %v9676
    %9730 = vmatpush.bf16.msra.mxu0 %v9675
    %9731 = vmatmul.bf16.gmra.mxu0 %v9573
    %v9732 = vpop.f32.mrf.mxu0
    %v9733 = vadd.f32 %v9484, %v9732
    %v9734 = vpop.f32.mrf.mxu0
    %v9735 = vadd.f32 %v9486, %v9734
    %9736 = vmatmul.bf16.gmra.mxu0 %v9056
    %v9737 = vpop.f32.mrf.mxu0
    %v9738 = vadd.f32 %v9489, %v9737
    %v9739 = vpop.f32.mrf.mxu0
    %v9740 = vadd.f32 %v9491, %v9739
    %9741 = vmatmul.bf16.gmra.mxu0 %v9059
    %v9742 = vpop.f32.mrf.mxu0
    %v9743 = vadd.f32 %v9494, %v9742
    %v9744 = vpop.f32.mrf.mxu0
    %v9745 = vadd.f32 %v9496, %v9744
    %9746 = vmatmul.bf16.gmra.mxu0 %v9062
    %v9747 = vpop.f32.mrf.mxu0
    %v9748 = vadd.f32 %v9499, %v9747
    %v9749 = vpop.f32.mrf.mxu0
    %v9750 = vadd.f32 %v9501, %v9749
    %9751 = vmatmul.bf16.gmra.mxu0 %v9065
    %v9752 = vpop.f32.mrf.mxu0
    %v9753 = vadd.f32 %v9504, %v9752
    %v9754 = vpop.f32.mrf.mxu0
    %v9755 = vadd.f32 %v9506, %v9754
    %9756 = vmatmul.bf16.gmra.mxu0 %v9068
    %v9757 = vpop.f32.mrf.mxu0
    %v9758 = vadd.f32 %v9509, %v9757
    %v9759 = vpop.f32.mrf.mxu0
    %v9760 = vadd.f32 %v9511, %v9759
    %9761 = vmatmul.bf16.gmra.mxu0 %v9071
    %v9762 = vpop.f32.mrf.mxu0
    %v9763 = vadd.f32 %v9514, %v9762
    %v9764 = vpop.f32.mrf.mxu0
    %v9765 = vadd.f32 %v9516, %v9764
    %9766 = vmatmul.bf16.gmra.mxu0 %v9074
    %v9767 = vpop.f32.mrf.mxu0
    %v9768 = vadd.f32 %v9519, %v9767
    %v9769 = vpop.f32.mrf.mxu0
    %v9770 = vadd.f32 %v9521, %v9769
    %9771 = vmatmul.bf16.gmra.mxu0 %v9077
    %v9772 = vpop.f32.mrf.mxu0
    %v9773 = vadd.f32 %v9524, %v9772
    %v9774 = vpop.f32.mrf.mxu0
    %v9775 = vadd.f32 %v9526, %v9774
    %9776 = vmatmul.bf16.gmra.mxu0 %v9080
    %v9777 = vpop.f32.mrf.mxu0
    %v9778 = vadd.f32 %v9529, %v9777
    %v9779 = vpop.f32.mrf.mxu0
    %v9780 = vadd.f32 %v9531, %v9779
    %9781 = vmatmul.bf16.gmra.mxu0 %v9083
    %v9782 = vpop.f32.mrf.mxu0
    %v9783 = vadd.f32 %v9534, %v9782
    %v9784 = vpop.f32.mrf.mxu0
    %v9785 = vadd.f32 %v9536, %v9784
    %9786 = vmatmul.bf16.gmra.mxu0 %v9086
    %v9787 = vpop.f32.mrf.mxu0
    %v9788 = vadd.f32 %v9539, %v9787
    %v9789 = vpop.f32.mrf.mxu0
    %v9790 = vadd.f32 %v9541, %v9789
    %9791 = vmatmul.bf16.gmra.mxu0 %v9089
    %v9792 = vpop.f32.mrf.mxu0
    %v9793 = vadd.f32 %v9544, %v9792
    %v9794 = vpop.f32.mrf.mxu0
    %v9795 = vadd.f32 %v9546, %v9794
    %9796 = vmatmul.bf16.gmra.mxu0 %v9092
    %v9797 = vpop.f32.mrf.mxu0
    %v9798 = vadd.f32 %v9549, %v9797
    %v9799 = vpop.f32.mrf.mxu0
    %v9800 = vadd.f32 %v9551, %v9799
    %9801 = vmatmul.bf16.gmra.mxu0 %v9095
    %v9802 = vpop.f32.mrf.mxu0
    %v9803 = vadd.f32 %v9554, %v9802
    %v9804 = vpop.f32.mrf.mxu0
    %v9805 = vadd.f32 %v9556, %v9804
    %9806 = vmatmul.bf16.gmra.mxu0 %v9098
    %v9807 = vpop.f32.mrf.mxu0
    %v9808 = vadd.f32 %v9559, %v9807
    %v9809 = vpop.f32.mrf.mxu0
    %v9810 = vadd.f32 %v9561, %v9809
    %9811 = vdwg.mxu0
    %9812 = vmatpush.bf16.msra.mxu0 %v9690
    %9813 = vmatpush.bf16.msra.mxu0 %v9689
    %9814 = vmatpush.bf16.msra.mxu0 %v9688
    %9815 = vmatpush.bf16.msra.mxu0 %v9687
    %9816 = vmatpush.bf16.msra.mxu0 %v9686
    %9817 = vmatpush.bf16.msra.mxu0 %v9685
    %9818 = vmatpush.bf16.msra.mxu0 %v9684
    %9819 = vmatpush.bf16.msra.mxu0 %v9683
    %9820 = vmatmul.bf16.gmra.mxu0 %v9574
    %v9821 = vpop.f32.mrf.mxu0
    %v9822 = vadd.f32 %v9733, %v9821
    %v9823 = vpop.f32.mrf.mxu0
    %v9824 = vadd.f32 %v9735, %v9823
    %9825 = vmatmul.bf16.gmra.mxu0 %v9057
    %v9826 = vpop.f32.mrf.mxu0
    %v9827 = vadd.f32 %v9738, %v9826
    %v9828 = vpop.f32.mrf.mxu0
    %v9829 = vadd.f32 %v9740, %v9828
    %9830 = vmatmul.bf16.gmra.mxu0 %v9060
    %v9831 = vpop.f32.mrf.mxu0
    %v9832 = vadd.f32 %v9743, %v9831
    %v9833 = vpop.f32.mrf.mxu0
    %v9834 = vadd.f32 %v9745, %v9833
    %9835 = vmatmul.bf16.gmra.mxu0 %v9063
    %v9836 = vpop.f32.mrf.mxu0
    %v9837 = vadd.f32 %v9748, %v9836
    %v9838 = vpop.f32.mrf.mxu0
    %v9839 = vadd.f32 %v9750, %v9838
    %9840 = vmatmul.bf16.gmra.mxu0 %v9066
    %v9841 = vpop.f32.mrf.mxu0
    %v9842 = vadd.f32 %v9753, %v9841
    %v9843 = vpop.f32.mrf.mxu0
    %v9844 = vadd.f32 %v9755, %v9843
    %9845 = vmatmul.bf16.gmra.mxu0 %v9069
    %v9846 = vpop.f32.mrf.mxu0
    %v9847 = vadd.f32 %v9758, %v9846
    %v9848 = vpop.f32.mrf.mxu0
    %v9849 = vadd.f32 %v9760, %v9848
    %9850 = vmatmul.bf16.gmra.mxu0 %v9072
    %v9851 = vpop.f32.mrf.mxu0
    %v9852 = vadd.f32 %v9763, %v9851
    %v9853 = vpop.f32.mrf.mxu0
    %v9854 = vadd.f32 %v9765, %v9853
    %9855 = vmatmul.bf16.gmra.mxu0 %v9075
    %v9856 = vpop.f32.mrf.mxu0
    %v9857 = vadd.f32 %v9768, %v9856
    %v9858 = vpop.f32.mrf.mxu0
    %v9859 = vadd.f32 %v9770, %v9858
    %9860 = vmatmul.bf16.gmra.mxu0 %v9078
    %v9861 = vpop.f32.mrf.mxu0
    %v9862 = vadd.f32 %v9773, %v9861
    %v9863 = vpop.f32.mrf.mxu0
    %v9864 = vadd.f32 %v9775, %v9863
    %9865 = vmatmul.bf16.gmra.mxu0 %v9081
    %v9866 = vpop.f32.mrf.mxu0
    %v9867 = vadd.f32 %v9778, %v9866
    %v9868 = vpop.f32.mrf.mxu0
    %v9869 = vadd.f32 %v9780, %v9868
    %9870 = vmatmul.bf16.gmra.mxu0 %v9084
    %v9871 = vpop.f32.mrf.mxu0
    %v9872 = vadd.f32 %v9783, %v9871
    %v9873 = vpop.f32.mrf.mxu0
    %v9874 = vadd.f32 %v9785, %v9873
    %9875 = vmatmul.bf16.gmra.mxu0 %v9087
    %v9876 = vpop.f32.mrf.mxu0
    %v9877 = vadd.f32 %v9788, %v9876
    %v9878 = vpop.f32.mrf.mxu0
    %v9879 = vadd.f32 %v9790, %v9878
    %9880 = vmatmul.bf16.gmra.mxu0 %v9090
    %v9881 = vpop.f32.mrf.mxu0
    %v9882 = vadd.f32 %v9793, %v9881
    %v9883 = vpop.f32.mrf.mxu0
    %v9884 = vadd.f32 %v9795, %v9883
    %9885 = vmatmul.bf16.gmra.mxu0 %v9093
    %v9886 = vpop.f32.mrf.mxu0
    %v9887 = vadd.f32 %v9798, %v9886
    %v9888 = vpop.f32.mrf.mxu0
    %v9889 = vadd.f32 %v9800, %v9888
    %9890 = vmatmul.bf16.gmra.mxu0 %v9096
    %v9891 = vpop.f32.mrf.mxu0
    %v9892 = vadd.f32 %v9803, %v9891
    %v9893 = vpop.f32.mrf.mxu0
    %v9894 = vadd.f32 %v9805, %v9893
    %9895 = vmatmul.bf16.gmra.mxu0 %v9099
    %v9896 = vpop.f32.mrf.mxu0
    %v9897 = vadd.f32 %v9808, %v9896
    %v9898 = vpop.f32.mrf.mxu0
    %v9899 = vadd.f32 %v9810, %v9898
    %9900 = vdwg.mxu0
    %9901 = vmatpush.bf16.msra.mxu0 %v9698
    %9902 = vmatpush.bf16.msra.mxu0 %v9697
    %9903 = vmatpush.bf16.msra.mxu0 %v9696
    %9904 = vmatpush.bf16.msra.mxu0 %v9695
    %9905 = vmatpush.bf16.msra.mxu0 %v9694
    %9906 = vmatpush.bf16.msra.mxu0 %v9693
    %9907 = vmatpush.bf16.msra.mxu0 %v9692
    %9908 = vmatpush.bf16.msra.mxu0 %v9691
    %9909 = vmatmul.bf16.gmra.mxu0 %v9575
    %v9910 = vpop.f32.mrf.mxu0
    %v9911 = vadd.f32 %v9822, %v9910
    %v9912 = vpop.f32.mrf.mxu0
    %v9913 = vadd.f32 %v9824, %v9912
    %9914 = vmatmul.bf16.gmra.mxu0 %v9058
    %v9915 = vpop.f32.mrf.mxu0
    %v9916 = vadd.f32 %v9827, %v9915
    %v9917 = vpop.f32.mrf.mxu0
    %v9918 = vadd.f32 %v9829, %v9917
    %9919 = vmatmul.bf16.gmra.mxu0 %v9061
    %v9920 = vpop.f32.mrf.mxu0
    %v9921 = vadd.f32 %v9832, %v9920
    %v9922 = vpop.f32.mrf.mxu0
    %v9923 = vadd.f32 %v9834, %v9922
    %9924 = vmatmul.bf16.gmra.mxu0 %v9064
    %v9925 = vpop.f32.mrf.mxu0
    %v9926 = vadd.f32 %v9837, %v9925
    %v9927 = vpop.f32.mrf.mxu0
    %v9928 = vadd.f32 %v9839, %v9927
    %9929 = vmatmul.bf16.gmra.mxu0 %v9067
    %v9930 = vpop.f32.mrf.mxu0
    %v9931 = vadd.f32 %v9842, %v9930
    %v9932 = vpop.f32.mrf.mxu0
    %v9933 = vadd.f32 %v9844, %v9932
    %9934 = vmatmul.bf16.gmra.mxu0 %v9070
    %v9935 = vpop.f32.mrf.mxu0
    %v9936 = vadd.f32 %v9847, %v9935
    %v9937 = vpop.f32.mrf.mxu0
    %v9938 = vadd.f32 %v9849, %v9937
    %9939 = vmatmul.bf16.gmra.mxu0 %v9073
    %v9940 = vpop.f32.mrf.mxu0
    %v9941 = vadd.f32 %v9852, %v9940
    %v9942 = vpop.f32.mrf.mxu0
    %v9943 = vadd.f32 %v9854, %v9942
    %9944 = vmatmul.bf16.gmra.mxu0 %v9076
    %v9945 = vpop.f32.mrf.mxu0
    %v9946 = vadd.f32 %v9857, %v9945
    %v9947 = vpop.f32.mrf.mxu0
    %v9948 = vadd.f32 %v9859, %v9947
    %9949 = vmatmul.bf16.gmra.mxu0 %v9079
    %v9950 = vpop.f32.mrf.mxu0
    %v9951 = vadd.f32 %v9862, %v9950
    %v9952 = vpop.f32.mrf.mxu0
    %v9953 = vadd.f32 %v9864, %v9952
    %9954 = vmatmul.bf16.gmra.mxu0 %v9082
    %v9955 = vpop.f32.mrf.mxu0
    %v9956 = vadd.f32 %v9867, %v9955
    %v9957 = vpop.f32.mrf.mxu0
    %v9958 = vadd.f32 %v9869, %v9957
    %9959 = vmatmul.bf16.gmra.mxu0 %v9085
    %v9960 = vpop.f32.mrf.mxu0
    %v9961 = vadd.f32 %v9872, %v9960
    %v9962 = vpop.f32.mrf.mxu0
    %v9963 = vadd.f32 %v9874, %v9962
    %9964 = vmatmul.bf16.gmra.mxu0 %v9088
    %v9965 = vpop.f32.mrf.mxu0
    %v9966 = vadd.f32 %v9877, %v9965
    %v9967 = vpop.f32.mrf.mxu0
    %v9968 = vadd.f32 %v9879, %v9967
    %9969 = vmatmul.bf16.gmra.mxu0 %v9091
    %v9970 = vpop.f32.mrf.mxu0
    %v9971 = vadd.f32 %v9882, %v9970
    %v9972 = vpop.f32.mrf.mxu0
    %v9973 = vadd.f32 %v9884, %v9972
    %9974 = vmatmul.bf16.gmra.mxu0 %v9094
    %v9975 = vpop.f32.mrf.mxu0
    %v9976 = vadd.f32 %v9887, %v9975
    %v9977 = vpop.f32.mrf.mxu0
    %v9978 = vadd.f32 %v9889, %v9977
    %9979 = vmatmul.bf16.gmra.mxu0 %v9097
    %v9980 = vpop.f32.mrf.mxu0
    %v9981 = vadd.f32 %v9892, %v9980
    %v9982 = vpop.f32.mrf.mxu0
    %v9983 = vadd.f32 %v9894, %v9982
    %9984 = vmatmul.bf16.gmra.mxu0 %v9100
    %v9985 = vpop.f32.mrf.mxu0
    %v9986 = vadd.f32 %v9897, %v9985
    %v9987 = vpop.f32.mrf.mxu0
    %v9988 = vadd.f32 %v9899, %v9987
    %9989 = vdwg.mxu0
    %v9990 = vld [vmem:[%s4618] sm:$0xf]
    %v9991 = vld [vmem:[%s4618 + $0x4] sm:$0xf]
    %v9992 = vld [vmem:[%s4618 + $0x8] sm:$0xf]
    %v9993 = vld [vmem:[%s4618 + $0xc] sm:$0xf]
    %v9994 = vld [vmem:[%s4618 + $0x10] sm:$0xf]
    %v9995 = vld [vmem:[%s4618 + $0x14] sm:$0xf]
    %v9996 = vld [vmem:[%s4618 + $0x18] sm:$0xf]
    %v9997 = vld [vmem:[%s4618 + $0x1c] sm:$0xf]
    %v9998 = vld [vmem:[%s4618 + $0x20] sm:$0xf]
    %v9999 = vld [vmem:[%s4618 + $0x24] sm:$0xf]
    %v10000 = vld [vmem:[%s4618 + $0x28] sm:$0xf]
    %v10001 = vld [vmem:[%s4618 + $0x2c] sm:$0xf]
    %v10002 = vld [vmem:[%s4618 + $0x30] sm:$0xf]
    %v10003 = vld [vmem:[%s4618 + $0x34] sm:$0xf]
    %v10004 = vld [vmem:[%s4618 + $0x38] sm:$0xf]
    %v10005 = vld [vmem:[%s4618 + $0x3c] sm:$0xf]
    %v10006 = vld [vmem:[%s4618 + $0x40] sm:$0xf]
    %v10007 = vld [vmem:[%s4618 + $0x44] sm:$0xf]
    %v10008 = vld [vmem:[%s4618 + $0x48] sm:$0xf]
    %v10009 = vld [vmem:[%s4618 + $0x4c] sm:$0xf]
    %v10010 = vld [vmem:[%s4618 + $0x50] sm:$0xf]
    %v10011 = vld [vmem:[%s4618 + $0x54] sm:$0xf]
    %v10012 = vld [vmem:[%s4618 + $0x58] sm:$0xf]
    %v10013 = vld [vmem:[%s4618 + $0x5c] sm:$0xf]
    %v10014 = vld [vmem:[%s4618 + $0x60] sm:$0xf]
    %v10015 = vld [vmem:[%s4618 + $0x64] sm:$0xf]
    %v10016 = vld [vmem:[%s4618 + $0x68] sm:$0xf]
    %v10017 = vld [vmem:[%s4618 + $0x6c] sm:$0xf]
    %v10018 = vld [vmem:[%s4618 + $0x70] sm:$0xf]
    %v10019 = vld [vmem:[%s4618 + $0x74] sm:$0xf]
    %v10020 = vld [vmem:[%s4618 + $0x78] sm:$0xf]
    %v10021 = vld [vmem:[%s4618 + $0x7c] sm:$0xf]
    %v10022 = vld [vmem:[%s4618 + $0x80] sm:$0xf]
    %v10023 = vld [vmem:[%s4618 + $0x84] sm:$0xf]
    %v10024 = vld [vmem:[%s4618 + $0x88] sm:$0xf]
    %v10025 = vld [vmem:[%s4618 + $0x8c] sm:$0xf]
    %v10026 = vld [vmem:[%s4618 + $0x90] sm:$0xf]
    %v10027 = vld [vmem:[%s4618 + $0x94] sm:$0xf]
    %v10028 = vld [vmem:[%s4618 + $0x98] sm:$0xf]
    %v10029 = vld [vmem:[%s4618 + $0x9c] sm:$0xf]
    %v10030 = vld [vmem:[%s4618 + $0xa0] sm:$0xf]
    %v10031 = vld [vmem:[%s4618 + $0xa4] sm:$0xf]
    %v10032 = vld [vmem:[%s4618 + $0xa8] sm:$0xf]
    %v10033 = vld [vmem:[%s4618 + $0xac] sm:$0xf]
    %v10034 = vld [vmem:[%s4618 + $0xb0] sm:$0xf]
    %v10035 = vld [vmem:[%s4618 + $0xb4] sm:$0xf]
    %v10036 = vld [vmem:[%s4618 + $0xb8] sm:$0xf]
    %v10037 = vld [vmem:[%s4618 + $0xbc] sm:$0xf]
    %v10042 = vunpack.c.l.b16 %v8796
    %v10043 = vunpack.c.h.b16 %v8796
    %v10044 = vunpack.c.l.b16 %v8797
    %v10045 = vunpack.c.l.b16 %v8798
    %v10046 = vunpack.c.h.b16 %v8798
    %v10047 = vunpack.c.l.b16 %v8799
    %v10048 = vpack.c.b16 %v10045, %v10042
    %v10049 = vpack.c.b16 %v10046, %v10043
    %v10050 = vpack.c.b16 %v10047, %v10044
    %v10102 = vunpack.c.l.b16 %v9990
    %v10103 = vunpack.c.l.b16 %v9991
    %v10104 = vunpack.c.l.b16 %v9992
    %v10105 = vunpack.c.l.b16 %v9993
    %v10106 = vunpack.c.l.b16 %v9994
    %v10107 = vunpack.c.l.b16 %v9995
    %v10108 = vunpack.c.l.b16 %v9996
    %v10109 = vunpack.c.l.b16 %v9997
    %v10110 = vunpack.c.l.b16 %v9998
    %v10111 = vunpack.c.l.b16 %v9999
    %v10112 = vunpack.c.l.b16 %v10000
    %v10113 = vunpack.c.l.b16 %v10001
    %v10114 = vunpack.c.l.b16 %v10002
    %v10115 = vunpack.c.l.b16 %v10003
    %v10116 = vunpack.c.l.b16 %v10004
    %v10117 = vunpack.c.l.b16 %v10005
    %v10118 = vunpack.c.l.b16 %v10006
    %v10119 = vunpack.c.l.b16 %v10007
    %v10120 = vunpack.c.l.b16 %v10008
    %v10121 = vunpack.c.l.b16 %v10009
    %v10122 = vunpack.c.l.b16 %v10010
    %v10123 = vunpack.c.l.b16 %v10011
    %v10124 = vunpack.c.l.b16 %v10012
    %v10125 = vunpack.c.l.b16 %v10013
    %v10126 = vunpack.c.l.b16 %v10014
    %v10127 = vunpack.c.l.b16 %v10015
    %v10128 = vunpack.c.l.b16 %v10016
    %v10129 = vunpack.c.l.b16 %v10017
    %v10130 = vunpack.c.l.b16 %v10018
    %v10131 = vunpack.c.l.b16 %v10019
    %v10132 = vunpack.c.l.b16 %v10020
    %v10133 = vunpack.c.l.b16 %v10021
    %v10134 = vunpack.c.l.b16 %v10022
    %v10135 = vunpack.c.l.b16 %v10023
    %v10136 = vunpack.c.l.b16 %v10024
    %v10137 = vunpack.c.l.b16 %v10025
    %v10138 = vunpack.c.l.b16 %v10026
    %v10139 = vunpack.c.l.b16 %v10027
    %v10140 = vunpack.c.l.b16 %v10028
    %v10141 = vunpack.c.l.b16 %v10029
    %v10142 = vunpack.c.l.b16 %v10030
    %v10143 = vunpack.c.l.b16 %v10031
    %v10144 = vunpack.c.l.b16 %v10032
    %v10145 = vunpack.c.l.b16 %v10033
    %v10146 = vunpack.c.l.b16 %v10034
    %v10147 = vunpack.c.l.b16 %v10035
    %v10148 = vunpack.c.l.b16 %v10036
    %v10149 = vunpack.c.l.b16 %v10037
    %v10150 = vpack.c.b16 %v10103, %v10102
    %v10151 = vpack.c.b16 %v10105, %v10104
    %v10152 = vpack.c.b16 %v10107, %v10106
    %v10153 = vpack.c.b16 %v10109, %v10108
    %v10154 = vpack.c.b16 %v10111, %v10110
    %v10155 = vpack.c.b16 %v10113, %v10112
    %v10156 = vpack.c.b16 %v10115, %v10114
    %v10157 = vpack.c.b16 %v10117, %v10116
    %v10158 = vpack.c.b16 %v10119, %v10118
    %v10159 = vpack.c.b16 %v10121, %v10120
    %v10160 = vpack.c.b16 %v10123, %v10122
    %v10161 = vpack.c.b16 %v10125, %v10124
    %v10162 = vpack.c.b16 %v10127, %v10126
    %v10163 = vpack.c.b16 %v10129, %v10128
    %v10164 = vpack.c.b16 %v10131, %v10130
    %v10165 = vpack.c.b16 %v10133, %v10132
    %v10166 = vpack.c.b16 %v10135, %v10134
    %v10167 = vpack.c.b16 %v10137, %v10136
    %v10168 = vpack.c.b16 %v10139, %v10138
    %v10169 = vpack.c.b16 %v10141, %v10140
    %v10170 = vpack.c.b16 %v10143, %v10142
    %v10171 = vpack.c.b16 %v10145, %v10144
    %v10172 = vpack.c.b16 %v10147, %v10146
    %v10173 = vpack.c.b16 %v10149, %v10148
    %10198 = vmatpush.bf16.msra.mxu0 %v10157
    %10199 = vmatpush.bf16.msra.mxu0 %v10156
    %10200 = vmatpush.bf16.msra.mxu0 %v10155
    %10201 = vmatpush.bf16.msra.mxu0 %v10154
    %10202 = vmatpush.bf16.msra.mxu0 %v10153
    %10203 = vmatpush.bf16.msra.mxu0 %v10152
    %10204 = vmatpush.bf16.msra.mxu0 %v10151
    %10205 = vmatpush.bf16.msra.mxu0 %v10150
    %10206 = vmatmul.bf16.gmra.mxu0 %v9059
    %v10207 = vpop.f32.mrf.mxu0
    %v10208 = vadd.f32 0.0, %v10207
    %v10209 = vpop.f32.mrf.mxu0
    %v10210 = vadd.f32 0.0, %v10209
    %10211 = vmatmul.bf16.gmra.mxu0 %v9062
    %v10212 = vpop.f32.mrf.mxu0
    %v10213 = vadd.f32 0.0, %v10212
    %v10214 = vpop.f32.mrf.mxu0
    %v10215 = vadd.f32 0.0, %v10214
    %10216 = vmatmul.bf16.gmra.mxu0 %v9065
    %v10217 = vpop.f32.mrf.mxu0
    %v10218 = vadd.f32 0.0, %v10217
    %v10219 = vpop.f32.mrf.mxu0
    %v10220 = vadd.f32 0.0, %v10219
    %10221 = vmatmul.bf16.gmra.mxu0 %v9068
    %v10222 = vpop.f32.mrf.mxu0
    %v10223 = vadd.f32 0.0, %v10222
    %v10224 = vpop.f32.mrf.mxu0
    %v10225 = vadd.f32 0.0, %v10224
    %10226 = vmatmul.bf16.gmra.mxu0 %v9071
    %v10227 = vpop.f32.mrf.mxu0
    %v10228 = vadd.f32 0.0, %v10227
    %v10229 = vpop.f32.mrf.mxu0
    %v10230 = vadd.f32 0.0, %v10229
    %10231 = vmatmul.bf16.gmra.mxu0 %v9074
    %v10232 = vpop.f32.mrf.mxu0
    %v10233 = vadd.f32 0.0, %v10232
    %v10234 = vpop.f32.mrf.mxu0
    %v10235 = vadd.f32 0.0, %v10234
    %10236 = vmatmul.bf16.gmra.mxu0 %v9077
    %v10237 = vpop.f32.mrf.mxu0
    %v10238 = vadd.f32 0.0, %v10237
    %v10239 = vpop.f32.mrf.mxu0
    %v10240 = vadd.f32 0.0, %v10239
    %10241 = vmatmul.bf16.gmra.mxu0 %v9080
    %v10242 = vpop.f32.mrf.mxu0
    %v10243 = vadd.f32 0.0, %v10242
    %v10244 = vpop.f32.mrf.mxu0
    %v10245 = vadd.f32 0.0, %v10244
    %10246 = vmatmul.bf16.gmra.mxu0 %v9083
    %v10247 = vpop.f32.mrf.mxu0
    %v10248 = vadd.f32 0.0, %v10247
    %v10249 = vpop.f32.mrf.mxu0
    %v10250 = vadd.f32 0.0, %v10249
    %10251 = vmatmul.bf16.gmra.mxu0 %v9086
    %v10252 = vpop.f32.mrf.mxu0
    %v10253 = vadd.f32 0.0, %v10252
    %v10254 = vpop.f32.mrf.mxu0
    %v10255 = vadd.f32 0.0, %v10254
    %10256 = vmatmul.bf16.gmra.mxu0 %v9089
    %v10257 = vpop.f32.mrf.mxu0
    %v10258 = vadd.f32 0.0, %v10257
    %v10259 = vpop.f32.mrf.mxu0
    %v10260 = vadd.f32 0.0, %v10259
    %10261 = vmatmul.bf16.gmra.mxu0 %v9092
    %v10262 = vpop.f32.mrf.mxu0
    %v10263 = vadd.f32 0.0, %v10262
    %v10264 = vpop.f32.mrf.mxu0
    %v10265 = vadd.f32 0.0, %v10264
    %10266 = vmatmul.bf16.gmra.mxu0 %v9095
    %v10267 = vpop.f32.mrf.mxu0
    %v10268 = vadd.f32 0.0, %v10267
    %v10269 = vpop.f32.mrf.mxu0
    %v10270 = vadd.f32 0.0, %v10269
    %10271 = vmatmul.bf16.gmra.mxu0 %v9098
    %v10272 = vpop.f32.mrf.mxu0
    %v10273 = vadd.f32 0.0, %v10272
    %v10274 = vpop.f32.mrf.mxu0
    %v10275 = vadd.f32 0.0, %v10274
    %10276 = vmatmul.bf16.gmra.mxu0 %v9101
    %v10277 = vpop.f32.mrf.mxu0
    %v10278 = vadd.f32 0.0, %v10277
    %v10279 = vpop.f32.mrf.mxu0
    %v10280 = vadd.f32 0.0, %v10279
    %10281 = vmatmul.bf16.gmra.mxu0 %v10048
    %v10282 = vpop.f32.mrf.mxu0
    %v10283 = vadd.f32 0.0, %v10282
    %v10284 = vpop.f32.mrf.mxu0
    %v10285 = vadd.f32 0.0, %v10284
    %10286 = vdwg.mxu0
    %10287 = vmatpush.bf16.msra.mxu0 %v10165
    %10288 = vmatpush.bf16.msra.mxu0 %v10164
    %10289 = vmatpush.bf16.msra.mxu0 %v10163
    %10290 = vmatpush.bf16.msra.mxu0 %v10162
    %10291 = vmatpush.bf16.msra.mxu0 %v10161
    %10292 = vmatpush.bf16.msra.mxu0 %v10160
    %10293 = vmatpush.bf16.msra.mxu0 %v10159
    %10294 = vmatpush.bf16.msra.mxu0 %v10158
    %10295 = vmatmul.bf16.gmra.mxu0 %v9060
    %v10296 = vpop.f32.mrf.mxu0
    %v10297 = vadd.f32 %v10208, %v10296
    %v10298 = vpop.f32.mrf.mxu0
    %v10299 = vadd.f32 %v10210, %v10298
    %10300 = vmatmul.bf16.gmra.mxu0 %v9063
    %v10301 = vpop.f32.mrf.mxu0
    %v10302 = vadd.f32 %v10213, %v10301
    %v10303 = vpop.f32.mrf.mxu0
    %v10304 = vadd.f32 %v10215, %v10303
    %10305 = vmatmul.bf16.gmra.mxu0 %v9066
    %v10306 = vpop.f32.mrf.mxu0
    %v10307 = vadd.f32 %v10218, %v10306
    %v10308 = vpop.f32.mrf.mxu0
    %v10309 = vadd.f32 %v10220, %v10308
    %10310 = vmatmul.bf16.gmra.mxu0 %v9069
    %v10311 = vpop.f32.mrf.mxu0
    %v10312 = vadd.f32 %v10223, %v10311
    %v10313 = vpop.f32.mrf.mxu0
    %v10314 = vadd.f32 %v10225, %v10313
    %10315 = vmatmul.bf16.gmra.mxu0 %v9072
    %v10316 = vpop.f32.mrf.mxu0
    %v10317 = vadd.f32 %v10228, %v10316
    %v10318 = vpop.f32.mrf.mxu0
    %v10319 = vadd.f32 %v10230, %v10318
    %10320 = vmatmul.bf16.gmra.mxu0 %v9075
    %v10321 = vpop.f32.mrf.mxu0
    %v10322 = vadd.f32 %v10233, %v10321
    %v10323 = vpop.f32.mrf.mxu0
    %v10324 = vadd.f32 %v10235, %v10323
    %10325 = vmatmul.bf16.gmra.mxu0 %v9078
    %v10326 = vpop.f32.mrf.mxu0
    %v10327 = vadd.f32 %v10238, %v10326
    %v10328 = vpop.f32.mrf.mxu0
    %v10329 = vadd.f32 %v10240, %v10328
    %10330 = vmatmul.bf16.gmra.mxu0 %v9081
    %v10331 = vpop.f32.mrf.mxu0
    %v10332 = vadd.f32 %v10243, %v10331
    %v10333 = vpop.f32.mrf.mxu0
    %v10334 = vadd.f32 %v10245, %v10333
    %10335 = vmatmul.bf16.gmra.mxu0 %v9084
    %v10336 = vpop.f32.mrf.mxu0
    %v10337 = vadd.f32 %v10248, %v10336
    %v10338 = vpop.f32.mrf.mxu0
    %v10339 = vadd.f32 %v10250, %v10338
    %10340 = vmatmul.bf16.gmra.mxu0 %v9087
    %v10341 = vpop.f32.mrf.mxu0
    %v10342 = vadd.f32 %v10253, %v10341
    %v10343 = vpop.f32.mrf.mxu0
    %v10344 = vadd.f32 %v10255, %v10343
    %10345 = vmatmul.bf16.gmra.mxu0 %v9090
    %v10346 = vpop.f32.mrf.mxu0
    %v10347 = vadd.f32 %v10258, %v10346
    %v10348 = vpop.f32.mrf.mxu0
    %v10349 = vadd.f32 %v10260, %v10348
    %10350 = vmatmul.bf16.gmra.mxu0 %v9093
    %v10351 = vpop.f32.mrf.mxu0
    %v10352 = vadd.f32 %v10263, %v10351
    %v10353 = vpop.f32.mrf.mxu0
    %v10354 = vadd.f32 %v10265, %v10353
    %10355 = vmatmul.bf16.gmra.mxu0 %v9096
    %v10356 = vpop.f32.mrf.mxu0
    %v10357 = vadd.f32 %v10268, %v10356
    %v10358 = vpop.f32.mrf.mxu0
    %v10359 = vadd.f32 %v10270, %v10358
    %10360 = vmatmul.bf16.gmra.mxu0 %v9099
    %v10361 = vpop.f32.mrf.mxu0
    %v10362 = vadd.f32 %v10273, %v10361
    %v10363 = vpop.f32.mrf.mxu0
    %v10364 = vadd.f32 %v10275, %v10363
    %10365 = vmatmul.bf16.gmra.mxu0 %v9102
    %v10366 = vpop.f32.mrf.mxu0
    %v10367 = vadd.f32 %v10278, %v10366
    %v10368 = vpop.f32.mrf.mxu0
    %v10369 = vadd.f32 %v10280, %v10368
    %10370 = vmatmul.bf16.gmra.mxu0 %v10049
    %v10371 = vpop.f32.mrf.mxu0
    %v10372 = vadd.f32 %v10283, %v10371
    %v10373 = vpop.f32.mrf.mxu0
    %v10374 = vadd.f32 %v10285, %v10373
    %10375 = vdwg.mxu0
    %10376 = vmatpush.bf16.msra.mxu0 %v10173
    %10377 = vmatpush.bf16.msra.mxu0 %v10172
    %10378 = vmatpush.bf16.msra.mxu0 %v10171
    %10379 = vmatpush.bf16.msra.mxu0 %v10170
    %10380 = vmatpush.bf16.msra.mxu0 %v10169
    %10381 = vmatpush.bf16.msra.mxu0 %v10168
    %10382 = vmatpush.bf16.msra.mxu0 %v10167
    %10383 = vmatpush.bf16.msra.mxu0 %v10166
    %10384 = vmatmul.bf16.gmra.mxu0 %v9061
    %v10385 = vpop.f32.mrf.mxu0
    %v10386 = vadd.f32 %v10297, %v10385
    %v10387 = vpop.f32.mrf.mxu0
    %v10388 = vadd.f32 %v10299, %v10387
    %10389 = vmatmul.bf16.gmra.mxu0 %v9064
    %v10390 = vpop.f32.mrf.mxu0
    %v10391 = vadd.f32 %v10302, %v10390
    %v10392 = vpop.f32.mrf.mxu0
    %v10393 = vadd.f32 %v10304, %v10392
    %10394 = vmatmul.bf16.gmra.mxu0 %v9067
    %v10395 = vpop.f32.mrf.mxu0
    %v10396 = vadd.f32 %v10307, %v10395
    %v10397 = vpop.f32.mrf.mxu0
    %v10398 = vadd.f32 %v10309, %v10397
    %10399 = vmatmul.bf16.gmra.mxu0 %v9070
    %v10400 = vpop.f32.mrf.mxu0
    %v10401 = vadd.f32 %v10312, %v10400
    %v10402 = vpop.f32.mrf.mxu0
    %v10403 = vadd.f32 %v10314, %v10402
    %10404 = vmatmul.bf16.gmra.mxu0 %v9073
    %v10405 = vpop.f32.mrf.mxu0
    %v10406 = vadd.f32 %v10317, %v10405
    %v10407 = vpop.f32.mrf.mxu0
    %v10408 = vadd.f32 %v10319, %v10407
    %10409 = vmatmul.bf16.gmra.mxu0 %v9076
    %v10410 = vpop.f32.mrf.mxu0
    %v10411 = vadd.f32 %v10322, %v10410
    %v10412 = vpop.f32.mrf.mxu0
    %v10413 = vadd.f32 %v10324, %v10412
    %10414 = vmatmul.bf16.gmra.mxu0 %v9079
    %v10415 = vpop.f32.mrf.mxu0
    %v10416 = vadd.f32 %v10327, %v10415
    %v10417 = vpop.f32.mrf.mxu0
    %v10418 = vadd.f32 %v10329, %v10417
    %10419 = vmatmul.bf16.gmra.mxu0 %v9082
    %v10420 = vpop.f32.mrf.mxu0
    %v10421 = vadd.f32 %v10332, %v10420
    %v10422 = vpop.f32.mrf.mxu0
    %v10423 = vadd.f32 %v10334, %v10422
    %10424 = vmatmul.bf16.gmra.mxu0 %v9085
    %v10425 = vpop.f32.mrf.mxu0
    %v10426 = vadd.f32 %v10337, %v10425
    %v10427 = vpop.f32.mrf.mxu0
    %v10428 = vadd.f32 %v10339, %v10427
    %10429 = vmatmul.bf16.gmra.mxu0 %v9088
    %v10430 = vpop.f32.mrf.mxu0
    %v10431 = vadd.f32 %v10342, %v10430
    %v10432 = vpop.f32.mrf.mxu0
    %v10433 = vadd.f32 %v10344, %v10432
    %10434 = vmatmul.bf16.gmra.mxu0 %v9091
    %v10435 = vpop.f32.mrf.mxu0
    %v10436 = vadd.f32 %v10347, %v10435
    %v10437 = vpop.f32.mrf.mxu0
    %v10438 = vadd.f32 %v10349, %v10437
    %10439 = vmatmul.bf16.gmra.mxu0 %v9094
    %v10440 = vpop.f32.mrf.mxu0
    %v10441 = vadd.f32 %v10352, %v10440
    %v10442 = vpop.f32.mrf.mxu0
    %v10443 = vadd.f32 %v10354, %v10442
    %10444 = vmatmul.bf16.gmra.mxu0 %v9097
    %v10445 = vpop.f32.mrf.mxu0
    %v10446 = vadd.f32 %v10357, %v10445
    %v10447 = vpop.f32.mrf.mxu0
    %v10448 = vadd.f32 %v10359, %v10447
    %10449 = vmatmul.bf16.gmra.mxu0 %v9100
    %v10450 = vpop.f32.mrf.mxu0
    %v10451 = vadd.f32 %v10362, %v10450
    %v10452 = vpop.f32.mrf.mxu0
    %v10453 = vadd.f32 %v10364, %v10452
    %10454 = vmatmul.bf16.gmra.mxu0 %v9103
    %v10455 = vpop.f32.mrf.mxu0
    %v10456 = vadd.f32 %v10367, %v10455
    %v10457 = vpop.f32.mrf.mxu0
    %v10458 = vadd.f32 %v10369, %v10457
    %10459 = vmatmul.bf16.gmra.mxu0 %v10050
    %v10460 = vpop.f32.mrf.mxu0
    %v10461 = vadd.f32 %v10372, %v10460
    %v10462 = vpop.f32.mrf.mxu0
    %v10463 = vadd.f32 %v10374, %v10462
    %10464 = vdwg.mxu0
    %v10465 = vadd.f32 %v9911, %v10386
    %v10466 = vadd.f32 %v9913, %v10388
    %v10467 = vadd.f32 %v9916, %v10391
    %v10468 = vadd.f32 %v9918, %v10393
    %v10469 = vadd.f32 %v9921, %v10396
    %v10470 = vadd.f32 %v9923, %v10398
    %v10471 = vadd.f32 %v9926, %v10401
    %v10472 = vadd.f32 %v9928, %v10403
    %v10473 = vadd.f32 %v9931, %v10406
    %v10474 = vadd.f32 %v9933, %v10408
    %v10475 = vadd.f32 %v9936, %v10411
    %v10476 = vadd.f32 %v9938, %v10413
    %v10477 = vadd.f32 %v9941, %v10416
    %v10478 = vadd.f32 %v9943, %v10418
    %v10479 = vadd.f32 %v9946, %v10421
    %v10480 = vadd.f32 %v9948, %v10423
    %v10481 = vadd.f32 %v9951, %v10426
    %v10482 = vadd.f32 %v9953, %v10428
    %v10483 = vadd.f32 %v9956, %v10431
    %v10484 = vadd.f32 %v9958, %v10433
    %v10485 = vadd.f32 %v9961, %v10436
    %v10486 = vadd.f32 %v9963, %v10438
    %v10487 = vadd.f32 %v9966, %v10441
    %v10488 = vadd.f32 %v9968, %v10443
    %v10489 = vadd.f32 %v9971, %v10446
    %v10490 = vadd.f32 %v9973, %v10448
    %v10491 = vadd.f32 %v9976, %v10451
    %v10492 = vadd.f32 %v9978, %v10453
    %v10493 = vadd.f32 %v9981, %v10456
    %v10494 = vadd.f32 %v9983, %v10458
    %v10495 = vadd.f32 %v9986, %v10461
    %v10496 = vadd.f32 %v9988, %v10463
    %v10497 = vadd.f32 %v10465, %v10466
    %v10498 = vadd.f32 %v10497, %v10467
    %v10499 = vadd.f32 %v10498, %v10468
    %v10500 = vadd.f32 %v10499, %v10469
    %v10501 = vadd.f32 %v10500, %v10470
    %v10502 = vadd.f32 %v10501, %v10471
    %v10503 = vadd.f32 %v10502, %v10472
    %v10504 = vadd.f32 %v10503, %v10473
    %v10505 = vadd.f32 %v10504, %v10474
    %v10506 = vadd.f32 %v10505, %v10475
    %v10507 = vadd.f32 %v10506, %v10476
    %v10508 = vadd.f32 %v10507, %v10477
    %v10509 = vadd.f32 %v10508, %v10478
    %v10510 = vadd.f32 %v10509, %v10479
    %v10511 = vadd.f32 %v10510, %v10480
    %v10512 = vadd.f32 %v10511, %v10481
    %v10513 = vadd.f32 %v10512, %v10482
    %v10514 = vadd.f32 %v10513, %v10483
    %v10515 = vadd.f32 %v10514, %v10484
    %v10516 = vadd.f32 %v10515, %v10485
    %v10517 = vadd.f32 %v10516, %v10486
    %v10518 = vadd.f32 %v10517, %v10487
    %v10519 = vadd.f32 %v10518, %v10488
    %v10520 = vadd.f32 %v10519, %v10489
    %v10521 = vadd.f32 %v10520, %v10490
    %v10522 = vadd.f32 %v10521, %v10491
    %v10523 = vadd.f32 %v10522, %v10492
    %v10524 = vadd.f32 %v10523, %v10493
    %v10525 = vadd.f32 %v10524, %v10494
    %v10526 = vadd.f32 %v10525, %v10495
    %v10527 = vadd.f32 %v10526, %v10496
    %v10528 = vrot.slane %v10527, 4
    %v10529 = vadd.f32 %v10527, %v10528
    %v10530 = vrot.slane %v10529, 2
    %v10531 = vadd.f32 %v10529, %v10530
    %v10532 = vrot.slane %v10531, 1
    %v10533 = vadd.f32 %v10531, %v10532
    %v10534 = vmul.f32 %v10533, 0.00390625
    %v10535 = vmul.f32 %v10465, %v10465
    %v10536 = vmul.f32 %v10466, %v10466
    %v10537 = vmul.f32 %v10467, %v10467
    %v10538 = vmul.f32 %v10468, %v10468
    %v10539 = vmul.f32 %v10469, %v10469
    %v10540 = vmul.f32 %v10470, %v10470
    %v10541 = vmul.f32 %v10471, %v10471
    %v10542 = vmul.f32 %v10472, %v10472
    %v10543 = vmul.f32 %v10473, %v10473
    %v10544 = vmul.f32 %v10474, %v10474
    %v10545 = vmul.f32 %v10475, %v10475
    %v10546 = vmul.f32 %v10476, %v10476
    %v10547 = vmul.f32 %v10477, %v10477
    %v10548 = vmul.f32 %v10478, %v10478
    %v10549 = vmul.f32 %v10479, %v10479
    %v10550 = vmul.f32 %v10480, %v10480
    %v10551 = vmul.f32 %v10481, %v10481
    %v10552 = vmul.f32 %v10482, %v10482
    %v10553 = vmul.f32 %v10483, %v10483
    %v10554 = vmul.f32 %v10484, %v10484
    %v10555 = vmul.f32 %v10485, %v10485
    %v10556 = vmul.f32 %v10486, %v10486
    %v10557 = vmul.f32 %v10487, %v10487
    %v10558 = vmul.f32 %v10488, %v10488
    %v10559 = vmul.f32 %v10489, %v10489
    %v10560 = vmul.f32 %v10490, %v10490
    %v10561 = vmul.f32 %v10491, %v10491
    %v10562 = vmul.f32 %v10492, %v10492
    %v10563 = vmul.f32 %v10493, %v10493
    %v10564 = vmul.f32 %v10494, %v10494
    %v10565 = vmul.f32 %v10495, %v10495
    %v10566 = vmul.f32 %v10496, %v10496
    %v10567 = vadd.f32 %v10535, %v10536
    %v10568 = vadd.f32 %v10567, %v10537
    %v10569 = vadd.f32 %v10568, %v10538
    %v10570 = vadd.f32 %v10569, %v10539
    %v10571 = vadd.f32 %v10570, %v10540
    %v10572 = vadd.f32 %v10571, %v10541
    %v10573 = vadd.f32 %v10572, %v10542
    %v10574 = vadd.f32 %v10573, %v10543
    %v10575 = vadd.f32 %v10574, %v10544
    %v10576 = vadd.f32 %v10575, %v10545
    %v10577 = vadd.f32 %v10576, %v10546
    %v10578 = vadd.f32 %v10577, %v10547
    %v10579 = vadd.f32 %v10578, %v10548
    %v10580 = vadd.f32 %v10579, %v10549
    %v10581 = vadd.f32 %v10580, %v10550
    %v10582 = vadd.f32 %v10581, %v10551
    %v10583 = vadd.f32 %v10582, %v10552
    %v10584 = vadd.f32 %v10583, %v10553
    %v10585 = vadd.f32 %v10584, %v10554
    %v10586 = vadd.f32 %v10585, %v10555
    %v10587 = vadd.f32 %v10586, %v10556
    %v10588 = vadd.f32 %v10587, %v10557
    %v10589 = vadd.f32 %v10588, %v10558
    %v10590 = vadd.f32 %v10589, %v10559
    %v10591 = vadd.f32 %v10590, %v10560
    %v10592 = vadd.f32 %v10591, %v10561
    %v10593 = vadd.f32 %v10592, %v10562
    %v10594 = vadd.f32 %v10593, %v10563
    %v10595 = vadd.f32 %v10594, %v10564
    %v10596 = vadd.f32 %v10595, %v10565
    %v10597 = vadd.f32 %v10596, %v10566
    %v10598 = vrot.slane %v10597, 4
    %v10599 = vadd.f32 %v10597, %v10598
    %v10600 = vrot.slane %v10599, 2
    %v10601 = vadd.f32 %v10599, %v10600
    %v10602 = vrot.slane %v10601, 1
    %v10603 = vadd.f32 %v10601, %v10602
    %v10604 = vmul.f32 %v10603, 0.00390625
    %v10605 = vmul.f32 %v10534, %v10534
    %v10606 = vsub.f32 %v10604, %v10605
    %v10607 = vld [vmem:[%s5] sm:$0x1]
    %v10608 = vadd.f32 %v10606, 1e-05
    %v10609 = vrsqrt.pop %v10608
    %v10610 = vmul.f32 %v10609, %v10608
    %v10611 = vmul.f32 %v10610, %v10609
    %v10612 = vmul.f32 0.5, %v10611
    %v10613 = vsub.f32 1.5, %v10612
    %v10614 = vmul.f32 %v10609, %v10613
    %vm10615 = vweird.f32 %v10608
    %vm10616 = vweird.f32 %v10609
    %vm10617 = vmor %vm10615, %vm10616
    %v10618 = vsel %vm10617, %v10609, %v10614
    %v10619 = vmul.f32 %v10607, %v10618
    %v10620 = vld [vmem:[%s6] sm:$0x1]
    %v10621 = vmul.f32 %v10534, %v10619
    %v10622 = vsub.f32 %v10620, %v10621
    %v10624 = vperm.slane %v10619, 0
    %v10626 = vmul.f32 %v10465, %v10624
    %v10627 = vmul.f32 %v10466, %v10624
    %v10628 = vmul.f32 %v10467, %v10624
    %v10629 = vmul.f32 %v10468, %v10624
    %v10630 = vmul.f32 %v10469, %v10624
    %v10631 = vmul.f32 %v10470, %v10624
    %v10632 = vmul.f32 %v10471, %v10624
    %v10633 = vmul.f32 %v10472, %v10624
    %v10634 = vmul.f32 %v10473, %v10624
    %v10635 = vmul.f32 %v10474, %v10624
    %v10636 = vmul.f32 %v10475, %v10624
    %v10637 = vmul.f32 %v10476, %v10624
    %v10638 = vmul.f32 %v10477, %v10624
    %v10639 = vmul.f32 %v10478, %v10624
    %v10640 = vmul.f32 %v10479, %v10624
    %v10641 = vmul.f32 %v10480, %v10624
    %v10642 = vmul.f32 %v10481, %v10624
    %v10643 = vmul.f32 %v10482, %v10624
    %v10644 = vmul.f32 %v10483, %v10624
    %v10645 = vmul.f32 %v10484, %v10624
    %v10646 = vmul.f32 %v10485, %v10624
    %v10647 = vmul.f32 %v10486, %v10624
    %v10648 = vmul.f32 %v10487, %v10624
    %v10649 = vmul.f32 %v10488, %v10624
    %v10650 = vmul.f32 %v10489, %v10624
    %v10651 = vmul.f32 %v10490, %v10624
    %v10652 = vmul.f32 %v10491, %v10624
    %v10653 = vmul.f32 %v10492, %v10624
    %v10654 = vmul.f32 %v10493, %v10624
    %v10655 = vmul.f32 %v10494, %v10624
    %v10656 = vmul.f32 %v10495, %v10624
    %v10657 = vmul.f32 %v10496, %v10624
    %v10659 = vperm.slane %v10622, 0
    %v10661 = vadd.f32 %v10626, %v10659
    %v10662 = vadd.f32 %v10627, %v10659
    %v10663 = vadd.f32 %v10628, %v10659
    %v10664 = vadd.f32 %v10629, %v10659
    %v10665 = vadd.f32 %v10630, %v10659
    %v10666 = vadd.f32 %v10631, %v10659
    %v10667 = vadd.f32 %v10632, %v10659
    %v10668 = vadd.f32 %v10633, %v10659
    %v10669 = vadd.f32 %v10634, %v10659
    %v10670 = vadd.f32 %v10635, %v10659
    %v10671 = vadd.f32 %v10636, %v10659
    %v10672 = vadd.f32 %v10637, %v10659
    %v10673 = vadd.f32 %v10638, %v10659
    %v10674 = vadd.f32 %v10639, %v10659
    %v10675 = vadd.f32 %v10640, %v10659
    %v10676 = vadd.f32 %v10641, %v10659
    %v10677 = vadd.f32 %v10642, %v10659
    %v10678 = vadd.f32 %v10643, %v10659
    %v10679 = vadd.f32 %v10644, %v10659
    %v10680 = vadd.f32 %v10645, %v10659
    %v10681 = vadd.f32 %v10646, %v10659
    %v10682 = vadd.f32 %v10647, %v10659
    %v10683 = vadd.f32 %v10648, %v10659
    %v10684 = vadd.f32 %v10649, %v10659
    %v10685 = vadd.f32 %v10650, %v10659
    %v10686 = vadd.f32 %v10651, %v10659
    %v10687 = vadd.f32 %v10652, %v10659
    %v10688 = vadd.f32 %v10653, %v10659
    %v10689 = vadd.f32 %v10654, %v10659
    %v10690 = vadd.f32 %v10655, %v10659
    %v10691 = vadd.f32 %v10656, %v10659
    %v10692 = vadd.f32 %v10657, %v10659
    %v10693 = vmax.f32 %v10661, 0.0
    %v10694 = vmax.f32 %v10662, 0.0
    %v10695 = vmax.f32 %v10663, 0.0
    %v10696 = vmax.f32 %v10664, 0.0
    %v10697 = vmax.f32 %v10665, 0.0
    %v10698 = vmax.f32 %v10666, 0.0
    %v10699 = vmax.f32 %v10667, 0.0
    %v10700 = vmax.f32 %v10668, 0.0
    %v10701 = vmax.f32 %v10669, 0.0
    %v10702 = vmax.f32 %v10670, 0.0
    %v10703 = vmax.f32 %v10671, 0.0
    %v10704 = vmax.f32 %v10672, 0.0
    %v10705 = vmax.f32 %v10673, 0.0
    %v10706 = vmax.f32 %v10674, 0.0
    %v10707 = vmax.f32 %v10675, 0.0
    %v10708 = vmax.f32 %v10676, 0.0
    %v10709 = vmax.f32 %v10677, 0.0
    %v10710 = vmax.f32 %v10678, 0.0
    %v10711 = vmax.f32 %v10679, 0.0
    %v10712 = vmax.f32 %v10680, 0.0
    %v10713 = vmax.f32 %v10681, 0.0
    %v10714 = vmax.f32 %v10682, 0.0
    %v10715 = vmax.f32 %v10683, 0.0
    %v10716 = vmax.f32 %v10684, 0.0
    %v10717 = vmax.f32 %v10685, 0.0
    %v10718 = vmax.f32 %v10686, 0.0
    %v10719 = vmax.f32 %v10687, 0.0
    %v10720 = vmax.f32 %v10688, 0.0
    %v10721 = vmax.f32 %v10689, 0.0
    %v10722 = vmax.f32 %v10690, 0.0
    %v10723 = vmax.f32 %v10691, 0.0
    %v10724 = vmax.f32 %v10692, 0.0
    %v10725 = vadd.f32 %v10693, %v5419
    %v10726 = vadd.f32 %v10694, %v5420
    %v10727 = vadd.f32 %v10695, %v5421
    %v10728 = vadd.f32 %v10696, %v5422
    %v10729 = vadd.f32 %v10697, %v5423
    %v10730 = vadd.f32 %v10698, %v5424
    %v10731 = vadd.f32 %v10699, %v5425
    %v10732 = vadd.f32 %v10700, %v5426
    %v10733 = vadd.f32 %v10701, %v5427
    %v10734 = vadd.f32 %v10702, %v5428
    %v10735 = vadd.f32 %v10703, %v5429
    %v10736 = vadd.f32 %v10704, %v5430
    %v10737 = vadd.f32 %v10705, %v5431
    %v10738 = vadd.f32 %v10706, %v5432
    %v10739 = vadd.f32 %v10707, %v5433
    %v10740 = vadd.f32 %v10708, %v5434
    %v10741 = vadd.f32 %v10709, %v5435
    %v10742 = vadd.f32 %v10710, %v5436
    %v10743 = vadd.f32 %v10711, %v5437
    %v10744 = vadd.f32 %v10712, %v5438
    %v10745 = vadd.f32 %v10713, %v5439
    %v10746 = vadd.f32 %v10714, %v5440
    %v10747 = vadd.f32 %v10715, %v5441
    %v10748 = vadd.f32 %v10716, %v5442
    %v10749 = vadd.f32 %v10717, %v5443
    %v10750 = vadd.f32 %v10718, %v5444
    %v10751 = vadd.f32 %v10719, %v5445
    %v10752 = vadd.f32 %v10720, %v5446
    %v10753 = vadd.f32 %v10721, %v5447
    %v10754 = vadd.f32 %v10722, %v5448
    %v10755 = vadd.f32 %v10723, %v5449
    %v10756 = vadd.f32 %v10724, %v5450
    %s10757 = scalar_lea.vmem [#allocation3], 256
    %10758 = vst [vmem:[%s10757] sm:$0xff] %v10725
    %10759 = vst [vmem:[%s10757 + $0x8] sm:$0xff] %v10726
    %10760 = vst [vmem:[%s10757 + $0x10] sm:$0xff] %v10727
    %10761 = vst [vmem:[%s10757 + $0x18] sm:$0xff] %v10728
    %10762 = vst [vmem:[%s10757 + $0x20] sm:$0xff] %v10729
    %10763 = vst [vmem:[%s10757 + $0x28] sm:$0xff] %v10730
    %10764 = vst [vmem:[%s10757 + $0x30] sm:$0xff] %v10731
    %10765 = vst [vmem:[%s10757 + $0x38] sm:$0xff] %v10732
    %10766 = vst [vmem:[%s10757 + $0x40] sm:$0xff] %v10733
    %10767 = vst [vmem:[%s10757 + $0x48] sm:$0xff] %v10734
    %10768 = vst [vmem:[%s10757 + $0x50] sm:$0xff] %v10735
    %10769 = vst [vmem:[%s10757 + $0x58] sm:$0xff] %v10736
    %10770 = vst [vmem:[%s10757 + $0x60] sm:$0xff] %v10737
    %10771 = vst [vmem:[%s10757 + $0x68] sm:$0xff] %v10738
    %10772 = vst [vmem:[%s10757 + $0x70] sm:$0xff] %v10739
    %10773 = vst [vmem:[%s10757 + $0x78] sm:$0xff] %v10740
    %10774 = vst [vmem:[%s10757 + $0x80] sm:$0xff] %v10741
    %10775 = vst [vmem:[%s10757 + $0x88] sm:$0xff] %v10742
    %10776 = vst [vmem:[%s10757 + $0x90] sm:$0xff] %v10743
    %10777 = vst [vmem:[%s10757 + $0x98] sm:$0xff] %v10744
    %10778 = vst [vmem:[%s10757 + $0xa0] sm:$0xff] %v10745
    %10779 = vst [vmem:[%s10757 + $0xa8] sm:$0xff] %v10746
    %10780 = vst [vmem:[%s10757 + $0xb0] sm:$0xff] %v10747
    %10781 = vst [vmem:[%s10757 + $0xb8] sm:$0xff] %v10748
    %10782 = vst [vmem:[%s10757 + $0xc0] sm:$0xff] %v10749
    %10783 = vst [vmem:[%s10757 + $0xc8] sm:$0xff] %v10750
    %10784 = vst [vmem:[%s10757 + $0xd0] sm:$0xff] %v10751
    %10785 = vst [vmem:[%s10757 + $0xd8] sm:$0xff] %v10752
    %10786 = vst [vmem:[%s10757 + $0xe0] sm:$0xff] %v10753
    %10787 = vst [vmem:[%s10757 + $0xe8] sm:$0xff] %v10754
    %10788 = vst [vmem:[%s10757 + $0xf0] sm:$0xff] %v10755
    %10789 = vst [vmem:[%s10757 + $0xf8] sm:$0xff] %v10756
    // Predicated region
    $region30: #{residual_block.1} parent=1 // pred_check
      _
    $region31: #{residual_block.1} parent=1 // pred_check_branch
      %10791 = sbr.rel (0) target = $region33
    $region32: #{residual_block.1} parent=1 // pred_region
      %10793 = vsyncadd [#allocation4], 0
      %s10794 = sshll.u32 [#allocation3], 4
      %s10795 = int_to_ptr.vmem [resolvable:$true] %s10794
      %s10796 = sshll.u32 %s7, 4
      %s10797 = int_to_ptr.hbm [resolvable:$true] %s10796
      %10802 = dma.vmem_to_hbm [thread:$0]  %s10795, 8192, %s10797, [#allocation4], 128, 128, 8
    $region33: #{residual_block.1} parent=1 // pred_fallthru
      _
    // Predicated region
    $region34: #{residual_block.1} parent=1 // pred_check
      _
    $region35: #{residual_block.1} parent=1 // pred_check_branch
      %10804 = sbr.rel (0) target = $region37
    $region36: #{residual_block.1} parent=1 // pred_region
      %10806 = dma.done [#allocation4], 8192
    $region37: #{residual_block.1} parent=1 // pred_fallthru
      _
    %10807 = vsyncpa [#allocation4], 1

</llo_original>
